<compile_context>
chip_gen: v7x
topology: tpu7x:2x2x1
jax: 0.10.0
libtpu: 0.0.40
codegen_flags: <defaults>
</compile_context>

<pallas_src>
import functools

import numpy as np

import jax
import jax.numpy as jnp
from jax import lax
from jax.experimental import pallas as pl
from jax.experimental.pallas import tpu as pltpu

C1 = 32                       # "1536" channels
C2 = 2 * C1                   # "3072" channels
H = W = 7
HW = H * W
IMG = 28                      # 28 / 4 = 7 patches per side -> 49 tokens
PATCH = 4
PATCH_DIM = 3 * PATCH * PATCH
SWIN_HIDDEN = 256             # "2048"
SWIN_OUT = 110
NUM_CLIP = 16
NUM_CLASSES = 10
PRED_IN = 2 + NUM_CLIP + SWIN_OUT     # 128, as in the PyTorch module
PRED_PAD = 128                        # lane-dense padded predictor output
NEG_INF = -1e30

_VMEM = pltpu.MemorySpace.VMEM


# ----------------------------- in-kernel helpers -----------------------------

def _mvn(t, eps=1e-5):
    """mean_variance_norm over tokens (axis 0) per channel; unbiased var like torch.var."""
    n = t.shape[0]
    mean = jnp.mean(t, axis=0, keepdims=True)
    d = t - mean
    var = jnp.sum(d * d, axis=0, keepdims=True) * (1.0 / (n - 1)) + eps
    return d * lax.rsqrt(var)


def _softmax_last(s):
    m = jnp.max(s, axis=-1, keepdims=True)
    e = jnp.exp(s - m)
    return e * pl.reciprocal(jnp.sum(e, axis=-1, keepdims=True), approx=True)


def _bdot(a, b):
    # bf16 x bf16 MXU matmul with f32 accumulation (operands cast just before dot).
    return jnp.dot(a.astype(jnp.bfloat16), b.astype(jnp.bfloat16),
                   preferred_element_type=jnp.float32)


def _bdot_nt(a, b):
    # a @ b.T without materializing the transpose, bf16 inputs, f32 accumulation.
    return lax.dot_general(a.astype(jnp.bfloat16), b.astype(jnp.bfloat16),
                           (((1,), (1,)), ((), ())),
                           preferred_element_type=jnp.float32)


def _fdot(a, b):
    return jnp.dot(a, b, preferred_element_type=jnp.float32)


def _sigmoid(y):
    # numerically stable sigmoid (no exp overflow), reciprocal on the EUP.
    z = jnp.exp(-jnp.abs(y))
    r = pl.reciprocal(1.0 + z, approx=True)
    return jnp.where(y >= 0, r, z * r)


def _nlb_core(gpt, ci, wW, bW, gamma, beta, s1, s7, anchor_mask):
    """NonLocalBlock body after the fused [g | phi | theta] projection.

    gpt: (HW, 3*ci) = [g | phi | theta].  MaxPool2d(2,2) over the 7x7 token grid
    is a window-max over all 49 anchors done with two constant shift matmuls
    (max over {0,+1}, then that result shifted by +7 covers {0,+1,+7,+8});
    invalid anchors are removed by an additive -inf mask before the softmax,
    which is exactly equivalent to pooling down to the 9 valid windows.
    """
    gph = gpt[:, 0:2 * ci]            # the two pooled projections (g, phi)
    th = gpt[:, 2 * ci:3 * ci]        # theta (not pooled)
    m1 = jnp.maximum(gph, _fdot(s1, gph))
    m = jnp.maximum(m1, _fdot(s7, m1))
    gp = m[:, 0:ci]                   # pooled g   (49 anchors, invalid ones masked)
    pp = m[:, ci:2 * ci]              # pooled phi
    f = _bdot_nt(th, pp) + anchor_mask                # (HW, HW), invalid cols -> -inf
    fdc = _softmax_last(f)
    y = _bdot(fdc, gp)                                # (HW, ci)
    wy = _bdot(y, wW) + bW
    # TODO(synk): BatchNorm uses per-sample statistics here; exact only because
    # gamma = beta = 0 at init (as in the PyTorch module) so the BN term vanishes.
    mu = jnp.mean(wy, axis=0, keepdims=True)
    var = jnp.mean((wy - mu) * (wy - mu), axis=0, keepdims=True)
    return gamma * ((wy - mu) * lax.rsqrt(var + 1e-5)) + beta


# --------------------------------- kernels -----------------------------------

def embed_kernel(p_ref, w_ref, b_ref, o_ref):
    # fused Swin-stub patch embeddings for [GenAes | StyAes.model_1 | StyAes.model_2]
    o_ref[...] = _fdot(p_ref[...], w_ref[...]) + b_ref[...]


def body_kernel(tok_ref, pooled_ref, qa_ref, shifts_ref, mask_ref,
                san_w_ref, san_b_ref,
                n1_w_ref, n1_b_ref, n1_wW_ref, n1_bW_ref, n1_gm_ref, n1_bt_ref,
                n2_w_ref, n2_b_ref, n2_wW_ref, n2_bW_ref, n2_gm_ref, n2_bt_ref,
                w1_ref, b1_ref, w2_ref, b2_ref, wc_ref, bc_ref,
                wpq_ref, wpc_ref, wps_ref, bp_ref,
                out_ref, fc_ref, *, bs):
    """Fully fused per-grid-step forward:
    SANet + ReLU + NLB_1 + concat + NLB_2 + flatten + SWIN MLP + CLIP stub + head."""
    f32 = jnp.float32
    bf16 = jnp.bfloat16
    s1 = shifts_ref[0]
    s7 = shifts_ref[1]
    amask = mask_ref[...]
    sw = san_w_ref[...]               # (C1, 4*C1) bf16 = [wf | wg | wh | wo]
    sb = san_b_ref[...]
    n1w = n1_w_ref[...]
    n2w = n2_w_ref[...]

    for s in range(bs):               # static unroll over samples of this step
        gen = tok_ref[s, 0]           # (HW, C1)
        sty = tok_ref[s, 1]
        aes = tok_ref[s, 2]

        # ---------------- SANet (content = aes, style = sty) ----------------
        cn = _mvn(aes)
        sn = _mvn(sty)
        Fm = _bdot(cn, sw[:, 0:C1]) + sb[:, 0:C1]
        Gm = _bdot(sn, sw[:, C1:2 * C1]) + sb[:, C1:2 * C1]
        Hm = _bdot(sty, sw[:, 2 * C1:3 * C1]) + sb[:, 2 * C1:3 * C1]
        S = _softmax_last(_bdot_nt(Fm, Gm))                    # (HW, HW)
        O = _bdot(S, Hm)                                       # (HW, C1)
        O = _bdot(O, sw[:, 3 * C1:4 * C1]) + sb[:, 3 * C1:4 * C1] + aes
        x1 = jnp.maximum(O, 0.0)                               # F.relu in my_SANet

        # ---------------- NLB_1 (C = C1, Ci = C1//2) ----------------
        gpt1 = _bdot(x1, n1w) + n1_b_ref[...]
        x1 = x1 + _nlb_core(gpt1, C1 // 2, n1_wW_ref[...], n1_bW_ref[...],
                            n1_gm_ref[...], n1_bt_ref[...], s1, s7, amask)

        # -------- NLB_2 on channel-concat([x1, gen])  (C = C2, Ci = C2//2) ---
        # concat folded in as split matmuls + split residuals (no jnp.concatenate)
        gpt2 = (_bdot(x1, n2w[0:C1, :]) + _bdot(gen, n2w[C1:C2, :]) + n2_b_ref[...])
        wy2 = _nlb_core(gpt2, C2 // 2, n2_wW_ref[...], n2_bW_ref[...],
                        n2_gm_ref[...], n2_bt_ref[...], s1, s7, amask)
        zL = wy2[:, 0:C1] + x1        # channels 0..C1-1  (sty / NLB_1 path)
        zR = wy2[:, C1:C2] + gen      # channels C1..C2-1 (gen path)

        # token-major flatten into the VMEM fc scratch (rows of w1 were
        # pre-permuted so this equals torch.flatten(NCHW) + the original Linear)
        for t in range(HW):
            fc_ref[pl.ds(s, 1), pl.ds(t * C2, C1)] = zL[t:t + 1, :].astype(bf16)
            fc_ref[pl.ds(s, 1), pl.ds(t * C2 + C1, C1)] = zR[t:t + 1, :].astype(bf16)

    # ---------------- head, batched over the bs samples of this step ----------
    fc = fc_ref[...]                                           # (bs, HW*C2) bf16
    h1 = _fdot(fc, w1_ref[...]) + b1_ref[...]                  # (bs, SWIN_HIDDEN)
    h1 = jnp.maximum(h1, 0.0)
    # TODO(synk): Dropout(p=0.2) treated as identity (inference semantics).
    swin = _sigmoid(_bdot(h1, w2_ref[...]) + b2_ref[...])      # (bs, 110)
    # CLIP-IQA stub: pooled RGB means -> 16 sigmoid "scores"
    clip = _sigmoid(_fdot(pooled_ref[:, 0, :], wc_ref[...]) + bc_ref[...])   # (bs, 16)
    # final predictor on concat([q, A_q, clip, swin]) done as split matmuls
    out = (_fdot(qa_ref[:, 0, :], wpq_ref[...])
           + _fdot(clip, wpc_ref[...])
           + _fdot(swin, wps_ref[...])
           + bp_ref[...])
    out_ref[:, 0, :] = out                                     # (bs, 128) lane-dense


# ------------------------------- pallas wrappers ------------------------------

def _vmem_spec():
    return pl.BlockSpec(memory_space=_VMEM)


def _const_spec(arr):
    nd = arr.ndim
    return pl.BlockSpec(arr.shape, lambda g, _nd=nd: (0,) * _nd)


def _pick_bs(batch):
    """Samples per grid step: batch as much as possible while keeping >= 2 grid
    steps (so v7x's two TensorCores both get work via 'parallel')."""
    for bs in (8, 4, 2):
        if batch % bs == 0 and batch // bs >= 2:
            return bs
    return 1


def embed_pallas(patches, kp):
    n = patches.shape[0]
    return pl.pallas_call(
        embed_kernel,
        out_shape=jax.ShapeDtypeStruct((n, 3 * C1), jnp.float32),
        in_specs=[_vmem_spec(), _vmem_spec(), _vmem_spec()],
        out_specs=_vmem_spec(),
    )(patches, kp["w_embed"], kp["b_embed"])


def body_pallas(tok, pooled, qa, kp):
    B = tok.shape[0]
    bs = _pick_bs(B)
    steps = B // bs
    n1 = kp["nlb1"]
    n2 = kp["nlb2"]
    consts = [kp["shifts"], kp["anchor_mask"], kp["san_w"], kp["san_b"],
              n1["wgpt"], n1["bgpt"], n1["wW"], n1["bW"], n1["gamma"], n1["beta"],
              n2["wgpt"], n2["bgpt"], n2["wW"], n2["bW"], n2["gamma"], n2["beta"],
              kp["w1"], kp["b1"], kp["w2"], kp["b2"],
              kp["w_clip"], kp["b_clip"],
              kp["wp_qa"], kp["wp_clip"], kp["wp_swin"], kp["bp"]]
    data_specs = [
        pl.BlockSpec((bs, 3, HW, C1), lambda g: (g, 0, 0, 0)),
        pl.BlockSpec((bs, 1, 3), lambda g: (g, 0, 0)),
        pl.BlockSpec((bs, 1, 2), lambda g: (g, 0, 0)),
    ]
    return pl.pallas_call(
        functools.partial(body_kernel, bs=bs),
        out_shape=jax.ShapeDtypeStruct((B, 1, PRED_PAD), jnp.float32),
        grid=(steps,),
        in_specs=data_specs + [_const_spec(c) for c in consts],
        out_specs=pl.BlockSpec((bs, 1, PRED_PAD), lambda g: (g, 0, 0)),
        scratch_shapes=[pltpu.VMEM((bs, HW * C2), jnp.bfloat16)],
        compiler_params=pltpu.CompilerParams(dimension_semantics=("parallel",)),
    )(tok, pooled, qa, *consts)


# -------------------------------- model glue ----------------------------------

def bsfn_ava_forward(kp, x, q_score, A_q_score):
    B = x.shape[0]

    # CLIP-IQA stub pooling + 4x4 patch extraction (pure layout ops, fused by XLA)
    pooled = jnp.mean(x, axis=(2, 3)).reshape(B, 1, 3)                   # (B, 1, 3)
    patches = (x.reshape(B, 3, H, PATCH, W, PATCH)
                 .transpose(0, 2, 4, 1, 3, 5)
                 .reshape(B * HW, PATCH_DIM))

    # fused Swin-stub patch embeddings: [GenAes | StyAes.model_1 | StyAes.model_2]
    emb = embed_pallas(patches, kp)                                      # (B*HW, 3*C1)

    # single fused permutation reproducing torch's .view(-1,C,49).view(-1,C,7,7)
    # for all three backbones at once -> channel-last tokens (B, 3, HW, C1)
    tok = (emb.reshape(B, HW, 3, C1).transpose(0, 2, 1, 3)
              .reshape(B, 3, C1, HW).transpose(0, 1, 3, 2))

    qa = jnp.stack([q_score.astype(jnp.float32), A_q_score.astype(jnp.float32)],
                   axis=1).reshape(B, 1, 2)

    out = body_pallas(tok, pooled, qa, kp)                               # (B, 1, 128)
    return out.reshape(B, PRED_PAD)[:, :NUM_CLASSES]


# ------------------------------- parameter init --------------------------------

def init_params(key, num_classes=NUM_CLASSES):
    """PyTorch-layout parameters (weights as (out, in))."""
    keys = iter(jax.random.split(key, 64))

    def w(shape, scale=0.05):
        return (scale * jax.random.normal(next(keys), shape)).astype(jnp.float32)

    def zeros(shape):
        return jnp.zeros(shape, jnp.float32)

    def nlb(C, Ci):
        return dict(wg=w((Ci, C)), bg=zeros((1, Ci)),
                    wt=w((Ci, C)), bt=zeros((1, Ci)),
                    wp=w((Ci, C)), bp=zeros((1, Ci)),
                    wW=w((C, Ci)), bW=zeros((1, C)),
                    gamma=zeros((1, C)), beta=zeros((1, C)))   # BN init'd to 0 as in torch

    return dict(
        clip=dict(w=w((NUM_CLIP, 3)), b=zeros((1, NUM_CLIP))),
        gen=dict(w=w((C1, PATCH_DIM)), b=zeros((1, C1))),
        sty1=dict(w=w((C1, PATCH_DIM)), b=zeros((1, C1))),
        sty2=dict(w=w((C1, PATCH_DIM)), b=zeros((1, C1))),
        sanet=dict(wf=w((C1, C1)), bf=zeros((1, C1)),
                   wg=w((C1, C1)), bg=zeros((1, C1)),
                   wh=w((C1, C1)), bh=zeros((1, C1)),
                   wo=w((C1, C1)), bo=zeros((1, C1))),
        nlb1=nlb(C1, C1 // 2),
        nlb2=nlb(C2, C2 // 2),
        swinpred=dict(w1=w((SWIN_HIDDEN, C2 * HW)), b1=zeros((1, SWIN_HIDDEN)),
                      w2=w((SWIN_OUT, SWIN_HIDDEN)), b2=zeros((1, SWIN_OUT))),
        pred=dict(w=w((num_classes, PRED_IN)), b=zeros((1, num_classes))),
    )


def prepare_params(p):
    """One-time conversion to kernel layout: pre-transpose, fuse shared-input
    projections, bf16 the MXU weights, pad the predictor to 128 lanes, and
    build the NLB pooling constants."""
    f32 = jnp.float32
    bf16 = jnp.bfloat16

    # constants for the 2x2 MaxPool over the 7x7 token grid (2 shift mats + mask)
    idx = np.arange(HW)
    shifts = np.zeros((2, HW, HW), np.float32)
    for si, k in enumerate((1, W)):
        rows = idx[idx + k < HW]
        shifts[si, rows, rows + k] = 1.0
    hh, ww = idx // W, idx % W
    valid = (hh % 2 == 0) & (hh < W - 1) & (ww % 2 == 0) & (ww < W - 1)
    anchor_mask = np.where(valid, 0.0, NEG_INF).astype(np.float32)[None, :]

    # fused patch-embeddings: columns = [GenAes | model_1 (sty) | model_2 (aes)]
    w_embed = jnp.concatenate([p["gen"]["w"].T, p["sty1"]["w"].T, p["sty2"]["w"].T], axis=1)
    b_embed = jnp.concatenate([p["gen"]["b"], p["sty1"]["b"], p["sty2"]["b"]], axis=1)

    sa = p["sanet"]
    san_w = jnp.concatenate([sa["wf"].T, sa["wg"].T, sa["wh"].T, sa["wo"].T],
                            axis=1).astype(bf16)
    san_b = jnp.concatenate([sa["bf"], sa["bg"], sa["bh"], sa["bo"]], axis=1)

    def nlb(q):
        # fused [g | phi | theta] projection (pooled ones first), stored (Cin, Cout) bf16
        return dict(wgpt=jnp.concatenate([q["wg"].T, q["wp"].T, q["wt"].T],
                                         axis=1).astype(bf16),
                    bgpt=jnp.concatenate([q["bg"], q["bp"], q["bt"]], axis=1),
                    wW=q["wW"].T.astype(bf16), bW=q["bW"],
                    gamma=q["gamma"], beta=q["beta"])

    sp = p["swinpred"]
    # torch flattens NCHW (input index = c*HW + hw); re-order w1 rows so the kernel
    # can use the token-major (hw*C2 + c) flatten with no runtime transpose; bf16.
    w1_t = sp["w1"].T                                               # (C2*HW, HID)
    w1_tok = (w1_t.reshape(C2, HW, SWIN_HIDDEN).transpose(1, 0, 2)
              .reshape(HW * C2, SWIN_HIDDEN).astype(bf16))

    pr = p["pred"]
    ncls = pr["w"].shape[0]
    wp_pad = jnp.zeros((PRED_IN, PRED_PAD), f32).at[:, :ncls].set(pr["w"].T)
    bp_pad = jnp.zeros((1, PRED_PAD), f32).at[:, :ncls].set(pr["b"])

    return dict(
        shifts=jnp.asarray(shifts), anchor_mask=jnp.asarray(anchor_mask),
        w_embed=w_embed, b_embed=b_embed,
        san_w=san_w, san_b=san_b,
        nlb1=nlb(p["nlb1"]), nlb2=nlb(p["nlb2"]),
        w_clip=p["clip"]["w"].T, b_clip=p["clip"]["b"],
        w1=w1_tok, b1=sp["b1"], w2=sp["w2"].T.astype(bf16), b2=sp["b2"],
        wp_qa=wp_pad[0:2], wp_clip=wp_pad[2:2 + NUM_CLIP], wp_swin=wp_pad[2 + NUM_CLIP:],
        bp=bp_pad,
    )


# ------------------------------------ main --------------------------------------

if __name__ == "__main__":
    key = jax.random.PRNGKey(0)
    kx, kq, ka, kp_key = jax.random.split(key, 4)

    B = 2
    x = jax.random.normal(kx, (B, 3, IMG, IMG), jnp.float32)          # NCHW image
    q_score = jax.random.uniform(kq, (B,), jnp.float32) * 10.0
    A_q_score = jax.random.uniform(ka, (B,), jnp.float32) * 10.0

    torch_params = init_params(kp_key, num_classes=NUM_CLASSES)
    kparams = prepare_params(torch_params)                            # one-time layout prep

    fwd = jax.jit(bsfn_ava_forward)
    out = fwd(kparams, x, q_score, A_q_score)
    out = jax.block_until_ready(out)
    assert out.shape == (B, NUM_CLASSES), out.shape
    print("KERNEL_OK")
</pallas_src>

<mosaic_0001>
module attributes {stable_mosaic.version = 11 : i64} {
  func.func @embed_kernel(%arg0: memref<98x48xf32, #tpu.memory_space<vmem>>, %arg1: memref<48x96xf32, #tpu.memory_space<vmem>>, %arg2: memref<1x96xf32, #tpu.memory_space<vmem>>, %arg3: memref<98x96xf32, #tpu.memory_space<vmem>>) attributes {dimension_semantics = [], scalar_prefetch = 0 : i64, scratch_operands = 0 : i64, tpu.core_type = #tpu.core_type<tc>} {
    %c0 = arith.constant 0 : index
    %c0_0 = arith.constant 0 : index
    %0 = vector.load %arg0[%c0, %c0_0] : memref<98x48xf32, #tpu.memory_space<vmem>>, vector<98x48xf32>
    %c0_1 = arith.constant 0 : index
    %c0_2 = arith.constant 0 : index
    %1 = vector.load %arg1[%c0_1, %c0_2] : memref<48x96xf32, #tpu.memory_space<vmem>>, vector<48x96xf32>
    %cst = arith.constant dense<0.000000e+00> : vector<98x96xf32>
    %2 = tpu.matmul %0, %1, %cst {dimension_numbers = #tpu.dot_dimension_numbers<[1], [0], [0], [1], [0, 0, 1, 1], [], []>} : vector<98x48xf32>, vector<48x96xf32>, vector<98x96xf32> -> vector<98x96xf32>
    %c0_3 = arith.constant 0 : index
    %c0_4 = arith.constant 0 : index
    %3 = vector.load %arg2[%c0_3, %c0_4] : memref<1x96xf32, #tpu.memory_space<vmem>>, vector<1x96xf32>
    %4 = vector.broadcast %3 : vector<1x96xf32> to vector<98x96xf32>
    %5 = arith.addf %2, %4 : vector<98x96xf32>
    %c0_5 = arith.constant 0 : index
    %c0_6 = arith.constant 0 : index
    %6 = vector.load %arg3[%c0_5, %c0_6] : memref<98x96xf32, #tpu.memory_space<vmem>>, vector<98x96xf32>
    tpu.vector_store %arg3[%c0_5, %c0_6], %5 {strides = array<i32>} : memref<98x96xf32, #tpu.memory_space<vmem>>, vector<98x96xf32>,
    return
  }
}

module attributes {stable_mosaic.version = 11 : i64} {
  func.func @body_kernel(%arg0: i32, %arg1: memref<1x3x49x32xf32, #tpu.memory_space<vmem>>, %arg2: memref<1x1x3xf32, #tpu.memory_space<vmem>>, %arg3: memref<1x1x2xf32, #tpu.memory_space<vmem>>, %arg4: memref<2x49x49xf32, #tpu.memory_space<vmem>>, %arg5: memref<1x49xf32, #tpu.memory_space<vmem>>, %arg6: memref<32x128xbf16, #tpu.memory_space<vmem>>, %arg7: memref<1x128xf32, #tpu.memory_space<vmem>>, %arg8: memref<32x48xbf16, #tpu.memory_space<vmem>>, %arg9: memref<1x48xf32, #tpu.memory_space<vmem>>, %arg10: memref<16x32xbf16, #tpu.memory_space<vmem>>, %arg11: memref<1x32xf32, #tpu.memory_space<vmem>>, %arg12: memref<1x32xf32, #tpu.memory_space<vmem>>, %arg13: memref<1x32xf32, #tpu.memory_space<vmem>>, %arg14: memref<64x96xbf16, #tpu.memory_space<vmem>>, %arg15: memref<1x96xf32, #tpu.memory_space<vmem>>, %arg16: memref<32x64xbf16, #tpu.memory_space<vmem>>, %arg17: memref<1x64xf32, #tpu.memory_space<vmem>>, %arg18: memref<1x64xf32, #tpu.memory_space<vmem>>, %arg19: memref<1x64xf32, #tpu.memory_space<vmem>>, %arg20: memref<3136x256xbf16, #tpu.memory_space<vmem>>, %arg21: memref<1x256xf32, #tpu.memory_space<vmem>>, %arg22: memref<256x110xbf16, #tpu.memory_space<vmem>>, %arg23: memref<1x110xf32, #tpu.memory_space<vmem>>, %arg24: memref<3x16xf32, #tpu.memory_space<vmem>>, %arg25: memref<1x16xf32, #tpu.memory_space<vmem>>, %arg26: memref<2x128xf32, #tpu.memory_space<vmem>>, %arg27: memref<16x128xf32, #tpu.memory_space<vmem>>, %arg28: memref<110x128xf32, #tpu.memory_space<vmem>>, %arg29: memref<1x128xf32, #tpu.memory_space<vmem>>, %arg30: memref<1x1x128xf32, #tpu.memory_space<vmem>>, %arg31: memref<1x3136xbf16, #tpu.memory_space<vmem>>) attributes {dimension_semantics = [#tpu.dimension_semantics<parallel>], iteration_bounds = array<i64: 2>, scalar_prefetch = 0 : i64, scratch_operands = 1 : i64, tpu.core_type = #tpu.core_type<tc>, window_params = [{transform_indices = @transform_0, window_bounds = array<i64: 1, 3, 49, 32>}, {transform_indices = @transform_1, window_bounds = array<i64: 1, 1, 3>}, {transform_indices = @transform_2, window_bounds = array<i64: 1, 1, 2>}, {pipeline_mode = #tpu.pipeline_mode<synchronous>, transform_indices = @transform_3, window_bounds = array<i64: 2, 49, 49>}, {pipeline_mode = #tpu.pipeline_mode<synchronous>, transform_indices = @transform_4, window_bounds = array<i64: 1, 49>}, {pipeline_mode = #tpu.pipeline_mode<synchronous>, transform_indices = @transform_5, window_bounds = array<i64: 32, 128>}, {pipeline_mode = #tpu.pipeline_mode<synchronous>, transform_indices = @transform_6, window_bounds = array<i64: 1, 128>}, {pipeline_mode = #tpu.pipeline_mode<synchronous>, transform_indices = @transform_7, window_bounds = array<i64: 32, 48>}, {pipeline_mode = #tpu.pipeline_mode<synchronous>, transform_indices = @transform_8, window_bounds = array<i64: 1, 48>}, {pipeline_mode = #tpu.pipeline_mode<synchronous>, transform_indices = @transform_9, window_bounds = array<i64: 16, 32>}, {pipeline_mode = #tpu.pipeline_mode<synchronous>, transform_indices = @transform_10, window_bounds = array<i64: 1, 32>}, {pipeline_mode = #tpu.pipeline_mode<synchronous>, transform_indices = @transform_11, window_bounds = array<i64: 1, 32>}, {pipeline_mode = #tpu.pipeline_mode<synchronous>, transform_indices = @transform_12, window_bounds = array<i64: 1, 32>}, {pipeline_mode = #tpu.pipeline_mode<synchronous>, transform_indices = @transform_13, window_bounds = array<i64: 64, 96>}, {pipeline_mode = #tpu.pipeline_mode<synchronous>, transform_indices = @transform_14, window_bounds = array<i64: 1, 96>}, {pipeline_mode = #tpu.pipeline_mode<synchronous>, transform_indices = @transform_15, window_bounds = array<i64: 32, 64>}, {pipeline_mode = #tpu.pipeline_mode<synchronous>, transform_indices = @transform_16, window_bounds = array<i64: 1, 64>}, {pipeline_mode = #tpu.pipeline_mode<synchronous>, transform_indices = @transform_17, window_bounds = array<i64: 1, 64>}, {pipeline_mode = #tpu.pipeline_mode<synchronous>, transform_indices = @transform_18, window_bounds = array<i64: 1, 64>}, {pipeline_mode = #tpu.pipeline_mode<synchronous>, transform_indices = @transform_19, window_bounds = array<i64: 3136, 256>}, {pipeline_mode = #tpu.pipeline_mode<synchronous>, transform_indices = @transform_20, window_bounds = array<i64: 1, 256>}, {pipeline_mode = #tpu.pipeline_mode<synchronous>, transform_indices = @transform_21, window_bounds = array<i64: 256, 110>}, {pipeline_mode = #tpu.pipeline_mode<synchronous>, transform_indices = @transform_22, window_bounds = array<i64: 1, 110>}, {pipeline_mode = #tpu.pipeline_mode<synchronous>, transform_indices = @transform_23, window_bounds = array<i64: 3, 16>}, {pipeline_mode = #tpu.pipeline_mode<synchronous>, transform_indices = @transform_24, window_bounds = array<i64: 1, 16>}, {pipeline_mode = #tpu.pipeline_mode<synchronous>, transform_indices = @transform_25, window_bounds = array<i64: 2, 128>}, {pipeline_mode = #tpu.pipeline_mode<synchronous>, transform_indices = @transform_26, window_bounds = array<i64: 16, 128>}, {pipeline_mode = #tpu.pipeline_mode<synchronous>, transform_indices = @transform_27, window_bounds = array<i64: 110, 128>}, {pipeline_mode = #tpu.pipeline_mode<synchronous>, transform_indices = @transform_28, window_bounds = array<i64: 1, 128>}, {transform_indices = @transform_29, window_bounds = array<i64: 1, 1, 128>}]} {
    %c0 = arith.constant 0 : index
    %c0_0 = arith.constant 0 : index
    %c0_1 = arith.constant 0 : index
    %0 = vector.load %arg4[%c0, %c0_0, %c0_1] : memref<2x49x49xf32, #tpu.memory_space<vmem>>, vector<1x49x49xf32>
    %1 = vector.shape_cast %0 : vector<1x49x49xf32> to vector<49x49xf32>
    %c1 = arith.constant 1 : index
    %c0_2 = arith.constant 0 : index
    %c0_3 = arith.constant 0 : index
    %2 = vector.load %arg4[%c1, %c0_2, %c0_3] : memref<2x49x49xf32, #tpu.memory_space<vmem>>, vector<1x49x49xf32>
    %3 = vector.shape_cast %2 : vector<1x49x49xf32> to vector<49x49xf32>
    %c0_4 = arith.constant 0 : index
    %c0_5 = arith.constant 0 : index
    %4 = vector.load %arg5[%c0_4, %c0_5] : memref<1x49xf32, #tpu.memory_space<vmem>>, vector<1x49xf32>
    %c0_6 = arith.constant 0 : index
    %c0_7 = arith.constant 0 : index
    %5 = vector.load %arg6[%c0_6, %c0_7] : memref<32x128xbf16, #tpu.memory_space<vmem>>, vector<32x128xbf16>
    %c0_8 = arith.constant 0 : index
    %c0_9 = arith.constant 0 : index
    %6 = vector.load %arg7[%c0_8, %c0_9] : memref<1x128xf32, #tpu.memory_space<vmem>>, vector<1x128xf32>
    %c0_10 = arith.constant 0 : index
    %c0_11 = arith.constant 0 : index
    %7 = vector.load %arg8[%c0_10, %c0_11] : memref<32x48xbf16, #tpu.memory_space<vmem>>, vector<32x48xbf16>
    %c0_12 = arith.constant 0 : index
    %c0_13 = arith.constant 0 : index
    %8 = vector.load %arg14[%c0_12, %c0_13] : memref<64x96xbf16, #tpu.memory_space<vmem>>, vector<64x96xbf16>
    %c0_14 = arith.constant 0 : index
    %c0_15 = arith.constant 0 : index
    %c0_16 = arith.constant 0 : index
    %c0_17 = arith.constant 0 : index
    %9 = vector.load %arg1[%c0_14, %c0_15, %c0_16, %c0_17] : memref<1x3x49x32xf32, #tpu.memory_space<vmem>>, vector<1x1x49x32xf32>
    %10 = vector.shape_cast %9 : vector<1x1x49x32xf32> to vector<49x32xf32>
    %c0_18 = arith.constant 0 : index
    %c1_19 = arith.constant 1 : index
    %c0_20 = arith.constant 0 : index
    %c0_21 = arith.constant 0 : index
    %11 = vector.load %arg1[%c0_18, %c1_19, %c0_20, %c0_21] : memref<1x3x49x32xf32, #tpu.memory_space<vmem>>, vector<1x1x49x32xf32>
    %12 = vector.shape_cast %11 : vector<1x1x49x32xf32> to vector<49x32xf32>
    %c0_22 = arith.constant 0 : index
    %c2 = arith.constant 2 : index
    %c0_23 = arith.constant 0 : index
    %c0_24 = arith.constant 0 : index
    %13 = vector.load %arg1[%c0_22, %c2, %c0_23, %c0_24] : memref<1x3x49x32xf32, #tpu.memory_space<vmem>>, vector<1x1x49x32xf32>
    %14 = vector.shape_cast %13 : vector<1x1x49x32xf32> to vector<49x32xf32>
    %cst = arith.constant dense<0.000000e+00> : vector<32xf32>
    %15 = vector.multi_reduction <add>, %14, %cst [0] : vector<49x32xf32> to vector<32xf32>
    %16 = vector.shape_cast %15 : vector<32xf32> to vector<1x32xf32>
    %cst_25 = arith.constant 4.900000e+01 : f32
    %17 = vector.broadcast %cst_25 : f32 to vector<1x32xf32>
    %18 = arith.divf %16, %17 : vector<1x32xf32>
    %19 = vector.broadcast %18 : vector<1x32xf32> to vector<49x32xf32>
    %20 = arith.subf %14, %19 : vector<49x32xf32>
    %21 = arith.mulf %20, %20 : vector<49x32xf32>
    %cst_26 = arith.constant dense<0.000000e+00> : vector<32xf32>
    %22 = vector.multi_reduction <add>, %21, %cst_26 [0] : vector<49x32xf32> to vector<32xf32>
    %23 = vector.shape_cast %22 : vector<32xf32> to vector<1x32xf32>
    %cst_27 = arith.constant 0.020833334 : f32
    %24 = vector.broadcast %cst_27 : f32 to vector<1x32xf32>
    %25 = arith.mulf %23, %24 : vector<1x32xf32>
    %cst_28 = arith.constant 9.99999974E-6 : f32
    %26 = vector.broadcast %cst_28 : f32 to vector<1x32xf32>
    %27 = arith.addf %25, %26 : vector<1x32xf32>
    %28 = math.rsqrt %27 : vector<1x32xf32>
    %29 = vector.broadcast %28 : vector<1x32xf32> to vector<49x32xf32>
    %30 = arith.mulf %20, %29 : vector<49x32xf32>
    %cst_29 = arith.constant dense<0.000000e+00> : vector<32xf32>
    %31 = vector.multi_reduction <add>, %12, %cst_29 [0] : vector<49x32xf32> to vector<32xf32>
    %32 = vector.shape_cast %31 : vector<32xf32> to vector<1x32xf32>
    %cst_30 = arith.constant 4.900000e+01 : f32
    %33 = vector.broadcast %cst_30 : f32 to vector<1x32xf32>
    %34 = arith.divf %32, %33 : vector<1x32xf32>
    %35 = vector.broadcast %34 : vector<1x32xf32> to vector<49x32xf32>
    %36 = arith.subf %12, %35 : vector<49x32xf32>
    %37 = arith.mulf %36, %36 : vector<49x32xf32>
    %cst_31 = arith.constant dense<0.000000e+00> : vector<32xf32>
    %38 = vector.multi_reduction <add>, %37, %cst_31 [0] : vector<49x32xf32> to vector<32xf32>
    %39 = vector.shape_cast %38 : vector<32xf32> to vector<1x32xf32>
    %cst_32 = arith.constant 0.020833334 : f32
    %40 = vector.broadcast %cst_32 : f32 to vector<1x32xf32>
    %41 = arith.mulf %39, %40 : vector<1x32xf32>
    %cst_33 = arith.constant 9.99999974E-6 : f32
    %42 = vector.broadcast %cst_33 : f32 to vector<1x32xf32>
    %43 = arith.addf %41, %42 : vector<1x32xf32>
    %44 = math.rsqrt %43 : vector<1x32xf32>
    %45 = vector.broadcast %44 : vector<1x32xf32> to vector<49x32xf32>
    %46 = arith.mulf %36, %45 : vector<49x32xf32>
    %47 = vector.extract_strided_slice %5 {offsets = [0, 0], sizes = [32, 32], strides = [1, 1]} : vector<32x128xbf16> to vector<32x32xbf16>
    %48 = arith.truncf %30 : vector<49x32xf32> to vector<49x32xbf16>
    %cst_34 = arith.constant dense<0.000000e+00> : vector<49x32xf32>
    %49 = tpu.matmul %48, %47, %cst_34 {dimension_numbers = #tpu.dot_dimension_numbers<[1], [0], [0], [1], [0, 0, 1, 1], [], []>} : vector<49x32xbf16>, vector<32x32xbf16>, vector<49x32xf32> -> vector<49x32xf32>
    %50 = vector.extract_strided_slice %6 {offsets = [0, 0], sizes = [1, 32], strides = [1, 1]} : vector<1x128xf32> to vector<1x32xf32>
    %51 = vector.broadcast %50 : vector<1x32xf32> to vector<49x32xf32>
    %52 = arith.addf %49, %51 : vector<49x32xf32>
    %53 = vector.extract_strided_slice %5 {offsets = [0, 32], sizes = [32, 32], strides = [1, 1]} : vector<32x128xbf16> to vector<32x32xbf16>
    %54 = arith.truncf %46 : vector<49x32xf32> to vector<49x32xbf16>
    %cst_35 = arith.constant dense<0.000000e+00> : vector<49x32xf32>
    %55 = tpu.matmul %54, %53, %cst_35 {dimension_numbers = #tpu.dot_dimension_numbers<[1], [0], [0], [1], [0, 0, 1, 1], [], []>} : vector<49x32xbf16>, vector<32x32xbf16>, vector<49x32xf32> -> vector<49x32xf32>
    %56 = vector.extract_strided_slice %6 {offsets = [0, 32], sizes = [1, 32], strides = [1, 1]} : vector<1x128xf32> to vector<1x32xf32>
    %57 = vector.broadcast %56 : vector<1x32xf32> to vector<49x32xf32>
    %58 = arith.addf %55, %57 : vector<49x32xf32>
    %59 = vector.extract_strided_slice %5 {offsets = [0, 64], sizes = [32, 32], strides = [1, 1]} : vector<32x128xbf16> to vector<32x32xbf16>
    %60 = arith.truncf %12 : vector<49x32xf32> to vector<49x32xbf16>
    %cst_36 = arith.constant dense<0.000000e+00> : vector<49x32xf32>
    %61 = tpu.matmul %60, %59, %cst_36 {dimension_numbers = #tpu.dot_dimension_numbers<[1], [0], [0], [1], [0, 0, 1, 1], [], []>} : vector<49x32xbf16>, vector<32x32xbf16>, vector<49x32xf32> -> vector<49x32xf32>
    %62 = vector.extract_strided_slice %6 {offsets = [0, 64], sizes = [1, 32], strides = [1, 1]} : vector<1x128xf32> to vector<1x32xf32>
    %63 = vector.broadcast %62 : vector<1x32xf32> to vector<49x32xf32>
    %64 = arith.addf %61, %63 : vector<49x32xf32>
    %65 = arith.truncf %52 : vector<49x32xf32> to vector<49x32xbf16>
    %66 = arith.truncf %58 : vector<49x32xf32> to vector<49x32xbf16>
    %cst_37 = arith.constant dense<0.000000e+00> : vector<49x49xf32>
    %67 = tpu.matmul %65, %66, %cst_37 {dimension_numbers = #tpu.dot_dimension_numbers<[1], [1], [0], [0], [0, 0, 1, 0], [], []>} : vector<49x32xbf16>, vector<49x32xbf16>, vector<49x49xf32> -> vector<49x49xf32>
    %cst_38 = arith.constant dense<0xFF800000> : vector<49xf32>
    %68 = vector.multi_reduction <maximumf>, %67, %cst_38 [1] : vector<49x49xf32> to vector<49xf32>
    %69 = vector.shape_cast %68 : vector<49xf32> to vector<49x1xf32>
    %70 = vector.broadcast %69 : vector<49x1xf32> to vector<49x49xf32>
    %71 = arith.subf %67, %70 : vector<49x49xf32>
    %72 = math.exp %71 : vector<49x49xf32>
    %cst_39 = arith.constant dense<0.000000e+00> : vector<49xf32>
    %73 = vector.multi_reduction <add>, %72, %cst_39 [1] : vector<49x49xf32> to vector<49xf32>
    %74 = vector.shape_cast %73 : vector<49xf32> to vector<49x1xf32>
    %75 = tpu.reciprocal %74 {approx = true} : vector<49x1xf32> -> vector<49x1xf32>
    %76 = vector.broadcast %75 : vector<49x1xf32> to vector<49x49xf32>
    %77 = arith.mulf %72, %76 : vector<49x49xf32>
    %78 = arith.truncf %77 : vector<49x49xf32> to vector<49x49xbf16>
    %79 = arith.truncf %64 : vector<49x32xf32> to vector<49x32xbf16>
    %cst_40 = arith.constant dense<0.000000e+00> : vector<49x32xf32>
    %80 = tpu.matmul %78, %79, %cst_40 {dimension_numbers = #tpu.dot_dimension_numbers<[1], [0], [0], [1], [0, 0, 1, 1], [], []>} : vector<49x49xbf16>, vector<49x32xbf16>, vector<49x32xf32> -> vector<49x32xf32>
    %81 = vector.extract_strided_slice %5 {offsets = [0, 96], sizes = [32, 32], strides = [1, 1]} : vector<32x128xbf16> to vector<32x32xbf16>
    %82 = arith.truncf %80 : vector<49x32xf32> to vector<49x32xbf16>
    %cst_41 = arith.constant dense<0.000000e+00> : vector<49x32xf32>
    %83 = tpu.matmul %82, %81, %cst_41 {dimension_numbers = #tpu.dot_dimension_numbers<[1], [0], [0], [1], [0, 0, 1, 1], [], []>} : vector<49x32xbf16>, vector<32x32xbf16>, vector<49x32xf32> -> vector<49x32xf32>
    %84 = vector.extract_strided_slice %6 {offsets = [0, 96], sizes = [1, 32], strides = [1, 1]} : vector<1x128xf32> to vector<1x32xf32>
    %85 = vector.broadcast %84 : vector<1x32xf32> to vector<49x32xf32>
    %86 = arith.addf %83, %85 : vector<49x32xf32>
    %87 = arith.addf %86, %14 : vector<49x32xf32>
    %cst_42 = arith.constant 0.000000e+00 : f32
    %88 = vector.broadcast %cst_42 : f32 to vector<49x32xf32>
    %89 = arith.maximumf %87, %88 : vector<49x32xf32>
    %90 = arith.truncf %89 : vector<49x32xf32> to vector<49x32xbf16>
    %cst_43 = arith.constant dense<0.000000e+00> : vector<49x48xf32>
    %91 = tpu.matmul %90, %7, %cst_43 {dimension_numbers = #tpu.dot_dimension_numbers<[1], [0], [0], [1], [0, 0, 1, 1], [], []>} : vector<49x32xbf16>, vector<32x48xbf16>, vector<49x48xf32> -> vector<49x48xf32>
    %c0_44 = arith.constant 0 : index
    %c0_45 = arith.constant 0 : index
    %92 = vector.load %arg9[%c0_44, %c0_45] : memref<1x48xf32, #tpu.memory_space<vmem>>, vector<1x48xf32>
    %93 = vector.broadcast %92 : vector<1x48xf32> to vector<49x48xf32>
    %94 = arith.addf %91, %93 : vector<49x48xf32>
    %c0_46 = arith.constant 0 : index
    %c0_47 = arith.constant 0 : index
    %95 = vector.load %arg10[%c0_46, %c0_47] : memref<16x32xbf16, #tpu.memory_space<vmem>>, vector<16x32xbf16>
    %c0_48 = arith.constant 0 : index
    %c0_49 = arith.constant 0 : index
    %96 = vector.load %arg11[%c0_48, %c0_49] : memref<1x32xf32, #tpu.memory_space<vmem>>, vector<1x32xf32>
    %c0_50 = arith.constant 0 : index
    %c0_51 = arith.constant 0 : index
    %97 = vector.load %arg12[%c0_50, %c0_51] : memref<1x32xf32, #tpu.memory_space<vmem>>, vector<1x32xf32>
    %c0_52 = arith.constant 0 : index
    %c0_53 = arith.constant 0 : index
    %98 = vector.load %arg13[%c0_52, %c0_53] : memref<1x32xf32, #tpu.memory_space<vmem>>, vector<1x32xf32>
    %99 = vector.extract_strided_slice %94 {offsets = [0, 0], sizes = [49, 32], strides = [1, 1]} : vector<49x48xf32> to vector<49x32xf32>
    %100 = vector.extract_strided_slice %94 {offsets = [0, 32], sizes = [49, 16], strides = [1, 1]} : vector<49x48xf32> to vector<49x16xf32>
    %cst_54 = arith.constant dense<0.000000e+00> : vector<49x32xf32>
    %101 = tpu.matmul %1, %99, %cst_54 {dimension_numbers = #tpu.dot_dimension_numbers<[1], [0], [0], [1], [0, 0, 1, 1], [], []>} : vector<49x49xf32>, vector<49x32xf32>, vector<49x32xf32> -> vector<49x32xf32>
    %102 = arith.maximumf %99, %101 : vector<49x32xf32>
    %cst_55 = arith.constant dense<0.000000e+00> : vector<49x32xf32>
    %103 = tpu.matmul %3, %102, %cst_55 {dimension_numbers = #tpu.dot_dimension_numbers<[1], [0], [0], [1], [0, 0, 1, 1], [], []>} : vector<49x49xf32>, vector<49x32xf32>, vector<49x32xf32> -> vector<49x32xf32>
    %104 = arith.maximumf %102, %103 : vector<49x32xf32>
    %105 = vector.extract_strided_slice %104 {offsets = [0, 0], sizes = [49, 16], strides = [1, 1]} : vector<49x32xf32> to vector<49x16xf32>
    %106 = vector.extract_strided_slice %104 {offsets = [0, 16], sizes = [49, 16], strides = [1, 1]} : vector<49x32xf32> to vector<49x16xf32>
    %107 = arith.truncf %100 : vector<49x16xf32> to vector<49x16xbf16>
    %108 = arith.truncf %106 : vector<49x16xf32> to vector<49x16xbf16>
    %cst_56 = arith.constant dense<0.000000e+00> : vector<49x49xf32>
    %109 = tpu.matmul %107, %108, %cst_56 {dimension_numbers = #tpu.dot_dimension_numbers<[1], [1], [0], [0], [0, 0, 1, 0], [], []>} : vector<49x16xbf16>, vector<49x16xbf16>, vector<49x49xf32> -> vector<49x49xf32>
    %110 = vector.broadcast %4 : vector<1x49xf32> to vector<49x49xf32>
    %111 = arith.addf %109, %110 : vector<49x49xf32>
    %cst_57 = arith.constant dense<0xFF800000> : vector<49xf32>
    %112 = vector.multi_reduction <maximumf>, %111, %cst_57 [1] : vector<49x49xf32> to vector<49xf32>
    %113 = vector.shape_cast %112 : vector<49xf32> to vector<49x1xf32>
    %114 = vector.broadcast %113 : vector<49x1xf32> to vector<49x49xf32>
    %115 = arith.subf %111, %114 : vector<49x49xf32>
    %116 = math.exp %115 : vector<49x49xf32>
    %cst_58 = arith.constant dense<0.000000e+00> : vector<49xf32>
    %117 = vector.multi_reduction <add>, %116, %cst_58 [1] : vector<49x49xf32> to vector<49xf32>
    %118 = vector.shape_cast %117 : vector<49xf32> to vector<49x1xf32>
    %119 = tpu.reciprocal %118 {approx = true} : vector<49x1xf32> -> vector<49x1xf32>
    %120 = vector.broadcast %119 : vector<49x1xf32> to vector<49x49xf32>
    %121 = arith.mulf %116, %120 : vector<49x49xf32>
    %122 = arith.truncf %121 : vector<49x49xf32> to vector<49x49xbf16>
    %123 = arith.truncf %105 : vector<49x16xf32> to vector<49x16xbf16>
    %cst_59 = arith.constant dense<0.000000e+00> : vector<49x16xf32>
    %124 = tpu.matmul %122, %123, %cst_59 {dimension_numbers = #tpu.dot_dimension_numbers<[1], [0], [0], [1], [0, 0, 1, 1], [], []>} : vector<49x49xbf16>, vector<49x16xbf16>, vector<49x16xf32> -> vector<49x16xf32>
    %125 = arith.truncf %124 : vector<49x16xf32> to vector<49x16xbf16>
    %cst_60 = arith.constant dense<0.000000e+00> : vector<49x32xf32>
    %126 = tpu.matmul %125, %95, %cst_60 {dimension_numbers = #tpu.dot_dimension_numbers<[1], [0], [0], [1], [0, 0, 1, 1], [], []>} : vector<49x16xbf16>, vector<16x32xbf16>, vector<49x32xf32> -> vector<49x32xf32>
    %127 = vector.broadcast %96 : vector<1x32xf32> to vector<49x32xf32>
    %128 = arith.addf %126, %127 : vector<49x32xf32>
    %cst_61 = arith.constant dense<0.000000e+00> : vector<32xf32>
    %129 = vector.multi_reduction <add>, %128, %cst_61 [0] : vector<49x32xf32> to vector<32xf32>
    %130 = vector.shape_cast %129 : vector<32xf32> to vector<1x32xf32>
    %cst_62 = arith.constant 4.900000e+01 : f32
    %131 = vector.broadcast %cst_62 : f32 to vector<1x32xf32>
    %132 = arith.divf %130, %131 : vector<1x32xf32>
    %133 = vector.broadcast %132 : vector<1x32xf32> to vector<49x32xf32>
    %134 = arith.subf %128, %133 : vector<49x32xf32>
    %135 = vector.broadcast %132 : vector<1x32xf32> to vector<49x32xf32>
    %136 = arith.subf %128, %135 : vector<49x32xf32>
    %137 = arith.mulf %134, %136 : vector<49x32xf32>
    %cst_63 = arith.constant dense<0.000000e+00> : vector<32xf32>
    %138 = vector.multi_reduction <add>, %137, %cst_63 [0] : vector<49x32xf32> to vector<32xf32>
    %139 = vector.shape_cast %138 : vector<32xf32> to vector<1x32xf32>
    %cst_64 = arith.constant 4.900000e+01 : f32
    %140 = vector.broadcast %cst_64 : f32 to vector<1x32xf32>
    %141 = arith.divf %139, %140 : vector<1x32xf32>
    %142 = vector.broadcast %132 : vector<1x32xf32> to vector<49x32xf32>
    %143 = arith.subf %128, %142 : vector<49x32xf32>
    %cst_65 = arith.constant 9.99999974E-6 : f32
    %144 = vector.broadcast %cst_65 : f32 to vector<1x32xf32>
    %145 = arith.addf %141, %144 : vector<1x32xf32>
    %146 = math.rsqrt %145 : vector<1x32xf32>
    %147 = vector.broadcast %146 : vector<1x32xf32> to vector<49x32xf32>
    %148 = arith.mulf %143, %147 : vector<49x32xf32>
    %149 = vector.broadcast %97 : vector<1x32xf32> to vector<49x32xf32>
    %150 = arith.mulf %149, %148 : vector<49x32xf32>
    %151 = vector.broadcast %98 : vector<1x32xf32> to vector<49x32xf32>
    %152 = arith.addf %150, %151 : vector<49x32xf32>
    %153 = arith.addf %89, %152 : vector<49x32xf32>
    %154 = vector.extract_strided_slice %8 {offsets = [0, 0], sizes = [32, 96], strides = [1, 1]} : vector<64x96xbf16> to vector<32x96xbf16>
    %155 = arith.truncf %153 : vector<49x32xf32> to vector<49x32xbf16>
    %cst_66 = arith.constant dense<0.000000e+00> : vector<49x96xf32>
    %156 = tpu.matmul %155, %154, %cst_66 {dimension_numbers = #tpu.dot_dimension_numbers<[1], [0], [0], [1], [0, 0, 1, 1], [], []>} : vector<49x32xbf16>, vector<32x96xbf16>, vector<49x96xf32> -> vector<49x96xf32>
    %157 = vector.extract_strided_slice %8 {offsets = [32, 0], sizes = [32, 96], strides = [1, 1]} : vector<64x96xbf16> to vector<32x96xbf16>
    %158 = arith.truncf %10 : vector<49x32xf32> to vector<49x32xbf16>
    %cst_67 = arith.constant dense<0.000000e+00> : vector<49x96xf32>
    %159 = tpu.matmul %158, %157, %cst_67 {dimension_numbers = #tpu.dot_dimension_numbers<[1], [0], [0], [1], [0, 0, 1, 1], [], []>} : vector<49x32xbf16>, vector<32x96xbf16>, vector<49x96xf32> -> vector<49x96xf32>
    %160 = arith.addf %156, %159 : vector<49x96xf32>
    %c0_68 = arith.constant 0 : index
    %c0_69 = arith.constant 0 : index
    %161 = vector.load %arg15[%c0_68, %c0_69] : memref<1x96xf32, #tpu.memory_space<vmem>>, vector<1x96xf32>
    %162 = vector.broadcast %161 : vector<1x96xf32> to vector<49x96xf32>
    %163 = arith.addf %160, %162 : vector<49x96xf32>
    %c0_70 = arith.constant 0 : index
    %c0_71 = arith.constant 0 : index
    %164 = vector.load %arg16[%c0_70, %c0_71] : memref<32x64xbf16, #tpu.memory_space<vmem>>, vector<32x64xbf16>
    %c0_72 = arith.constant 0 : index
    %c0_73 = arith.constant 0 : index
    %165 = vector.load %arg17[%c0_72, %c0_73] : memref<1x64xf32, #tpu.memory_space<vmem>>, vector<1x64xf32>
    %c0_74 = arith.constant 0 : index
    %c0_75 = arith.constant 0 : index
    %166 = vector.load %arg18[%c0_74, %c0_75] : memref<1x64xf32, #tpu.memory_space<vmem>>, vector<1x64xf32>
    %c0_76 = arith.constant 0 : index
    %c0_77 = arith.constant 0 : index
    %167 = vector.load %arg19[%c0_76, %c0_77] : memref<1x64xf32, #tpu.memory_space<vmem>>, vector<1x64xf32>
    %168 = vector.extract_strided_slice %163 {offsets = [0, 0], sizes = [49, 64], strides = [1, 1]} : vector<49x96xf32> to vector<49x64xf32>
    %169 = vector.extract_strided_slice %163 {offsets = [0, 64], sizes = [49, 32], strides = [1, 1]} : vector<49x96xf32> to vector<49x32xf32>
    %cst_78 = arith.constant dense<0.000000e+00> : vector<49x64xf32>
    %170 = tpu.matmul %1, %168, %cst_78 {dimension_numbers = #tpu.dot_dimension_numbers<[1], [0], [0], [1], [0, 0, 1, 1], [], []>} : vector<49x49xf32>, vector<49x64xf32>, vector<49x64xf32> -> vector<49x64xf32>
    %171 = arith.maximumf %168, %170 : vector<49x64xf32>
    %cst_79 = arith.constant dense<0.000000e+00> : vector<49x64xf32>
    %172 = tpu.matmul %3, %171, %cst_79 {dimension_numbers = #tpu.dot_dimension_numbers<[1], [0], [0], [1], [0, 0, 1, 1], [], []>} : vector<49x49xf32>, vector<49x64xf32>, vector<49x64xf32> -> vector<49x64xf32>
    %173 = arith.maximumf %171, %172 : vector<49x64xf32>
    %174 = vector.extract_strided_slice %173 {offsets = [0, 0], sizes = [49, 32], strides = [1, 1]} : vector<49x64xf32> to vector<49x32xf32>
    %175 = vector.extract_strided_slice %173 {offsets = [0, 32], sizes = [49, 32], strides = [1, 1]} : vector<49x64xf32> to vector<49x32xf32>
    %176 = arith.truncf %169 : vector<49x32xf32> to vector<49x32xbf16>
    %177 = arith.truncf %175 : vector<49x32xf32> to vector<49x32xbf16>
    %cst_80 = arith.constant dense<0.000000e+00> : vector<49x49xf32>
    %178 = tpu.matmul %176, %177, %cst_80 {dimension_numbers = #tpu.dot_dimension_numbers<[1], [1], [0], [0], [0, 0, 1, 0], [], []>} : vector<49x32xbf16>, vector<49x32xbf16>, vector<49x49xf32> -> vector<49x49xf32>
    %179 = vector.broadcast %4 : vector<1x49xf32> to vector<49x49xf32>
    %180 = arith.addf %178, %179 : vector<49x49xf32>
    %cst_81 = arith.constant dense<0xFF800000> : vector<49xf32>
    %181 = vector.multi_reduction <maximumf>, %180, %cst_81 [1] : vector<49x49xf32> to vector<49xf32>
    %182 = vector.shape_cast %181 : vector<49xf32> to vector<49x1xf32>
    %183 = vector.broadcast %182 : vector<49x1xf32> to vector<49x49xf32>
    %184 = arith.subf %180, %183 : vector<49x49xf32>
    %185 = math.exp %184 : vector<49x49xf32>
    %cst_82 = arith.constant dense<0.000000e+00> : vector<49xf32>
    %186 = vector.multi_reduction <add>, %185, %cst_82 [1] : vector<49x49xf32> to vector<49xf32>
    %187 = vector.shape_cast %186 : vector<49xf32> to vector<49x1xf32>
    %188 = tpu.reciprocal %187 {approx = true} : vector<49x1xf32> -> vector<49x1xf32>
    %189 = vector.broadcast %188 : vector<49x1xf32> to vector<49x49xf32>
    %190 = arith.mulf %185, %189 : vector<49x49xf32>
    %191 = arith.truncf %190 : vector<49x49xf32> to vector<49x49xbf16>
    %192 = arith.truncf %174 : vector<49x32xf32> to vector<49x32xbf16>
    %cst_83 = arith.constant dense<0.000000e+00> : vector<49x32xf32>
    %193 = tpu.matmul %191, %192, %cst_83 {dimension_numbers = #tpu.dot_dimension_numbers<[1], [0], [0], [1], [0, 0, 1, 1], [], []>} : vector<49x49xbf16>, vector<49x32xbf16>, vector<49x32xf32> -> vector<49x32xf32>
    %194 = arith.truncf %193 : vector<49x32xf32> to vector<49x32xbf16>
    %cst_84 = arith.constant dense<0.000000e+00> : vector<49x64xf32>
    %195 = tpu.matmul %194, %164, %cst_84 {dimension_numbers = #tpu.dot_dimension_numbers<[1], [0], [0], [1], [0, 0, 1, 1], [], []>} : vector<49x32xbf16>, vector<32x64xbf16>, vector<49x64xf32> -> vector<49x64xf32>
    %196 = vector.broadcast %165 : vector<1x64xf32> to vector<49x64xf32>
    %197 = arith.addf %195, %196 : vector<49x64xf32>
    %cst_85 = arith.constant dense<0.000000e+00> : vector<64xf32>
    %198 = vector.multi_reduction <add>, %197, %cst_85 [0] : vector<49x64xf32> to vector<64xf32>
    %199 = vector.shape_cast %198 : vector<64xf32> to vector<1x64xf32>
    %cst_86 = arith.constant 4.900000e+01 : f32
    %200 = vector.broadcast %cst_86 : f32 to vector<1x64xf32>
    %201 = arith.divf %199, %200 : vector<1x64xf32>
    %202 = vector.broadcast %201 : vector<1x64xf32> to vector<49x64xf32>
    %203 = arith.subf %197, %202 : vector<49x64xf32>
    %204 = vector.broadcast %201 : vector<1x64xf32> to vector<49x64xf32>
    %205 = arith.subf %197, %204 : vector<49x64xf32>
    %206 = arith.mulf %203, %205 : vector<49x64xf32>
    %cst_87 = arith.constant dense<0.000000e+00> : vector<64xf32>
    %207 = vector.multi_reduction <add>, %206, %cst_87 [0] : vector<49x64xf32> to vector<64xf32>
    %208 = vector.shape_cast %207 : vector<64xf32> to vector<1x64xf32>
    %cst_88 = arith.constant 4.900000e+01 : f32
    %209 = vector.broadcast %cst_88 : f32 to vector<1x64xf32>
    %210 = arith.divf %208, %209 : vector<1x64xf32>
    %211 = vector.broadcast %201 : vector<1x64xf32> to vector<49x64xf32>
    %212 = arith.subf %197, %211 : vector<49x64xf32>
    %cst_89 = arith.constant 9.99999974E-6 : f32
    %213 = vector.broadcast %cst_89 : f32 to vector<1x64xf32>
    %214 = arith.addf %210, %213 : vector<1x64xf32>
    %215 = math.rsqrt %214 : vector<1x64xf32>
    %216 = vector.broadcast %215 : vector<1x64xf32> to vector<49x64xf32>
    %217 = arith.mulf %212, %216 : vector<49x64xf32>
    %218 = vector.broadcast %166 : vector<1x64xf32> to vector<49x64xf32>
    %219 = arith.mulf %218, %217 : vector<49x64xf32>
    %220 = vector.broadcast %167 : vector<1x64xf32> to vector<49x64xf32>
    %221 = arith.addf %219, %220 : vector<49x64xf32>
    %222 = vector.extract_strided_slice %221 {offsets = [0, 0], sizes = [49, 32], strides = [1, 1]} : vector<49x64xf32> to vector<49x32xf32>
    %223 = arith.addf %222, %153 : vector<49x32xf32>
    %224 = vector.extract_strided_slice %221 {offsets = [0, 32], sizes = [49, 32], strides = [1, 1]} : vector<49x64xf32> to vector<49x32xf32>
    %225 = arith.addf %224, %10 : vector<49x32xf32>
    %226 = vector.extract_strided_slice %223 {offsets = [0, 0], sizes = [1, 32], strides = [1, 1]} : vector<49x32xf32> to vector<1x32xf32>
    %227 = arith.truncf %226 : vector<1x32xf32> to vector<1x32xbf16>
    %c0_90 = arith.constant 0 : index
    %c0_91 = arith.constant 0 : index
    %228 = vector.load %arg31[%c0_90, %c0_91] : memref<1x3136xbf16, #tpu.memory_space<vmem>>, vector<1x32xbf16>
    tpu.vector_store %arg31[%c0_90, %c0_91], %227 {strides = array<i32>} : memref<1x3136xbf16, #tpu.memory_space<vmem>>, vector<1x32xbf16>,
    %229 = vector.extract_strided_slice %225 {offsets = [0, 0], sizes = [1, 32], strides = [1, 1]} : vector<49x32xf32> to vector<1x32xf32>
    %230 = arith.truncf %229 : vector<1x32xf32> to vector<1x32xbf16>
    %c0_92 = arith.constant 0 : index
    %c32 = arith.constant 32 : index
    %231 = vector.load %arg31[%c0_92, %c32] : memref<1x3136xbf16, #tpu.memory_space<vmem>>, vector<1x32xbf16>
    tpu.vector_store %arg31[%c0_92, %c32], %230 {strides = array<i32>} : memref<1x3136xbf16, #tpu.memory_space<vmem>>, vector<1x32xbf16>,
    %232 = vector.extract_strided_slice %223 {offsets = [1, 0], sizes = [1, 32], strides = [1, 1]} : vector<49x32xf32> to vector<1x32xf32>
    %233 = arith.truncf %232 : vector<1x32xf32> to vector<1x32xbf16>
    %c0_93 = arith.constant 0 : index
    %c64 = arith.constant 64 : index
    %234 = vector.load %arg31[%c0_93, %c64] : memref<1x3136xbf16, #tpu.memory_space<vmem>>, vector<1x32xbf16>
    tpu.vector_store %arg31[%c0_93, %c64], %233 {strides = array<i32>} : memref<1x3136xbf16, #tpu.memory_space<vmem>>, vector<1x32xbf16>,
    %235 = vector.extract_strided_slice %225 {offsets = [1, 0], sizes = [1, 32], strides = [1, 1]} : vector<49x32xf32> to vector<1x32xf32>
    %236 = arith.truncf %235 : vector<1x32xf32> to vector<1x32xbf16>
    %c0_94 = arith.constant 0 : index
    %c96 = arith.constant 96 : index
    %237 = vector.load %arg31[%c0_94, %c96] : memref<1x3136xbf16, #tpu.memory_space<vmem>>, vector<1x32xbf16>
    tpu.vector_store %arg31[%c0_94, %c96], %236 {strides = array<i32>} : memref<1x3136xbf16, #tpu.memory_space<vmem>>, vector<1x32xbf16>,
    %238 = vector.extract_strided_slice %223 {offsets = [2, 0], sizes = [1, 32], strides = [1, 1]} : vector<49x32xf32> to vector<1x32xf32>
    %239 = arith.truncf %238 : vector<1x32xf32> to vector<1x32xbf16>
    %c0_95 = arith.constant 0 : index
    %c128 = arith.constant 128 : index
    %240 = vector.load %arg31[%c0_95, %c128] : memref<1x3136xbf16, #tpu.memory_space<vmem>>, vector<1x32xbf16>
    tpu.vector_store %arg31[%c0_95, %c128], %239 {strides = array<i32>} : memref<1x3136xbf16, #tpu.memory_space<vmem>>, vector<1x32xbf16>,
    %241 = vector.extract_strided_slice %225 {offsets = [2, 0], sizes = [1, 32], strides = [1, 1]} : vector<49x32xf32> to vector<1x32xf32>
    %242 = arith.truncf %241 : vector<1x32xf32> to vector<1x32xbf16>
    %c0_96 = arith.constant 0 : index
    %c160 = arith.constant 160 : index
    %243 = vector.load %arg31[%c0_96, %c160] : memref<1x3136xbf16, #tpu.memory_space<vmem>>, vector<1x32xbf16>
    tpu.vector_store %arg31[%c0_96, %c160], %242 {strides = array<i32>} : memref<1x3136xbf16, #tpu.memory_space<vmem>>, vector<1x32xbf16>,
    %244 = vector.extract_strided_slice %223 {offsets = [3, 0], sizes = [1, 32], strides = [1, 1]} : vector<49x32xf32> to vector<1x32xf32>
    %245 = arith.truncf %244 : vector<1x32xf32> to vector<1x32xbf16>
    %c0_97 = arith.constant 0 : index
    %c192 = arith.constant 192 : index
    %246 = vector.load %arg31[%c0_97, %c192] : memref<1x3136xbf16, #tpu.memory_space<vmem>>, vector<1x32xbf16>
    tpu.vector_store %arg31[%c0_97, %c192], %245 {strides = array<i32>} : memref<1x3136xbf16, #tpu.memory_space<vmem>>, vector<1x32xbf16>,
    %247 = vector.extract_strided_slice %225 {offsets = [3, 0], sizes = [1, 32], strides = [1, 1]} : vector<49x32xf32> to vector<1x32xf32>
    %248 = arith.truncf %247 : vector<1x32xf32> to vector<1x32xbf16>
    %c0_98 = arith.constant 0 : index
    %c224 = arith.constant 224 : index
    %249 = vector.load %arg31[%c0_98, %c224] : memref<1x3136xbf16, #tpu.memory_space<vmem>>, vector<1x32xbf16>
    tpu.vector_store %arg31[%c0_98, %c224], %248 {strides = array<i32>} : memref<1x3136xbf16, #tpu.memory_space<vmem>>, vector<1x32xbf16>,
    %250 = vector.extract_strided_slice %223 {offsets = [4, 0], sizes = [1, 32], strides = [1, 1]} : vector<49x32xf32> to vector<1x32xf32>
    %251 = arith.truncf %250 : vector<1x32xf32> to vector<1x32xbf16>
    %c0_99 = arith.constant 0 : index
    %c256 = arith.constant 256 : index
    %252 = vector.load %arg31[%c0_99, %c256] : memref<1x3136xbf16, #tpu.memory_space<vmem>>, vector<1x32xbf16>
    tpu.vector_store %arg31[%c0_99, %c256], %251 {strides = array<i32>} : memref<1x3136xbf16, #tpu.memory_space<vmem>>, vector<1x32xbf16>,
    %253 = vector.extract_strided_slice %225 {offsets = [4, 0], sizes = [1, 32], strides = [1, 1]} : vector<49x32xf32> to vector<1x32xf32>
    %254 = arith.truncf %253 : vector<1x32xf32> to vector<1x32xbf16>
    %c0_100 = arith.constant 0 : index
    %c288 = arith.constant 288 : index
    %255 = vector.load %arg31[%c0_100, %c288] : memref<1x3136xbf16, #tpu.memory_space<vmem>>, vector<1x32xbf16>
    tpu.vector_store %arg31[%c0_100, %c288], %254 {strides = array<i32>} : memref<1x3136xbf16, #tpu.memory_space<vmem>>, vector<1x32xbf16>,
    %256 = vector.extract_strided_slice %223 {offsets = [5, 0], sizes = [1, 32], strides = [1, 1]} : vector<49x32xf32> to vector<1x32xf32>
    %257 = arith.truncf %256 : vector<1x32xf32> to vector<1x32xbf16>
    %c0_101 = arith.constant 0 : index
    %c320 = arith.constant 320 : index
    %258 = vector.load %arg31[%c0_101, %c320] : memref<1x3136xbf16, #tpu.memory_space<vmem>>, vector<1x32xbf16>
    tpu.vector_store %arg31[%c0_101, %c320], %257 {strides = array<i32>} : memref<1x3136xbf16, #tpu.memory_space<vmem>>, vector<1x32xbf16>,
    %259 = vector.extract_strided_slice %225 {offsets = [5, 0], sizes = [1, 32], strides = [1, 1]} : vector<49x32xf32> to vector<1x32xf32>
    %260 = arith.truncf %259 : vector<1x32xf32> to vector<1x32xbf16>
    %c0_102 = arith.constant 0 : index
    %c352 = arith.constant 352 : index
    %261 = vector.load %arg31[%c0_102, %c352] : memref<1x3136xbf16, #tpu.memory_space<vmem>>, vector<1x32xbf16>
    tpu.vector_store %arg31[%c0_102, %c352], %260 {strides = array<i32>} : memref<1x3136xbf16, #tpu.memory_space<vmem>>, vector<1x32xbf16>,
    %262 = vector.extract_strided_slice %223 {offsets = [6, 0], sizes = [1, 32], strides = [1, 1]} : vector<49x32xf32> to vector<1x32xf32>
    %263 = arith.truncf %262 : vector<1x32xf32> to vector<1x32xbf16>
    %c0_103 = arith.constant 0 : index
    %c384 = arith.constant 384 : index
    %264 = vector.load %arg31[%c0_103, %c384] : memref<1x3136xbf16, #tpu.memory_space<vmem>>, vector<1x32xbf16>
    tpu.vector_store %arg31[%c0_103, %c384], %263 {strides = array<i32>} : memref<1x3136xbf16, #tpu.memory_space<vmem>>, vector<1x32xbf16>,
    %265 = vector.extract_strided_slice %225 {offsets = [6, 0], sizes = [1, 32], strides = [1, 1]} : vector<49x32xf32> to vector<1x32xf32>
    %266 = arith.truncf %265 : vector<1x32xf32> to vector<1x32xbf16>
    %c0_104 = arith.constant 0 : index
    %c416 = arith.constant 416 : index
    %267 = vector.load %arg31[%c0_104, %c416] : memref<1x3136xbf16, #tpu.memory_space<vmem>>, vector<1x32xbf16>
    tpu.vector_store %arg31[%c0_104, %c416], %266 {strides = array<i32>} : memref<1x3136xbf16, #tpu.memory_space<vmem>>, vector<1x32xbf16>,
    %268 = vector.extract_strided_slice %223 {offsets = [7, 0], sizes = [1, 32], strides = [1, 1]} : vector<49x32xf32> to vector<1x32xf32>
    %269 = arith.truncf %268 : vector<1x32xf32> to vector<1x32xbf16>
    %c0_105 = arith.constant 0 : index
    %c448 = arith.constant 448 : index
    %270 = vector.load %arg31[%c0_105, %c448] : memref<1x3136xbf16, #tpu.memory_space<vmem>>, vector<1x32xbf16>
    tpu.vector_store %arg31[%c0_105, %c448], %269 {strides = array<i32>} : memref<1x3136xbf16, #tpu.memory_space<vmem>>, vector<1x32xbf16>,
    %271 = vector.extract_strided_slice %225 {offsets = [7, 0], sizes = [1, 32], strides = [1, 1]} : vector<49x32xf32> to vector<1x32xf32>
    %272 = arith.truncf %271 : vector<1x32xf32> to vector<1x32xbf16>
    %c0_106 = arith.constant 0 : index
    %c480 = arith.constant 480 : index
    %273 = vector.load %arg31[%c0_106, %c480] : memref<1x3136xbf16, #tpu.memory_space<vmem>>, vector<1x32xbf16>
    tpu.vector_store %arg31[%c0_106, %c480], %272 {strides = array<i32>} : memref<1x3136xbf16, #tpu.memory_space<vmem>>, vector<1x32xbf16>,
    %274 = vector.extract_strided_slice %223 {offsets = [8, 0], sizes = [1, 32], strides = [1, 1]} : vector<49x32xf32> to vector<1x32xf32>
    %275 = arith.truncf %274 : vector<1x32xf32> to vector<1x32xbf16>
    %c0_107 = arith.constant 0 : index
    %c512 = arith.constant 512 : index
    %276 = vector.load %arg31[%c0_107, %c512] : memref<1x3136xbf16, #tpu.memory_space<vmem>>, vector<1x32xbf16>
    tpu.vector_store %arg31[%c0_107, %c512], %275 {strides = array<i32>} : memref<1x3136xbf16, #tpu.memory_space<vmem>>, vector<1x32xbf16>,
    %277 = vector.extract_strided_slice %225 {offsets = [8, 0], sizes = [1, 32], strides = [1, 1]} : vector<49x32xf32> to vector<1x32xf32>
    %278 = arith.truncf %277 : vector<1x32xf32> to vector<1x32xbf16>
    %c0_108 = arith.constant 0 : index
    %c544 = arith.constant 544 : index
    %279 = vector.load %arg31[%c0_108, %c544] : memref<1x3136xbf16, #tpu.memory_space<vmem>>, vector<1x32xbf16>
    tpu.vector_store %arg31[%c0_108, %c544], %278 {strides = array<i32>} : memref<1x3136xbf16, #tpu.memory_space<vmem>>, vector<1x32xbf16>,
    %280 = vector.extract_strided_slice %223 {offsets = [9, 0], sizes = [1, 32], strides = [1, 1]} : vector<49x32xf32> to vector<1x32xf32>
    %281 = arith.truncf %280 : vector<1x32xf32> to vector<1x32xbf16>
    %c0_109 = arith.constant 0 : index
    %c576 = arith.constant 576 : index
    %282 = vector.load %arg31[%c0_109, %c576] : memref<1x3136xbf16, #tpu.memory_space<vmem>>, vector<1x32xbf16>
    tpu.vector_store %arg31[%c0_109, %c576], %281 {strides = array<i32>} : memref<1x3136xbf16, #tpu.memory_space<vmem>>, vector<1x32xbf16>,
    %283 = vector.extract_strided_slice %225 {offsets = [9, 0], sizes = [1, 32], strides = [1, 1]} : vector<49x32xf32> to vector<1x32xf32>
    %284 = arith.truncf %283 : vector<1x32xf32> to vector<1x32xbf16>
    %c0_110 = arith.constant 0 : index
    %c608 = arith.constant 608 : index
    %285 = vector.load %arg31[%c0_110, %c608] : memref<1x3136xbf16, #tpu.memory_space<vmem>>, vector<1x32xbf16>
    tpu.vector_store %arg31[%c0_110, %c608], %284 {strides = array<i32>} : memref<1x3136xbf16, #tpu.memory_space<vmem>>, vector<1x32xbf16>,
    %286 = vector.extract_strided_slice %223 {offsets = [10, 0], sizes = [1, 32], strides = [1, 1]} : vector<49x32xf32> to vector<1x32xf32>
    %287 = arith.truncf %286 : vector<1x32xf32> to vector<1x32xbf16>
    %c0_111 = arith.constant 0 : index
    %c640 = arith.constant 640 : index
    %288 = vector.load %arg31[%c0_111, %c640] : memref<1x3136xbf16, #tpu.memory_space<vmem>>, vector<1x32xbf16>
    tpu.vector_store %arg31[%c0_111, %c640], %287 {strides = array<i32>} : memref<1x3136xbf16, #tpu.memory_space<vmem>>, vector<1x32xbf16>,
    %289 = vector.extract_strided_slice %225 {offsets = [10, 0], sizes = [1, 32], strides = [1, 1]} : vector<49x32xf32> to vector<1x32xf32>
    %290 = arith.truncf %289 : vector<1x32xf32> to vector<1x32xbf16>
    %c0_112 = arith.constant 0 : index
    %c672 = arith.constant 672 : index
    %291 = vector.load %arg31[%c0_112, %c672] : memref<1x3136xbf16, #tpu.memory_space<vmem>>, vector<1x32xbf16>
    tpu.vector_store %arg31[%c0_112, %c672], %290 {strides = array<i32>} : memref<1x3136xbf16, #tpu.memory_space<vmem>>, vector<1x32xbf16>,
    %292 = vector.extract_strided_slice %223 {offsets = [11, 0], sizes = [1, 32], strides = [1, 1]} : vector<49x32xf32> to vector<1x32xf32>
    %293 = arith.truncf %292 : vector<1x32xf32> to vector<1x32xbf16>
    %c0_113 = arith.constant 0 : index
    %c704 = arith.constant 704 : index
    %294 = vector.load %arg31[%c0_113, %c704] : memref<1x3136xbf16, #tpu.memory_space<vmem>>, vector<1x32xbf16>
    tpu.vector_store %arg31[%c0_113, %c704], %293 {strides = array<i32>} : memref<1x3136xbf16, #tpu.memory_space<vmem>>, vector<1x32xbf16>,
    %295 = vector.extract_strided_slice %225 {offsets = [11, 0], sizes = [1, 32], strides = [1, 1]} : vector<49x32xf32> to vector<1x32xf32>
    %296 = arith.truncf %295 : vector<1x32xf32> to vector<1x32xbf16>
    %c0_114 = arith.constant 0 : index
    %c736 = arith.constant 736 : index
    %297 = vector.load %arg31[%c0_114, %c736] : memref<1x3136xbf16, #tpu.memory_space<vmem>>, vector<1x32xbf16>
    tpu.vector_store %arg31[%c0_114, %c736], %296 {strides = array<i32>} : memref<1x3136xbf16, #tpu.memory_space<vmem>>, vector<1x32xbf16>,
    %298 = vector.extract_strided_slice %223 {offsets = [12, 0], sizes = [1, 32], strides = [1, 1]} : vector<49x32xf32> to vector<1x32xf32>
    %299 = arith.truncf %298 : vector<1x32xf32> to vector<1x32xbf16>
    %c0_115 = arith.constant 0 : index
    %c768 = arith.constant 768 : index
    %300 = vector.load %arg31[%c0_115, %c768] : memref<1x3136xbf16, #tpu.memory_space<vmem>>, vector<1x32xbf16>
    tpu.vector_store %arg31[%c0_115, %c768], %299 {strides = array<i32>} : memref<1x3136xbf16, #tpu.memory_space<vmem>>, vector<1x32xbf16>,
    %301 = vector.extract_strided_slice %225 {offsets = [12, 0], sizes = [1, 32], strides = [1, 1]} : vector<49x32xf32> to vector<1x32xf32>
    %302 = arith.truncf %301 : vector<1x32xf32> to vector<1x32xbf16>
    %c0_116 = arith.constant 0 : index
    %c800 = arith.constant 800 : index
    %303 = vector.load %arg31[%c0_116, %c800] : memref<1x3136xbf16, #tpu.memory_space<vmem>>, vector<1x32xbf16>
    tpu.vector_store %arg31[%c0_116, %c800], %302 {strides = array<i32>} : memref<1x3136xbf16, #tpu.memory_space<vmem>>, vector<1x32xbf16>,
    %304 = vector.extract_strided_slice %223 {offsets = [13, 0], sizes = [1, 32], strides = [1, 1]} : vector<49x32xf32> to vector<1x32xf32>
    %305 = arith.truncf %304 : vector<1x32xf32> to vector<1x32xbf16>
    %c0_117 = arith.constant 0 : index
    %c832 = arith.constant 832 : index
    %306 = vector.load %arg31[%c0_117, %c832] : memref<1x3136xbf16, #tpu.memory_space<vmem>>, vector<1x32xbf16>
    tpu.vector_store %arg31[%c0_117, %c832], %305 {strides = array<i32>} : memref<1x3136xbf16, #tpu.memory_space<vmem>>, vector<1x32xbf16>,
    %307 = vector.extract_strided_slice %225 {offsets = [13, 0], sizes = [1, 32], strides = [1, 1]} : vector<49x32xf32> to vector<1x32xf32>
    %308 = arith.truncf %307 : vector<1x32xf32> to vector<1x32xbf16>
    %c0_118 = arith.constant 0 : index
    %c864 = arith.constant 864 : index
    %309 = vector.load %arg31[%c0_118, %c864] : memref<1x3136xbf16, #tpu.memory_space<vmem>>, vector<1x32xbf16>
    tpu.vector_store %arg31[%c0_118, %c864], %308 {strides = array<i32>} : memref<1x3136xbf16, #tpu.memory_space<vmem>>, vector<1x32xbf16>,
    %310 = vector.extract_strided_slice %223 {offsets = [14, 0], sizes = [1, 32], strides = [1, 1]} : vector<49x32xf32> to vector<1x32xf32>
    %311 = arith.truncf %310 : vector<1x32xf32> to vector<1x32xbf16>
    %c0_119 = arith.constant 0 : index
    %c896 = arith.constant 896 : index
    %312 = vector.load %arg31[%c0_119, %c896] : memref<1x3136xbf16, #tpu.memory_space<vmem>>, vector<1x32xbf16>
    tpu.vector_store %arg31[%c0_119, %c896], %311 {strides = array<i32>} : memref<1x3136xbf16, #tpu.memory_space<vmem>>, vector<1x32xbf16>,
    %313 = vector.extract_strided_slice %225 {offsets = [14, 0], sizes = [1, 32], strides = [1, 1]} : vector<49x32xf32> to vector<1x32xf32>
    %314 = arith.truncf %313 : vector<1x32xf32> to vector<1x32xbf16>
    %c0_120 = arith.constant 0 : index
    %c928 = arith.constant 928 : index
    %315 = vector.load %arg31[%c0_120, %c928] : memref<1x3136xbf16, #tpu.memory_space<vmem>>, vector<1x32xbf16>
    tpu.vector_store %arg31[%c0_120, %c928], %314 {strides = array<i32>} : memref<1x3136xbf16, #tpu.memory_space<vmem>>, vector<1x32xbf16>,
    %316 = vector.extract_strided_slice %223 {offsets = [15, 0], sizes = [1, 32], strides = [1, 1]} : vector<49x32xf32> to vector<1x32xf32>
    %317 = arith.truncf %316 : vector<1x32xf32> to vector<1x32xbf16>
    %c0_121 = arith.constant 0 : index
    %c960 = arith.constant 960 : index
    %318 = vector.load %arg31[%c0_121, %c960] : memref<1x3136xbf16, #tpu.memory_space<vmem>>, vector<1x32xbf16>
    tpu.vector_store %arg31[%c0_121, %c960], %317 {strides = array<i32>} : memref<1x3136xbf16, #tpu.memory_space<vmem>>, vector<1x32xbf16>,
    %319 = vector.extract_strided_slice %225 {offsets = [15, 0], sizes = [1, 32], strides = [1, 1]} : vector<49x32xf32> to vector<1x32xf32>
    %320 = arith.truncf %319 : vector<1x32xf32> to vector<1x32xbf16>
    %c0_122 = arith.constant 0 : index
    %c992 = arith.constant 992 : index
    %321 = vector.load %arg31[%c0_122, %c992] : memref<1x3136xbf16, #tpu.memory_space<vmem>>, vector<1x32xbf16>
    tpu.vector_store %arg31[%c0_122, %c992], %320 {strides = array<i32>} : memref<1x3136xbf16, #tpu.memory_space<vmem>>, vector<1x32xbf16>,
    %322 = vector.extract_strided_slice %223 {offsets = [16, 0], sizes = [1, 32], strides = [1, 1]} : vector<49x32xf32> to vector<1x32xf32>
    %323 = arith.truncf %322 : vector<1x32xf32> to vector<1x32xbf16>
    %c0_123 = arith.constant 0 : index
    %c1024 = arith.constant 1024 : index
    %324 = vector.load %arg31[%c0_123, %c1024] : memref<1x3136xbf16, #tpu.memory_space<vmem>>, vector<1x32xbf16>
    tpu.vector_store %arg31[%c0_123, %c1024], %323 {strides = array<i32>} : memref<1x3136xbf16, #tpu.memory_space<vmem>>, vector<1x32xbf16>,
    %325 = vector.extract_strided_slice %225 {offsets = [16, 0], sizes = [1, 32], strides = [1, 1]} : vector<49x32xf32> to vector<1x32xf32>
    %326 = arith.truncf %325 : vector<1x32xf32> to vector<1x32xbf16>
    %c0_124 = arith.constant 0 : index
    %c1056 = arith.constant 1056 : index
    %327 = vector.load %arg31[%c0_124, %c1056] : memref<1x3136xbf16, #tpu.memory_space<vmem>>, vector<1x32xbf16>
    tpu.vector_store %arg31[%c0_124, %c1056], %326 {strides = array<i32>} : memref<1x3136xbf16, #tpu.memory_space<vmem>>, vector<1x32xbf16>,
    %328 = vector.extract_strided_slice %223 {offsets = [17, 0], sizes = [1, 32], strides = [1, 1]} : vector<49x32xf32> to vector<1x32xf32>
    %329 = arith.truncf %328 : vector<1x32xf32> to vector<1x32xbf16>
    %c0_125 = arith.constant 0 : index
    %c1088 = arith.constant 1088 : index
    %330 = vector.load %arg31[%c0_125, %c1088] : memref<1x3136xbf16, #tpu.memory_space<vmem>>, vector<1x32xbf16>
    tpu.vector_store %arg31[%c0_125, %c1088], %329 {strides = array<i32>} : memref<1x3136xbf16, #tpu.memory_space<vmem>>, vector<1x32xbf16>,
    %331 = vector.extract_strided_slice %225 {offsets = [17, 0], sizes = [1, 32], strides = [1, 1]} : vector<49x32xf32> to vector<1x32xf32>
    %332 = arith.truncf %331 : vector<1x32xf32> to vector<1x32xbf16>
    %c0_126 = arith.constant 0 : index
    %c1120 = arith.constant 1120 : index
    %333 = vector.load %arg31[%c0_126, %c1120] : memref<1x3136xbf16, #tpu.memory_space<vmem>>, vector<1x32xbf16>
    tpu.vector_store %arg31[%c0_126, %c1120], %332 {strides = array<i32>} : memref<1x3136xbf16, #tpu.memory_space<vmem>>, vector<1x32xbf16>,
    %334 = vector.extract_strided_slice %223 {offsets = [18, 0], sizes = [1, 32], strides = [1, 1]} : vector<49x32xf32> to vector<1x32xf32>
    %335 = arith.truncf %334 : vector<1x32xf32> to vector<1x32xbf16>
    %c0_127 = arith.constant 0 : index
    %c1152 = arith.constant 1152 : index
    %336 = vector.load %arg31[%c0_127, %c1152] : memref<1x3136xbf16, #tpu.memory_space<vmem>>, vector<1x32xbf16>
    tpu.vector_store %arg31[%c0_127, %c1152], %335 {strides = array<i32>} : memref<1x3136xbf16, #tpu.memory_space<vmem>>, vector<1x32xbf16>,
    %337 = vector.extract_strided_slice %225 {offsets = [18, 0], sizes = [1, 32], strides = [1, 1]} : vector<49x32xf32> to vector<1x32xf32>
    %338 = arith.truncf %337 : vector<1x32xf32> to vector<1x32xbf16>
    %c0_128 = arith.constant 0 : index
    %c1184 = arith.constant 1184 : index
    %339 = vector.load %arg31[%c0_128, %c1184] : memref<1x3136xbf16, #tpu.memory_space<vmem>>, vector<1x32xbf16>
    tpu.vector_store %arg31[%c0_128, %c1184], %338 {strides = array<i32>} : memref<1x3136xbf16, #tpu.memory_space<vmem>>, vector<1x32xbf16>,
    %340 = vector.extract_strided_slice %223 {offsets = [19, 0], sizes = [1, 32], strides = [1, 1]} : vector<49x32xf32> to vector<1x32xf32>
    %341 = arith.truncf %340 : vector<1x32xf32> to vector<1x32xbf16>
    %c0_129 = arith.constant 0 : index
    %c1216 = arith.constant 1216 : index
    %342 = vector.load %arg31[%c0_129, %c1216] : memref<1x3136xbf16, #tpu.memory_space<vmem>>, vector<1x32xbf16>
    tpu.vector_store %arg31[%c0_129, %c1216], %341 {strides = array<i32>} : memref<1x3136xbf16, #tpu.memory_space<vmem>>, vector<1x32xbf16>,
    %343 = vector.extract_strided_slice %225 {offsets = [19, 0], sizes = [1, 32], strides = [1, 1]} : vector<49x32xf32> to vector<1x32xf32>
    %344 = arith.truncf %343 : vector<1x32xf32> to vector<1x32xbf16>
    %c0_130 = arith.constant 0 : index
    %c1248 = arith.constant 1248 : index
    %345 = vector.load %arg31[%c0_130, %c1248] : memref<1x3136xbf16, #tpu.memory_space<vmem>>, vector<1x32xbf16>
    tpu.vector_store %arg31[%c0_130, %c1248], %344 {strides = array<i32>} : memref<1x3136xbf16, #tpu.memory_space<vmem>>, vector<1x32xbf16>,
    %346 = vector.extract_strided_slice %223 {offsets = [20, 0], sizes = [1, 32], strides = [1, 1]} : vector<49x32xf32> to vector<1x32xf32>
    %347 = arith.truncf %346 : vector<1x32xf32> to vector<1x32xbf16>
    %c0_131 = arith.constant 0 : index
    %c1280 = arith.constant 1280 : index
    %348 = vector.load %arg31[%c0_131, %c1280] : memref<1x3136xbf16, #tpu.memory_space<vmem>>, vector<1x32xbf16>
    tpu.vector_store %arg31[%c0_131, %c1280], %347 {strides = array<i32>} : memref<1x3136xbf16, #tpu.memory_space<vmem>>, vector<1x32xbf16>,
    %349 = vector.extract_strided_slice %225 {offsets = [20, 0], sizes = [1, 32], strides = [1, 1]} : vector<49x32xf32> to vector<1x32xf32>
    %350 = arith.truncf %349 : vector<1x32xf32> to vector<1x32xbf16>
    %c0_132 = arith.constant 0 : index
    %c1312 = arith.constant 1312 : index
    %351 = vector.load %arg31[%c0_132, %c1312] : memref<1x3136xbf16, #tpu.memory_space<vmem>>, vector<1x32xbf16>
    tpu.vector_store %arg31[%c0_132, %c1312], %350 {strides = array<i32>} : memref<1x3136xbf16, #tpu.memory_space<vmem>>, vector<1x32xbf16>,
    %352 = vector.extract_strided_slice %223 {offsets = [21, 0], sizes = [1, 32], strides = [1, 1]} : vector<49x32xf32> to vector<1x32xf32>
    %353 = arith.truncf %352 : vector<1x32xf32> to vector<1x32xbf16>
    %c0_133 = arith.constant 0 : index
    %c1344 = arith.constant 1344 : index
    %354 = vector.load %arg31[%c0_133, %c1344] : memref<1x3136xbf16, #tpu.memory_space<vmem>>, vector<1x32xbf16>
    tpu.vector_store %arg31[%c0_133, %c1344], %353 {strides = array<i32>} : memref<1x3136xbf16, #tpu.memory_space<vmem>>, vector<1x32xbf16>,
    %355 = vector.extract_strided_slice %225 {offsets = [21, 0], sizes = [1, 32], strides = [1, 1]} : vector<49x32xf32> to vector<1x32xf32>
    %356 = arith.truncf %355 : vector<1x32xf32> to vector<1x32xbf16>
    %c0_134 = arith.constant 0 : index
    %c1376 = arith.constant 1376 : index
    %357 = vector.load %arg31[%c0_134, %c1376] : memref<1x3136xbf16, #tpu.memory_space<vmem>>, vector<1x32xbf16>
    tpu.vector_store %arg31[%c0_134, %c1376], %356 {strides = array<i32>} : memref<1x3136xbf16, #tpu.memory_space<vmem>>, vector<1x32xbf16>,
    %358 = vector.extract_strided_slice %223 {offsets = [22, 0], sizes = [1, 32], strides = [1, 1]} : vector<49x32xf32> to vector<1x32xf32>
    %359 = arith.truncf %358 : vector<1x32xf32> to vector<1x32xbf16>
    %c0_135 = arith.constant 0 : index
    %c1408 = arith.constant 1408 : index
    %360 = vector.load %arg31[%c0_135, %c1408] : memref<1x3136xbf16, #tpu.memory_space<vmem>>, vector<1x32xbf16>
    tpu.vector_store %arg31[%c0_135, %c1408], %359 {strides = array<i32>} : memref<1x3136xbf16, #tpu.memory_space<vmem>>, vector<1x32xbf16>,
    %361 = vector.extract_strided_slice %225 {offsets = [22, 0], sizes = [1, 32], strides = [1, 1]} : vector<49x32xf32> to vector<1x32xf32>
    %362 = arith.truncf %361 : vector<1x32xf32> to vector<1x32xbf16>
    %c0_136 = arith.constant 0 : index
    %c1440 = arith.constant 1440 : index
    %363 = vector.load %arg31[%c0_136, %c1440] : memref<1x3136xbf16, #tpu.memory_space<vmem>>, vector<1x32xbf16>
    tpu.vector_store %arg31[%c0_136, %c1440], %362 {strides = array<i32>} : memref<1x3136xbf16, #tpu.memory_space<vmem>>, vector<1x32xbf16>,
    %364 = vector.extract_strided_slice %223 {offsets = [23, 0], sizes = [1, 32], strides = [1, 1]} : vector<49x32xf32> to vector<1x32xf32>
    %365 = arith.truncf %364 : vector<1x32xf32> to vector<1x32xbf16>
    %c0_137 = arith.constant 0 : index
    %c1472 = arith.constant 1472 : index
    %366 = vector.load %arg31[%c0_137, %c1472] : memref<1x3136xbf16, #tpu.memory_space<vmem>>, vector<1x32xbf16>
    tpu.vector_store %arg31[%c0_137, %c1472], %365 {strides = array<i32>} : memref<1x3136xbf16, #tpu.memory_space<vmem>>, vector<1x32xbf16>,
    %367 = vector.extract_strided_slice %225 {offsets = [23, 0], sizes = [1, 32], strides = [1, 1]} : vector<49x32xf32> to vector<1x32xf32>
    %368 = arith.truncf %367 : vector<1x32xf32> to vector<1x32xbf16>
    %c0_138 = arith.constant 0 : index
    %c1504 = arith.constant 1504 : index
    %369 = vector.load %arg31[%c0_138, %c1504] : memref<1x3136xbf16, #tpu.memory_space<vmem>>, vector<1x32xbf16>
    tpu.vector_store %arg31[%c0_138, %c1504], %368 {strides = array<i32>} : memref<1x3136xbf16, #tpu.memory_space<vmem>>, vector<1x32xbf16>,
    %370 = vector.extract_strided_slice %223 {offsets = [24, 0], sizes = [1, 32], strides = [1, 1]} : vector<49x32xf32> to vector<1x32xf32>
    %371 = arith.truncf %370 : vector<1x32xf32> to vector<1x32xbf16>
    %c0_139 = arith.constant 0 : index
    %c1536 = arith.constant 1536 : index
    %372 = vector.load %arg31[%c0_139, %c1536] : memref<1x3136xbf16, #tpu.memory_space<vmem>>, vector<1x32xbf16>
    tpu.vector_store %arg31[%c0_139, %c1536], %371 {strides = array<i32>} : memref<1x3136xbf16, #tpu.memory_space<vmem>>, vector<1x32xbf16>,
    %373 = vector.extract_strided_slice %225 {offsets = [24, 0], sizes = [1, 32], strides = [1, 1]} : vector<49x32xf32> to vector<1x32xf32>
    %374 = arith.truncf %373 : vector<1x32xf32> to vector<1x32xbf16>
    %c0_140 = arith.constant 0 : index
    %c1568 = arith.constant 1568 : index
    %375 = vector.load %arg31[%c0_140, %c1568] : memref<1x3136xbf16, #tpu.memory_space<vmem>>, vector<1x32xbf16>
    tpu.vector_store %arg31[%c0_140, %c1568], %374 {strides = array<i32>} : memref<1x3136xbf16, #tpu.memory_space<vmem>>, vector<1x32xbf16>,
    %376 = vector.extract_strided_slice %223 {offsets = [25, 0], sizes = [1, 32], strides = [1, 1]} : vector<49x32xf32> to vector<1x32xf32>
    %377 = arith.truncf %376 : vector<1x32xf32> to vector<1x32xbf16>
    %c0_141 = arith.constant 0 : index
    %c1600 = arith.constant 1600 : index
    %378 = vector.load %arg31[%c0_141, %c1600] : memref<1x3136xbf16, #tpu.memory_space<vmem>>, vector<1x32xbf16>
    tpu.vector_store %arg31[%c0_141, %c1600], %377 {strides = array<i32>} : memref<1x3136xbf16, #tpu.memory_space<vmem>>, vector<1x32xbf16>,
    %379 = vector.extract_strided_slice %225 {offsets = [25, 0], sizes = [1, 32], strides = [1, 1]} : vector<49x32xf32> to vector<1x32xf32>
    %380 = arith.truncf %379 : vector<1x32xf32> to vector<1x32xbf16>
    %c0_142 = arith.constant 0 : index
    %c1632 = arith.constant 1632 : index
    %381 = vector.load %arg31[%c0_142, %c1632] : memref<1x3136xbf16, #tpu.memory_space<vmem>>, vector<1x32xbf16>
    tpu.vector_store %arg31[%c0_142, %c1632], %380 {strides = array<i32>} : memref<1x3136xbf16, #tpu.memory_space<vmem>>, vector<1x32xbf16>,
    %382 = vector.extract_strided_slice %223 {offsets = [26, 0], sizes = [1, 32], strides = [1, 1]} : vector<49x32xf32> to vector<1x32xf32>
    %383 = arith.truncf %382 : vector<1x32xf32> to vector<1x32xbf16>
    %c0_143 = arith.constant 0 : index
    %c1664 = arith.constant 1664 : index
    %384 = vector.load %arg31[%c0_143, %c1664] : memref<1x3136xbf16, #tpu.memory_space<vmem>>, vector<1x32xbf16>
    tpu.vector_store %arg31[%c0_143, %c1664], %383 {strides = array<i32>} : memref<1x3136xbf16, #tpu.memory_space<vmem>>, vector<1x32xbf16>,
    %385 = vector.extract_strided_slice %225 {offsets = [26, 0], sizes = [1, 32], strides = [1, 1]} : vector<49x32xf32> to vector<1x32xf32>
    %386 = arith.truncf %385 : vector<1x32xf32> to vector<1x32xbf16>
    %c0_144 = arith.constant 0 : index
    %c1696 = arith.constant 1696 : index
    %387 = vector.load %arg31[%c0_144, %c1696] : memref<1x3136xbf16, #tpu.memory_space<vmem>>, vector<1x32xbf16>
    tpu.vector_store %arg31[%c0_144, %c1696], %386 {strides = array<i32>} : memref<1x3136xbf16, #tpu.memory_space<vmem>>, vector<1x32xbf16>,
    %388 = vector.extract_strided_slice %223 {offsets = [27, 0], sizes = [1, 32], strides = [1, 1]} : vector<49x32xf32> to vector<1x32xf32>
    %389 = arith.truncf %388 : vector<1x32xf32> to vector<1x32xbf16>
    %c0_145 = arith.constant 0 : index
    %c1728 = arith.constant 1728 : index
    %390 = vector.load %arg31[%c0_145, %c1728] : memref<1x3136xbf16, #tpu.memory_space<vmem>>, vector<1x32xbf16>
    tpu.vector_store %arg31[%c0_145, %c1728], %389 {strides = array<i32>} : memref<1x3136xbf16, #tpu.memory_space<vmem>>, vector<1x32xbf16>,
    %391 = vector.extract_strided_slice %225 {offsets = [27, 0], sizes = [1, 32], strides = [1, 1]} : vector<49x32xf32> to vector<1x32xf32>
    %392 = arith.truncf %391 : vector<1x32xf32> to vector<1x32xbf16>
    %c0_146 = arith.constant 0 : index
    %c1760 = arith.constant 1760 : index
    %393 = vector.load %arg31[%c0_146, %c1760] : memref<1x3136xbf16, #tpu.memory_space<vmem>>, vector<1x32xbf16>
    tpu.vector_store %arg31[%c0_146, %c1760], %392 {strides = array<i32>} : memref<1x3136xbf16, #tpu.memory_space<vmem>>, vector<1x32xbf16>,
    %394 = vector.extract_strided_slice %223 {offsets = [28, 0], sizes = [1, 32], strides = [1, 1]} : vector<49x32xf32> to vector<1x32xf32>
    %395 = arith.truncf %394 : vector<1x32xf32> to vector<1x32xbf16>
    %c0_147 = arith.constant 0 : index
    %c1792 = arith.constant 1792 : index
    %396 = vector.load %arg31[%c0_147, %c1792] : memref<1x3136xbf16, #tpu.memory_space<vmem>>, vector<1x32xbf16>
    tpu.vector_store %arg31[%c0_147, %c1792], %395 {strides = array<i32>} : memref<1x3136xbf16, #tpu.memory_space<vmem>>, vector<1x32xbf16>,
    %397 = vector.extract_strided_slice %225 {offsets = [28, 0], sizes = [1, 32], strides = [1, 1]} : vector<49x32xf32> to vector<1x32xf32>
    %398 = arith.truncf %397 : vector<1x32xf32> to vector<1x32xbf16>
    %c0_148 = arith.constant 0 : index
    %c1824 = arith.constant 1824 : index
    %399 = vector.load %arg31[%c0_148, %c1824] : memref<1x3136xbf16, #tpu.memory_space<vmem>>, vector<1x32xbf16>
    tpu.vector_store %arg31[%c0_148, %c1824], %398 {strides = array<i32>} : memref<1x3136xbf16, #tpu.memory_space<vmem>>, vector<1x32xbf16>,
    %400 = vector.extract_strided_slice %223 {offsets = [29, 0], sizes = [1, 32], strides = [1, 1]} : vector<49x32xf32> to vector<1x32xf32>
    %401 = arith.truncf %400 : vector<1x32xf32> to vector<1x32xbf16>
    %c0_149 = arith.constant 0 : index
    %c1856 = arith.constant 1856 : index
    %402 = vector.load %arg31[%c0_149, %c1856] : memref<1x3136xbf16, #tpu.memory_space<vmem>>, vector<1x32xbf16>
    tpu.vector_store %arg31[%c0_149, %c1856], %401 {strides = array<i32>} : memref<1x3136xbf16, #tpu.memory_space<vmem>>, vector<1x32xbf16>,
    %403 = vector.extract_strided_slice %225 {offsets = [29, 0], sizes = [1, 32], strides = [1, 1]} : vector<49x32xf32> to vector<1x32xf32>
    %404 = arith.truncf %403 : vector<1x32xf32> to vector<1x32xbf16>
    %c0_150 = arith.constant 0 : index
    %c1888 = arith.constant 1888 : index
    %405 = vector.load %arg31[%c0_150, %c1888] : memref<1x3136xbf16, #tpu.memory_space<vmem>>, vector<1x32xbf16>
    tpu.vector_store %arg31[%c0_150, %c1888], %404 {strides = array<i32>} : memref<1x3136xbf16, #tpu.memory_space<vmem>>, vector<1x32xbf16>,
    %406 = vector.extract_strided_slice %223 {offsets = [30, 0], sizes = [1, 32], strides = [1, 1]} : vector<49x32xf32> to vector<1x32xf32>
    %407 = arith.truncf %406 : vector<1x32xf32> to vector<1x32xbf16>
    %c0_151 = arith.constant 0 : index
    %c1920 = arith.constant 1920 : index
    %408 = vector.load %arg31[%c0_151, %c1920] : memref<1x3136xbf16, #tpu.memory_space<vmem>>, vector<1x32xbf16>
    tpu.vector_store %arg31[%c0_151, %c1920], %407 {strides = array<i32>} : memref<1x3136xbf16, #tpu.memory_space<vmem>>, vector<1x32xbf16>,
    %409 = vector.extract_strided_slice %225 {offsets = [30, 0], sizes = [1, 32], strides = [1, 1]} : vector<49x32xf32> to vector<1x32xf32>
    %410 = arith.truncf %409 : vector<1x32xf32> to vector<1x32xbf16>
    %c0_152 = arith.constant 0 : index
    %c1952 = arith.constant 1952 : index
    %411 = vector.load %arg31[%c0_152, %c1952] : memref<1x3136xbf16, #tpu.memory_space<vmem>>, vector<1x32xbf16>
    tpu.vector_store %arg31[%c0_152, %c1952], %410 {strides = array<i32>} : memref<1x3136xbf16, #tpu.memory_space<vmem>>, vector<1x32xbf16>,
    %412 = vector.extract_strided_slice %223 {offsets = [31, 0], sizes = [1, 32], strides = [1, 1]} : vector<49x32xf32> to vector<1x32xf32>
    %413 = arith.truncf %412 : vector<1x32xf32> to vector<1x32xbf16>
    %c0_153 = arith.constant 0 : index
    %c1984 = arith.constant 1984 : index
    %414 = vector.load %arg31[%c0_153, %c1984] : memref<1x3136xbf16, #tpu.memory_space<vmem>>, vector<1x32xbf16>
    tpu.vector_store %arg31[%c0_153, %c1984], %413 {strides = array<i32>} : memref<1x3136xbf16, #tpu.memory_space<vmem>>, vector<1x32xbf16>,
    %415 = vector.extract_strided_slice %225 {offsets = [31, 0], sizes = [1, 32], strides = [1, 1]} : vector<49x32xf32> to vector<1x32xf32>
    %416 = arith.truncf %415 : vector<1x32xf32> to vector<1x32xbf16>
    %c0_154 = arith.constant 0 : index
    %c2016 = arith.constant 2016 : index
    %417 = vector.load %arg31[%c0_154, %c2016] : memref<1x3136xbf16, #tpu.memory_space<vmem>>, vector<1x32xbf16>
    tpu.vector_store %arg31[%c0_154, %c2016], %416 {strides = array<i32>} : memref<1x3136xbf16, #tpu.memory_space<vmem>>, vector<1x32xbf16>,
    %418 = vector.extract_strided_slice %223 {offsets = [32, 0], sizes = [1, 32], strides = [1, 1]} : vector<49x32xf32> to vector<1x32xf32>
    %419 = arith.truncf %418 : vector<1x32xf32> to vector<1x32xbf16>
    %c0_155 = arith.constant 0 : index
    %c2048 = arith.constant 2048 : index
    %420 = vector.load %arg31[%c0_155, %c2048] : memref<1x3136xbf16, #tpu.memory_space<vmem>>, vector<1x32xbf16>
    tpu.vector_store %arg31[%c0_155, %c2048], %419 {strides = array<i32>} : memref<1x3136xbf16, #tpu.memory_space<vmem>>, vector<1x32xbf16>,
    %421 = vector.extract_strided_slice %225 {offsets = [32, 0], sizes = [1, 32], strides = [1, 1]} : vector<49x32xf32> to vector<1x32xf32>
    %422 = arith.truncf %421 : vector<1x32xf32> to vector<1x32xbf16>
    %c0_156 = arith.constant 0 : index
    %c2080 = arith.constant 2080 : index
    %423 = vector.load %arg31[%c0_156, %c2080] : memref<1x3136xbf16, #tpu.memory_space<vmem>>, vector<1x32xbf16>
    tpu.vector_store %arg31[%c0_156, %c2080], %422 {strides = array<i32>} : memref<1x3136xbf16, #tpu.memory_space<vmem>>, vector<1x32xbf16>,
    %424 = vector.extract_strided_slice %223 {offsets = [33, 0], sizes = [1, 32], strides = [1, 1]} : vector<49x32xf32> to vector<1x32xf32>
    %425 = arith.truncf %424 : vector<1x32xf32> to vector<1x32xbf16>
    %c0_157 = arith.constant 0 : index
    %c2112 = arith.constant 2112 : index
    %426 = vector.load %arg31[%c0_157, %c2112] : memref<1x3136xbf16, #tpu.memory_space<vmem>>, vector<1x32xbf16>
    tpu.vector_store %arg31[%c0_157, %c2112], %425 {strides = array<i32>} : memref<1x3136xbf16, #tpu.memory_space<vmem>>, vector<1x32xbf16>,
    %427 = vector.extract_strided_slice %225 {offsets = [33, 0], sizes = [1, 32], strides = [1, 1]} : vector<49x32xf32> to vector<1x32xf32>
    %428 = arith.truncf %427 : vector<1x32xf32> to vector<1x32xbf16>
    %c0_158 = arith.constant 0 : index
    %c2144 = arith.constant 2144 : index
    %429 = vector.load %arg31[%c0_158, %c2144] : memref<1x3136xbf16, #tpu.memory_space<vmem>>, vector<1x32xbf16>
    tpu.vector_store %arg31[%c0_158, %c2144], %428 {strides = array<i32>} : memref<1x3136xbf16, #tpu.memory_space<vmem>>, vector<1x32xbf16>,
    %430 = vector.extract_strided_slice %223 {offsets = [34, 0], sizes = [1, 32], strides = [1, 1]} : vector<49x32xf32> to vector<1x32xf32>
    %431 = arith.truncf %430 : vector<1x32xf32> to vector<1x32xbf16>
    %c0_159 = arith.constant 0 : index
    %c2176 = arith.constant 2176 : index
    %432 = vector.load %arg31[%c0_159, %c2176] : memref<1x3136xbf16, #tpu.memory_space<vmem>>, vector<1x32xbf16>
    tpu.vector_store %arg31[%c0_159, %c2176], %431 {strides = array<i32>} : memref<1x3136xbf16, #tpu.memory_space<vmem>>, vector<1x32xbf16>,
    %433 = vector.extract_strided_slice %225 {offsets = [34, 0], sizes = [1, 32], strides = [1, 1]} : vector<49x32xf32> to vector<1x32xf32>
    %434 = arith.truncf %433 : vector<1x32xf32> to vector<1x32xbf16>
    %c0_160 = arith.constant 0 : index
    %c2208 = arith.constant 2208 : index
    %435 = vector.load %arg31[%c0_160, %c2208] : memref<1x3136xbf16, #tpu.memory_space<vmem>>, vector<1x32xbf16>
    tpu.vector_store %arg31[%c0_160, %c2208], %434 {strides = array<i32>} : memref<1x3136xbf16, #tpu.memory_space<vmem>>, vector<1x32xbf16>,
    %436 = vector.extract_strided_slice %223 {offsets = [35, 0], sizes = [1, 32], strides = [1, 1]} : vector<49x32xf32> to vector<1x32xf32>
    %437 = arith.truncf %436 : vector<1x32xf32> to vector<1x32xbf16>
    %c0_161 = arith.constant 0 : index
    %c2240 = arith.constant 2240 : index
    %438 = vector.load %arg31[%c0_161, %c2240] : memref<1x3136xbf16, #tpu.memory_space<vmem>>, vector<1x32xbf16>
    tpu.vector_store %arg31[%c0_161, %c2240], %437 {strides = array<i32>} : memref<1x3136xbf16, #tpu.memory_space<vmem>>, vector<1x32xbf16>,
    %439 = vector.extract_strided_slice %225 {offsets = [35, 0], sizes = [1, 32], strides = [1, 1]} : vector<49x32xf32> to vector<1x32xf32>
    %440 = arith.truncf %439 : vector<1x32xf32> to vector<1x32xbf16>
    %c0_162 = arith.constant 0 : index
    %c2272 = arith.constant 2272 : index
    %441 = vector.load %arg31[%c0_162, %c2272] : memref<1x3136xbf16, #tpu.memory_space<vmem>>, vector<1x32xbf16>
    tpu.vector_store %arg31[%c0_162, %c2272], %440 {strides = array<i32>} : memref<1x3136xbf16, #tpu.memory_space<vmem>>, vector<1x32xbf16>,
    %442 = vector.extract_strided_slice %223 {offsets = [36, 0], sizes = [1, 32], strides = [1, 1]} : vector<49x32xf32> to vector<1x32xf32>
    %443 = arith.truncf %442 : vector<1x32xf32> to vector<1x32xbf16>
    %c0_163 = arith.constant 0 : index
    %c2304 = arith.constant 2304 : index
    %444 = vector.load %arg31[%c0_163, %c2304] : memref<1x3136xbf16, #tpu.memory_space<vmem>>, vector<1x32xbf16>
    tpu.vector_store %arg31[%c0_163, %c2304], %443 {strides = array<i32>} : memref<1x3136xbf16, #tpu.memory_space<vmem>>, vector<1x32xbf16>,
    %445 = vector.extract_strided_slice %225 {offsets = [36, 0], sizes = [1, 32], strides = [1, 1]} : vector<49x32xf32> to vector<1x32xf32>
    %446 = arith.truncf %445 : vector<1x32xf32> to vector<1x32xbf16>
    %c0_164 = arith.constant 0 : index
    %c2336 = arith.constant 2336 : index
    %447 = vector.load %arg31[%c0_164, %c2336] : memref<1x3136xbf16, #tpu.memory_space<vmem>>, vector<1x32xbf16>
    tpu.vector_store %arg31[%c0_164, %c2336], %446 {strides = array<i32>} : memref<1x3136xbf16, #tpu.memory_space<vmem>>, vector<1x32xbf16>,
    %448 = vector.extract_strided_slice %223 {offsets = [37, 0], sizes = [1, 32], strides = [1, 1]} : vector<49x32xf32> to vector<1x32xf32>
    %449 = arith.truncf %448 : vector<1x32xf32> to vector<1x32xbf16>
    %c0_165 = arith.constant 0 : index
    %c2368 = arith.constant 2368 : index
    %450 = vector.load %arg31[%c0_165, %c2368] : memref<1x3136xbf16, #tpu.memory_space<vmem>>, vector<1x32xbf16>
    tpu.vector_store %arg31[%c0_165, %c2368], %449 {strides = array<i32>} : memref<1x3136xbf16, #tpu.memory_space<vmem>>, vector<1x32xbf16>,
    %451 = vector.extract_strided_slice %225 {offsets = [37, 0], sizes = [1, 32], strides = [1, 1]} : vector<49x32xf32> to vector<1x32xf32>
    %452 = arith.truncf %451 : vector<1x32xf32> to vector<1x32xbf16>
    %c0_166 = arith.constant 0 : index
    %c2400 = arith.constant 2400 : index
    %453 = vector.load %arg31[%c0_166, %c2400] : memref<1x3136xbf16, #tpu.memory_space<vmem>>, vector<1x32xbf16>
    tpu.vector_store %arg31[%c0_166, %c2400], %452 {strides = array<i32>} : memref<1x3136xbf16, #tpu.memory_space<vmem>>, vector<1x32xbf16>,
    %454 = vector.extract_strided_slice %223 {offsets = [38, 0], sizes = [1, 32], strides = [1, 1]} : vector<49x32xf32> to vector<1x32xf32>
    %455 = arith.truncf %454 : vector<1x32xf32> to vector<1x32xbf16>
    %c0_167 = arith.constant 0 : index
    %c2432 = arith.constant 2432 : index
    %456 = vector.load %arg31[%c0_167, %c2432] : memref<1x3136xbf16, #tpu.memory_space<vmem>>, vector<1x32xbf16>
    tpu.vector_store %arg31[%c0_167, %c2432], %455 {strides = array<i32>} : memref<1x3136xbf16, #tpu.memory_space<vmem>>, vector<1x32xbf16>,
    %457 = vector.extract_strided_slice %225 {offsets = [38, 0], sizes = [1, 32], strides = [1, 1]} : vector<49x32xf32> to vector<1x32xf32>
    %458 = arith.truncf %457 : vector<1x32xf32> to vector<1x32xbf16>
    %c0_168 = arith.constant 0 : index
    %c2464 = arith.constant 2464 : index
    %459 = vector.load %arg31[%c0_168, %c2464] : memref<1x3136xbf16, #tpu.memory_space<vmem>>, vector<1x32xbf16>
    tpu.vector_store %arg31[%c0_168, %c2464], %458 {strides = array<i32>} : memref<1x3136xbf16, #tpu.memory_space<vmem>>, vector<1x32xbf16>,
    %460 = vector.extract_strided_slice %223 {offsets = [39, 0], sizes = [1, 32], strides = [1, 1]} : vector<49x32xf32> to vector<1x32xf32>
    %461 = arith.truncf %460 : vector<1x32xf32> to vector<1x32xbf16>
    %c0_169 = arith.constant 0 : index
    %c2496 = arith.constant 2496 : index
    %462 = vector.load %arg31[%c0_169, %c2496] : memref<1x3136xbf16, #tpu.memory_space<vmem>>, vector<1x32xbf16>
    tpu.vector_store %arg31[%c0_169, %c2496], %461 {strides = array<i32>} : memref<1x3136xbf16, #tpu.memory_space<vmem>>, vector<1x32xbf16>,
    %463 = vector.extract_strided_slice %225 {offsets = [39, 0], sizes = [1, 32], strides = [1, 1]} : vector<49x32xf32> to vector<1x32xf32>
    %464 = arith.truncf %463 : vector<1x32xf32> to vector<1x32xbf16>
    %c0_170 = arith.constant 0 : index
    %c2528 = arith.constant 2528 : index
    %465 = vector.load %arg31[%c0_170, %c2528] : memref<1x3136xbf16, #tpu.memory_space<vmem>>, vector<1x32xbf16>
    tpu.vector_store %arg31[%c0_170, %c2528], %464 {strides = array<i32>} : memref<1x3136xbf16, #tpu.memory_space<vmem>>, vector<1x32xbf16>,
    %466 = vector.extract_strided_slice %223 {offsets = [40, 0], sizes = [1, 32], strides = [1, 1]} : vector<49x32xf32> to vector<1x32xf32>
    %467 = arith.truncf %466 : vector<1x32xf32> to vector<1x32xbf16>
    %c0_171 = arith.constant 0 : index
    %c2560 = arith.constant 2560 : index
    %468 = vector.load %arg31[%c0_171, %c2560] : memref<1x3136xbf16, #tpu.memory_space<vmem>>, vector<1x32xbf16>
    tpu.vector_store %arg31[%c0_171, %c2560], %467 {strides = array<i32>} : memref<1x3136xbf16, #tpu.memory_space<vmem>>, vector<1x32xbf16>,
    %469 = vector.extract_strided_slice %225 {offsets = [40, 0], sizes = [1, 32], strides = [1, 1]} : vector<49x32xf32> to vector<1x32xf32>
    %470 = arith.truncf %469 : vector<1x32xf32> to vector<1x32xbf16>
    %c0_172 = arith.constant 0 : index
    %c2592 = arith.constant 2592 : index
    %471 = vector.load %arg31[%c0_172, %c2592] : memref<1x3136xbf16, #tpu.memory_space<vmem>>, vector<1x32xbf16>
    tpu.vector_store %arg31[%c0_172, %c2592], %470 {strides = array<i32>} : memref<1x3136xbf16, #tpu.memory_space<vmem>>, vector<1x32xbf16>,
    %472 = vector.extract_strided_slice %223 {offsets = [41, 0], sizes = [1, 32], strides = [1, 1]} : vector<49x32xf32> to vector<1x32xf32>
    %473 = arith.truncf %472 : vector<1x32xf32> to vector<1x32xbf16>
    %c0_173 = arith.constant 0 : index
    %c2624 = arith.constant 2624 : index
    %474 = vector.load %arg31[%c0_173, %c2624] : memref<1x3136xbf16, #tpu.memory_space<vmem>>, vector<1x32xbf16>
    tpu.vector_store %arg31[%c0_173, %c2624], %473 {strides = array<i32>} : memref<1x3136xbf16, #tpu.memory_space<vmem>>, vector<1x32xbf16>,
    %475 = vector.extract_strided_slice %225 {offsets = [41, 0], sizes = [1, 32], strides = [1, 1]} : vector<49x32xf32> to vector<1x32xf32>
    %476 = arith.truncf %475 : vector<1x32xf32> to vector<1x32xbf16>
    %c0_174 = arith.constant 0 : index
    %c2656 = arith.constant 2656 : index
    %477 = vector.load %arg31[%c0_174, %c2656] : memref<1x3136xbf16, #tpu.memory_space<vmem>>, vector<1x32xbf16>
    tpu.vector_store %arg31[%c0_174, %c2656], %476 {strides = array<i32>} : memref<1x3136xbf16, #tpu.memory_space<vmem>>, vector<1x32xbf16>,
    %478 = vector.extract_strided_slice %223 {offsets = [42, 0], sizes = [1, 32], strides = [1, 1]} : vector<49x32xf32> to vector<1x32xf32>
    %479 = arith.truncf %478 : vector<1x32xf32> to vector<1x32xbf16>
    %c0_175 = arith.constant 0 : index
    %c2688 = arith.constant 2688 : index
    %480 = vector.load %arg31[%c0_175, %c2688] : memref<1x3136xbf16, #tpu.memory_space<vmem>>, vector<1x32xbf16>
    tpu.vector_store %arg31[%c0_175, %c2688], %479 {strides = array<i32>} : memref<1x3136xbf16, #tpu.memory_space<vmem>>, vector<1x32xbf16>,
    %481 = vector.extract_strided_slice %225 {offsets = [42, 0], sizes = [1, 32], strides = [1, 1]} : vector<49x32xf32> to vector<1x32xf32>
    %482 = arith.truncf %481 : vector<1x32xf32> to vector<1x32xbf16>
    %c0_176 = arith.constant 0 : index
    %c2720 = arith.constant 2720 : index
    %483 = vector.load %arg31[%c0_176, %c2720] : memref<1x3136xbf16, #tpu.memory_space<vmem>>, vector<1x32xbf16>
    tpu.vector_store %arg31[%c0_176, %c2720], %482 {strides = array<i32>} : memref<1x3136xbf16, #tpu.memory_space<vmem>>, vector<1x32xbf16>,
    %484 = vector.extract_strided_slice %223 {offsets = [43, 0], sizes = [1, 32], strides = [1, 1]} : vector<49x32xf32> to vector<1x32xf32>
    %485 = arith.truncf %484 : vector<1x32xf32> to vector<1x32xbf16>
    %c0_177 = arith.constant 0 : index
    %c2752 = arith.constant 2752 : index
    %486 = vector.load %arg31[%c0_177, %c2752] : memref<1x3136xbf16, #tpu.memory_space<vmem>>, vector<1x32xbf16>
    tpu.vector_store %arg31[%c0_177, %c2752], %485 {strides = array<i32>} : memref<1x3136xbf16, #tpu.memory_space<vmem>>, vector<1x32xbf16>,
    %487 = vector.extract_strided_slice %225 {offsets = [43, 0], sizes = [1, 32], strides = [1, 1]} : vector<49x32xf32> to vector<1x32xf32>
    %488 = arith.truncf %487 : vector<1x32xf32> to vector<1x32xbf16>
    %c0_178 = arith.constant 0 : index
    %c2784 = arith.constant 2784 : index
    %489 = vector.load %arg31[%c0_178, %c2784] : memref<1x3136xbf16, #tpu.memory_space<vmem>>, vector<1x32xbf16>
    tpu.vector_store %arg31[%c0_178, %c2784], %488 {strides = array<i32>} : memref<1x3136xbf16, #tpu.memory_space<vmem>>, vector<1x32xbf16>,
    %490 = vector.extract_strided_slice %223 {offsets = [44, 0], sizes = [1, 32], strides = [1, 1]} : vector<49x32xf32> to vector<1x32xf32>
    %491 = arith.truncf %490 : vector<1x32xf32> to vector<1x32xbf16>
    %c0_179 = arith.constant 0 : index
    %c2816 = arith.constant 2816 : index
    %492 = vector.load %arg31[%c0_179, %c2816] : memref<1x3136xbf16, #tpu.memory_space<vmem>>, vector<1x32xbf16>
    tpu.vector_store %arg31[%c0_179, %c2816], %491 {strides = array<i32>} : memref<1x3136xbf16, #tpu.memory_space<vmem>>, vector<1x32xbf16>,
    %493 = vector.extract_strided_slice %225 {offsets = [44, 0], sizes = [1, 32], strides = [1, 1]} : vector<49x32xf32> to vector<1x32xf32>
    %494 = arith.truncf %493 : vector<1x32xf32> to vector<1x32xbf16>
    %c0_180 = arith.constant 0 : index
    %c2848 = arith.constant 2848 : index
    %495 = vector.load %arg31[%c0_180, %c2848] : memref<1x3136xbf16, #tpu.memory_space<vmem>>, vector<1x32xbf16>
    tpu.vector_store %arg31[%c0_180, %c2848], %494 {strides = array<i32>} : memref<1x3136xbf16, #tpu.memory_space<vmem>>, vector<1x32xbf16>,
    %496 = vector.extract_strided_slice %223 {offsets = [45, 0], sizes = [1, 32], strides = [1, 1]} : vector<49x32xf32> to vector<1x32xf32>
    %497 = arith.truncf %496 : vector<1x32xf32> to vector<1x32xbf16>
    %c0_181 = arith.constant 0 : index
    %c2880 = arith.constant 2880 : index
    %498 = vector.load %arg31[%c0_181, %c2880] : memref<1x3136xbf16, #tpu.memory_space<vmem>>, vector<1x32xbf16>
    tpu.vector_store %arg31[%c0_181, %c2880], %497 {strides = array<i32>} : memref<1x3136xbf16, #tpu.memory_space<vmem>>, vector<1x32xbf16>,
    %499 = vector.extract_strided_slice %225 {offsets = [45, 0], sizes = [1, 32], strides = [1, 1]} : vector<49x32xf32> to vector<1x32xf32>
    %500 = arith.truncf %499 : vector<1x32xf32> to vector<1x32xbf16>
    %c0_182 = arith.constant 0 : index
    %c2912 = arith.constant 2912 : index
    %501 = vector.load %arg31[%c0_182, %c2912] : memref<1x3136xbf16, #tpu.memory_space<vmem>>, vector<1x32xbf16>
    tpu.vector_store %arg31[%c0_182, %c2912], %500 {strides = array<i32>} : memref<1x3136xbf16, #tpu.memory_space<vmem>>, vector<1x32xbf16>,
    %502 = vector.extract_strided_slice %223 {offsets = [46, 0], sizes = [1, 32], strides = [1, 1]} : vector<49x32xf32> to vector<1x32xf32>
    %503 = arith.truncf %502 : vector<1x32xf32> to vector<1x32xbf16>
    %c0_183 = arith.constant 0 : index
    %c2944 = arith.constant 2944 : index
    %504 = vector.load %arg31[%c0_183, %c2944] : memref<1x3136xbf16, #tpu.memory_space<vmem>>, vector<1x32xbf16>
    tpu.vector_store %arg31[%c0_183, %c2944], %503 {strides = array<i32>} : memref<1x3136xbf16, #tpu.memory_space<vmem>>, vector<1x32xbf16>,
    %505 = vector.extract_strided_slice %225 {offsets = [46, 0], sizes = [1, 32], strides = [1, 1]} : vector<49x32xf32> to vector<1x32xf32>
    %506 = arith.truncf %505 : vector<1x32xf32> to vector<1x32xbf16>
    %c0_184 = arith.constant 0 : index
    %c2976 = arith.constant 2976 : index
    %507 = vector.load %arg31[%c0_184, %c2976] : memref<1x3136xbf16, #tpu.memory_space<vmem>>, vector<1x32xbf16>
    tpu.vector_store %arg31[%c0_184, %c2976], %506 {strides = array<i32>} : memref<1x3136xbf16, #tpu.memory_space<vmem>>, vector<1x32xbf16>,
    %508 = vector.extract_strided_slice %223 {offsets = [47, 0], sizes = [1, 32], strides = [1, 1]} : vector<49x32xf32> to vector<1x32xf32>
    %509 = arith.truncf %508 : vector<1x32xf32> to vector<1x32xbf16>
    %c0_185 = arith.constant 0 : index
    %c3008 = arith.constant 3008 : index
    %510 = vector.load %arg31[%c0_185, %c3008] : memref<1x3136xbf16, #tpu.memory_space<vmem>>, vector<1x32xbf16>
    tpu.vector_store %arg31[%c0_185, %c3008], %509 {strides = array<i32>} : memref<1x3136xbf16, #tpu.memory_space<vmem>>, vector<1x32xbf16>,
    %511 = vector.extract_strided_slice %225 {offsets = [47, 0], sizes = [1, 32], strides = [1, 1]} : vector<49x32xf32> to vector<1x32xf32>
    %512 = arith.truncf %511 : vector<1x32xf32> to vector<1x32xbf16>
    %c0_186 = arith.constant 0 : index
    %c3040 = arith.constant 3040 : index
    %513 = vector.load %arg31[%c0_186, %c3040] : memref<1x3136xbf16, #tpu.memory_space<vmem>>, vector<1x32xbf16>
    tpu.vector_store %arg31[%c0_186, %c3040], %512 {strides = array<i32>} : memref<1x3136xbf16, #tpu.memory_space<vmem>>, vector<1x32xbf16>,
    %514 = vector.extract_strided_slice %223 {offsets = [48, 0], sizes = [1, 32], strides = [1, 1]} : vector<49x32xf32> to vector<1x32xf32>
    %515 = arith.truncf %514 : vector<1x32xf32> to vector<1x32xbf16>
    %c0_187 = arith.constant 0 : index
    %c3072 = arith.constant 3072 : index
    %516 = vector.load %arg31[%c0_187, %c3072] : memref<1x3136xbf16, #tpu.memory_space<vmem>>, vector<1x32xbf16>
    tpu.vector_store %arg31[%c0_187, %c3072], %515 {strides = array<i32>} : memref<1x3136xbf16, #tpu.memory_space<vmem>>, vector<1x32xbf16>,
    %517 = vector.extract_strided_slice %225 {offsets = [48, 0], sizes = [1, 32], strides = [1, 1]} : vector<49x32xf32> to vector<1x32xf32>
    %518 = arith.truncf %517 : vector<1x32xf32> to vector<1x32xbf16>
    %c0_188 = arith.constant 0 : index
    %c3104 = arith.constant 3104 : index
    %519 = vector.load %arg31[%c0_188, %c3104] : memref<1x3136xbf16, #tpu.memory_space<vmem>>, vector<1x32xbf16>
    tpu.vector_store %arg31[%c0_188, %c3104], %518 {strides = array<i32>} : memref<1x3136xbf16, #tpu.memory_space<vmem>>, vector<1x32xbf16>,
    %c0_189 = arith.constant 0 : index
    %c0_190 = arith.constant 0 : index
    %520 = vector.load %arg31[%c0_189, %c0_190] : memref<1x3136xbf16, #tpu.memory_space<vmem>>, vector<1x3136xbf16>
    %c0_191 = arith.constant 0 : index
    %c0_192 = arith.constant 0 : index
    %521 = vector.load %arg20[%c0_191, %c0_192] : memref<3136x256xbf16, #tpu.memory_space<vmem>>, vector<3136x256xbf16>
    %cst_193 = arith.constant dense<0.000000e+00> : vector<1x256xf32>
    %522 = tpu.matmul %520, %521, %cst_193 {dimension_numbers = #tpu.dot_dimension_numbers<[1], [0], [0], [1], [0, 0, 1, 1], [], []>} : vector<1x3136xbf16>, vector<3136x256xbf16>, vector<1x256xf32> -> vector<1x256xf32>
    %c0_194 = arith.constant 0 : index
    %c0_195 = arith.constant 0 : index
    %523 = vector.load %arg21[%c0_194, %c0_195] : memref<1x256xf32, #tpu.memory_space<vmem>>, vector<1x256xf32>
    %524 = arith.addf %522, %523 : vector<1x256xf32>
    %cst_196 = arith.constant 0.000000e+00 : f32
    %525 = vector.broadcast %cst_196 : f32 to vector<1x256xf32>
    %526 = arith.maximumf %524, %525 : vector<1x256xf32>
    %c0_197 = arith.constant 0 : index
    %c0_198 = arith.constant 0 : index
    %527 = vector.load %arg22[%c0_197, %c0_198] : memref<256x110xbf16, #tpu.memory_space<vmem>>, vector<256x110xbf16>
    %528 = arith.truncf %526 : vector<1x256xf32> to vector<1x256xbf16>
    %cst_199 = arith.constant dense<0.000000e+00> : vector<1x110xf32>
    %529 = tpu.matmul %528, %527, %cst_199 {dimension_numbers = #tpu.dot_dimension_numbers<[1], [0], [0], [1], [0, 0, 1, 1], [], []>} : vector<1x256xbf16>, vector<256x110xbf16>, vector<1x110xf32> -> vector<1x110xf32>
    %c0_200 = arith.constant 0 : index
    %c0_201 = arith.constant 0 : index
    %530 = vector.load %arg23[%c0_200, %c0_201] : memref<1x110xf32, #tpu.memory_space<vmem>>, vector<1x110xf32>
    %531 = arith.addf %529, %530 : vector<1x110xf32>
    %532 = math.absf %531 : vector<1x110xf32>
    %cst_202 = arith.constant 0.000000e+00 : f32
    %533 = vector.broadcast %cst_202 : f32 to vector<1x110xf32>
    %534 = arith.subf %533, %532 : vector<1x110xf32>
    %535 = math.exp %534 : vector<1x110xf32>
    %cst_203 = arith.constant 1.000000e+00 : f32
    %536 = vector.broadcast %cst_203 : f32 to vector<1x110xf32>
    %537 = arith.addf %536, %535 : vector<1x110xf32>
    %538 = tpu.reciprocal %537 {approx = true} : vector<1x110xf32> -> vector<1x110xf32>
    %cst_204 = arith.constant 0.000000e+00 : f32
    %539 = vector.broadcast %cst_204 : f32 to vector<1x110xf32>
    %540 = arith.cmpf oge, %531, %539 : vector<1x110xf32>
    %541 = arith.mulf %535, %538 : vector<1x110xf32>
    %542 = arith.select %540, %538, %541 : vector<1x110xi1>, vector<1x110xf32>
    %c0_205 = arith.constant 0 : index
    %c0_206 = arith.constant 0 : index
    %c0_207 = arith.constant 0 : index
    %543 = vector.load %arg2[%c0_205, %c0_206, %c0_207] : memref<1x1x3xf32, #tpu.memory_space<vmem>>, vector<1x1x3xf32>
    %544 = vector.shape_cast %543 : vector<1x1x3xf32> to vector<1x3xf32>
    %c0_208 = arith.constant 0 : index
    %c0_209 = arith.constant 0 : index
    %545 = vector.load %arg24[%c0_208, %c0_209] : memref<3x16xf32, #tpu.memory_space<vmem>>, vector<3x16xf32>
    %cst_210 = arith.constant dense<0.000000e+00> : vector<1x16xf32>
    %546 = tpu.matmul %544, %545, %cst_210 {dimension_numbers = #tpu.dot_dimension_numbers<[1], [0], [0], [1], [0, 0, 1, 1], [], []>} : vector<1x3xf32>, vector<3x16xf32>, vector<1x16xf32> -> vector<1x16xf32>
    %c0_211 = arith.constant 0 : index
    %c0_212 = arith.constant 0 : index
    %547 = vector.load %arg25[%c0_211, %c0_212] : memref<1x16xf32, #tpu.memory_space<vmem>>, vector<1x16xf32>
    %548 = arith.addf %546, %547 : vector<1x16xf32>
    %549 = math.absf %548 : vector<1x16xf32>
    %cst_213 = arith.constant 0.000000e+00 : f32
    %550 = vector.broadcast %cst_213 : f32 to vector<1x16xf32>
    %551 = arith.subf %550, %549 : vector<1x16xf32>
    %552 = math.exp %551 : vector<1x16xf32>
    %cst_214 = arith.constant 1.000000e+00 : f32
    %553 = vector.broadcast %cst_214 : f32 to vector<1x16xf32>
    %554 = arith.addf %553, %552 : vector<1x16xf32>
    %555 = tpu.reciprocal %554 {approx = true} : vector<1x16xf32> -> vector<1x16xf32>
    %cst_215 = arith.constant 0.000000e+00 : f32
    %556 = vector.broadcast %cst_215 : f32 to vector<1x16xf32>
    %557 = arith.cmpf oge, %548, %556 : vector<1x16xf32>
    %558 = arith.mulf %552, %555 : vector<1x16xf32>
    %559 = arith.select %557, %555, %558 : vector<1x16xi1>, vector<1x16xf32>
    %c0_216 = arith.constant 0 : index
    %c0_217 = arith.constant 0 : index
    %c0_218 = arith.constant 0 : index
    %560 = vector.load %arg3[%c0_216, %c0_217, %c0_218] : memref<1x1x2xf32, #tpu.memory_space<vmem>>, vector<1x1x2xf32>
    %561 = vector.shape_cast %560 : vector<1x1x2xf32> to vector<1x2xf32>
    %c0_219 = arith.constant 0 : index
    %c0_220 = arith.constant 0 : index
    %562 = vector.load %arg26[%c0_219, %c0_220] : memref<2x128xf32, #tpu.memory_space<vmem>>, vector<2x128xf32>
    %cst_221 = arith.constant dense<0.000000e+00> : vector<1x128xf32>
    %563 = tpu.matmul %561, %562, %cst_221 {dimension_numbers = #tpu.dot_dimension_numbers<[1], [0], [0], [1], [0, 0, 1, 1], [], []>} : vector<1x2xf32>, vector<2x128xf32>, vector<1x128xf32> -> vector<1x128xf32>
    %c0_222 = arith.constant 0 : index
    %c0_223 = arith.constant 0 : index
    %564 = vector.load %arg27[%c0_222, %c0_223] : memref<16x128xf32, #tpu.memory_space<vmem>>, vector<16x128xf32>
    %cst_224 = arith.constant dense<0.000000e+00> : vector<1x128xf32>
    %565 = tpu.matmul %559, %564, %cst_224 {dimension_numbers = #tpu.dot_dimension_numbers<[1], [0], [0], [1], [0, 0, 1, 1], [], []>} : vector<1x16xf32>, vector<16x128xf32>, vector<1x128xf32> -> vector<1x128xf32>
    %566 = arith.addf %563, %565 : vector<1x128xf32>
    %c0_225 = arith.constant 0 : index
    %c0_226 = arith.constant 0 : index
    %567 = vector.load %arg28[%c0_225, %c0_226] : memref<110x128xf32, #tpu.memory_space<vmem>>, vector<110x128xf32>
    %cst_227 = arith.constant dense<0.000000e+00> : vector<1x128xf32>
    %568 = tpu.matmul %542, %567, %cst_227 {dimension_numbers = #tpu.dot_dimension_numbers<[1], [0], [0], [1], [0, 0, 1, 1], [], []>} : vector<1x110xf32>, vector<110x128xf32>, vector<1x128xf32> -> vector<1x128xf32>
    %569 = arith.addf %566, %568 : vector<1x128xf32>
    %c0_228 = arith.constant 0 : index
    %c0_229 = arith.constant 0 : index
    %570 = vector.load %arg29[%c0_228, %c0_229] : memref<1x128xf32, #tpu.memory_space<vmem>>, vector<1x128xf32>
    %571 = arith.addf %569, %570 : vector<1x128xf32>
    %c0_230 = arith.constant 0 : index
    %c0_231 = arith.constant 0 : index
    %c0_232 = arith.constant 0 : index
    %572 = vector.load %arg30[%c0_230, %c0_231, %c0_232] : memref<1x1x128xf32, #tpu.memory_space<vmem>>, vector<1x1x128xf32>
    %573 = vector.shape_cast %572 : vector<1x1x128xf32> to vector<1x128xf32>
    %574 = vector.shape_cast %571 : vector<1x128xf32> to vector<1x1x128xf32>
    tpu.vector_store %arg30[%c0_230, %c0_231, %c0_232], %574 {strides = array<i32>} : memref<1x1x128xf32, #tpu.memory_space<vmem>>, vector<1x1x128xf32>,
    return
  }
  func.func @transform_0(%arg0: i32) -> (i32, i32, i32, i32) {
    %c0_i32 = arith.constant 0 : i32
    %c0_i32_0 = arith.constant 0 : i32
    %c0_i32_1 = arith.constant 0 : i32
    %c0_i32_2 = arith.constant 0 : i32
    return %arg0, %c0_i32, %c0_i32_0, %c0_i32_1 : i32, i32, i32, i32
  }
  func.func @transform_1(%arg0: i32) -> (i32, i32, i32) {
    %c0_i32 = arith.constant 0 : i32
    %c0_i32_0 = arith.constant 0 : i32
    %c0_i32_1 = arith.constant 0 : i32
    return %arg0, %c0_i32, %c0_i32_0 : i32, i32, i32
  }
  func.func @transform_2(%arg0: i32) -> (i32, i32, i32) {
    %c0_i32 = arith.constant 0 : i32
    %c0_i32_0 = arith.constant 0 : i32
    %c0_i32_1 = arith.constant 0 : i32
    return %arg0, %c0_i32, %c0_i32_0 : i32, i32, i32
  }
  func.func @transform_3(%arg0: i32) -> (i32, i32, i32) {
    %c0_i32 = arith.constant 0 : i32
    %c0_i32_0 = arith.constant 0 : i32
    %c0_i32_1 = arith.constant 0 : i32
    %c0_i32_2 = arith.constant 0 : i32
    return %c0_i32, %c0_i32_0, %c0_i32_1 : i32, i32, i32
  }
  func.func @transform_4(%arg0: i32) -> (i32, i32) {
    %c0_i32 = arith.constant 0 : i32
    %c0_i32_0 = arith.constant 0 : i32
    %c0_i32_1 = arith.constant 0 : i32
    return %c0_i32, %c0_i32_0 : i32, i32
  }
  func.func @transform_5(%arg0: i32) -> (i32, i32) {
    %c0_i32 = arith.constant 0 : i32
    %c0_i32_0 = arith.constant 0 : i32
    %c0_i32_1 = arith.constant 0 : i32
    return %c0_i32, %c0_i32_0 : i32, i32
  }
  func.func @transform_6(%arg0: i32) -> (i32, i32) {
    %c0_i32 = arith.constant 0 : i32
    %c0_i32_0 = arith.constant 0 : i32
    %c0_i32_1 = arith.constant 0 : i32
    return %c0_i32, %c0_i32_0 : i32, i32
  }
  func.func @transform_7(%arg0: i32) -> (i32, i32) {
    %c0_i32 = arith.constant 0 : i32
    %c0_i32_0 = arith.constant 0 : i32
    %c0_i32_1 = arith.constant 0 : i32
    return %c0_i32, %c0_i32_0 : i32, i32
  }
  func.func @transform_8(%arg0: i32) -> (i32, i32) {
    %c0_i32 = arith.constant 0 : i32
    %c0_i32_0 = arith.constant 0 : i32
    %c0_i32_1 = arith.constant 0 : i32
    return %c0_i32, %c0_i32_0 : i32, i32
  }
  func.func @transform_9(%arg0: i32) -> (i32, i32) {
    %c0_i32 = arith.constant 0 : i32
    %c0_i32_0 = arith.constant 0 : i32
    %c0_i32_1 = arith.constant 0 : i32
    return %c0_i32, %c0_i32_0 : i32, i32
  }
  func.func @transform_10(%arg0: i32) -> (i32, i32) {
    %c0_i32 = arith.constant 0 : i32
    %c0_i32_0 = arith.constant 0 : i32
    %c0_i32_1 = arith.constant 0 : i32
    return %c0_i32, %c0_i32_0 : i32, i32
  }
  func.func @transform_11(%arg0: i32) -> (i32, i32) {
    %c0_i32 = arith.constant 0 : i32
    %c0_i32_0 = arith.constant 0 : i32
    %c0_i32_1 = arith.constant 0 : i32
    return %c0_i32, %c0_i32_0 : i32, i32
  }
  func.func @transform_12(%arg0: i32) -> (i32, i32) {
    %c0_i32 = arith.constant 0 : i32
    %c0_i32_0 = arith.constant 0 : i32
    %c0_i32_1 = arith.constant 0 : i32
    return %c0_i32, %c0_i32_0 : i32, i32
  }
  func.func @transform_13(%arg0: i32) -> (i32, i32) {
    %c0_i32 = arith.constant 0 : i32
    %c0_i32_0 = arith.constant 0 : i32
    %c0_i32_1 = arith.constant 0 : i32
    return %c0_i32, %c0_i32_0 : i32, i32
  }
  func.func @transform_14(%arg0: i32) -> (i32, i32) {
    %c0_i32 = arith.constant 0 : i32
    %c0_i32_0 = arith.constant 0 : i32
    %c0_i32_1 = arith.constant 0 : i32
    return %c0_i32, %c0_i32_0 : i32, i32
  }
  func.func @transform_15(%arg0: i32) -> (i32, i32) {
    %c0_i32 = arith.constant 0 : i32
    %c0_i32_0 = arith.constant 0 : i32
    %c0_i32_1 = arith.constant 0 : i32
    return %c0_i32, %c0_i32_0 : i32, i32
  }
  func.func @transform_16(%arg0: i32) -> (i32, i32) {
    %c0_i32 = arith.constant 0 : i32
    %c0_i32_0 = arith.constant 0 : i32
    %c0_i32_1 = arith.constant 0 : i32
    return %c0_i32, %c0_i32_0 : i32, i32
  }
  func.func @transform_17(%arg0: i32) -> (i32, i32) {
    %c0_i32 = arith.constant 0 : i32
    %c0_i32_0 = arith.constant 0 : i32
    %c0_i32_1 = arith.constant 0 : i32
    return %c0_i32, %c0_i32_0 : i32, i32
  }
  func.func @transform_18(%arg0: i32) -> (i32, i32) {
    %c0_i32 = arith.constant 0 : i32
    %c0_i32_0 = arith.constant 0 : i32
    %c0_i32_1 = arith.constant 0 : i32
    return %c0_i32, %c0_i32_0 : i32, i32
  }
  func.func @transform_19(%arg0: i32) -> (i32, i32) {
    %c0_i32 = arith.constant 0 : i32
    %c0_i32_0 = arith.constant 0 : i32
    %c0_i32_1 = arith.constant 0 : i32
    return %c0_i32, %c0_i32_0 : i32, i32
  }
  func.func @transform_20(%arg0: i32) -> (i32, i32) {
    %c0_i32 = arith.constant 0 : i32
    %c0_i32_0 = arith.constant 0 : i32
    %c0_i32_1 = arith.constant 0 : i32
    return %c0_i32, %c0_i32_0 : i32, i32
  }
  func.func @transform_21(%arg0: i32) -> (i32, i32) {
    %c0_i32 = arith.constant 0 : i32
    %c0_i32_0 = arith.constant 0 : i32
    %c0_i32_1 = arith.constant 0 : i32
    return %c0_i32, %c0_i32_0 : i32, i32
  }
  func.func @transform_22(%arg0: i32) -> (i32, i32) {
    %c0_i32 = arith.constant 0 : i32
    %c0_i32_0 = arith.constant 0 : i32
    %c0_i32_1 = arith.constant 0 : i32
    return %c0_i32, %c0_i32_0 : i32, i32
  }
  func.func @transform_23(%arg0: i32) -> (i32, i32) {
    %c0_i32 = arith.constant 0 : i32
    %c0_i32_0 = arith.constant 0 : i32
    %c0_i32_1 = arith.constant 0 : i32
    return %c0_i32, %c0_i32_0 : i32, i32
  }
  func.func @transform_24(%arg0: i32) -> (i32, i32) {
    %c0_i32 = arith.constant 0 : i32
    %c0_i32_0 = arith.constant 0 : i32
    %c0_i32_1 = arith.constant 0 : i32
    return %c0_i32, %c0_i32_0 : i32, i32
  }
  func.func @transform_25(%arg0: i32) -> (i32, i32) {
    %c0_i32 = arith.constant 0 : i32
    %c0_i32_0 = arith.constant 0 : i32
    %c0_i32_1 = arith.constant 0 : i32
    return %c0_i32, %c0_i32_0 : i32, i32
  }
  func.func @transform_26(%arg0: i32) -> (i32, i32) {
    %c0_i32 = arith.constant 0 : i32
    %c0_i32_0 = arith.constant 0 : i32
    %c0_i32_1 = arith.constant 0 : i32
    return %c0_i32, %c0_i32_0 : i32, i32
  }
  func.func @transform_27(%arg0: i32) -> (i32, i32) {
    %c0_i32 = arith.constant 0 : i32
    %c0_i32_0 = arith.constant 0 : i32
    %c0_i32_1 = arith.constant 0 : i32
    return %c0_i32, %c0_i32_0 : i32, i32
  }
  func.func @transform_28(%arg0: i32) -> (i32, i32) {
    %c0_i32 = arith.constant 0 : i32
    %c0_i32_0 = arith.constant 0 : i32
    %c0_i32_1 = arith.constant 0 : i32
    return %c0_i32, %c0_i32_0 : i32, i32
  }
  func.func @transform_29(%arg0: i32) -> (i32, i32, i32) {
    %c0_i32 = arith.constant 0 : i32
    %c0_i32_0 = arith.constant 0 : i32
    %c0_i32_1 = arith.constant 0 : i32
    return %arg0, %c0_i32, %c0_i32_0 : i32, i32, i32
  }
}

</mosaic_0001>

<llo_original>
// kernel: bsfn_ava_forward.2
$region0: #{bsfn_ava_forward.2}
  #allocation0 [shape = 'u32[]', space=smem, size = 0x4, offset = 0x4, fixed_abs, tag = 'smem constant byte address 0x4 - core index']
  #allocation1 [shape = 'u32[144,128]{1,0:T(1,128)}', space=vmem, size = 0x12000, scoped, tag = 'internal scratch']
  %s0 = inlined_call_operand.vmem [shape: f32[98,48], index: 0, kind: input, shape index: {}]
  %s1 = inlined_call_operand.vmem [shape: f32[48,96], index: 1, kind: input, shape index: {}]
  %s2 = inlined_call_operand.vmem [shape: f32[1,96], index: 2, kind: input, shape index: {}]
  %s3 = inlined_call_operand.vmem [shape: f32[98,96], index: 3, kind: output, shape index: {}]
  %s4 = sld [smem:[#allocation0]]
  $region22: #{bsfn_ava_forward.2} parent=0
    _
  %s6 = ssub.s32 1, %s4
  %s7 = scalar_select 0, %s6, %s4
  // Predicated region
  $region2: #{bsfn_ava_forward.2} parent=0 // pred_check
    _
  $region3: #{bsfn_ava_forward.2} parent=0 // pred_check_branch
    %9 = sbr.rel (0) target = $region5
  $region4: #{bsfn_ava_forward.2} parent=0 // pred_region
    _
  $region5: #{bsfn_ava_forward.2} parent=0 // pred_fallthru
    _
  // Predicated region
  $region6: #{bsfn_ava_forward.2} parent=0 // pred_check
    _
  $region7: #{bsfn_ava_forward.2} parent=0 // pred_check_branch
    %11 = sbr.rel (0) target = $region9
  $region8: #{bsfn_ava_forward.2} parent=0 // pred_region
    _
  $region9: #{bsfn_ava_forward.2} parent=0 // pred_fallthru
    _
  // Predicated region
  $region10: #{bsfn_ava_forward.2} parent=0 // pred_check
    _
  $region11: #{bsfn_ava_forward.2} parent=0 // pred_check_branch
    %13 = sbr.rel (0) target = $region13
  $region12: #{bsfn_ava_forward.2} parent=0 // pred_region
    _
  $region13: #{bsfn_ava_forward.2} parent=0 // pred_fallthru
    _
  %v14 = vld [vmem:[%s0] sm:$0xff]
  %v15 = vld [vmem:[%s0 + $0x8] sm:$0xff]
  %v16 = vld [vmem:[%s0 + $0x10] sm:$0xff]
  %v17 = vld [vmem:[%s0 + $0x18] sm:$0xff]
  %v18 = vld [vmem:[%s0 + $0x20] sm:$0xff]
  %v19 = vld [vmem:[%s0 + $0x28] sm:$0xff]
  %v20 = vld [vmem:[%s0 + $0x30] sm:$0xff]
  %v21 = vld [vmem:[%s0 + $0x38] sm:$0xff]
  %v22 = vld [vmem:[%s0 + $0x40] sm:$0xff]
  %v23 = vld [vmem:[%s0 + $0x48] sm:$0xff]
  %v24 = vld [vmem:[%s0 + $0x50] sm:$0xff]
  %v25 = vld [vmem:[%s0 + $0x58] sm:$0xff]
  %v26 = vld [vmem:[%s0 + $0x60] sm:$0x3]
  %v27 = vld [vmem:[%s1] sm:$0xff]
  %v28 = vld [vmem:[%s1 + $0x8] sm:$0xff]
  %v29 = vld [vmem:[%s1 + $0x10] sm:$0xff]
  %v30 = vld [vmem:[%s1 + $0x18] sm:$0xff]
  %v31 = vld [vmem:[%s1 + $0x20] sm:$0xff]
  %v32 = vld [vmem:[%s1 + $0x28] sm:$0xff]
  %v33 = vld [vmem:[%s2] sm:$0x1]
  %v35 = vlaneseq
  %v36 = vshrl.u32 %v35, 7
  %v37 = vsub.s32 0, %v36
  %v38 = vrot.slane %v33, %v37
  %vm40 = vcmask 392192
  %v42 = vsel %vm40, %v14, 0
  %v45 = vsel %vm40, %v15, 0
  %v48 = vsel %vm40, %v16, 0
  %v51 = vsel %vm40, %v17, 0
  %v54 = vsel %vm40, %v18, 0
  %v57 = vsel %vm40, %v19, 0
  %v60 = vsel %vm40, %v20, 0
  %v63 = vsel %vm40, %v21, 0
  %v66 = vsel %vm40, %v22, 0
  %v69 = vsel %vm40, %v23, 0
  %v72 = vsel %vm40, %v24, 0
  %v75 = vsel %vm40, %v25, 0
  %v78 = vsel %vm40, %v26, 0
  %80 = vmatprep.subr.mxu0 0.0
  %81 = vmatpush1.msra.mxu0 %v27
  %82 = vmatprep.subr.mxu0 0.0
  %83 = vmatpush1.msra.mxu0 %v28
  %84 = vmatprep.subr.mxu0 0.0
  %85 = vmatpush1.msra.mxu0 %v29
  %86 = vmatprep.subr.mxu0 0.0
  %87 = vmatpush1.msra.mxu0 %v30
  %88 = vmatprep.subr.mxu0 0.0
  %89 = vmatpush1.msra.mxu0 %v31
  %90 = vmatprep.subr.mxu0 0.0
  %91 = vmatpush1.msra.mxu0 %v32
  %92 = vmatprep.subr.mxu0 0.0
  %93 = vmatpush1.msra.mxu0 0.0
  %94 = vmatprep.subr.mxu0 0.0
  %95 = vmatpush1.msra.mxu0 0.0
  %96 = vmatprep.subr.mxu0 0.0
  %97 = vmatpush1.msra.mxu0 0.0
  %98 = vmatprep.subr.mxu0 0.0
  %99 = vmatpush1.msra.mxu0 0.0
  %100 = vmatprep.subr.mxu0 0.0
  %101 = vmatpush1.msra.mxu0 0.0
  %102 = vmatprep.subr.mxu0 0.0
  %103 = vmatpush1.msra.mxu0 0.0
  %104 = vmatprep.subr.mxu0 0.0
  %105 = vmatpush1.msra.mxu0 0.0
  %106 = vmatprep.subr.mxu0 0.0
  %107 = vmatpush1.msra.mxu0 0.0
  %108 = vmatprep.subr.mxu0 0.0
  %109 = vmatpush1.msra.mxu0 0.0
  %110 = vmatprep.subr.mxu0 0.0
  %111 = vmatpush1.msra.mxu0 0.0
  %112 = vmatprep.subr.mxu0 0.0
  %113 = vmatpush1.msra.mxu0 0.0
  %114 = vmatprep.subr.mxu0 0.0
  %115 = vmatpush1.msra.mxu0 0.0
  %116 = vmatprep.subr.mxu0 0.0
  %117 = vmatpush1.msra.mxu0 0.0
  %118 = vmatprep.subr.mxu0 0.0
  %119 = vmatpush1.msra.mxu0 0.0
  %120 = vmatprep.subr.mxu0 0.0
  %121 = vmatpush1.msra.mxu0 0.0
  %122 = vmatprep.subr.mxu0 0.0
  %123 = vmatpush1.msra.mxu0 0.0
  %124 = vmatprep.subr.mxu0 0.0
  %125 = vmatpush1.msra.mxu0 0.0
  %126 = vmatprep.subr.mxu0 0.0
  %127 = vmatpush1.msra.mxu0 0.0
  %128 = vmatprep.subr.mxu0 0.0
  %129 = vmatpush1.msra.mxu0 0.0
  %130 = vmatprep.subr.mxu0 0.0
  %131 = vmatpush1.msra.mxu0 0.0
  %132 = vmatprep.subr.mxu0 0.0
  %133 = vmatpush1.msra.mxu0 0.0
  %134 = vmatprep.subr.mxu0 0.0
  %135 = vmatpush1.msra.mxu0 0.0
  %136 = vmatprep.subr.mxu0 0.0
  %137 = vmatpush1.msra.mxu0 0.0
  %138 = vmatprep.subr.mxu0 0.0
  %139 = vmatpush1.msra.mxu0 0.0
  %140 = vmatprep.subr.mxu0 0.0
  %141 = vmatpush1.msra.mxu0 0.0
  %142 = vmatprep.subr.mxu0 0.0
  %143 = vmatpush1.msra.mxu0 0.0
  %144 = vmatprep.mubr.f32.mxu0 0.0
  %145 = vmatmul.mubr.f32.gmra.mrb[0].mxu0 %v42
  %v146 = vpop.f32.mrb[0].mxu0
  %v147 = vadd.f32 %v38, %v146
  %v148 = vpop.f32.mrb[0].mxu0
  %149 = vmatprep.mubr.f32.mxu0 0.0
  %150 = vmatmul.mubr.f32.gmra.mrb[0].mxu0 %v45
  %v151 = vpop.f32.mrb[0].mxu0
  %v152 = vadd.f32 %v38, %v151
  %v153 = vpop.f32.mrb[0].mxu0
  %154 = vmatprep.mubr.f32.mxu0 0.0
  %155 = vmatmul.mubr.f32.gmra.mrb[0].mxu0 %v48
  %v156 = vpop.f32.mrb[0].mxu0
  %v157 = vadd.f32 %v38, %v156
  %v158 = vpop.f32.mrb[0].mxu0
  %159 = vmatprep.mubr.f32.mxu0 0.0
  %160 = vmatmul.mubr.f32.gmra.mrb[0].mxu0 %v51
  %v161 = vpop.f32.mrb[0].mxu0
  %v162 = vadd.f32 %v38, %v161
  %v163 = vpop.f32.mrb[0].mxu0
  %164 = vmatprep.mubr.f32.mxu0 0.0
  %165 = vmatmul.mubr.f32.gmra.mrb[0].mxu0 %v54
  %v166 = vpop.f32.mrb[0].mxu0
  %v167 = vadd.f32 %v38, %v166
  %v168 = vpop.f32.mrb[0].mxu0
  %169 = vmatprep.mubr.f32.mxu0 0.0
  %170 = vmatmul.mubr.f32.gmra.mrb[0].mxu0 %v57
  %v171 = vpop.f32.mrb[0].mxu0
  %v172 = vadd.f32 %v38, %v171
  %v173 = vpop.f32.mrb[0].mxu0
  %174 = vmatprep.mubr.f32.mxu0 0.0
  %175 = vmatmul.mubr.f32.gmra.mrb[0].mxu0 %v60
  %v176 = vpop.f32.mrb[0].mxu0
  %v177 = vadd.f32 %v38, %v176
  %v178 = vpop.f32.mrb[0].mxu0
  %179 = vmatprep.mubr.f32.mxu0 0.0
  %180 = vmatmul.mubr.f32.gmra.mrb[0].mxu0 %v63
  %v181 = vpop.f32.mrb[0].mxu0
  %v182 = vadd.f32 %v38, %v181
  %v183 = vpop.f32.mrb[0].mxu0
  %184 = vmatprep.mubr.f32.mxu0 0.0
  %185 = vmatmul.mubr.f32.gmra.mrb[0].mxu0 %v66
  %v186 = vpop.f32.mrb[0].mxu0
  %v187 = vadd.f32 %v38, %v186
  %v188 = vpop.f32.mrb[0].mxu0
  %189 = vmatprep.mubr.f32.mxu0 0.0
  %190 = vmatmul.mubr.f32.gmra.mrb[0].mxu0 %v69
  %v191 = vpop.f32.mrb[0].mxu0
  %v192 = vadd.f32 %v38, %v191
  %v193 = vpop.f32.mrb[0].mxu0
  %194 = vmatprep.mubr.f32.mxu0 0.0
  %195 = vmatmul.mubr.f32.gmra.mrb[0].mxu0 %v72
  %v196 = vpop.f32.mrb[0].mxu0
  %v197 = vadd.f32 %v38, %v196
  %v198 = vpop.f32.mrb[0].mxu0
  %199 = vmatprep.mubr.f32.mxu0 0.0
  %200 = vmatmul.mubr.f32.gmra.mrb[0].mxu0 %v75
  %v201 = vpop.f32.mrb[0].mxu0
  %v202 = vadd.f32 %v38, %v201
  %v203 = vpop.f32.mrb[0].mxu0
  %204 = vmatprep.mubr.f32.mxu0 0.0
  %205 = vmatmul.mubr.f32.gmra.mrb[0].mxu0 %v78
  %v206 = vpop.f32.mrb[0].mxu0
  %v207 = vadd.f32 %v38, %v206
  %v208 = vpop.f32.mrb[0].mxu0
  %209 = vdwg.mxu0
  %vm210 = vcmask 785408
  %211 = vst.msk [vmem:[%s3] sm:$0xff] %vm210, %v147
  %212 = vst.msk [vmem:[%s3 + $0x8] sm:$0xff] %vm210, %v152
  %213 = vst.msk [vmem:[%s3 + $0x10] sm:$0xff] %vm210, %v157
  %214 = vst.msk [vmem:[%s3 + $0x18] sm:$0xff] %vm210, %v162
  %215 = vst.msk [vmem:[%s3 + $0x20] sm:$0xff] %vm210, %v167
  %216 = vst.msk [vmem:[%s3 + $0x28] sm:$0xff] %vm210, %v172
  %217 = vst.msk [vmem:[%s3 + $0x30] sm:$0xff] %vm210, %v177
  %218 = vst.msk [vmem:[%s3 + $0x38] sm:$0xff] %vm210, %v182
  %219 = vst.msk [vmem:[%s3 + $0x40] sm:$0xff] %vm210, %v187
  %220 = vst.msk [vmem:[%s3 + $0x48] sm:$0xff] %vm210, %v192
  %221 = vst.msk [vmem:[%s3 + $0x50] sm:$0xff] %vm210, %v197
  %222 = vst.msk [vmem:[%s3 + $0x58] sm:$0xff] %vm210, %v202
  %vm223 = vcmask 779264
  %224 = vst.msk [vmem:[%s3 + $0x60] sm:$0x3] %vm223, %v207
  // Predicated region
  $region14: #{bsfn_ava_forward.2} parent=0 // pred_check
    _
  $region15: #{bsfn_ava_forward.2} parent=0 // pred_check_branch
    %226 = sbr.rel (0) target = $region17
  $region16: #{bsfn_ava_forward.2} parent=0 // pred_region
    _
  $region17: #{bsfn_ava_forward.2} parent=0 // pred_fallthru
    _
  // Predicated region
  $region18: #{bsfn_ava_forward.2} parent=0 // pred_check
    _
  $region19: #{bsfn_ava_forward.2} parent=0 // pred_check_branch
    %228 = sbr.rel (0) target = $region21
  $region20: #{bsfn_ava_forward.2} parent=0 // pred_region
    _
  $region21: #{bsfn_ava_forward.2} parent=0 // pred_fallthru
    _

// kernel: bsfn_ava_forward.3
$region0: #{bsfn_ava_forward.3}
  #allocation0 [shape = 'u32[]', space=smem, size = 0x4, offset = 0x4, fixed_abs, tag = 'smem constant byte address 0x4 - core index']
  #allocation1 [shape = 'u32[144,128]{1,0:T(1,128)}', space=vmem, size = 0x12000, scoped, tag = 'internal scratch']
  #allocation2 [shape = 'bf16[1,3136]{1,0:T(2,128)(2,1)}', space=vmem, size = 0x3200, scoped, tag = 'scratch operand']
  %s0 = inlined_call_operand.smem [shape: u32[30], index: -1, kind: input, shape index: {}]
  %s1 = sld [smem:[%s0]]
  %s2 = scalar_lea.smem %s0, 1
  %s3 = sld [smem:[%s2]]
  %s4 = scalar_lea.smem %s0, 2
  %s5 = sld [smem:[%s4]]
  %s6 = scalar_lea.smem %s0, 3
  %s7 = sld [smem:[%s6]]
  %s8 = scalar_lea.smem %s0, 4
  %s9 = sld [smem:[%s8]]
  %s10 = scalar_lea.smem %s0, 5
  %s11 = sld [smem:[%s10]]
  %s12 = scalar_lea.smem %s0, 6
  %s13 = sld [smem:[%s12]]
  %s14 = scalar_lea.smem %s0, 7
  %s15 = sld [smem:[%s14]]
  %s16 = scalar_lea.smem %s0, 8
  %s17 = sld [smem:[%s16]]
  %s18 = scalar_lea.smem %s0, 9
  %s19 = sld [smem:[%s18]]
  %s20 = scalar_lea.smem %s0, 10
  %s21 = sld [smem:[%s20]]
  %s22 = scalar_lea.smem %s0, 11
  %s23 = sld [smem:[%s22]]
  %s24 = scalar_lea.smem %s0, 12
  %s25 = sld [smem:[%s24]]
  %s26 = scalar_lea.smem %s0, 13
  %s27 = sld [smem:[%s26]]
  %s28 = scalar_lea.smem %s0, 14
  %s29 = sld [smem:[%s28]]
  %s30 = scalar_lea.smem %s0, 15
  %s31 = sld [smem:[%s30]]
  %s32 = scalar_lea.smem %s0, 16
  %s33 = sld [smem:[%s32]]
  %s34 = scalar_lea.smem %s0, 17
  %s35 = sld [smem:[%s34]]
  %s36 = scalar_lea.smem %s0, 18
  %s37 = sld [smem:[%s36]]
  %s38 = scalar_lea.smem %s0, 19
  %s39 = sld [smem:[%s38]]
  %s40 = scalar_lea.smem %s0, 20
  %s41 = sld [smem:[%s40]]
  %s42 = scalar_lea.smem %s0, 21
  %s43 = sld [smem:[%s42]]
  %s44 = scalar_lea.smem %s0, 22
  %s45 = sld [smem:[%s44]]
  %s46 = scalar_lea.smem %s0, 23
  %s47 = sld [smem:[%s46]]
  %s48 = scalar_lea.smem %s0, 24
  %s49 = sld [smem:[%s48]]
  %s50 = scalar_lea.smem %s0, 25
  %s51 = sld [smem:[%s50]]
  %s52 = scalar_lea.smem %s0, 26
  %s53 = sld [smem:[%s52]]
  %s54 = scalar_lea.smem %s0, 27
  %s55 = sld [smem:[%s54]]
  %s56 = scalar_lea.smem %s0, 28
  %s57 = sld [smem:[%s56]]
  %s58 = scalar_lea.smem %s0, 29
  %s59 = sld [smem:[%s58]]
  %s60 = sld [smem:[#allocation0]]
  $region149: #{bsfn_ava_forward.3} parent=0
    _
  %s62 = ssub.s32 1, %s60
  %s63 = scalar_select 0, %s62, %s60
  $region1: #{bsfn_ava_forward.3} parent=0
    #allocation3 [shape = 'u8[1024]{0}', space=vmem, size = 0x400, scoped, tag = 'output window, operand 0']
    #allocation4 [shape = 's32[2]{0}', space=sflag, size = 0x8, scoped, tag = 'scoped memory for bsfn_ava_forward.3']
    %64 = vsyncpa [#allocation4], 0
    %s65 = scalar_lea.sflag [#allocation4], 1
    %66 = vsyncpa %s65, 0
    loop: start=0, step=1, limit=4
    $region2: #{bsfn_ava_forward.3} parent=1 // loop_pre_header
      _
    $region3: #{bsfn_ava_forward.3} parent=1 // loop_header
      %s68 = sphi 0, %s72
      %p69 = scmp.ge.s32.totalorder %s68, 4
      %s78 = sphi 0, %s80
      %s81 = sphi 0, %s78
      %s82 = sphi 0, %s81
      %s98 = sphi 0, %s82
      %s104 = sphi 0, %s106
      %s107 = sphi 0, %s104
      %s108 = sphi 0, %s107
      %s124 = sphi 0, %s108
      %s130 = sphi 0, %s132
      %s133 = sphi 0, %s130
      %s134 = sphi 0, %s133
      %s150 = sphi 0, %s134
      %s154 = sphi 0, %s154
      %s156 = sphi 0, %s154
      %s157 = sphi 0, %s156
      %s171 = sphi 0, %s157
      %s175 = sphi 0, %s175
      %s177 = sphi 0, %s175
      %s178 = sphi 0, %s177
      %s192 = sphi 0, %s178
      %s196 = sphi 0, %s196
      %s198 = sphi 0, %s196
      %s199 = sphi 0, %s198
      %s213 = sphi 0, %s199
      %s217 = sphi 0, %s217
      %s219 = sphi 0, %s217
      %s220 = sphi 0, %s219
      %s234 = sphi 0, %s220
      %s238 = sphi 0, %s238
      %s240 = sphi 0, %s238
      %s241 = sphi 0, %s240
      %s255 = sphi 0, %s241
      %s259 = sphi 0, %s259
      %s261 = sphi 0, %s259
      %s262 = sphi 0, %s261
      %s276 = sphi 0, %s262
      %s280 = sphi 0, %s280
      %s282 = sphi 0, %s280
      %s283 = sphi 0, %s282
      %s297 = sphi 0, %s283
      %s301 = sphi 0, %s301
      %s303 = sphi 0, %s301
      %s304 = sphi 0, %s303
      %s318 = sphi 0, %s304
      %s322 = sphi 0, %s322
      %s324 = sphi 0, %s322
      %s325 = sphi 0, %s324
      %s339 = sphi 0, %s325
      %s343 = sphi 0, %s343
      %s345 = sphi 0, %s343
      %s346 = sphi 0, %s345
      %s360 = sphi 0, %s346
      %s364 = sphi 0, %s364
      %s366 = sphi 0, %s364
      %s367 = sphi 0, %s366
      %s381 = sphi 0, %s367
      %s385 = sphi 0, %s385
      %s387 = sphi 0, %s385
      %s388 = sphi 0, %s387
      %s402 = sphi 0, %s388
      %s406 = sphi 0, %s406
      %s408 = sphi 0, %s406
      %s409 = sphi 0, %s408
      %s423 = sphi 0, %s409
      %s427 = sphi 0, %s427
      %s429 = sphi 0, %s427
      %s430 = sphi 0, %s429
      %s444 = sphi 0, %s430
      %s448 = sphi 0, %s448
      %s450 = sphi 0, %s448
      %s451 = sphi 0, %s450
      %s465 = sphi 0, %s451
      %s469 = sphi 0, %s469
      %s471 = sphi 0, %s469
      %s472 = sphi 0, %s471
      %s486 = sphi 0, %s472
      %s490 = sphi 0, %s490
      %s492 = sphi 0, %s490
      %s493 = sphi 0, %s492
      %s507 = sphi 0, %s493
      %s511 = sphi 0, %s511
      %s513 = sphi 0, %s511
      %s514 = sphi 0, %s513
      %s528 = sphi 0, %s514
      %s532 = sphi 0, %s532
      %s534 = sphi 0, %s532
      %s535 = sphi 0, %s534
      %s549 = sphi 0, %s535
      %s553 = sphi 0, %s553
      %s555 = sphi 0, %s553
      %s556 = sphi 0, %s555
      %s570 = sphi 0, %s556
      %s574 = sphi 0, %s574
      %s576 = sphi 0, %s574
      %s577 = sphi 0, %s576
      %s591 = sphi 0, %s577
      %s595 = sphi 0, %s595
      %s597 = sphi 0, %s595
      %s598 = sphi 0, %s597
      %s612 = sphi 0, %s598
      %s616 = sphi 0, %s616
      %s618 = sphi 0, %s616
      %s619 = sphi 0, %s618
      %s633 = sphi 0, %s619
      %s637 = sphi 0, %s637
      %s639 = sphi 0, %s637
      %s640 = sphi 0, %s639
      %s654 = sphi 0, %s640
      %s658 = sphi 0, %s658
      %s660 = sphi 0, %s658
      %s661 = sphi 0, %s660
      %s675 = sphi 0, %s661
      %s679 = sphi 0, %s679
      %s681 = sphi 0, %s679
      %s682 = sphi 0, %s681
      %s696 = sphi 0, %s682
      %s702 = sphi 0, %s704
      %s705 = sphi 0, %s702
      %s706 = sphi 0, %s705
      %s722 = sphi 0, %s706
    $region4: #{bsfn_ava_forward.3} parent=1 // loop_header_branch
      %71 = sbr.rel (%p69) target = $region8
    $region5: #{bsfn_ava_forward.3} parent=1 // loop_body
      %s73 = ssub.s32 %s68, 1
      %s74 = ssub.s32 %s68, 2
      %s75 = sadd.s32 %s68, 1
      %s76 = ssub.s32 %s68, %s75
      %p77 = scmp.eq.s32.totalorder %s76, 0
      %s79 = sadd.s32 %s78, 1
      %s80 = scalar_select %p77, %s78, %s79
      %p83 = pneg %p77
      %p84 = scmp.eq.s32.totalorder %s68, 1
      %p85 = por %p83, %p84
      %p86 = scmp.ne.s32.totalorder %s78, %s81
      %p87 = scmp.eq.s32.totalorder %s68, 0
      %p88 = por %p86, %p87
      %p89 = scmp.ne.s32.totalorder %s78, %s81
      %p90 = scmp.eq.s32.totalorder %s73, 1
      %p91 = por %p89, %p90
      %p92 = scmp.ne.s32.totalorder %s81, %s82
      %p93 = scmp.eq.s32.totalorder %s73, 0
      %p94 = por %p92, %p93
      %p95 = scmp.ne.s32.totalorder %s81, %s82
      %p96 = scmp.eq.s32.totalorder %s74, 1
      %p97 = por %p95, %p96
      %p99 = scmp.ne.s32.totalorder %s82, %s98
      %p100 = scmp.eq.s32.totalorder %s74, 0
      %p101 = por %p99, %p100
      %s102 = ssub.s32 %s68, %s75
      %p103 = scmp.eq.s32.totalorder %s102, 0
      %s105 = sadd.s32 %s104, 1
      %s106 = scalar_select %p103, %s104, %s105
      %p109 = pneg %p103
      %p110 = scmp.eq.s32.totalorder %s68, 1
      %p111 = por %p109, %p110
      %p112 = scmp.ne.s32.totalorder %s104, %s107
      %p113 = scmp.eq.s32.totalorder %s68, 0
      %p114 = por %p112, %p113
      %p115 = scmp.ne.s32.totalorder %s104, %s107
      %p116 = scmp.eq.s32.totalorder %s73, 1
      %p117 = por %p115, %p116
      %p118 = scmp.ne.s32.totalorder %s107, %s108
      %p119 = scmp.eq.s32.totalorder %s73, 0
      %p120 = por %p118, %p119
      %p121 = scmp.ne.s32.totalorder %s107, %s108
      %p122 = scmp.eq.s32.totalorder %s74, 1
      %p123 = por %p121, %p122
      %p125 = scmp.ne.s32.totalorder %s108, %s124
      %p126 = scmp.eq.s32.totalorder %s74, 0
      %p127 = por %p125, %p126
      %s128 = ssub.s32 %s68, %s75
      %p129 = scmp.eq.s32.totalorder %s128, 0
      %s131 = sadd.s32 %s130, 1
      %s132 = scalar_select %p129, %s130, %s131
      %p135 = pneg %p129
      %p136 = scmp.eq.s32.totalorder %s68, 1
      %p137 = por %p135, %p136
      %p138 = scmp.ne.s32.totalorder %s130, %s133
      %p139 = scmp.eq.s32.totalorder %s68, 0
      %p140 = por %p138, %p139
      %p141 = scmp.ne.s32.totalorder %s130, %s133
      %p142 = scmp.eq.s32.totalorder %s73, 1
      %p143 = por %p141, %p142
      %p144 = scmp.ne.s32.totalorder %s133, %s134
      %p145 = scmp.eq.s32.totalorder %s73, 0
      %p146 = por %p144, %p145
      %p147 = scmp.ne.s32.totalorder %s133, %s134
      %p148 = scmp.eq.s32.totalorder %s74, 1
      %p149 = por %p147, %p148
      %p151 = scmp.ne.s32.totalorder %s134, %s150
      %p152 = scmp.eq.s32.totalorder %s74, 0
      %p153 = por %p151, %p152
      %s155 = sadd.s32 %s154, 1
      %p158 = scmp.eq.s32.totalorder %s68, 1
      %p159 = scmp.ne.s32.totalorder %s154, %s156
      %p160 = scmp.eq.s32.totalorder %s68, 0
      %p161 = por %p159, %p160
      %p162 = scmp.ne.s32.totalorder %s154, %s156
      %p163 = scmp.eq.s32.totalorder %s73, 1
      %p164 = por %p162, %p163
      %p165 = scmp.ne.s32.totalorder %s156, %s157
      %p166 = scmp.eq.s32.totalorder %s73, 0
      %p167 = por %p165, %p166
      %p168 = scmp.ne.s32.totalorder %s156, %s157
      %p169 = scmp.eq.s32.totalorder %s74, 1
      %p170 = por %p168, %p169
      %p172 = scmp.ne.s32.totalorder %s157, %s171
      %p173 = scmp.eq.s32.totalorder %s74, 0
      %p174 = por %p172, %p173
      %s176 = sadd.s32 %s175, 1
      %p179 = scmp.eq.s32.totalorder %s68, 1
      %p180 = scmp.ne.s32.totalorder %s175, %s177
      %p181 = scmp.eq.s32.totalorder %s68, 0
      %p182 = por %p180, %p181
      %p183 = scmp.ne.s32.totalorder %s175, %s177
      %p184 = scmp.eq.s32.totalorder %s73, 1
      %p185 = por %p183, %p184
      %p186 = scmp.ne.s32.totalorder %s177, %s178
      %p187 = scmp.eq.s32.totalorder %s73, 0
      %p188 = por %p186, %p187
      %p189 = scmp.ne.s32.totalorder %s177, %s178
      %p190 = scmp.eq.s32.totalorder %s74, 1
      %p191 = por %p189, %p190
      %p193 = scmp.ne.s32.totalorder %s178, %s192
      %p194 = scmp.eq.s32.totalorder %s74, 0
      %p195 = por %p193, %p194
      %s197 = sadd.s32 %s196, 1
      %p200 = scmp.eq.s32.totalorder %s68, 1
      %p201 = scmp.ne.s32.totalorder %s196, %s198
      %p202 = scmp.eq.s32.totalorder %s68, 0
      %p203 = por %p201, %p202
      %p204 = scmp.ne.s32.totalorder %s196, %s198
      %p205 = scmp.eq.s32.totalorder %s73, 1
      %p206 = por %p204, %p205
      %p207 = scmp.ne.s32.totalorder %s198, %s199
      %p208 = scmp.eq.s32.totalorder %s73, 0
      %p209 = por %p207, %p208
      %p210 = scmp.ne.s32.totalorder %s198, %s199
      %p211 = scmp.eq.s32.totalorder %s74, 1
      %p212 = por %p210, %p211
      %p214 = scmp.ne.s32.totalorder %s199, %s213
      %p215 = scmp.eq.s32.totalorder %s74, 0
      %p216 = por %p214, %p215
      %s218 = sadd.s32 %s217, 1
      %p221 = scmp.eq.s32.totalorder %s68, 1
      %p222 = scmp.ne.s32.totalorder %s217, %s219
      %p223 = scmp.eq.s32.totalorder %s68, 0
      %p224 = por %p222, %p223
      %p225 = scmp.ne.s32.totalorder %s217, %s219
      %p226 = scmp.eq.s32.totalorder %s73, 1
      %p227 = por %p225, %p226
      %p228 = scmp.ne.s32.totalorder %s219, %s220
      %p229 = scmp.eq.s32.totalorder %s73, 0
      %p230 = por %p228, %p229
      %p231 = scmp.ne.s32.totalorder %s219, %s220
      %p232 = scmp.eq.s32.totalorder %s74, 1
      %p233 = por %p231, %p232
      %p235 = scmp.ne.s32.totalorder %s220, %s234
      %p236 = scmp.eq.s32.totalorder %s74, 0
      %p237 = por %p235, %p236
      %s239 = sadd.s32 %s238, 1
      %p242 = scmp.eq.s32.totalorder %s68, 1
      %p243 = scmp.ne.s32.totalorder %s238, %s240
      %p244 = scmp.eq.s32.totalorder %s68, 0
      %p245 = por %p243, %p244
      %p246 = scmp.ne.s32.totalorder %s238, %s240
      %p247 = scmp.eq.s32.totalorder %s73, 1
      %p248 = por %p246, %p247
      %p249 = scmp.ne.s32.totalorder %s240, %s241
      %p250 = scmp.eq.s32.totalorder %s73, 0
      %p251 = por %p249, %p250
      %p252 = scmp.ne.s32.totalorder %s240, %s241
      %p253 = scmp.eq.s32.totalorder %s74, 1
      %p254 = por %p252, %p253
      %p256 = scmp.ne.s32.totalorder %s241, %s255
      %p257 = scmp.eq.s32.totalorder %s74, 0
      %p258 = por %p256, %p257
      %s260 = sadd.s32 %s259, 1
      %p263 = scmp.eq.s32.totalorder %s68, 1
      %p264 = scmp.ne.s32.totalorder %s259, %s261
      %p265 = scmp.eq.s32.totalorder %s68, 0
      %p266 = por %p264, %p265
      %p267 = scmp.ne.s32.totalorder %s259, %s261
      %p268 = scmp.eq.s32.totalorder %s73, 1
      %p269 = por %p267, %p268
      %p270 = scmp.ne.s32.totalorder %s261, %s262
      %p271 = scmp.eq.s32.totalorder %s73, 0
      %p272 = por %p270, %p271
      %p273 = scmp.ne.s32.totalorder %s261, %s262
      %p274 = scmp.eq.s32.totalorder %s74, 1
      %p275 = por %p273, %p274
      %p277 = scmp.ne.s32.totalorder %s262, %s276
      %p278 = scmp.eq.s32.totalorder %s74, 0
      %p279 = por %p277, %p278
      %s281 = sadd.s32 %s280, 1
      %p284 = scmp.eq.s32.totalorder %s68, 1
      %p285 = scmp.ne.s32.totalorder %s280, %s282
      %p286 = scmp.eq.s32.totalorder %s68, 0
      %p287 = por %p285, %p286
      %p288 = scmp.ne.s32.totalorder %s280, %s282
      %p289 = scmp.eq.s32.totalorder %s73, 1
      %p290 = por %p288, %p289
      %p291 = scmp.ne.s32.totalorder %s282, %s283
      %p292 = scmp.eq.s32.totalorder %s73, 0
      %p293 = por %p291, %p292
      %p294 = scmp.ne.s32.totalorder %s282, %s283
      %p295 = scmp.eq.s32.totalorder %s74, 1
      %p296 = por %p294, %p295
      %p298 = scmp.ne.s32.totalorder %s283, %s297
      %p299 = scmp.eq.s32.totalorder %s74, 0
      %p300 = por %p298, %p299
      %s302 = sadd.s32 %s301, 1
      %p305 = scmp.eq.s32.totalorder %s68, 1
      %p306 = scmp.ne.s32.totalorder %s301, %s303
      %p307 = scmp.eq.s32.totalorder %s68, 0
      %p308 = por %p306, %p307
      %p309 = scmp.ne.s32.totalorder %s301, %s303
      %p310 = scmp.eq.s32.totalorder %s73, 1
      %p311 = por %p309, %p310
      %p312 = scmp.ne.s32.totalorder %s303, %s304
      %p313 = scmp.eq.s32.totalorder %s73, 0
      %p314 = por %p312, %p313
      %p315 = scmp.ne.s32.totalorder %s303, %s304
      %p316 = scmp.eq.s32.totalorder %s74, 1
      %p317 = por %p315, %p316
      %p319 = scmp.ne.s32.totalorder %s304, %s318
      %p320 = scmp.eq.s32.totalorder %s74, 0
      %p321 = por %p319, %p320
      %s323 = sadd.s32 %s322, 1
      %p326 = scmp.eq.s32.totalorder %s68, 1
      %p327 = scmp.ne.s32.totalorder %s322, %s324
      %p328 = scmp.eq.s32.totalorder %s68, 0
      %p329 = por %p327, %p328
      %p330 = scmp.ne.s32.totalorder %s322, %s324
      %p331 = scmp.eq.s32.totalorder %s73, 1
      %p332 = por %p330, %p331
      %p333 = scmp.ne.s32.totalorder %s324, %s325
      %p334 = scmp.eq.s32.totalorder %s73, 0
      %p335 = por %p333, %p334
      %p336 = scmp.ne.s32.totalorder %s324, %s325
      %p337 = scmp.eq.s32.totalorder %s74, 1
      %p338 = por %p336, %p337
      %p340 = scmp.ne.s32.totalorder %s325, %s339
      %p341 = scmp.eq.s32.totalorder %s74, 0
      %p342 = por %p340, %p341
      %s344 = sadd.s32 %s343, 1
      %p347 = scmp.eq.s32.totalorder %s68, 1
      %p348 = scmp.ne.s32.totalorder %s343, %s345
      %p349 = scmp.eq.s32.totalorder %s68, 0
      %p350 = por %p348, %p349
      %p351 = scmp.ne.s32.totalorder %s343, %s345
      %p352 = scmp.eq.s32.totalorder %s73, 1
      %p353 = por %p351, %p352
      %p354 = scmp.ne.s32.totalorder %s345, %s346
      %p355 = scmp.eq.s32.totalorder %s73, 0
      %p356 = por %p354, %p355
      %p357 = scmp.ne.s32.totalorder %s345, %s346
      %p358 = scmp.eq.s32.totalorder %s74, 1
      %p359 = por %p357, %p358
      %p361 = scmp.ne.s32.totalorder %s346, %s360
      %p362 = scmp.eq.s32.totalorder %s74, 0
      %p363 = por %p361, %p362
      %s365 = sadd.s32 %s364, 1
      %p368 = scmp.eq.s32.totalorder %s68, 1
      %p369 = scmp.ne.s32.totalorder %s364, %s366
      %p370 = scmp.eq.s32.totalorder %s68, 0
      %p371 = por %p369, %p370
      %p372 = scmp.ne.s32.totalorder %s364, %s366
      %p373 = scmp.eq.s32.totalorder %s73, 1
      %p374 = por %p372, %p373
      %p375 = scmp.ne.s32.totalorder %s366, %s367
      %p376 = scmp.eq.s32.totalorder %s73, 0
      %p377 = por %p375, %p376
      %p378 = scmp.ne.s32.totalorder %s366, %s367
      %p379 = scmp.eq.s32.totalorder %s74, 1
      %p380 = por %p378, %p379
      %p382 = scmp.ne.s32.totalorder %s367, %s381
      %p383 = scmp.eq.s32.totalorder %s74, 0
      %p384 = por %p382, %p383
      %s386 = sadd.s32 %s385, 1
      %p389 = scmp.eq.s32.totalorder %s68, 1
      %p390 = scmp.ne.s32.totalorder %s385, %s387
      %p391 = scmp.eq.s32.totalorder %s68, 0
      %p392 = por %p390, %p391
      %p393 = scmp.ne.s32.totalorder %s385, %s387
      %p394 = scmp.eq.s32.totalorder %s73, 1
      %p395 = por %p393, %p394
      %p396 = scmp.ne.s32.totalorder %s387, %s388
      %p397 = scmp.eq.s32.totalorder %s73, 0
      %p398 = por %p396, %p397
      %p399 = scmp.ne.s32.totalorder %s387, %s388
      %p400 = scmp.eq.s32.totalorder %s74, 1
      %p401 = por %p399, %p400
      %p403 = scmp.ne.s32.totalorder %s388, %s402
      %p404 = scmp.eq.s32.totalorder %s74, 0
      %p405 = por %p403, %p404
      %s407 = sadd.s32 %s406, 1
      %p410 = scmp.eq.s32.totalorder %s68, 1
      %p411 = scmp.ne.s32.totalorder %s406, %s408
      %p412 = scmp.eq.s32.totalorder %s68, 0
      %p413 = por %p411, %p412
      %p414 = scmp.ne.s32.totalorder %s406, %s408
      %p415 = scmp.eq.s32.totalorder %s73, 1
      %p416 = por %p414, %p415
      %p417 = scmp.ne.s32.totalorder %s408, %s409
      %p418 = scmp.eq.s32.totalorder %s73, 0
      %p419 = por %p417, %p418
      %p420 = scmp.ne.s32.totalorder %s408, %s409
      %p421 = scmp.eq.s32.totalorder %s74, 1
      %p422 = por %p420, %p421
      %p424 = scmp.ne.s32.totalorder %s409, %s423
      %p425 = scmp.eq.s32.totalorder %s74, 0
      %p426 = por %p424, %p425
      %s428 = sadd.s32 %s427, 1
      %p431 = scmp.eq.s32.totalorder %s68, 1
      %p432 = scmp.ne.s32.totalorder %s427, %s429
      %p433 = scmp.eq.s32.totalorder %s68, 0
      %p434 = por %p432, %p433
      %p435 = scmp.ne.s32.totalorder %s427, %s429
      %p436 = scmp.eq.s32.totalorder %s73, 1
      %p437 = por %p435, %p436
      %p438 = scmp.ne.s32.totalorder %s429, %s430
      %p439 = scmp.eq.s32.totalorder %s73, 0
      %p440 = por %p438, %p439
      %p441 = scmp.ne.s32.totalorder %s429, %s430
      %p442 = scmp.eq.s32.totalorder %s74, 1
      %p443 = por %p441, %p442
      %p445 = scmp.ne.s32.totalorder %s430, %s444
      %p446 = scmp.eq.s32.totalorder %s74, 0
      %p447 = por %p445, %p446
      %s449 = sadd.s32 %s448, 1
      %p452 = scmp.eq.s32.totalorder %s68, 1
      %p453 = scmp.ne.s32.totalorder %s448, %s450
      %p454 = scmp.eq.s32.totalorder %s68, 0
      %p455 = por %p453, %p454
      %p456 = scmp.ne.s32.totalorder %s448, %s450
      %p457 = scmp.eq.s32.totalorder %s73, 1
      %p458 = por %p456, %p457
      %p459 = scmp.ne.s32.totalorder %s450, %s451
      %p460 = scmp.eq.s32.totalorder %s73, 0
      %p461 = por %p459, %p460
      %p462 = scmp.ne.s32.totalorder %s450, %s451
      %p463 = scmp.eq.s32.totalorder %s74, 1
      %p464 = por %p462, %p463
      %p466 = scmp.ne.s32.totalorder %s451, %s465
      %p467 = scmp.eq.s32.totalorder %s74, 0
      %p468 = por %p466, %p467
      %s470 = sadd.s32 %s469, 1
      %p473 = scmp.eq.s32.totalorder %s68, 1
      %p474 = scmp.ne.s32.totalorder %s469, %s471
      %p475 = scmp.eq.s32.totalorder %s68, 0
      %p476 = por %p474, %p475
      %p477 = scmp.ne.s32.totalorder %s469, %s471
      %p478 = scmp.eq.s32.totalorder %s73, 1
      %p479 = por %p477, %p478
      %p480 = scmp.ne.s32.totalorder %s471, %s472
      %p481 = scmp.eq.s32.totalorder %s73, 0
      %p482 = por %p480, %p481
      %p483 = scmp.ne.s32.totalorder %s471, %s472
      %p484 = scmp.eq.s32.totalorder %s74, 1
      %p485 = por %p483, %p484
      %p487 = scmp.ne.s32.totalorder %s472, %s486
      %p488 = scmp.eq.s32.totalorder %s74, 0
      %p489 = por %p487, %p488
      %s491 = sadd.s32 %s490, 1
      %p494 = scmp.eq.s32.totalorder %s68, 1
      %p495 = scmp.ne.s32.totalorder %s490, %s492
      %p496 = scmp.eq.s32.totalorder %s68, 0
      %p497 = por %p495, %p496
      %p498 = scmp.ne.s32.totalorder %s490, %s492
      %p499 = scmp.eq.s32.totalorder %s73, 1
      %p500 = por %p498, %p499
      %p501 = scmp.ne.s32.totalorder %s492, %s493
      %p502 = scmp.eq.s32.totalorder %s73, 0
      %p503 = por %p501, %p502
      %p504 = scmp.ne.s32.totalorder %s492, %s493
      %p505 = scmp.eq.s32.totalorder %s74, 1
      %p506 = por %p504, %p505
      %p508 = scmp.ne.s32.totalorder %s493, %s507
      %p509 = scmp.eq.s32.totalorder %s74, 0
      %p510 = por %p508, %p509
      %s512 = sadd.s32 %s511, 1
      %p515 = scmp.eq.s32.totalorder %s68, 1
      %p516 = scmp.ne.s32.totalorder %s511, %s513
      %p517 = scmp.eq.s32.totalorder %s68, 0
      %p518 = por %p516, %p517
      %p519 = scmp.ne.s32.totalorder %s511, %s513
      %p520 = scmp.eq.s32.totalorder %s73, 1
      %p521 = por %p519, %p520
      %p522 = scmp.ne.s32.totalorder %s513, %s514
      %p523 = scmp.eq.s32.totalorder %s73, 0
      %p524 = por %p522, %p523
      %p525 = scmp.ne.s32.totalorder %s513, %s514
      %p526 = scmp.eq.s32.totalorder %s74, 1
      %p527 = por %p525, %p526
      %p529 = scmp.ne.s32.totalorder %s514, %s528
      %p530 = scmp.eq.s32.totalorder %s74, 0
      %p531 = por %p529, %p530
      %s533 = sadd.s32 %s532, 1
      %p536 = scmp.eq.s32.totalorder %s68, 1
      %p537 = scmp.ne.s32.totalorder %s532, %s534
      %p538 = scmp.eq.s32.totalorder %s68, 0
      %p539 = por %p537, %p538
      %p540 = scmp.ne.s32.totalorder %s532, %s534
      %p541 = scmp.eq.s32.totalorder %s73, 1
      %p542 = por %p540, %p541
      %p543 = scmp.ne.s32.totalorder %s534, %s535
      %p544 = scmp.eq.s32.totalorder %s73, 0
      %p545 = por %p543, %p544
      %p546 = scmp.ne.s32.totalorder %s534, %s535
      %p547 = scmp.eq.s32.totalorder %s74, 1
      %p548 = por %p546, %p547
      %p550 = scmp.ne.s32.totalorder %s535, %s549
      %p551 = scmp.eq.s32.totalorder %s74, 0
      %p552 = por %p550, %p551
      %s554 = sadd.s32 %s553, 1
      %p557 = scmp.eq.s32.totalorder %s68, 1
      %p558 = scmp.ne.s32.totalorder %s553, %s555
      %p559 = scmp.eq.s32.totalorder %s68, 0
      %p560 = por %p558, %p559
      %p561 = scmp.ne.s32.totalorder %s553, %s555
      %p562 = scmp.eq.s32.totalorder %s73, 1
      %p563 = por %p561, %p562
      %p564 = scmp.ne.s32.totalorder %s555, %s556
      %p565 = scmp.eq.s32.totalorder %s73, 0
      %p566 = por %p564, %p565
      %p567 = scmp.ne.s32.totalorder %s555, %s556
      %p568 = scmp.eq.s32.totalorder %s74, 1
      %p569 = por %p567, %p568
      %p571 = scmp.ne.s32.totalorder %s556, %s570
      %p572 = scmp.eq.s32.totalorder %s74, 0
      %p573 = por %p571, %p572
      %s575 = sadd.s32 %s574, 1
      %p578 = scmp.eq.s32.totalorder %s68, 1
      %p579 = scmp.ne.s32.totalorder %s574, %s576
      %p580 = scmp.eq.s32.totalorder %s68, 0
      %p581 = por %p579, %p580
      %p582 = scmp.ne.s32.totalorder %s574, %s576
      %p583 = scmp.eq.s32.totalorder %s73, 1
      %p584 = por %p582, %p583
      %p585 = scmp.ne.s32.totalorder %s576, %s577
      %p586 = scmp.eq.s32.totalorder %s73, 0
      %p587 = por %p585, %p586
      %p588 = scmp.ne.s32.totalorder %s576, %s577
      %p589 = scmp.eq.s32.totalorder %s74, 1
      %p590 = por %p588, %p589
      %p592 = scmp.ne.s32.totalorder %s577, %s591
      %p593 = scmp.eq.s32.totalorder %s74, 0
      %p594 = por %p592, %p593
      %s596 = sadd.s32 %s595, 1
      %p599 = scmp.eq.s32.totalorder %s68, 1
      %p600 = scmp.ne.s32.totalorder %s595, %s597
      %p601 = scmp.eq.s32.totalorder %s68, 0
      %p602 = por %p600, %p601
      %p603 = scmp.ne.s32.totalorder %s595, %s597
      %p604 = scmp.eq.s32.totalorder %s73, 1
      %p605 = por %p603, %p604
      %p606 = scmp.ne.s32.totalorder %s597, %s598
      %p607 = scmp.eq.s32.totalorder %s73, 0
      %p608 = por %p606, %p607
      %p609 = scmp.ne.s32.totalorder %s597, %s598
      %p610 = scmp.eq.s32.totalorder %s74, 1
      %p611 = por %p609, %p610
      %p613 = scmp.ne.s32.totalorder %s598, %s612
      %p614 = scmp.eq.s32.totalorder %s74, 0
      %p615 = por %p613, %p614
      %s617 = sadd.s32 %s616, 1
      %p620 = scmp.eq.s32.totalorder %s68, 1
      %p621 = scmp.ne.s32.totalorder %s616, %s618
      %p622 = scmp.eq.s32.totalorder %s68, 0
      %p623 = por %p621, %p622
      %p624 = scmp.ne.s32.totalorder %s616, %s618
      %p625 = scmp.eq.s32.totalorder %s73, 1
      %p626 = por %p624, %p625
      %p627 = scmp.ne.s32.totalorder %s618, %s619
      %p628 = scmp.eq.s32.totalorder %s73, 0
      %p629 = por %p627, %p628
      %p630 = scmp.ne.s32.totalorder %s618, %s619
      %p631 = scmp.eq.s32.totalorder %s74, 1
      %p632 = por %p630, %p631
      %p634 = scmp.ne.s32.totalorder %s619, %s633
      %p635 = scmp.eq.s32.totalorder %s74, 0
      %p636 = por %p634, %p635
      %s638 = sadd.s32 %s637, 1
      %p641 = scmp.eq.s32.totalorder %s68, 1
      %p642 = scmp.ne.s32.totalorder %s637, %s639
      %p643 = scmp.eq.s32.totalorder %s68, 0
      %p644 = por %p642, %p643
      %p645 = scmp.ne.s32.totalorder %s637, %s639
      %p646 = scmp.eq.s32.totalorder %s73, 1
      %p647 = por %p645, %p646
      %p648 = scmp.ne.s32.totalorder %s639, %s640
      %p649 = scmp.eq.s32.totalorder %s73, 0
      %p650 = por %p648, %p649
      %p651 = scmp.ne.s32.totalorder %s639, %s640
      %p652 = scmp.eq.s32.totalorder %s74, 1
      %p653 = por %p651, %p652
      %p655 = scmp.ne.s32.totalorder %s640, %s654
      %p656 = scmp.eq.s32.totalorder %s74, 0
      %p657 = por %p655, %p656
      %s659 = sadd.s32 %s658, 1
      %p662 = scmp.eq.s32.totalorder %s68, 1
      %p663 = scmp.ne.s32.totalorder %s658, %s660
      %p664 = scmp.eq.s32.totalorder %s68, 0
      %p665 = por %p663, %p664
      %p666 = scmp.ne.s32.totalorder %s658, %s660
      %p667 = scmp.eq.s32.totalorder %s73, 1
      %p668 = por %p666, %p667
      %p669 = scmp.ne.s32.totalorder %s660, %s661
      %p670 = scmp.eq.s32.totalorder %s73, 0
      %p671 = por %p669, %p670
      %p672 = scmp.ne.s32.totalorder %s660, %s661
      %p673 = scmp.eq.s32.totalorder %s74, 1
      %p674 = por %p672, %p673
      %p676 = scmp.ne.s32.totalorder %s661, %s675
      %p677 = scmp.eq.s32.totalorder %s74, 0
      %p678 = por %p676, %p677
      %s680 = sadd.s32 %s679, 1
      %p683 = scmp.eq.s32.totalorder %s68, 1
      %p684 = scmp.ne.s32.totalorder %s679, %s681
      %p685 = scmp.eq.s32.totalorder %s68, 0
      %p686 = por %p684, %p685
      %p687 = scmp.ne.s32.totalorder %s679, %s681
      %p688 = scmp.eq.s32.totalorder %s73, 1
      %p689 = por %p687, %p688
      %p690 = scmp.ne.s32.totalorder %s681, %s682
      %p691 = scmp.eq.s32.totalorder %s73, 0
      %p692 = por %p690, %p691
      %p693 = scmp.ne.s32.totalorder %s681, %s682
      %p694 = scmp.eq.s32.totalorder %s74, 1
      %p695 = por %p693, %p694
      %p697 = scmp.ne.s32.totalorder %s682, %s696
      %p698 = scmp.eq.s32.totalorder %s74, 0
      %p699 = por %p697, %p698
      %s700 = ssub.s32 %s68, %s75
      %p701 = scmp.eq.s32.totalorder %s700, 0
      %s703 = sadd.s32 %s702, 1
      %s704 = scalar_select %p701, %s702, %s703
      %p707 = pneg %p701
      %p708 = scmp.eq.s32.totalorder %s68, 1
      %p709 = por %p707, %p708
      %p710 = scmp.ne.s32.totalorder %s702, %s705
      %p711 = scmp.eq.s32.totalorder %s68, 0
      %p712 = por %p710, %p711
      %p713 = scmp.ne.s32.totalorder %s702, %s705
      %p714 = scmp.eq.s32.totalorder %s73, 1
      %p715 = por %p713, %p714
      %p716 = scmp.ne.s32.totalorder %s705, %s706
      %p717 = scmp.eq.s32.totalorder %s73, 0
      %p718 = por %p716, %p717
      %p719 = scmp.ne.s32.totalorder %s705, %s706
      %p720 = scmp.eq.s32.totalorder %s74, 1
      %p721 = por %p719, %p720
      %p723 = scmp.ne.s32.totalorder %s706, %s722
      %p724 = scmp.eq.s32.totalorder %s74, 0
      %p725 = por %p723, %p724
      %p726 = scmp.le.s32.totalorder 1, %s68
      %p727 = scmp.lt.s32.totalorder %s68, 3
      %p728 = pnand %p726, %p727
      %p729 = pneg %p728
      // Predicated region
      $region9: #{bsfn_ava_forward.3} parent=5 // pred_check
        _
      $region10: #{bsfn_ava_forward.3} parent=5 // pred_check_branch
        %731 = sbr.rel (%p728) target = $region12
      $region11: #{bsfn_ava_forward.3} parent=5 // pred_region
        %s732 = ssub.s32 %s68, 1
        // Predicated region
        $region13: #{bsfn_ava_forward.3} parent=11 // pred_check
          %p733 = pneg %p167
        $region14: #{bsfn_ava_forward.3} parent=11 // pred_check_branch
          %735 = sbr.rel (%p733) target = $region16
        $region15: #{bsfn_ava_forward.3} parent=11 // pred_region
          _
        $region16: #{bsfn_ava_forward.3} parent=11 // pred_fallthru
          _
        // Predicated region
        $region17: #{bsfn_ava_forward.3} parent=11 // pred_check
          %p736 = pneg %p188
        $region18: #{bsfn_ava_forward.3} parent=11 // pred_check_branch
          %738 = sbr.rel (%p736) target = $region20
        $region19: #{bsfn_ava_forward.3} parent=11 // pred_region
          _
        $region20: #{bsfn_ava_forward.3} parent=11 // pred_fallthru
          _
        // Predicated region
        $region21: #{bsfn_ava_forward.3} parent=11 // pred_check
          %p739 = pneg %p209
        $region22: #{bsfn_ava_forward.3} parent=11 // pred_check_branch
          %741 = sbr.rel (%p739) target = $region24
        $region23: #{bsfn_ava_forward.3} parent=11 // pred_region
          _
        $region24: #{bsfn_ava_forward.3} parent=11 // pred_fallthru
          _
        // Predicated region
        $region25: #{bsfn_ava_forward.3} parent=11 // pred_check
          %p742 = pneg %p230
        $region26: #{bsfn_ava_forward.3} parent=11 // pred_check_branch
          %744 = sbr.rel (%p742) target = $region28
        $region27: #{bsfn_ava_forward.3} parent=11 // pred_region
          _
        $region28: #{bsfn_ava_forward.3} parent=11 // pred_fallthru
          _
        // Predicated region
        $region29: #{bsfn_ava_forward.3} parent=11 // pred_check
          %p745 = pneg %p251
        $region30: #{bsfn_ava_forward.3} parent=11 // pred_check_branch
          %747 = sbr.rel (%p745) target = $region32
        $region31: #{bsfn_ava_forward.3} parent=11 // pred_region
          _
        $region32: #{bsfn_ava_forward.3} parent=11 // pred_fallthru
          _
        // Predicated region
        $region33: #{bsfn_ava_forward.3} parent=11 // pred_check
          %p748 = pneg %p272
        $region34: #{bsfn_ava_forward.3} parent=11 // pred_check_branch
          %750 = sbr.rel (%p748) target = $region36
        $region35: #{bsfn_ava_forward.3} parent=11 // pred_region
          _
        $region36: #{bsfn_ava_forward.3} parent=11 // pred_fallthru
          _
        // Predicated region
        $region37: #{bsfn_ava_forward.3} parent=11 // pred_check
          %p751 = pneg %p293
        $region38: #{bsfn_ava_forward.3} parent=11 // pred_check_branch
          %753 = sbr.rel (%p751) target = $region40
        $region39: #{bsfn_ava_forward.3} parent=11 // pred_region
          _
        $region40: #{bsfn_ava_forward.3} parent=11 // pred_fallthru
          _
        // Predicated region
        $region41: #{bsfn_ava_forward.3} parent=11 // pred_check
          %p754 = pneg %p314
        $region42: #{bsfn_ava_forward.3} parent=11 // pred_check_branch
          %756 = sbr.rel (%p754) target = $region44
        $region43: #{bsfn_ava_forward.3} parent=11 // pred_region
          _
        $region44: #{bsfn_ava_forward.3} parent=11 // pred_fallthru
          _
        // Predicated region
        $region45: #{bsfn_ava_forward.3} parent=11 // pred_check
          %p757 = pneg %p335
        $region46: #{bsfn_ava_forward.3} parent=11 // pred_check_branch
          %759 = sbr.rel (%p757) target = $region48
        $region47: #{bsfn_ava_forward.3} parent=11 // pred_region
          _
        $region48: #{bsfn_ava_forward.3} parent=11 // pred_fallthru
          _
        // Predicated region
        $region49: #{bsfn_ava_forward.3} parent=11 // pred_check
          %p760 = pneg %p356
        $region50: #{bsfn_ava_forward.3} parent=11 // pred_check_branch
          %762 = sbr.rel (%p760) target = $region52
        $region51: #{bsfn_ava_forward.3} parent=11 // pred_region
          _
        $region52: #{bsfn_ava_forward.3} parent=11 // pred_fallthru
          _
        // Predicated region
        $region53: #{bsfn_ava_forward.3} parent=11 // pred_check
          %p763 = pneg %p377
        $region54: #{bsfn_ava_forward.3} parent=11 // pred_check_branch
          %765 = sbr.rel (%p763) target = $region56
        $region55: #{bsfn_ava_forward.3} parent=11 // pred_region
          _
        $region56: #{bsfn_ava_forward.3} parent=11 // pred_fallthru
          _
        // Predicated region
        $region57: #{bsfn_ava_forward.3} parent=11 // pred_check
          %p766 = pneg %p398
        $region58: #{bsfn_ava_forward.3} parent=11 // pred_check_branch
          %768 = sbr.rel (%p766) target = $region60
        $region59: #{bsfn_ava_forward.3} parent=11 // pred_region
          _
        $region60: #{bsfn_ava_forward.3} parent=11 // pred_fallthru
          _
        // Predicated region
        $region61: #{bsfn_ava_forward.3} parent=11 // pred_check
          %p769 = pneg %p419
        $region62: #{bsfn_ava_forward.3} parent=11 // pred_check_branch
          %771 = sbr.rel (%p769) target = $region64
        $region63: #{bsfn_ava_forward.3} parent=11 // pred_region
          _
        $region64: #{bsfn_ava_forward.3} parent=11 // pred_fallthru
          _
        // Predicated region
        $region65: #{bsfn_ava_forward.3} parent=11 // pred_check
          %p772 = pneg %p440
        $region66: #{bsfn_ava_forward.3} parent=11 // pred_check_branch
          %774 = sbr.rel (%p772) target = $region68
        $region67: #{bsfn_ava_forward.3} parent=11 // pred_region
          _
        $region68: #{bsfn_ava_forward.3} parent=11 // pred_fallthru
          _
        // Predicated region
        $region69: #{bsfn_ava_forward.3} parent=11 // pred_check
          %p775 = pneg %p461
        $region70: #{bsfn_ava_forward.3} parent=11 // pred_check_branch
          %777 = sbr.rel (%p775) target = $region72
        $region71: #{bsfn_ava_forward.3} parent=11 // pred_region
          _
        $region72: #{bsfn_ava_forward.3} parent=11 // pred_fallthru
          _
        // Predicated region
        $region73: #{bsfn_ava_forward.3} parent=11 // pred_check
          %p778 = pneg %p482
        $region74: #{bsfn_ava_forward.3} parent=11 // pred_check_branch
          %780 = sbr.rel (%p778) target = $region76
        $region75: #{bsfn_ava_forward.3} parent=11 // pred_region
          _
        $region76: #{bsfn_ava_forward.3} parent=11 // pred_fallthru
          _
        // Predicated region
        $region77: #{bsfn_ava_forward.3} parent=11 // pred_check
          %p781 = pneg %p503
        $region78: #{bsfn_ava_forward.3} parent=11 // pred_check_branch
          %783 = sbr.rel (%p781) target = $region80
        $region79: #{bsfn_ava_forward.3} parent=11 // pred_region
          _
        $region80: #{bsfn_ava_forward.3} parent=11 // pred_fallthru
          _
        // Predicated region
        $region81: #{bsfn_ava_forward.3} parent=11 // pred_check
          %p784 = pneg %p524
        $region82: #{bsfn_ava_forward.3} parent=11 // pred_check_branch
          %786 = sbr.rel (%p784) target = $region84
        $region83: #{bsfn_ava_forward.3} parent=11 // pred_region
          _
        $region84: #{bsfn_ava_forward.3} parent=11 // pred_fallthru
          _
        // Predicated region
        $region85: #{bsfn_ava_forward.3} parent=11 // pred_check
          %p787 = pneg %p545
        $region86: #{bsfn_ava_forward.3} parent=11 // pred_check_branch
          %789 = sbr.rel (%p787) target = $region88
        $region87: #{bsfn_ava_forward.3} parent=11 // pred_region
          _
        $region88: #{bsfn_ava_forward.3} parent=11 // pred_fallthru
          _
        // Predicated region
        $region89: #{bsfn_ava_forward.3} parent=11 // pred_check
          %p790 = pneg %p566
        $region90: #{bsfn_ava_forward.3} parent=11 // pred_check_branch
          %792 = sbr.rel (%p790) target = $region92
        $region91: #{bsfn_ava_forward.3} parent=11 // pred_region
          _
        $region92: #{bsfn_ava_forward.3} parent=11 // pred_fallthru
          _
        // Predicated region
        $region93: #{bsfn_ava_forward.3} parent=11 // pred_check
          %p793 = pneg %p587
        $region94: #{bsfn_ava_forward.3} parent=11 // pred_check_branch
          %795 = sbr.rel (%p793) target = $region96
        $region95: #{bsfn_ava_forward.3} parent=11 // pred_region
          _
        $region96: #{bsfn_ava_forward.3} parent=11 // pred_fallthru
          _
        // Predicated region
        $region97: #{bsfn_ava_forward.3} parent=11 // pred_check
          %p796 = pneg %p608
        $region98: #{bsfn_ava_forward.3} parent=11 // pred_check_branch
          %798 = sbr.rel (%p796) target = $region100
        $region99: #{bsfn_ava_forward.3} parent=11 // pred_region
          _
        $region100: #{bsfn_ava_forward.3} parent=11 // pred_fallthru
          _
        // Predicated region
        $region101: #{bsfn_ava_forward.3} parent=11 // pred_check
          %p799 = pneg %p629
        $region102: #{bsfn_ava_forward.3} parent=11 // pred_check_branch
          %801 = sbr.rel (%p799) target = $region104
        $region103: #{bsfn_ava_forward.3} parent=11 // pred_region
          _
        $region104: #{bsfn_ava_forward.3} parent=11 // pred_fallthru
          _
        // Predicated region
        $region105: #{bsfn_ava_forward.3} parent=11 // pred_check
          %p802 = pneg %p650
        $region106: #{bsfn_ava_forward.3} parent=11 // pred_check_branch
          %804 = sbr.rel (%p802) target = $region108
        $region107: #{bsfn_ava_forward.3} parent=11 // pred_region
          _
        $region108: #{bsfn_ava_forward.3} parent=11 // pred_fallthru
          _
        // Predicated region
        $region109: #{bsfn_ava_forward.3} parent=11 // pred_check
          %p805 = pneg %p671
        $region110: #{bsfn_ava_forward.3} parent=11 // pred_check_branch
          %807 = sbr.rel (%p805) target = $region112
        $region111: #{bsfn_ava_forward.3} parent=11 // pred_region
          _
        $region112: #{bsfn_ava_forward.3} parent=11 // pred_fallthru
          _
        // Predicated region
        $region113: #{bsfn_ava_forward.3} parent=11 // pred_check
          %p808 = pneg %p692
        $region114: #{bsfn_ava_forward.3} parent=11 // pred_check_branch
          %810 = sbr.rel (%p808) target = $region116
        $region115: #{bsfn_ava_forward.3} parent=11 // pred_region
          _
        $region116: #{bsfn_ava_forward.3} parent=11 // pred_fallthru
          _
      $region12: #{bsfn_ava_forward.3} parent=5 // pred_fallthru
        _
      %p811 = scmp.lt.s32.totalorder %s68, 2
      // Predicated region
      $region117: #{bsfn_ava_forward.3} parent=5 // pred_check
        %p812 = pneg %p811
      $region118: #{bsfn_ava_forward.3} parent=5 // pred_check_branch
        %814 = sbr.rel (%p812) target = $region120
      $region119: #{bsfn_ava_forward.3} parent=5 // pred_region
        // Predicated region
        $region121: #{bsfn_ava_forward.3} parent=119 // pred_check
          %p815 = pneg %p88
        $region122: #{bsfn_ava_forward.3} parent=119 // pred_check_branch
          %817 = sbr.rel (%p815) target = $region124
        $region123: #{bsfn_ava_forward.3} parent=119 // pred_region
          %p818 = scmp.lt.s32.totalorder %s68, 1
          %s819 = scalar_select %p818, %s68, 1
          %s820 = smul.addr %s819, 21
          %s821 = smul.addr %s820, 8
          %s822 = scalar_lea.vmem %s1, %s821
        $region124: #{bsfn_ava_forward.3} parent=119 // pred_fallthru
          _
        // Predicated region
        $region125: #{bsfn_ava_forward.3} parent=119 // pred_check
          %p823 = pneg %p114
        $region126: #{bsfn_ava_forward.3} parent=119 // pred_check_branch
          %825 = sbr.rel (%p823) target = $region128
        $region127: #{bsfn_ava_forward.3} parent=119 // pred_region
          %p826 = scmp.lt.s32.totalorder %s68, 1
          %s827 = scalar_select %p826, %s68, 1
          %s828 = scalar_lea.vmem %s3, %s827
        $region128: #{bsfn_ava_forward.3} parent=119 // pred_fallthru
          _
        // Predicated region
        $region129: #{bsfn_ava_forward.3} parent=119 // pred_check
          %p829 = pneg %p140
        $region130: #{bsfn_ava_forward.3} parent=119 // pred_check_branch
          %831 = sbr.rel (%p829) target = $region132
        $region131: #{bsfn_ava_forward.3} parent=119 // pred_region
          %p832 = scmp.lt.s32.totalorder %s68, 1
          %s833 = scalar_select %p832, %s68, 1
          %s834 = scalar_lea.vmem %s5, %s833
        $region132: #{bsfn_ava_forward.3} parent=119 // pred_fallthru
          _
      $region120: #{bsfn_ava_forward.3} parent=5 // pred_fallthru
        _
      %p835 = scmp.le.s32.totalorder 1, %s68
      %p836 = scmp.lt.s32.totalorder %s68, 3
      %p837 = pnand %p835, %p836
      %p838 = pneg %p837
      // Predicated region
      $region133: #{bsfn_ava_forward.3} parent=5 // pred_check
        _
      $region134: #{bsfn_ava_forward.3} parent=5 // pred_check_branch
        %840 = sbr.rel (%p837) target = $region136
      $region135: #{bsfn_ava_forward.3} parent=5 // pred_region
        %s841 = ssub.s32 %s68, 1
        %p842 = scmp.lt.s32.totalorder %s73, 1
        %s843 = scalar_select %p842, %s73, 1
        %s844 = smul.addr %s843, 21
        %s845 = smul.addr %s844, 8
        %s846 = scalar_lea.vmem %s1, %s845
        %p847 = pneg %p94
        %p848 = pneg %p91
        %p849 = scmp.lt.s32.totalorder %s73, 1
        %s850 = scalar_select %p849, %s73, 1
        %s851 = scalar_lea.vmem %s3, %s850
        %p852 = pneg %p120
        %p853 = pneg %p117
        %p854 = scmp.lt.s32.totalorder %s73, 1
        %s855 = scalar_select %p854, %s73, 1
        %s856 = scalar_lea.vmem %s5, %s855
        %p857 = pneg %p146
        %p858 = pneg %p143
        %p859 = pneg %p167
        %p860 = pneg %p164
        %p861 = pneg %p188
        %p862 = pneg %p185
        %p863 = pneg %p209
        %p864 = pneg %p206
        %p865 = pneg %p230
        %p866 = pneg %p227
        %p867 = pneg %p251
        %p868 = pneg %p248
        %p869 = pneg %p272
        %p870 = pneg %p269
        %p871 = pneg %p293
        %p872 = pneg %p290
        %p873 = pneg %p314
        %p874 = pneg %p311
        %p875 = pneg %p335
        %p876 = pneg %p332
        %p877 = pneg %p356
        %p878 = pneg %p353
        %p879 = pneg %p377
        %p880 = pneg %p374
        %p881 = pneg %p398
        %p882 = pneg %p395
        %p883 = pneg %p419
        %p884 = pneg %p416
        %p885 = pneg %p440
        %p886 = pneg %p437
        %p887 = pneg %p461
        %p888 = pneg %p458
        %p889 = pneg %p482
        %p890 = pneg %p479
        %p891 = pneg %p503
        %p892 = pneg %p500
        %p893 = pneg %p524
        %p894 = pneg %p521
        %p895 = pneg %p545
        %p896 = pneg %p542
        %p897 = pneg %p566
        %p898 = pneg %p563
        %p899 = pneg %p587
        %p900 = pneg %p584
        %p901 = pneg %p608
        %p902 = pneg %p605
        %p903 = pneg %p629
        %p904 = pneg %p626
        %p905 = pneg %p650
        %p906 = pneg %p647
        %p907 = pneg %p671
        %p908 = pneg %p668
        %p909 = pneg %p692
        %p910 = pneg %p689
        %p911 = pneg %p718
        %p912 = pneg %p715
        %s913 = sand.u32 %s705, 1
        %s914 = scalar_lea.sflag [#allocation4], %s913
        %s915 = sand.u32 %s705, 1
        %s916 = scalar_lea.vmem [#allocation3], %s915
        %p917 = scmp.lt.s32.totalorder %s73, 1
        %s918 = scalar_select %p917, %s73, 1
        %s919 = smul.addr %s918, 21
        %s920 = smul.addr %s919, 8
        %s921 = scalar_lea.vmem %s1, %s920
        %p922 = scmp.lt.s32.totalorder %s73, 1
        %s923 = scalar_select %p922, %s73, 1
        %s924 = scalar_lea.vmem %s3, %s923
        %p925 = scmp.lt.s32.totalorder %s73, 1
        %s926 = scalar_select %p925, %s73, 1
        %s927 = scalar_lea.vmem %s5, %s926
        %v929 = vld [vmem:[%s7] sm:$0xff]
        %v930 = vld [vmem:[%s7 + $0x8] sm:$0xff]
        %v931 = vld [vmem:[%s7 + $0x10] sm:$0xff]
        %v932 = vld [vmem:[%s7 + $0x18] sm:$0xff]
        %v933 = vld [vmem:[%s7 + $0x20] sm:$0xff]
        %v934 = vld [vmem:[%s7 + $0x28] sm:$0xff]
        %v935 = vld [vmem:[%s7 + $0x30] sm:$0x1]
        %s936 = scalar_lea.vmem %s7, 56
        %v937 = vld [vmem:[%s936] sm:$0xff]
        %v938 = vld [vmem:[%s936 + $0x8] sm:$0xff]
        %v939 = vld [vmem:[%s936 + $0x10] sm:$0xff]
        %v940 = vld [vmem:[%s936 + $0x18] sm:$0xff]
        %v941 = vld [vmem:[%s936 + $0x20] sm:$0xff]
        %v942 = vld [vmem:[%s936 + $0x28] sm:$0xff]
        %v943 = vld [vmem:[%s936 + $0x30] sm:$0x1]
        %v944 = vld [vmem:[%s9] sm:$0x1]
        %v945 = vld [vmem:[%s11] sm:$0xf]
        %v946 = vld [vmem:[%s11 + $0x4] sm:$0xf]
        %v947 = vld [vmem:[%s11 + $0x8] sm:$0xf]
        %v948 = vld [vmem:[%s11 + $0xc] sm:$0xf]
        %v949 = vld [vmem:[%s13] sm:$0x1]
        %v950 = vld [vmem:[%s15] sm:$0xf]
        %v951 = vld [vmem:[%s15 + $0x4] sm:$0xf]
        %v952 = vld [vmem:[%s15 + $0x8] sm:$0xf]
        %v953 = vld [vmem:[%s15 + $0xc] sm:$0xf]
        %v954 = vld [vmem:[%s27] sm:$0xf]
        %v955 = vld [vmem:[%s27 + $0x4] sm:$0xf]
        %v956 = vld [vmem:[%s27 + $0x8] sm:$0xf]
        %v957 = vld [vmem:[%s27 + $0xc] sm:$0xf]
        %v958 = vld [vmem:[%s27 + $0x10] sm:$0xf]
        %v959 = vld [vmem:[%s27 + $0x14] sm:$0xf]
        %v960 = vld [vmem:[%s27 + $0x18] sm:$0xf]
        %v961 = vld [vmem:[%s27 + $0x1c] sm:$0xf]
        %v962 = vld [vmem:[%s921] sm:$0xff]
        %v963 = vld [vmem:[%s921 + $0x8] sm:$0xff]
        %v964 = vld [vmem:[%s921 + $0x10] sm:$0xff]
        %v965 = vld [vmem:[%s921 + $0x18] sm:$0xff]
        %v966 = vld [vmem:[%s921 + $0x20] sm:$0xff]
        %v967 = vld [vmem:[%s921 + $0x28] sm:$0xff]
        %v968 = vld [vmem:[%s921 + $0x30] sm:$0x1]
        %s969 = scalar_lea.vmem %s921, 56
        %v970 = vld [vmem:[%s969] sm:$0xff]
        %v971 = vld [vmem:[%s969 + $0x8] sm:$0xff]
        %v972 = vld [vmem:[%s969 + $0x10] sm:$0xff]
        %v973 = vld [vmem:[%s969 + $0x18] sm:$0xff]
        %v974 = vld [vmem:[%s969 + $0x20] sm:$0xff]
        %v975 = vld [vmem:[%s969 + $0x28] sm:$0xff]
        %v976 = vld [vmem:[%s969 + $0x30] sm:$0x1]
        %s977 = scalar_lea.vmem %s921, 112
        %v978 = vld [vmem:[%s977] sm:$0xff]
        %v979 = vld [vmem:[%s977 + $0x8] sm:$0xff]
        %v980 = vld [vmem:[%s977 + $0x10] sm:$0xff]
        %v981 = vld [vmem:[%s977 + $0x18] sm:$0xff]
        %v982 = vld [vmem:[%s977 + $0x20] sm:$0xff]
        %v983 = vld [vmem:[%s977 + $0x28] sm:$0xff]
        %v984 = vld [vmem:[%s977 + $0x30] sm:$0x1]
        %vm985 = vcmask 261120
        %v986 = vsel %vm985, %v978, 0.0
        %v987 = vsel %vm985, %v979, 0.0
        %v988 = vadd.f32 %v986, %v987
        %v989 = vsel %vm985, %v980, 0.0
        %v990 = vadd.f32 %v988, %v989
        %v991 = vsel %vm985, %v981, 0.0
        %v992 = vadd.f32 %v990, %v991
        %v993 = vsel %vm985, %v982, 0.0
        %v994 = vadd.f32 %v992, %v993
        %v995 = vsel %vm985, %v983, 0.0
        %v996 = vadd.f32 %v994, %v995
        %vm997 = vcmask 253952
        %v998 = vsel %vm997, %v984, 0.0
        %v999 = vadd.f32 %v996, %v998
        %v1000 = vrot.slane %v999, 4
        %v1001 = vadd.f32 %v999, %v1000
        %v1002 = vrot.slane %v1001, 2
        %v1003 = vadd.f32 %v1001, %v1002
        %v1004 = vrot.slane %v1003, 1
        %v1005 = vadd.f32 %v1003, %v1004
        %v1006 = vrcp.pop 49.0
        %v1007 = vmul.f32 %v1005, %v1006
        %v1008 = vsub.f32 %v978, %v1007
        %v1009 = vsub.f32 %v979, %v1007
        %v1010 = vsub.f32 %v980, %v1007
        %v1011 = vsub.f32 %v981, %v1007
        %v1012 = vsub.f32 %v982, %v1007
        %v1013 = vsub.f32 %v983, %v1007
        %v1014 = vsub.f32 %v984, %v1007
        %v1015 = vmul.f32 %v1008, %v1008
        %v1016 = vmul.f32 %v1009, %v1009
        %v1017 = vmul.f32 %v1010, %v1010
        %v1018 = vmul.f32 %v1011, %v1011
        %v1019 = vmul.f32 %v1012, %v1012
        %v1020 = vmul.f32 %v1013, %v1013
        %v1021 = vmul.f32 %v1014, %v1014
        %v1022 = vsel %vm985, %v1015, 0.0
        %v1023 = vsel %vm985, %v1016, 0.0
        %v1024 = vadd.f32 %v1022, %v1023
        %v1025 = vsel %vm985, %v1017, 0.0
        %v1026 = vadd.f32 %v1024, %v1025
        %v1027 = vsel %vm985, %v1018, 0.0
        %v1028 = vadd.f32 %v1026, %v1027
        %v1029 = vsel %vm985, %v1019, 0.0
        %v1030 = vadd.f32 %v1028, %v1029
        %v1031 = vsel %vm985, %v1020, 0.0
        %v1032 = vadd.f32 %v1030, %v1031
        %v1033 = vsel %vm997, %v1021, 0.0
        %v1034 = vadd.f32 %v1032, %v1033
        %v1035 = vrot.slane %v1034, 4
        %v1036 = vadd.f32 %v1034, %v1035
        %v1037 = vrot.slane %v1036, 2
        %v1038 = vadd.f32 %v1036, %v1037
        %v1039 = vrot.slane %v1038, 1
        %v1040 = vadd.f32 %v1038, %v1039
        %v1041 = vmul.f32 %v1040, 0.020833334
        %v1042 = vadd.f32 %v1041, 1e-05
        %v1043 = vrsqrt.pop %v1042
        %v1044 = vmul.f32 %v1008, %v1043
        %v1045 = vmul.f32 %v1009, %v1043
        %v1046 = vmul.f32 %v1010, %v1043
        %v1047 = vmul.f32 %v1011, %v1043
        %v1048 = vmul.f32 %v1012, %v1043
        %v1049 = vmul.f32 %v1013, %v1043
        %v1050 = vmul.f32 %v1014, %v1043
        %v1051 = vsel %vm985, %v970, 0.0
        %v1052 = vsel %vm985, %v971, 0.0
        %v1053 = vadd.f32 %v1051, %v1052
        %v1054 = vsel %vm985, %v972, 0.0
        %v1055 = vadd.f32 %v1053, %v1054
        %v1056 = vsel %vm985, %v973, 0.0
        %v1057 = vadd.f32 %v1055, %v1056
        %v1058 = vsel %vm985, %v974, 0.0
        %v1059 = vadd.f32 %v1057, %v1058
        %v1060 = vsel %vm985, %v975, 0.0
        %v1061 = vadd.f32 %v1059, %v1060
        %v1062 = vsel %vm997, %v976, 0.0
        %v1063 = vadd.f32 %v1061, %v1062
        %v1064 = vrot.slane %v1063, 4
        %v1065 = vadd.f32 %v1063, %v1064
        %v1066 = vrot.slane %v1065, 2
        %v1067 = vadd.f32 %v1065, %v1066
        %v1068 = vrot.slane %v1067, 1
        %v1069 = vadd.f32 %v1067, %v1068
        %v1070 = vmul.f32 %v1069, %v1006
        %v1071 = vsub.f32 %v970, %v1070
        %v1072 = vsub.f32 %v971, %v1070
        %v1073 = vsub.f32 %v972, %v1070
        %v1074 = vsub.f32 %v973, %v1070
        %v1075 = vsub.f32 %v974, %v1070
        %v1076 = vsub.f32 %v975, %v1070
        %v1077 = vsub.f32 %v976, %v1070
        %v1078 = vmul.f32 %v1071, %v1071
        %v1079 = vmul.f32 %v1072, %v1072
        %v1080 = vmul.f32 %v1073, %v1073
        %v1081 = vmul.f32 %v1074, %v1074
        %v1082 = vmul.f32 %v1075, %v1075
        %v1083 = vmul.f32 %v1076, %v1076
        %v1084 = vmul.f32 %v1077, %v1077
        %v1085 = vsel %vm985, %v1078, 0.0
        %v1086 = vsel %vm985, %v1079, 0.0
        %v1087 = vadd.f32 %v1085, %v1086
        %v1088 = vsel %vm985, %v1080, 0.0
        %v1089 = vadd.f32 %v1087, %v1088
        %v1090 = vsel %vm985, %v1081, 0.0
        %v1091 = vadd.f32 %v1089, %v1090
        %v1092 = vsel %vm985, %v1082, 0.0
        %v1093 = vadd.f32 %v1091, %v1092
        %v1094 = vsel %vm985, %v1083, 0.0
        %v1095 = vadd.f32 %v1093, %v1094
        %v1096 = vsel %vm997, %v1084, 0.0
        %v1097 = vadd.f32 %v1095, %v1096
        %v1098 = vrot.slane %v1097, 4
        %v1099 = vadd.f32 %v1097, %v1098
        %v1100 = vrot.slane %v1099, 2
        %v1101 = vadd.f32 %v1099, %v1100
        %v1102 = vrot.slane %v1101, 1
        %v1103 = vadd.f32 %v1101, %v1102
        %v1104 = vmul.f32 %v1103, 0.020833334
        %v1105 = vadd.f32 %v1104, 1e-05
        %v1106 = vrsqrt.pop %v1105
        %v1107 = vmul.f32 %v1071, %v1106
        %v1108 = vmul.f32 %v1072, %v1106
        %v1109 = vmul.f32 %v1073, %v1106
        %v1110 = vmul.f32 %v1074, %v1106
        %v1111 = vmul.f32 %v1075, %v1106
        %v1112 = vmul.f32 %v1076, %v1106
        %v1113 = vmul.f32 %v1077, %v1106
        %v1114 = vpack.c.bf16 %v1045, %v1044
        %v1115 = vpack.c.bf16 %v1047, %v1046
        %v1116 = vpack.c.bf16 %v1049, %v1048
        %v1117 = vpack.c.bf16 %v1050, %v1050
        %v1119 = vlaneseq
        %v1120 = vshrl.u32 %v1119, 7
        %v1121 = vsub.s32 0, %v1120
        %v1122 = vrot.slane %v949, %v1121
        %v1128 = vunpack.c.l.b16 %v945
        %v1129 = vunpack.c.l.b16 %v946
        %v1130 = vunpack.c.l.b16 %v947
        %v1131 = vunpack.c.l.b16 %v948
        %v1132 = vpack.c.b16 %v1129, %v1128
        %v1133 = vpack.c.b16 %v1131, %v1130
        %v1137 = vsel %vm985, %v1114, 0
        %v1140 = vsel %vm985, %v1115, 0
        %v1143 = vsel %vm985, %v1116, 0
        %v1146 = vsel %vm985, %v1117, 0
        %1148 = vmatprep.subr.bf16.mxu0 0
        %1149 = vmatpush1.bf16.msra.mxu0 %v1132
        %1150 = vmatprep.subr.bf16.mxu0 0
        %1151 = vmatpush1.bf16.msra.mxu0 %v1133
        %1152 = vmatprep.subr.bf16.mxu0 0
        %1153 = vmatpush1.bf16.msra.mxu0 0
        %1154 = vmatprep.subr.bf16.mxu0 0
        %1155 = vmatpush1.bf16.msra.mxu0 0
        %1156 = vmatprep.subr.bf16.mxu0 0
        %1157 = vmatpush1.bf16.msra.mxu0 0
        %1158 = vmatprep.subr.bf16.mxu0 0
        %1159 = vmatpush1.bf16.msra.mxu0 0
        %1160 = vmatprep.subr.bf16.mxu0 0
        %1161 = vmatpush1.bf16.msra.mxu0 0
        %1162 = vmatprep.subr.bf16.mxu0 0
        %1163 = vmatpush1.bf16.msra.mxu0 0
        %1164 = vmatprep.subr.bf16.mxu0 0
        %1165 = vmatpush1.bf16.msra.mxu0 0
        %1166 = vmatprep.subr.bf16.mxu0 0
        %1167 = vmatpush1.bf16.msra.mxu0 0
        %1168 = vmatprep.subr.bf16.mxu0 0
        %1169 = vmatpush1.bf16.msra.mxu0 0
        %1170 = vmatprep.subr.bf16.mxu0 0
        %1171 = vmatpush1.bf16.msra.mxu0 0
        %1172 = vmatprep.subr.bf16.mxu0 0
        %1173 = vmatpush1.bf16.msra.mxu0 0
        %1174 = vmatprep.subr.bf16.mxu0 0
        %1175 = vmatpush1.bf16.msra.mxu0 0
        %1176 = vmatprep.subr.bf16.mxu0 0
        %1177 = vmatpush1.bf16.msra.mxu0 0
        %1178 = vmatprep.subr.bf16.mxu0 0
        %1179 = vmatpush1.bf16.msra.mxu0 0
        %1180 = vmatprep.mubr.bf16.mxu0 0
        %1181 = vmatmul.mubr.bf16.gmra.mrb[0].mxu0 %v1137
        %v1182 = vpop.f32.mrb[0].mxu0
        %v1183 = vadd.f32 %v1122, %v1182
        %v1184 = vpop.f32.mrb[0].mxu0
        %v1185 = vpop.f32.mrb[0].mxu0
        %v1186 = vadd.f32 %v1122, %v1185
        %v1187 = vpop.f32.mrb[0].mxu0
        %1188 = vmatprep.mubr.bf16.mxu0 0
        %1189 = vmatmul.mubr.bf16.gmra.mrb[0].mxu0 %v1140
        %v1190 = vpop.f32.mrb[0].mxu0
        %v1191 = vadd.f32 %v1122, %v1190
        %v1192 = vpop.f32.mrb[0].mxu0
        %v1193 = vpop.f32.mrb[0].mxu0
        %v1194 = vadd.f32 %v1122, %v1193
        %v1195 = vpop.f32.mrb[0].mxu0
        %1196 = vmatprep.mubr.bf16.mxu0 0
        %1197 = vmatmul.mubr.bf16.gmra.mrb[0].mxu0 %v1143
        %v1198 = vpop.f32.mrb[0].mxu0
        %v1199 = vadd.f32 %v1122, %v1198
        %v1200 = vpop.f32.mrb[0].mxu0
        %v1201 = vpop.f32.mrb[0].mxu0
        %v1202 = vadd.f32 %v1122, %v1201
        %v1203 = vpop.f32.mrb[0].mxu0
        %1204 = vmatprep.mubr.bf16.mxu0 0
        %1205 = vmatmul.mubr.bf16.gmra.mrb[0].mxu0 %v1146
        %v1206 = vpop.f32.mrb[0].mxu0
        %v1207 = vadd.f32 %v1122, %v1206
        %v1208 = vpop.f32.mrb[0].mxu0
        %v1209 = vpop.f32.mrb[0].mxu0
        %v1210 = vpop.f32.mrb[0].mxu0
        %1211 = vdwg.mxu0
        %v1212 = vpack.c.bf16 %v1108, %v1107
        %v1213 = vpack.c.bf16 %v1110, %v1109
        %v1214 = vpack.c.bf16 %v1112, %v1111
        %v1215 = vpack.c.bf16 %v1113, %v1113
        %1216 = vrot.lane.b32.xlu0 %v1132, 96
        %v1217 = vpop.permute.xlu0 %1216
        %1218 = vrot.lane.b32.xlu0 %v1133, 96
        %v1219 = vpop.permute.xlu0 %1218
        %1222 = vrot.lane.b32.xlu0 %v1122, 96
        %v1223 = vpop.permute.xlu0 %1222
        %v1226 = vsel %vm985, %v1212, 0
        %v1229 = vsel %vm985, %v1213, 0
        %v1232 = vsel %vm985, %v1214, 0
        %v1235 = vsel %vm985, %v1215, 0
        %1237 = vmatprep.subr.bf16.mxu0 0
        %1238 = vmatpush1.bf16.msra.mxu0 %v1217
        %1239 = vmatprep.subr.bf16.mxu0 0
        %1240 = vmatpush1.bf16.msra.mxu0 %v1219
        %1241 = vmatprep.subr.bf16.mxu0 0
        %1242 = vmatpush1.bf16.msra.mxu0 0
        %1243 = vmatprep.subr.bf16.mxu0 0
        %1244 = vmatpush1.bf16.msra.mxu0 0
        %1245 = vmatprep.subr.bf16.mxu0 0
        %1246 = vmatpush1.bf16.msra.mxu0 0
        %1247 = vmatprep.subr.bf16.mxu0 0
        %1248 = vmatpush1.bf16.msra.mxu0 0
        %1249 = vmatprep.subr.bf16.mxu0 0
        %1250 = vmatpush1.bf16.msra.mxu0 0
        %1251 = vmatprep.subr.bf16.mxu0 0
        %1252 = vmatpush1.bf16.msra.mxu0 0
        %1253 = vmatprep.subr.bf16.mxu0 0
        %1254 = vmatpush1.bf16.msra.mxu0 0
        %1255 = vmatprep.subr.bf16.mxu0 0
        %1256 = vmatpush1.bf16.msra.mxu0 0
        %1257 = vmatprep.subr.bf16.mxu0 0
        %1258 = vmatpush1.bf16.msra.mxu0 0
        %1259 = vmatprep.subr.bf16.mxu0 0
        %1260 = vmatpush1.bf16.msra.mxu0 0
        %1261 = vmatprep.subr.bf16.mxu0 0
        %1262 = vmatpush1.bf16.msra.mxu0 0
        %1263 = vmatprep.subr.bf16.mxu0 0
        %1264 = vmatpush1.bf16.msra.mxu0 0
        %1265 = vmatprep.subr.bf16.mxu0 0
        %1266 = vmatpush1.bf16.msra.mxu0 0
        %1267 = vmatprep.subr.bf16.mxu0 0
        %1268 = vmatpush1.bf16.msra.mxu0 0
        %1269 = vmatprep.mubr.bf16.mxu0 0
        %1270 = vmatmul.mubr.bf16.gmra.mrb[0].mxu0 %v1226
        %v1271 = vpop.f32.mrb[0].mxu0
        %v1272 = vadd.f32 %v1223, %v1271
        %v1273 = vpop.f32.mrb[0].mxu0
        %v1274 = vpop.f32.mrb[0].mxu0
        %v1275 = vadd.f32 %v1223, %v1274
        %v1276 = vpop.f32.mrb[0].mxu0
        %1277 = vmatprep.mubr.bf16.mxu0 0
        %1278 = vmatmul.mubr.bf16.gmra.mrb[0].mxu0 %v1229
        %v1279 = vpop.f32.mrb[0].mxu0
        %v1280 = vadd.f32 %v1223, %v1279
        %v1281 = vpop.f32.mrb[0].mxu0
        %v1282 = vpop.f32.mrb[0].mxu0
        %v1283 = vadd.f32 %v1223, %v1282
        %v1284 = vpop.f32.mrb[0].mxu0
        %1285 = vmatprep.mubr.bf16.mxu0 0
        %1286 = vmatmul.mubr.bf16.gmra.mrb[0].mxu0 %v1232
        %v1287 = vpop.f32.mrb[0].mxu0
        %v1288 = vadd.f32 %v1223, %v1287
        %v1289 = vpop.f32.mrb[0].mxu0
        %v1290 = vpop.f32.mrb[0].mxu0
        %v1291 = vadd.f32 %v1223, %v1290
        %v1292 = vpop.f32.mrb[0].mxu0
        %1293 = vmatprep.mubr.bf16.mxu0 0
        %1294 = vmatmul.mubr.bf16.gmra.mrb[0].mxu0 %v1235
        %v1295 = vpop.f32.mrb[0].mxu0
        %v1296 = vadd.f32 %v1223, %v1295
        %v1297 = vpop.f32.mrb[0].mxu0
        %v1298 = vpop.f32.mrb[0].mxu0
        %v1299 = vpop.f32.mrb[0].mxu0
        %1300 = vdwg.mxu0
        %v1301 = vpack.c.bf16 %v971, %v970
        %v1302 = vpack.c.bf16 %v973, %v972
        %v1303 = vpack.c.bf16 %v975, %v974
        %v1304 = vpack.c.bf16 %v976, %v976
        %1305 = vrot.lane.b32.xlu0 %v1132, 64
        %v1306 = vpop.permute.xlu0 %1305
        %1307 = vrot.lane.b32.xlu0 %v1133, 64
        %v1308 = vpop.permute.xlu0 %1307
        %1311 = vrot.lane.b32.xlu0 %v1122, 64
        %v1312 = vpop.permute.xlu0 %1311
        %v1315 = vsel %vm985, %v1301, 0
        %v1318 = vsel %vm985, %v1302, 0
        %v1321 = vsel %vm985, %v1303, 0
        %v1324 = vsel %vm985, %v1304, 0
        %1326 = vmatprep.subr.bf16.mxu0 0
        %1327 = vmatpush1.bf16.msra.mxu0 %v1306
        %1328 = vmatprep.subr.bf16.mxu0 0
        %1329 = vmatpush1.bf16.msra.mxu0 %v1308
        %1330 = vmatprep.subr.bf16.mxu0 0
        %1331 = vmatpush1.bf16.msra.mxu0 0
        %1332 = vmatprep.subr.bf16.mxu0 0
        %1333 = vmatpush1.bf16.msra.mxu0 0
        %1334 = vmatprep.subr.bf16.mxu0 0
        %1335 = vmatpush1.bf16.msra.mxu0 0
        %1336 = vmatprep.subr.bf16.mxu0 0
        %1337 = vmatpush1.bf16.msra.mxu0 0
        %1338 = vmatprep.subr.bf16.mxu0 0
        %1339 = vmatpush1.bf16.msra.mxu0 0
        %1340 = vmatprep.subr.bf16.mxu0 0
        %1341 = vmatpush1.bf16.msra.mxu0 0
        %1342 = vmatprep.subr.bf16.mxu0 0
        %1343 = vmatpush1.bf16.msra.mxu0 0
        %1344 = vmatprep.subr.bf16.mxu0 0
        %1345 = vmatpush1.bf16.msra.mxu0 0
        %1346 = vmatprep.subr.bf16.mxu0 0
        %1347 = vmatpush1.bf16.msra.mxu0 0
        %1348 = vmatprep.subr.bf16.mxu0 0
        %1349 = vmatpush1.bf16.msra.mxu0 0
        %1350 = vmatprep.subr.bf16.mxu0 0
        %1351 = vmatpush1.bf16.msra.mxu0 0
        %1352 = vmatprep.subr.bf16.mxu0 0
        %1353 = vmatpush1.bf16.msra.mxu0 0
        %1354 = vmatprep.subr.bf16.mxu0 0
        %1355 = vmatpush1.bf16.msra.mxu0 0
        %1356 = vmatprep.subr.bf16.mxu0 0
        %1357 = vmatpush1.bf16.msra.mxu0 0
        %1358 = vmatprep.mubr.bf16.mxu0 0
        %1359 = vmatmul.mubr.bf16.gmra.mrb[0].mxu0 %v1315
        %v1360 = vpop.f32.mrb[0].mxu0
        %v1361 = vadd.f32 %v1312, %v1360
        %v1362 = vpop.f32.mrb[0].mxu0
        %v1363 = vpop.f32.mrb[0].mxu0
        %v1364 = vadd.f32 %v1312, %v1363
        %v1365 = vpop.f32.mrb[0].mxu0
        %1366 = vmatprep.mubr.bf16.mxu0 0
        %1367 = vmatmul.mubr.bf16.gmra.mrb[0].mxu0 %v1318
        %v1368 = vpop.f32.mrb[0].mxu0
        %v1369 = vadd.f32 %v1312, %v1368
        %v1370 = vpop.f32.mrb[0].mxu0
        %v1371 = vpop.f32.mrb[0].mxu0
        %v1372 = vadd.f32 %v1312, %v1371
        %v1373 = vpop.f32.mrb[0].mxu0
        %1374 = vmatprep.mubr.bf16.mxu0 0
        %1375 = vmatmul.mubr.bf16.gmra.mrb[0].mxu0 %v1321
        %v1376 = vpop.f32.mrb[0].mxu0
        %v1377 = vadd.f32 %v1312, %v1376
        %v1378 = vpop.f32.mrb[0].mxu0
        %v1379 = vpop.f32.mrb[0].mxu0
        %v1380 = vadd.f32 %v1312, %v1379
        %v1381 = vpop.f32.mrb[0].mxu0
        %1382 = vmatprep.mubr.bf16.mxu0 0
        %1383 = vmatmul.mubr.bf16.gmra.mrb[0].mxu0 %v1324
        %v1384 = vpop.f32.mrb[0].mxu0
        %v1385 = vadd.f32 %v1312, %v1384
        %v1386 = vpop.f32.mrb[0].mxu0
        %v1387 = vpop.f32.mrb[0].mxu0
        %v1388 = vpop.f32.mrb[0].mxu0
        %1389 = vdwg.mxu0
        %v1390 = vpack.c.bf16 %v1186, %v1183
        %v1391 = vpack.c.bf16 %v1194, %v1191
        %v1392 = vpack.c.bf16 %v1202, %v1199
        %v1393 = vpack.c.bf16 %v1207, %v1207
        %v1394 = vpack.c.bf16 %v1275, %v1272
        %v1395 = vpack.c.bf16 %v1283, %v1280
        %v1396 = vpack.c.bf16 %v1291, %v1288
        %v1397 = vpack.c.bf16 %v1296, %v1296
        %v1399 = vsel %vm985, %v1390, 0
        %v1402 = vsel %vm985, %v1391, 0
        %v1405 = vsel %vm985, %v1392, 0
        %v1408 = vsel %vm985, %v1393, 0
        %v1411 = vsel %vm985, %v1394, 0
        %v1414 = vsel %vm985, %v1395, 0
        %v1417 = vsel %vm985, %v1396, 0
        %v1420 = vsel %vm985, %v1397, 0
        %1422 = vmatprep.subr.bf16.mxu0 0
        %1423 = vmatpush1.bf16.xpose.msra.mxu0 %v1411
        %1424 = vmatprep.subr.bf16.mxu0 0
        %1425 = vmatpush1.bf16.xpose.msra.mxu0 %v1414
        %1426 = vmatprep.subr.bf16.mxu0 0
        %1427 = vmatpush1.bf16.xpose.msra.mxu0 %v1417
        %1428 = vmatprep.subr.bf16.mxu0 0
        %1429 = vmatpush1.bf16.xpose.msra.mxu0 %v1420
        %1430 = vmatprep.subr.bf16.mxu0 0
        %1431 = vmatpush1.bf16.xpose.msra.mxu0 0
        %1432 = vmatprep.subr.bf16.mxu0 0
        %1433 = vmatpush1.bf16.xpose.msra.mxu0 0
        %1434 = vmatprep.subr.bf16.mxu0 0
        %1435 = vmatpush1.bf16.xpose.msra.mxu0 0
        %1436 = vmatprep.subr.bf16.mxu0 0
        %1437 = vmatpush1.bf16.xpose.msra.mxu0 0
        %1438 = vmatprep.subr.bf16.mxu0 0
        %1439 = vmatpush1.bf16.xpose.msra.mxu0 0
        %1440 = vmatprep.subr.bf16.mxu0 0
        %1441 = vmatpush1.bf16.xpose.msra.mxu0 0
        %1442 = vmatprep.subr.bf16.mxu0 0
        %1443 = vmatpush1.bf16.xpose.msra.mxu0 0
        %1444 = vmatprep.subr.bf16.mxu0 0
        %1445 = vmatpush1.bf16.xpose.msra.mxu0 0
        %1446 = vmatprep.subr.bf16.mxu0 0
        %1447 = vmatpush1.bf16.xpose.msra.mxu0 0
        %1448 = vmatprep.subr.bf16.mxu0 0
        %1449 = vmatpush1.bf16.xpose.msra.mxu0 0
        %1450 = vmatprep.subr.bf16.mxu0 0
        %1451 = vmatpush1.bf16.xpose.msra.mxu0 0
        %1452 = vmatprep.subr.bf16.mxu0 0
        %1453 = vmatpush1.bf16.xpose.msra.mxu0 0
        %1454 = vmatprep.mubr.bf16.mxu0 0
        %1455 = vmatmul.mubr.bf16.gmra.mrb[0].mxu0 %v1399
        %v1456 = vpop.f32.mrb[0].mxu0
        %v1457 = vadd.f32 0.0, %v1456
        %v1458 = vpop.f32.mrb[0].mxu0
        %v1459 = vpop.f32.mrb[0].mxu0
        %v1460 = vadd.f32 0.0, %v1459
        %v1461 = vpop.f32.mrb[0].mxu0
        %1462 = vmatprep.mubr.bf16.mxu0 0
        %1463 = vmatmul.mubr.bf16.gmra.mrb[0].mxu0 %v1402
        %v1464 = vpop.f32.mrb[0].mxu0
        %v1465 = vadd.f32 0.0, %v1464
        %v1466 = vpop.f32.mrb[0].mxu0
        %v1467 = vpop.f32.mrb[0].mxu0
        %v1468 = vadd.f32 0.0, %v1467
        %v1469 = vpop.f32.mrb[0].mxu0
        %1470 = vmatprep.mubr.bf16.mxu0 0
        %1471 = vmatmul.mubr.bf16.gmra.mrb[0].mxu0 %v1405
        %v1472 = vpop.f32.mrb[0].mxu0
        %v1473 = vadd.f32 0.0, %v1472
        %v1474 = vpop.f32.mrb[0].mxu0
        %v1475 = vpop.f32.mrb[0].mxu0
        %v1476 = vadd.f32 0.0, %v1475
        %v1477 = vpop.f32.mrb[0].mxu0
        %1478 = vmatprep.mubr.bf16.mxu0 0
        %1479 = vmatmul.mubr.bf16.gmra.mrb[0].mxu0 %v1408
        %v1480 = vpop.f32.mrb[0].mxu0
        %v1481 = vadd.f32 0.0, %v1480
        %v1482 = vpop.f32.mrb[0].mxu0
        %v1483 = vpop.f32.mrb[0].mxu0
        %v1484 = vpop.f32.mrb[0].mxu0
        %1485 = vdwg.mxu0
        %vm1486 = vcmask 400384
        %v1487 = vsel %vm1486, %v1457, -inf
        %1488 = vmax.xlane.f32.xlu0 %v1487
        %v1489 = vpop.xlane.xlu0 %1488
        %v1490 = vsel %vm1486, %v1460, -inf
        %1491 = vmax.xlane.f32.xlu0 %v1490
        %v1492 = vpop.xlane.xlu0 %1491
        %v1493 = vsel %vm1486, %v1465, -inf
        %1494 = vmax.xlane.f32.xlu0 %v1493
        %v1495 = vpop.xlane.xlu0 %1494
        %v1496 = vsel %vm1486, %v1468, -inf
        %1497 = vmax.xlane.f32.xlu0 %v1496
        %v1498 = vpop.xlane.xlu0 %1497
        %v1499 = vsel %vm1486, %v1473, -inf
        %1500 = vmax.xlane.f32.xlu0 %v1499
        %v1501 = vpop.xlane.xlu0 %1500
        %v1502 = vsel %vm1486, %v1476, -inf
        %1503 = vmax.xlane.f32.xlu0 %v1502
        %v1504 = vpop.xlane.xlu0 %1503
        %vm1505 = vcmask 393216
        %v1506 = vsel %vm1505, %v1481, -inf
        %1507 = vmax.xlane.f32.xlu0 %v1506
        %v1508 = vpop.xlane.xlu0 %1507
        %v1509 = vsub.f32 %v1457, %v1489
        %v1510 = vsub.f32 %v1460, %v1492
        %v1511 = vsub.f32 %v1465, %v1495
        %v1512 = vsub.f32 %v1468, %v1498
        %v1513 = vsub.f32 %v1473, %v1501
        %v1514 = vsub.f32 %v1476, %v1504
        %v1515 = vsub.f32 %v1481, %v1508
        %v1516 = vmul.f32 %v1509, 1.442695
        %v1517 = vpow.pop %v1516
        %v1518 = vmul.f32 %v1510, 1.442695
        %v1519 = vpow.pop %v1518
        %v1520 = vmul.f32 %v1511, 1.442695
        %v1521 = vpow.pop %v1520
        %v1522 = vmul.f32 %v1512, 1.442695
        %v1523 = vpow.pop %v1522
        %v1524 = vmul.f32 %v1513, 1.442695
        %v1525 = vpow.pop %v1524
        %v1526 = vmul.f32 %v1514, 1.442695
        %v1527 = vpow.pop %v1526
        %v1528 = vmul.f32 %v1515, 1.442695
        %v1529 = vpow.pop %v1528
        %v1530 = vsel %vm1486, %v1517, 0.0
        %1531 = vadd.xlane.f32.xlu0 %v1530
        %v1532 = vpop.xlane.xlu0 %1531
        %v1533 = vsel %vm1486, %v1519, 0.0
        %1534 = vadd.xlane.f32.xlu0 %v1533
        %v1535 = vpop.xlane.xlu0 %1534
        %v1536 = vsel %vm1486, %v1521, 0.0
        %1537 = vadd.xlane.f32.xlu0 %v1536
        %v1538 = vpop.xlane.xlu0 %1537
        %v1539 = vsel %vm1486, %v1523, 0.0
        %1540 = vadd.xlane.f32.xlu0 %v1539
        %v1541 = vpop.xlane.xlu0 %1540
        %v1542 = vsel %vm1486, %v1525, 0.0
        %1543 = vadd.xlane.f32.xlu0 %v1542
        %v1544 = vpop.xlane.xlu0 %1543
        %v1545 = vsel %vm1486, %v1527, 0.0
        %1546 = vadd.xlane.f32.xlu0 %v1545
        %v1547 = vpop.xlane.xlu0 %1546
        %v1548 = vsel %vm1505, %v1529, 0.0
        %1549 = vadd.xlane.f32.xlu0 %v1548
        %v1550 = vpop.xlane.xlu0 %1549
        %v1551 = vrcp.pop %v1532
        %v1552 = vrcp.pop %v1535
        %v1553 = vrcp.pop %v1538
        %v1554 = vrcp.pop %v1541
        %v1555 = vrcp.pop %v1544
        %v1556 = vrcp.pop %v1547
        %v1557 = vrcp.pop %v1550
        %v1558 = vmul.f32 %v1517, %v1551
        %v1559 = vmul.f32 %v1519, %v1552
        %v1560 = vmul.f32 %v1521, %v1553
        %v1561 = vmul.f32 %v1523, %v1554
        %v1562 = vmul.f32 %v1525, %v1555
        %v1563 = vmul.f32 %v1527, %v1556
        %v1564 = vmul.f32 %v1529, %v1557
        %v1565 = vpack.c.bf16 %v1559, %v1558
        %v1566 = vpack.c.bf16 %v1561, %v1560
        %v1567 = vpack.c.bf16 %v1563, %v1562
        %v1568 = vpack.c.bf16 %v1564, %v1564
        %v1569 = vpack.c.bf16 %v1364, %v1361
        %v1570 = vpack.c.bf16 %v1372, %v1369
        %v1571 = vpack.c.bf16 %v1380, %v1377
        %v1572 = vpack.c.bf16 %v1385, %v1385
        %v1574 = vsel %vm1486, %v1565, 0
        %v1577 = vsel %vm1486, %v1566, 0
        %v1580 = vsel %vm1486, %v1567, 0
        %v1583 = vsel %vm1486, %v1568, 0
        %vm1585 = vcmask 1040384
        %v1586 = vsel 0, 4294967295, 65535
        %v1587 = vsel %vm1585, %v1586, 0
        %v1589 = vand.u32 %v1572, %v1587
        %1591 = vmatprep.subr.bf16.mxu0 0
        %1592 = vmatpush1.bf16.msra.mxu0 %v1569
        %1593 = vmatprep.subr.bf16.mxu0 0
        %1594 = vmatpush1.bf16.msra.mxu0 %v1570
        %1595 = vmatprep.subr.bf16.mxu0 0
        %1596 = vmatpush1.bf16.msra.mxu0 %v1571
        %1597 = vmatprep.subr.bf16.mxu0 0
        %1598 = vmatpush1.bf16.msra.mxu0 %v1589
        %1599 = vmatprep.subr.bf16.mxu0 0
        %1600 = vmatpush1.bf16.msra.mxu0 0
        %1601 = vmatprep.subr.bf16.mxu0 0
        %1602 = vmatpush1.bf16.msra.mxu0 0
        %1603 = vmatprep.subr.bf16.mxu0 0
        %1604 = vmatpush1.bf16.msra.mxu0 0
        %1605 = vmatprep.subr.bf16.mxu0 0
        %1606 = vmatpush1.bf16.msra.mxu0 0
        %1607 = vmatprep.subr.bf16.mxu0 0
        %1608 = vmatpush1.bf16.msra.mxu0 0
        %1609 = vmatprep.subr.bf16.mxu0 0
        %1610 = vmatpush1.bf16.msra.mxu0 0
        %1611 = vmatprep.subr.bf16.mxu0 0
        %1612 = vmatpush1.bf16.msra.mxu0 0
        %1613 = vmatprep.subr.bf16.mxu0 0
        %1614 = vmatpush1.bf16.msra.mxu0 0
        %1615 = vmatprep.subr.bf16.mxu0 0
        %1616 = vmatpush1.bf16.msra.mxu0 0
        %1617 = vmatprep.subr.bf16.mxu0 0
        %1618 = vmatpush1.bf16.msra.mxu0 0
        %1619 = vmatprep.subr.bf16.mxu0 0
        %1620 = vmatpush1.bf16.msra.mxu0 0
        %1621 = vmatprep.subr.bf16.mxu0 0
        %1622 = vmatpush1.bf16.msra.mxu0 0
        %1623 = vmatprep.mubr.bf16.mxu0 0
        %1624 = vmatmul.mubr.bf16.gmra.mrb[0].mxu0 %v1574
        %v1625 = vpop.f32.mrb[0].mxu0
        %v1626 = vadd.f32 0.0, %v1625
        %v1627 = vpop.f32.mrb[0].mxu0
        %v1628 = vpop.f32.mrb[0].mxu0
        %v1629 = vadd.f32 0.0, %v1628
        %v1630 = vpop.f32.mrb[0].mxu0
        %1631 = vmatprep.mubr.bf16.mxu0 0
        %1632 = vmatmul.mubr.bf16.gmra.mrb[0].mxu0 %v1577
        %v1633 = vpop.f32.mrb[0].mxu0
        %v1634 = vadd.f32 0.0, %v1633
        %v1635 = vpop.f32.mrb[0].mxu0
        %v1636 = vpop.f32.mrb[0].mxu0
        %v1637 = vadd.f32 0.0, %v1636
        %v1638 = vpop.f32.mrb[0].mxu0
        %1639 = vmatprep.mubr.bf16.mxu0 0
        %1640 = vmatmul.mubr.bf16.gmra.mrb[0].mxu0 %v1580
        %v1641 = vpop.f32.mrb[0].mxu0
        %v1642 = vadd.f32 0.0, %v1641
        %v1643 = vpop.f32.mrb[0].mxu0
        %v1644 = vpop.f32.mrb[0].mxu0
        %v1645 = vadd.f32 0.0, %v1644
        %v1646 = vpop.f32.mrb[0].mxu0
        %1647 = vmatprep.mubr.bf16.mxu0 0
        %1648 = vmatmul.mubr.bf16.gmra.mrb[0].mxu0 %v1583
        %v1649 = vpop.f32.mrb[0].mxu0
        %v1650 = vadd.f32 0.0, %v1649
        %v1651 = vpop.f32.mrb[0].mxu0
        %v1652 = vpop.f32.mrb[0].mxu0
        %v1653 = vpop.f32.mrb[0].mxu0
        %1654 = vdwg.mxu0
        %v1655 = vpack.c.bf16 %v1629, %v1626
        %v1656 = vpack.c.bf16 %v1637, %v1634
        %v1657 = vpack.c.bf16 %v1645, %v1642
        %v1658 = vpack.c.bf16 %v1650, %v1650
        %1659 = vrot.lane.b32.xlu0 %v1132, 32
        %v1660 = vpop.permute.xlu0 %1659
        %1661 = vrot.lane.b32.xlu0 %v1133, 32
        %v1662 = vpop.permute.xlu0 %1661
        %1665 = vrot.lane.b32.xlu0 %v1122, 32
        %v1666 = vpop.permute.xlu0 %1665
        %v1669 = vsel %vm985, %v1655, 0
        %v1672 = vsel %vm985, %v1656, 0
        %v1675 = vsel %vm985, %v1657, 0
        %v1678 = vsel %vm985, %v1658, 0
        %1680 = vmatprep.subr.bf16.mxu0 0
        %1681 = vmatpush1.bf16.msra.mxu0 %v1660
        %1682 = vmatprep.subr.bf16.mxu0 0
        %1683 = vmatpush1.bf16.msra.mxu0 %v1662
        %1684 = vmatprep.subr.bf16.mxu0 0
        %1685 = vmatpush1.bf16.msra.mxu0 0
        %1686 = vmatprep.subr.bf16.mxu0 0
        %1687 = vmatpush1.bf16.msra.mxu0 0
        %1688 = vmatprep.subr.bf16.mxu0 0
        %1689 = vmatpush1.bf16.msra.mxu0 0
        %1690 = vmatprep.subr.bf16.mxu0 0
        %1691 = vmatpush1.bf16.msra.mxu0 0
        %1692 = vmatprep.subr.bf16.mxu0 0
        %1693 = vmatpush1.bf16.msra.mxu0 0
        %1694 = vmatprep.subr.bf16.mxu0 0
        %1695 = vmatpush1.bf16.msra.mxu0 0
        %1696 = vmatprep.subr.bf16.mxu0 0
        %1697 = vmatpush1.bf16.msra.mxu0 0
        %1698 = vmatprep.subr.bf16.mxu0 0
        %1699 = vmatpush1.bf16.msra.mxu0 0
        %1700 = vmatprep.subr.bf16.mxu0 0
        %1701 = vmatpush1.bf16.msra.mxu0 0
        %1702 = vmatprep.subr.bf16.mxu0 0
        %1703 = vmatpush1.bf16.msra.mxu0 0
        %1704 = vmatprep.subr.bf16.mxu0 0
        %1705 = vmatpush1.bf16.msra.mxu0 0
        %1706 = vmatprep.subr.bf16.mxu0 0
        %1707 = vmatpush1.bf16.msra.mxu0 0
        %1708 = vmatprep.subr.bf16.mxu0 0
        %1709 = vmatpush1.bf16.msra.mxu0 0
        %1710 = vmatprep.subr.bf16.mxu0 0
        %1711 = vmatpush1.bf16.msra.mxu0 0
        %1712 = vmatprep.mubr.bf16.mxu0 0
        %1713 = vmatmul.mubr.bf16.gmra.mrb[0].mxu0 %v1669
        %v1714 = vpop.f32.mrb[0].mxu0
        %v1715 = vadd.f32 %v1666, %v1714
        %v1716 = vpop.f32.mrb[0].mxu0
        %v1717 = vpop.f32.mrb[0].mxu0
        %v1718 = vadd.f32 %v1666, %v1717
        %v1719 = vpop.f32.mrb[0].mxu0
        %1720 = vmatprep.mubr.bf16.mxu0 0
        %1721 = vmatmul.mubr.bf16.gmra.mrb[0].mxu0 %v1672
        %v1722 = vpop.f32.mrb[0].mxu0
        %v1723 = vadd.f32 %v1666, %v1722
        %v1724 = vpop.f32.mrb[0].mxu0
        %v1725 = vpop.f32.mrb[0].mxu0
        %v1726 = vadd.f32 %v1666, %v1725
        %v1727 = vpop.f32.mrb[0].mxu0
        %1728 = vmatprep.mubr.bf16.mxu0 0
        %1729 = vmatmul.mubr.bf16.gmra.mrb[0].mxu0 %v1675
        %v1730 = vpop.f32.mrb[0].mxu0
        %v1731 = vadd.f32 %v1666, %v1730
        %v1732 = vpop.f32.mrb[0].mxu0
        %v1733 = vpop.f32.mrb[0].mxu0
        %v1734 = vadd.f32 %v1666, %v1733
        %v1735 = vpop.f32.mrb[0].mxu0
        %1736 = vmatprep.mubr.bf16.mxu0 0
        %1737 = vmatmul.mubr.bf16.gmra.mrb[0].mxu0 %v1678
        %v1738 = vpop.f32.mrb[0].mxu0
        %v1739 = vadd.f32 %v1666, %v1738
        %v1740 = vpop.f32.mrb[0].mxu0
        %v1741 = vpop.f32.mrb[0].mxu0
        %v1742 = vpop.f32.mrb[0].mxu0
        %1743 = vdwg.mxu0
        %v1744 = vadd.f32 %v1715, %v978
        %v1745 = vadd.f32 %v1718, %v979
        %v1746 = vadd.f32 %v1723, %v980
        %v1747 = vadd.f32 %v1726, %v981
        %v1748 = vadd.f32 %v1731, %v982
        %v1749 = vadd.f32 %v1734, %v983
        %v1750 = vadd.f32 %v1739, %v984
        %v1751 = vmax.f32 %v1744, 0.0
        %v1752 = vmax.f32 %v1745, 0.0
        %v1753 = vmax.f32 %v1746, 0.0
        %v1754 = vmax.f32 %v1747, 0.0
        %v1755 = vmax.f32 %v1748, 0.0
        %v1756 = vmax.f32 %v1749, 0.0
        %v1757 = vmax.f32 %v1750, 0.0
        %v1758 = vpack.c.bf16 %v1752, %v1751
        %v1759 = vpack.c.bf16 %v1754, %v1753
        %v1760 = vpack.c.bf16 %v1756, %v1755
        %v1761 = vpack.c.bf16 %v1757, %v1757
        %v1762 = vld [vmem:[%s17] sm:$0x1]
        %v1764 = vlaneseq
        %v1765 = vshrl.u32 %v1764, 7
        %v1766 = vsub.s32 0, %v1765
        %v1767 = vrot.slane %v1762, %v1766
        %v1773 = vunpack.c.l.b16 %v950
        %v1774 = vunpack.c.l.b16 %v951
        %v1775 = vunpack.c.l.b16 %v952
        %v1776 = vunpack.c.l.b16 %v953
        %v1777 = vpack.c.b16 %v1774, %v1773
        %v1778 = vpack.c.b16 %v1776, %v1775
        %v1782 = vsel %vm985, %v1758, 0
        %v1785 = vsel %vm985, %v1759, 0
        %v1788 = vsel %vm985, %v1760, 0
        %v1791 = vsel %vm985, %v1761, 0
        %1793 = vmatprep.subr.bf16.mxu0 0
        %1794 = vmatpush1.bf16.msra.mxu0 %v1777
        %1795 = vmatprep.subr.bf16.mxu0 0
        %1796 = vmatpush1.bf16.msra.mxu0 %v1778
        %1797 = vmatprep.subr.bf16.mxu0 0
        %1798 = vmatpush1.bf16.msra.mxu0 0
        %1799 = vmatprep.subr.bf16.mxu0 0
        %1800 = vmatpush1.bf16.msra.mxu0 0
        %1801 = vmatprep.subr.bf16.mxu0 0
        %1802 = vmatpush1.bf16.msra.mxu0 0
        %1803 = vmatprep.subr.bf16.mxu0 0
        %1804 = vmatpush1.bf16.msra.mxu0 0
        %1805 = vmatprep.subr.bf16.mxu0 0
        %1806 = vmatpush1.bf16.msra.mxu0 0
        %1807 = vmatprep.subr.bf16.mxu0 0
        %1808 = vmatpush1.bf16.msra.mxu0 0
        %1809 = vmatprep.subr.bf16.mxu0 0
        %1810 = vmatpush1.bf16.msra.mxu0 0
        %1811 = vmatprep.subr.bf16.mxu0 0
        %1812 = vmatpush1.bf16.msra.mxu0 0
        %1813 = vmatprep.subr.bf16.mxu0 0
        %1814 = vmatpush1.bf16.msra.mxu0 0
        %1815 = vmatprep.subr.bf16.mxu0 0
        %1816 = vmatpush1.bf16.msra.mxu0 0
        %1817 = vmatprep.subr.bf16.mxu0 0
        %1818 = vmatpush1.bf16.msra.mxu0 0
        %1819 = vmatprep.subr.bf16.mxu0 0
        %1820 = vmatpush1.bf16.msra.mxu0 0
        %1821 = vmatprep.subr.bf16.mxu0 0
        %1822 = vmatpush1.bf16.msra.mxu0 0
        %1823 = vmatprep.subr.bf16.mxu0 0
        %1824 = vmatpush1.bf16.msra.mxu0 0
        %1825 = vmatprep.mubr.bf16.mxu0 0
        %1826 = vmatmul.mubr.bf16.gmra.mrb[0].mxu0 %v1782
        %v1827 = vpop.f32.mrb[0].mxu0
        %v1828 = vadd.f32 %v1767, %v1827
        %v1829 = vpop.f32.mrb[0].mxu0
        %v1830 = vpop.f32.mrb[0].mxu0
        %v1831 = vadd.f32 %v1767, %v1830
        %v1832 = vpop.f32.mrb[0].mxu0
        %1833 = vmatprep.mubr.bf16.mxu0 0
        %1834 = vmatmul.mubr.bf16.gmra.mrb[0].mxu0 %v1785
        %v1835 = vpop.f32.mrb[0].mxu0
        %v1836 = vadd.f32 %v1767, %v1835
        %v1837 = vpop.f32.mrb[0].mxu0
        %v1838 = vpop.f32.mrb[0].mxu0
        %v1839 = vadd.f32 %v1767, %v1838
        %v1840 = vpop.f32.mrb[0].mxu0
        %1841 = vmatprep.mubr.bf16.mxu0 0
        %1842 = vmatmul.mubr.bf16.gmra.mrb[0].mxu0 %v1788
        %v1843 = vpop.f32.mrb[0].mxu0
        %v1844 = vadd.f32 %v1767, %v1843
        %v1845 = vpop.f32.mrb[0].mxu0
        %v1846 = vpop.f32.mrb[0].mxu0
        %v1847 = vadd.f32 %v1767, %v1846
        %v1848 = vpop.f32.mrb[0].mxu0
        %1849 = vmatprep.mubr.bf16.mxu0 0
        %1850 = vmatmul.mubr.bf16.gmra.mrb[0].mxu0 %v1791
        %v1851 = vpop.f32.mrb[0].mxu0
        %v1852 = vadd.f32 %v1767, %v1851
        %v1853 = vpop.f32.mrb[0].mxu0
        %v1854 = vpop.f32.mrb[0].mxu0
        %v1855 = vpop.f32.mrb[0].mxu0
        %1856 = vdwg.mxu0
        %v1857 = vld [vmem:[%s19] sm:$0xf]
        %v1858 = vld [vmem:[%s19 + $0x4] sm:$0xf]
        %v1859 = vld [vmem:[%s21] sm:$0x1]
        %v1860 = vld [vmem:[%s23] sm:$0x1]
        %v1861 = vld [vmem:[%s25] sm:$0x1]
        %v1863 = vsel %vm1486, %v929, 0
        %v1866 = vsel %vm1486, %v930, 0
        %v1869 = vsel %vm1486, %v931, 0
        %v1872 = vsel %vm1486, %v932, 0
        %v1875 = vsel %vm1486, %v933, 0
        %v1878 = vsel %vm1486, %v934, 0
        %v1881 = vsel %vm1486, %v935, 0
        %v1884 = vsel %vm1585, %v1852, 0
        %1886 = vmatprep.subr.mxu0 0.0
        %1887 = vmatpush1.msra.mxu0 %v1828
        %1888 = vmatprep.subr.mxu0 0.0
        %1889 = vmatpush1.msra.mxu0 %v1831
        %1890 = vmatprep.subr.mxu0 0.0
        %1891 = vmatpush1.msra.mxu0 %v1836
        %1892 = vmatprep.subr.mxu0 0.0
        %1893 = vmatpush1.msra.mxu0 %v1839
        %1894 = vmatprep.subr.mxu0 0.0
        %1895 = vmatpush1.msra.mxu0 %v1844
        %1896 = vmatprep.subr.mxu0 0.0
        %1897 = vmatpush1.msra.mxu0 %v1847
        %1898 = vmatprep.subr.mxu0 0.0
        %1899 = vmatpush1.msra.mxu0 %v1884
        %1900 = vmatprep.subr.mxu0 0.0
        %1901 = vmatpush1.msra.mxu0 0.0
        %1902 = vmatprep.subr.mxu0 0.0
        %1903 = vmatpush1.msra.mxu0 0.0
        %1904 = vmatprep.subr.mxu0 0.0
        %1905 = vmatpush1.msra.mxu0 0.0
        %1906 = vmatprep.subr.mxu0 0.0
        %1907 = vmatpush1.msra.mxu0 0.0
        %1908 = vmatprep.subr.mxu0 0.0
        %1909 = vmatpush1.msra.mxu0 0.0
        %1910 = vmatprep.subr.mxu0 0.0
        %1911 = vmatpush1.msra.mxu0 0.0
        %1912 = vmatprep.subr.mxu0 0.0
        %1913 = vmatpush1.msra.mxu0 0.0
        %1914 = vmatprep.subr.mxu0 0.0
        %1915 = vmatpush1.msra.mxu0 0.0
        %1916 = vmatprep.subr.mxu0 0.0
        %1917 = vmatpush1.msra.mxu0 0.0
        %1918 = vmatprep.subr.mxu0 0.0
        %1919 = vmatpush1.msra.mxu0 0.0
        %1920 = vmatprep.subr.mxu0 0.0
        %1921 = vmatpush1.msra.mxu0 0.0
        %1922 = vmatprep.subr.mxu0 0.0
        %1923 = vmatpush1.msra.mxu0 0.0
        %1924 = vmatprep.subr.mxu0 0.0
        %1925 = vmatpush1.msra.mxu0 0.0
        %1926 = vmatprep.subr.mxu0 0.0
        %1927 = vmatpush1.msra.mxu0 0.0
        %1928 = vmatprep.subr.mxu0 0.0
        %1929 = vmatpush1.msra.mxu0 0.0
        %1930 = vmatprep.subr.mxu0 0.0
        %1931 = vmatpush1.msra.mxu0 0.0
        %1932 = vmatprep.subr.mxu0 0.0
        %1933 = vmatpush1.msra.mxu0 0.0
        %1934 = vmatprep.subr.mxu0 0.0
        %1935 = vmatpush1.msra.mxu0 0.0
        %1936 = vmatprep.subr.mxu0 0.0
        %1937 = vmatpush1.msra.mxu0 0.0
        %1938 = vmatprep.subr.mxu0 0.0
        %1939 = vmatpush1.msra.mxu0 0.0
        %1940 = vmatprep.subr.mxu0 0.0
        %1941 = vmatpush1.msra.mxu0 0.0
        %1942 = vmatprep.subr.mxu0 0.0
        %1943 = vmatpush1.msra.mxu0 0.0
        %1944 = vmatprep.subr.mxu0 0.0
        %1945 = vmatpush1.msra.mxu0 0.0
        %1946 = vmatprep.subr.mxu0 0.0
        %1947 = vmatpush1.msra.mxu0 0.0
        %1948 = vmatprep.subr.mxu0 0.0
        %1949 = vmatpush1.msra.mxu0 0.0
        %1950 = vmatprep.mubr.f32.mxu0 0.0
        %1951 = vmatmul.mubr.f32.gmra.mrb[0].mxu0 %v1863
        %v1952 = vpop.f32.mrb[0].mxu0
        %v1953 = vadd.f32 0.0, %v1952
        %v1954 = vpop.f32.mrb[0].mxu0
        %1955 = vmatprep.mubr.f32.mxu0 0.0
        %1956 = vmatmul.mubr.f32.gmra.mrb[0].mxu0 %v1866
        %v1957 = vpop.f32.mrb[0].mxu0
        %v1958 = vadd.f32 0.0, %v1957
        %v1959 = vpop.f32.mrb[0].mxu0
        %1960 = vmatprep.mubr.f32.mxu0 0.0
        %1961 = vmatmul.mubr.f32.gmra.mrb[0].mxu0 %v1869
        %v1962 = vpop.f32.mrb[0].mxu0
        %v1963 = vadd.f32 0.0, %v1962
        %v1964 = vpop.f32.mrb[0].mxu0
        %1965 = vmatprep.mubr.f32.mxu0 0.0
        %1966 = vmatmul.mubr.f32.gmra.mrb[0].mxu0 %v1872
        %v1967 = vpop.f32.mrb[0].mxu0
        %v1968 = vadd.f32 0.0, %v1967
        %v1969 = vpop.f32.mrb[0].mxu0
        %1970 = vmatprep.mubr.f32.mxu0 0.0
        %1971 = vmatmul.mubr.f32.gmra.mrb[0].mxu0 %v1875
        %v1972 = vpop.f32.mrb[0].mxu0
        %v1973 = vadd.f32 0.0, %v1972
        %v1974 = vpop.f32.mrb[0].mxu0
        %1975 = vmatprep.mubr.f32.mxu0 0.0
        %1976 = vmatmul.mubr.f32.gmra.mrb[0].mxu0 %v1878
        %v1977 = vpop.f32.mrb[0].mxu0
        %v1978 = vadd.f32 0.0, %v1977
        %v1979 = vpop.f32.mrb[0].mxu0
        %1980 = vmatprep.mubr.f32.mxu0 0.0
        %1981 = vmatmul.mubr.f32.gmra.mrb[0].mxu0 %v1881
        %v1982 = vpop.f32.mrb[0].mxu0
        %v1983 = vadd.f32 0.0, %v1982
        %v1984 = vpop.f32.mrb[0].mxu0
        %1985 = vdwg.mxu0
        %v1986 = vmax.f32 %v1828, %v1953
        %v1987 = vmax.f32 %v1831, %v1958
        %v1988 = vmax.f32 %v1836, %v1963
        %v1989 = vmax.f32 %v1839, %v1968
        %v1990 = vmax.f32 %v1844, %v1973
        %v1991 = vmax.f32 %v1847, %v1978
        %v1992 = vmax.f32 %v1852, %v1983
        %v1994 = vsel %vm1486, %v937, 0
        %v1997 = vsel %vm1486, %v938, 0
        %v2000 = vsel %vm1486, %v939, 0
        %v2003 = vsel %vm1486, %v940, 0
        %v2006 = vsel %vm1486, %v941, 0
        %v2009 = vsel %vm1486, %v942, 0
        %v2012 = vsel %vm1486, %v943, 0
        %v2015 = vsel %vm1585, %v1992, 0
        %2017 = vmatprep.subr.mxu0 0.0
        %2018 = vmatpush1.msra.mxu0 %v1986
        %2019 = vmatprep.subr.mxu0 0.0
        %2020 = vmatpush1.msra.mxu0 %v1987
        %2021 = vmatprep.subr.mxu0 0.0
        %2022 = vmatpush1.msra.mxu0 %v1988
        %2023 = vmatprep.subr.mxu0 0.0
        %2024 = vmatpush1.msra.mxu0 %v1989
        %2025 = vmatprep.subr.mxu0 0.0
        %2026 = vmatpush1.msra.mxu0 %v1990
        %2027 = vmatprep.subr.mxu0 0.0
        %2028 = vmatpush1.msra.mxu0 %v1991
        %2029 = vmatprep.subr.mxu0 0.0
        %2030 = vmatpush1.msra.mxu0 %v2015
        %2031 = vmatprep.subr.mxu0 0.0
        %2032 = vmatpush1.msra.mxu0 0.0
        %2033 = vmatprep.subr.mxu0 0.0
        %2034 = vmatpush1.msra.mxu0 0.0
        %2035 = vmatprep.subr.mxu0 0.0
        %2036 = vmatpush1.msra.mxu0 0.0
        %2037 = vmatprep.subr.mxu0 0.0
        %2038 = vmatpush1.msra.mxu0 0.0
        %2039 = vmatprep.subr.mxu0 0.0
        %2040 = vmatpush1.msra.mxu0 0.0
        %2041 = vmatprep.subr.mxu0 0.0
        %2042 = vmatpush1.msra.mxu0 0.0
        %2043 = vmatprep.subr.mxu0 0.0
        %2044 = vmatpush1.msra.mxu0 0.0
        %2045 = vmatprep.subr.mxu0 0.0
        %2046 = vmatpush1.msra.mxu0 0.0
        %2047 = vmatprep.subr.mxu0 0.0
        %2048 = vmatpush1.msra.mxu0 0.0
        %2049 = vmatprep.subr.mxu0 0.0
        %2050 = vmatpush1.msra.mxu0 0.0
        %2051 = vmatprep.subr.mxu0 0.0
        %2052 = vmatpush1.msra.mxu0 0.0
        %2053 = vmatprep.subr.mxu0 0.0
        %2054 = vmatpush1.msra.mxu0 0.0
        %2055 = vmatprep.subr.mxu0 0.0
        %2056 = vmatpush1.msra.mxu0 0.0
        %2057 = vmatprep.subr.mxu0 0.0
        %2058 = vmatpush1.msra.mxu0 0.0
        %2059 = vmatprep.subr.mxu0 0.0
        %2060 = vmatpush1.msra.mxu0 0.0
        %2061 = vmatprep.subr.mxu0 0.0
        %2062 = vmatpush1.msra.mxu0 0.0
        %2063 = vmatprep.subr.mxu0 0.0
        %2064 = vmatpush1.msra.mxu0 0.0
        %2065 = vmatprep.subr.mxu0 0.0
        %2066 = vmatpush1.msra.mxu0 0.0
        %2067 = vmatprep.subr.mxu0 0.0
        %2068 = vmatpush1.msra.mxu0 0.0
        %2069 = vmatprep.subr.mxu0 0.0
        %2070 = vmatpush1.msra.mxu0 0.0
        %2071 = vmatprep.subr.mxu0 0.0
        %2072 = vmatpush1.msra.mxu0 0.0
        %2073 = vmatprep.subr.mxu0 0.0
        %2074 = vmatpush1.msra.mxu0 0.0
        %2075 = vmatprep.subr.mxu0 0.0
        %2076 = vmatpush1.msra.mxu0 0.0
        %2077 = vmatprep.subr.mxu0 0.0
        %2078 = vmatpush1.msra.mxu0 0.0
        %2079 = vmatprep.subr.mxu0 0.0
        %2080 = vmatpush1.msra.mxu0 0.0
        %2081 = vmatprep.mubr.f32.mxu0 0.0
        %2082 = vmatmul.mubr.f32.gmra.mrb[0].mxu0 %v1994
        %v2083 = vpop.f32.mrb[0].mxu0
        %v2084 = vadd.f32 0.0, %v2083
        %v2085 = vpop.f32.mrb[0].mxu0
        %2086 = vmatprep.mubr.f32.mxu0 0.0
        %2087 = vmatmul.mubr.f32.gmra.mrb[0].mxu0 %v1997
        %v2088 = vpop.f32.mrb[0].mxu0
        %v2089 = vadd.f32 0.0, %v2088
        %v2090 = vpop.f32.mrb[0].mxu0
        %2091 = vmatprep.mubr.f32.mxu0 0.0
        %2092 = vmatmul.mubr.f32.gmra.mrb[0].mxu0 %v2000
        %v2093 = vpop.f32.mrb[0].mxu0
        %v2094 = vadd.f32 0.0, %v2093
        %v2095 = vpop.f32.mrb[0].mxu0
        %2096 = vmatprep.mubr.f32.mxu0 0.0
        %2097 = vmatmul.mubr.f32.gmra.mrb[0].mxu0 %v2003
        %v2098 = vpop.f32.mrb[0].mxu0
        %v2099 = vadd.f32 0.0, %v2098
        %v2100 = vpop.f32.mrb[0].mxu0
        %2101 = vmatprep.mubr.f32.mxu0 0.0
        %2102 = vmatmul.mubr.f32.gmra.mrb[0].mxu0 %v2006
        %v2103 = vpop.f32.mrb[0].mxu0
        %v2104 = vadd.f32 0.0, %v2103
        %v2105 = vpop.f32.mrb[0].mxu0
        %2106 = vmatprep.mubr.f32.mxu0 0.0
        %2107 = vmatmul.mubr.f32.gmra.mrb[0].mxu0 %v2009
        %v2108 = vpop.f32.mrb[0].mxu0
        %v2109 = vadd.f32 0.0, %v2108
        %v2110 = vpop.f32.mrb[0].mxu0
        %2111 = vmatprep.mubr.f32.mxu0 0.0
        %2112 = vmatmul.mubr.f32.gmra.mrb[0].mxu0 %v2012
        %v2113 = vpop.f32.mrb[0].mxu0
        %v2114 = vadd.f32 0.0, %v2113
        %v2115 = vpop.f32.mrb[0].mxu0
        %2116 = vdwg.mxu0
        %v2117 = vmax.f32 %v1986, %v2084
        %v2118 = vmax.f32 %v1987, %v2089
        %v2119 = vmax.f32 %v1988, %v2094
        %v2120 = vmax.f32 %v1989, %v2099
        %v2121 = vmax.f32 %v1990, %v2104
        %v2122 = vmax.f32 %v1991, %v2109
        %v2123 = vmax.f32 %v1992, %v2114
        %v2124 = vpack.c.bf16 %v1831, %v1828
        %v2125 = vpack.c.bf16 %v1839, %v1836
        %v2126 = vpack.c.bf16 %v1847, %v1844
        %v2127 = vpack.c.bf16 %v1852, %v1852
        %v2128 = vpack.c.bf16 %v2118, %v2117
        %v2129 = vpack.c.bf16 %v2120, %v2119
        %v2130 = vpack.c.bf16 %v2122, %v2121
        %v2131 = vpack.c.bf16 %v2123, %v2123
        %v2133 = vlaneseq
        %v2134 = vshrl.u32 %v2133, 7
        %v2135 = vsub.s32 0, %v2134
        %v2136 = vrot.slane %v944, %v2135
        %2142 = vrot.lane.b32.xlu0 %v2124, 96
        %v2143 = vpop.permute.xlu0 %2142
        %2144 = vrot.lane.b32.xlu0 %v2125, 96
        %v2145 = vpop.permute.xlu0 %2144
        %2146 = vrot.lane.b32.xlu0 %v2126, 96
        %v2147 = vpop.permute.xlu0 %2146
        %2148 = vrot.lane.b32.xlu0 %v2127, 96
        %v2149 = vpop.permute.xlu0 %2148
        %2154 = vrot.lane.b32.xlu0 %v2128, 112
        %v2155 = vpop.permute.xlu0 %2154
        %2156 = vrot.lane.b32.xlu0 %v2129, 112
        %v2157 = vpop.permute.xlu0 %2156
        %2158 = vrot.lane.b32.xlu0 %v2130, 112
        %v2159 = vpop.permute.xlu0 %2158
        %2160 = vrot.lane.b32.xlu0 %v2131, 112
        %v2161 = vpop.permute.xlu0 %2160
        %vm2162 = vcmask 130048
        %v2164 = vsel %vm2162, %v2143, 0
        %v2167 = vsel %vm2162, %v2145, 0
        %v2170 = vsel %vm2162, %v2147, 0
        %v2173 = vsel %vm2162, %v2149, 0
        %v2176 = vsel %vm2162, %v2155, 0
        %v2179 = vsel %vm2162, %v2157, 0
        %v2182 = vsel %vm2162, %v2159, 0
        %v2185 = vsel %vm2162, %v2161, 0
        %2187 = vmatprep.subr.bf16.mxu0 0
        %2188 = vmatpush1.bf16.xpose.msra.mxu0 %v2176
        %2189 = vmatprep.subr.bf16.mxu0 0
        %2190 = vmatpush1.bf16.xpose.msra.mxu0 %v2179
        %2191 = vmatprep.subr.bf16.mxu0 0
        %2192 = vmatpush1.bf16.xpose.msra.mxu0 %v2182
        %2193 = vmatprep.subr.bf16.mxu0 0
        %2194 = vmatpush1.bf16.xpose.msra.mxu0 %v2185
        %2195 = vmatprep.subr.bf16.mxu0 0
        %2196 = vmatpush1.bf16.xpose.msra.mxu0 0
        %2197 = vmatprep.subr.bf16.mxu0 0
        %2198 = vmatpush1.bf16.xpose.msra.mxu0 0
        %2199 = vmatprep.subr.bf16.mxu0 0
        %2200 = vmatpush1.bf16.xpose.msra.mxu0 0
        %2201 = vmatprep.subr.bf16.mxu0 0
        %2202 = vmatpush1.bf16.xpose.msra.mxu0 0
        %2203 = vmatprep.subr.bf16.mxu0 0
        %2204 = vmatpush1.bf16.xpose.msra.mxu0 0
        %2205 = vmatprep.subr.bf16.mxu0 0
        %2206 = vmatpush1.bf16.xpose.msra.mxu0 0
        %2207 = vmatprep.subr.bf16.mxu0 0
        %2208 = vmatpush1.bf16.xpose.msra.mxu0 0
        %2209 = vmatprep.subr.bf16.mxu0 0
        %2210 = vmatpush1.bf16.xpose.msra.mxu0 0
        %2211 = vmatprep.subr.bf16.mxu0 0
        %2212 = vmatpush1.bf16.xpose.msra.mxu0 0
        %2213 = vmatprep.subr.bf16.mxu0 0
        %2214 = vmatpush1.bf16.xpose.msra.mxu0 0
        %2215 = vmatprep.subr.bf16.mxu0 0
        %2216 = vmatpush1.bf16.xpose.msra.mxu0 0
        %2217 = vmatprep.subr.bf16.mxu0 0
        %2218 = vmatpush1.bf16.xpose.msra.mxu0 0
        %2219 = vmatprep.mubr.bf16.mxu0 0
        %2220 = vmatmul.mubr.bf16.gmra.mrb[0].mxu0 %v2164
        %v2221 = vpop.f32.mrb[0].mxu0
        %v2222 = vadd.f32 %v2136, %v2221
        %v2223 = vpop.f32.mrb[0].mxu0
        %v2224 = vpop.f32.mrb[0].mxu0
        %v2225 = vadd.f32 %v2136, %v2224
        %v2226 = vpop.f32.mrb[0].mxu0
        %2227 = vmatprep.mubr.bf16.mxu0 0
        %2228 = vmatmul.mubr.bf16.gmra.mrb[0].mxu0 %v2167
        %v2229 = vpop.f32.mrb[0].mxu0
        %v2230 = vadd.f32 %v2136, %v2229
        %v2231 = vpop.f32.mrb[0].mxu0
        %v2232 = vpop.f32.mrb[0].mxu0
        %v2233 = vadd.f32 %v2136, %v2232
        %v2234 = vpop.f32.mrb[0].mxu0
        %2235 = vmatprep.mubr.bf16.mxu0 0
        %2236 = vmatmul.mubr.bf16.gmra.mrb[0].mxu0 %v2170
        %v2237 = vpop.f32.mrb[0].mxu0
        %v2238 = vadd.f32 %v2136, %v2237
        %v2239 = vpop.f32.mrb[0].mxu0
        %v2240 = vpop.f32.mrb[0].mxu0
        %v2241 = vadd.f32 %v2136, %v2240
        %v2242 = vpop.f32.mrb[0].mxu0
        %2243 = vmatprep.mubr.bf16.mxu0 0
        %2244 = vmatmul.mubr.bf16.gmra.mrb[0].mxu0 %v2173
        %v2245 = vpop.f32.mrb[0].mxu0
        %v2246 = vadd.f32 %v2136, %v2245
        %v2247 = vpop.f32.mrb[0].mxu0
        %v2248 = vpop.f32.mrb[0].mxu0
        %v2249 = vpop.f32.mrb[0].mxu0
        %2250 = vdwg.mxu0
        %v2251 = vsel %vm1486, %v2222, -inf
        %2252 = vmax.xlane.f32.xlu0 %v2251
        %v2253 = vpop.xlane.xlu0 %2252
        %v2254 = vsel %vm1486, %v2225, -inf
        %2255 = vmax.xlane.f32.xlu0 %v2254
        %v2256 = vpop.xlane.xlu0 %2255
        %v2257 = vsel %vm1486, %v2230, -inf
        %2258 = vmax.xlane.f32.xlu0 %v2257
        %v2259 = vpop.xlane.xlu0 %2258
        %v2260 = vsel %vm1486, %v2233, -inf
        %2261 = vmax.xlane.f32.xlu0 %v2260
        %v2262 = vpop.xlane.xlu0 %2261
        %v2263 = vsel %vm1486, %v2238, -inf
        %2264 = vmax.xlane.f32.xlu0 %v2263
        %v2265 = vpop.xlane.xlu0 %2264
        %v2266 = vsel %vm1486, %v2241, -inf
        %2267 = vmax.xlane.f32.xlu0 %v2266
        %v2268 = vpop.xlane.xlu0 %2267
        %v2269 = vsel %vm1505, %v2246, -inf
        %2270 = vmax.xlane.f32.xlu0 %v2269
        %v2271 = vpop.xlane.xlu0 %2270
        %v2272 = vsub.f32 %v2222, %v2253
        %v2273 = vsub.f32 %v2225, %v2256
        %v2274 = vsub.f32 %v2230, %v2259
        %v2275 = vsub.f32 %v2233, %v2262
        %v2276 = vsub.f32 %v2238, %v2265
        %v2277 = vsub.f32 %v2241, %v2268
        %v2278 = vsub.f32 %v2246, %v2271
        %v2279 = vmul.f32 %v2272, 1.442695
        %v2280 = vpow.pop %v2279
        %v2281 = vmul.f32 %v2273, 1.442695
        %v2282 = vpow.pop %v2281
        %v2283 = vmul.f32 %v2274, 1.442695
        %v2284 = vpow.pop %v2283
        %v2285 = vmul.f32 %v2275, 1.442695
        %v2286 = vpow.pop %v2285
        %v2287 = vmul.f32 %v2276, 1.442695
        %v2288 = vpow.pop %v2287
        %v2289 = vmul.f32 %v2277, 1.442695
        %v2290 = vpow.pop %v2289
        %v2291 = vmul.f32 %v2278, 1.442695
        %v2292 = vpow.pop %v2291
        %v2293 = vsel %vm1486, %v2280, 0.0
        %2294 = vadd.xlane.f32.xlu0 %v2293
        %v2295 = vpop.xlane.xlu0 %2294
        %v2296 = vsel %vm1486, %v2282, 0.0
        %2297 = vadd.xlane.f32.xlu0 %v2296
        %v2298 = vpop.xlane.xlu0 %2297
        %v2299 = vsel %vm1486, %v2284, 0.0
        %2300 = vadd.xlane.f32.xlu0 %v2299
        %v2301 = vpop.xlane.xlu0 %2300
        %v2302 = vsel %vm1486, %v2286, 0.0
        %2303 = vadd.xlane.f32.xlu0 %v2302
        %v2304 = vpop.xlane.xlu0 %2303
        %v2305 = vsel %vm1486, %v2288, 0.0
        %2306 = vadd.xlane.f32.xlu0 %v2305
        %v2307 = vpop.xlane.xlu0 %2306
        %v2308 = vsel %vm1486, %v2290, 0.0
        %2309 = vadd.xlane.f32.xlu0 %v2308
        %v2310 = vpop.xlane.xlu0 %2309
        %v2311 = vsel %vm1505, %v2292, 0.0
        %2312 = vadd.xlane.f32.xlu0 %v2311
        %v2313 = vpop.xlane.xlu0 %2312
        %v2314 = vrcp.pop %v2295
        %v2315 = vrcp.pop %v2298
        %v2316 = vrcp.pop %v2301
        %v2317 = vrcp.pop %v2304
        %v2318 = vrcp.pop %v2307
        %v2319 = vrcp.pop %v2310
        %v2320 = vrcp.pop %v2313
        %v2321 = vmul.f32 %v2280, %v2314
        %v2322 = vmul.f32 %v2282, %v2315
        %v2323 = vmul.f32 %v2284, %v2316
        %v2324 = vmul.f32 %v2286, %v2317
        %v2325 = vmul.f32 %v2288, %v2318
        %v2326 = vmul.f32 %v2290, %v2319
        %v2327 = vmul.f32 %v2292, %v2320
        %v2328 = vpack.c.bf16 %v2322, %v2321
        %v2329 = vpack.c.bf16 %v2324, %v2323
        %v2330 = vpack.c.bf16 %v2326, %v2325
        %v2331 = vpack.c.bf16 %v2327, %v2327
        %v2333 = vsel %vm1486, %v2328, 0
        %v2336 = vsel %vm1486, %v2329, 0
        %v2339 = vsel %vm1486, %v2330, 0
        %v2342 = vsel %vm1486, %v2331, 0
        %v2345 = vand.u32 %v2131, %v1587
        %2347 = vmatprep.subr.bf16.mxu0 0
        %2348 = vmatpush1.bf16.msra.mxu0 %v2128
        %2349 = vmatprep.subr.bf16.mxu0 0
        %2350 = vmatpush1.bf16.msra.mxu0 %v2129
        %2351 = vmatprep.subr.bf16.mxu0 0
        %2352 = vmatpush1.bf16.msra.mxu0 %v2130
        %2353 = vmatprep.subr.bf16.mxu0 0
        %2354 = vmatpush1.bf16.msra.mxu0 %v2345
        %2355 = vmatprep.subr.bf16.mxu0 0
        %2356 = vmatpush1.bf16.msra.mxu0 0
        %2357 = vmatprep.subr.bf16.mxu0 0
        %2358 = vmatpush1.bf16.msra.mxu0 0
        %2359 = vmatprep.subr.bf16.mxu0 0
        %2360 = vmatpush1.bf16.msra.mxu0 0
        %2361 = vmatprep.subr.bf16.mxu0 0
        %2362 = vmatpush1.bf16.msra.mxu0 0
        %2363 = vmatprep.subr.bf16.mxu0 0
        %2364 = vmatpush1.bf16.msra.mxu0 0
        %2365 = vmatprep.subr.bf16.mxu0 0
        %2366 = vmatpush1.bf16.msra.mxu0 0
        %2367 = vmatprep.subr.bf16.mxu0 0
        %2368 = vmatpush1.bf16.msra.mxu0 0
        %2369 = vmatprep.subr.bf16.mxu0 0
        %2370 = vmatpush1.bf16.msra.mxu0 0
        %2371 = vmatprep.subr.bf16.mxu0 0
        %2372 = vmatpush1.bf16.msra.mxu0 0
        %2373 = vmatprep.subr.bf16.mxu0 0
        %2374 = vmatpush1.bf16.msra.mxu0 0
        %2375 = vmatprep.subr.bf16.mxu0 0
        %2376 = vmatpush1.bf16.msra.mxu0 0
        %2377 = vmatprep.subr.bf16.mxu0 0
        %2378 = vmatpush1.bf16.msra.mxu0 0
        %2379 = vmatprep.mubr.bf16.mxu0 0
        %2380 = vmatmul.mubr.bf16.gmra.mrb[0].mxu0 %v2333
        %v2381 = vpop.f32.mrb[0].mxu0
        %v2382 = vadd.f32 0.0, %v2381
        %v2383 = vpop.f32.mrb[0].mxu0
        %v2384 = vpop.f32.mrb[0].mxu0
        %v2385 = vadd.f32 0.0, %v2384
        %v2386 = vpop.f32.mrb[0].mxu0
        %2387 = vmatprep.mubr.bf16.mxu0 0
        %2388 = vmatmul.mubr.bf16.gmra.mrb[0].mxu0 %v2336
        %v2389 = vpop.f32.mrb[0].mxu0
        %v2390 = vadd.f32 0.0, %v2389
        %v2391 = vpop.f32.mrb[0].mxu0
        %v2392 = vpop.f32.mrb[0].mxu0
        %v2393 = vadd.f32 0.0, %v2392
        %v2394 = vpop.f32.mrb[0].mxu0
        %2395 = vmatprep.mubr.bf16.mxu0 0
        %2396 = vmatmul.mubr.bf16.gmra.mrb[0].mxu0 %v2339
        %v2397 = vpop.f32.mrb[0].mxu0
        %v2398 = vadd.f32 0.0, %v2397
        %v2399 = vpop.f32.mrb[0].mxu0
        %v2400 = vpop.f32.mrb[0].mxu0
        %v2401 = vadd.f32 0.0, %v2400
        %v2402 = vpop.f32.mrb[0].mxu0
        %2403 = vmatprep.mubr.bf16.mxu0 0
        %2404 = vmatmul.mubr.bf16.gmra.mrb[0].mxu0 %v2342
        %v2405 = vpop.f32.mrb[0].mxu0
        %v2406 = vadd.f32 0.0, %v2405
        %v2407 = vpop.f32.mrb[0].mxu0
        %v2408 = vpop.f32.mrb[0].mxu0
        %v2409 = vpop.f32.mrb[0].mxu0
        %2410 = vdwg.mxu0
        %v2411 = vpack.c.bf16 %v2385, %v2382
        %v2412 = vpack.c.bf16 %v2393, %v2390
        %v2413 = vpack.c.bf16 %v2401, %v2398
        %v2414 = vpack.c.bf16 %v2406, %v2406
        %v2416 = vlaneseq
        %v2417 = vshrl.u32 %v2416, 7
        %v2418 = vsub.s32 0, %v2417
        %v2419 = vrot.slane %v1859, %v2418
        %v2423 = vunpack.c.l.b16 %v1857
        %v2424 = vunpack.c.l.b16 %v1858
        %v2425 = vpack.c.b16 %v2424, %v2423
        %v2428 = vsel %vm2162, %v2411, 0
        %v2431 = vsel %vm2162, %v2412, 0
        %v2434 = vsel %vm2162, %v2413, 0
        %v2437 = vsel %vm2162, %v2414, 0
        %2439 = vmatprep.subr.bf16.mxu0 0
        %2440 = vmatpush1.bf16.msra.mxu0 %v2425
        %2441 = vmatprep.subr.bf16.mxu0 0
        %2442 = vmatpush1.bf16.msra.mxu0 0
        %2443 = vmatprep.subr.bf16.mxu0 0
        %2444 = vmatpush1.bf16.msra.mxu0 0
        %2445 = vmatprep.subr.bf16.mxu0 0
        %2446 = vmatpush1.bf16.msra.mxu0 0
        %2447 = vmatprep.subr.bf16.mxu0 0
        %2448 = vmatpush1.bf16.msra.mxu0 0
        %2449 = vmatprep.subr.bf16.mxu0 0
        %2450 = vmatpush1.bf16.msra.mxu0 0
        %2451 = vmatprep.subr.bf16.mxu0 0
        %2452 = vmatpush1.bf16.msra.mxu0 0
        %2453 = vmatprep.subr.bf16.mxu0 0
        %2454 = vmatpush1.bf16.msra.mxu0 0
        %2455 = vmatprep.subr.bf16.mxu0 0
        %2456 = vmatpush1.bf16.msra.mxu0 0
        %2457 = vmatprep.subr.bf16.mxu0 0
        %2458 = vmatpush1.bf16.msra.mxu0 0
        %2459 = vmatprep.subr.bf16.mxu0 0
        %2460 = vmatpush1.bf16.msra.mxu0 0
        %2461 = vmatprep.subr.bf16.mxu0 0
        %2462 = vmatpush1.bf16.msra.mxu0 0
        %2463 = vmatprep.subr.bf16.mxu0 0
        %2464 = vmatpush1.bf16.msra.mxu0 0
        %2465 = vmatprep.subr.bf16.mxu0 0
        %2466 = vmatpush1.bf16.msra.mxu0 0
        %2467 = vmatprep.subr.bf16.mxu0 0
        %2468 = vmatpush1.bf16.msra.mxu0 0
        %2469 = vmatprep.subr.bf16.mxu0 0
        %2470 = vmatpush1.bf16.msra.mxu0 0
        %2471 = vmatprep.mubr.bf16.mxu0 0
        %2472 = vmatmul.mubr.bf16.gmra.mrb[0].mxu0 %v2428
        %v2473 = vpop.f32.mrb[0].mxu0
        %v2474 = vadd.f32 %v2419, %v2473
        %v2475 = vpop.f32.mrb[0].mxu0
        %v2476 = vpop.f32.mrb[0].mxu0
        %v2477 = vadd.f32 %v2419, %v2476
        %v2478 = vpop.f32.mrb[0].mxu0
        %2479 = vmatprep.mubr.bf16.mxu0 0
        %2480 = vmatmul.mubr.bf16.gmra.mrb[0].mxu0 %v2431
        %v2481 = vpop.f32.mrb[0].mxu0
        %v2482 = vadd.f32 %v2419, %v2481
        %v2483 = vpop.f32.mrb[0].mxu0
        %v2484 = vpop.f32.mrb[0].mxu0
        %v2485 = vadd.f32 %v2419, %v2484
        %v2486 = vpop.f32.mrb[0].mxu0
        %2487 = vmatprep.mubr.bf16.mxu0 0
        %2488 = vmatmul.mubr.bf16.gmra.mrb[0].mxu0 %v2434
        %v2489 = vpop.f32.mrb[0].mxu0
        %v2490 = vadd.f32 %v2419, %v2489
        %v2491 = vpop.f32.mrb[0].mxu0
        %v2492 = vpop.f32.mrb[0].mxu0
        %v2493 = vadd.f32 %v2419, %v2492
        %v2494 = vpop.f32.mrb[0].mxu0
        %2495 = vmatprep.mubr.bf16.mxu0 0
        %2496 = vmatmul.mubr.bf16.gmra.mrb[0].mxu0 %v2437
        %v2497 = vpop.f32.mrb[0].mxu0
        %v2498 = vadd.f32 %v2419, %v2497
        %v2499 = vpop.f32.mrb[0].mxu0
        %v2500 = vpop.f32.mrb[0].mxu0
        %v2501 = vpop.f32.mrb[0].mxu0
        %2502 = vdwg.mxu0
        %v2503 = vsel %vm985, %v2474, 0.0
        %v2504 = vsel %vm985, %v2477, 0.0
        %v2505 = vadd.f32 %v2503, %v2504
        %v2506 = vsel %vm985, %v2482, 0.0
        %v2507 = vadd.f32 %v2505, %v2506
        %v2508 = vsel %vm985, %v2485, 0.0
        %v2509 = vadd.f32 %v2507, %v2508
        %v2510 = vsel %vm985, %v2490, 0.0
        %v2511 = vadd.f32 %v2509, %v2510
        %v2512 = vsel %vm985, %v2493, 0.0
        %v2513 = vadd.f32 %v2511, %v2512
        %v2514 = vsel %vm997, %v2498, 0.0
        %v2515 = vadd.f32 %v2513, %v2514
        %v2516 = vrot.slane %v2515, 4
        %v2517 = vadd.f32 %v2515, %v2516
        %v2518 = vrot.slane %v2517, 2
        %v2519 = vadd.f32 %v2517, %v2518
        %v2520 = vrot.slane %v2519, 1
        %v2521 = vadd.f32 %v2519, %v2520
        %v2522 = vmul.f32 %v2521, %v1006
        %v2523 = vsub.f32 %v2474, %v2522
        %v2524 = vsub.f32 %v2477, %v2522
        %v2525 = vsub.f32 %v2482, %v2522
        %v2526 = vsub.f32 %v2485, %v2522
        %v2527 = vsub.f32 %v2490, %v2522
        %v2528 = vsub.f32 %v2493, %v2522
        %v2529 = vsub.f32 %v2498, %v2522
        %v2530 = vmul.f32 %v2523, %v2523
        %v2531 = vmul.f32 %v2524, %v2524
        %v2532 = vmul.f32 %v2525, %v2525
        %v2533 = vmul.f32 %v2526, %v2526
        %v2534 = vmul.f32 %v2527, %v2527
        %v2535 = vmul.f32 %v2528, %v2528
        %v2536 = vmul.f32 %v2529, %v2529
        %v2537 = vsel %vm985, %v2530, 0.0
        %v2538 = vsel %vm985, %v2531, 0.0
        %v2539 = vadd.f32 %v2537, %v2538
        %v2540 = vsel %vm985, %v2532, 0.0
        %v2541 = vadd.f32 %v2539, %v2540
        %v2542 = vsel %vm985, %v2533, 0.0
        %v2543 = vadd.f32 %v2541, %v2542
        %v2544 = vsel %vm985, %v2534, 0.0
        %v2545 = vadd.f32 %v2543, %v2544
        %v2546 = vsel %vm985, %v2535, 0.0
        %v2547 = vadd.f32 %v2545, %v2546
        %v2548 = vsel %vm997, %v2536, 0.0
        %v2549 = vadd.f32 %v2547, %v2548
        %v2550 = vrot.slane %v2549, 4
        %v2551 = vadd.f32 %v2549, %v2550
        %v2552 = vrot.slane %v2551, 2
        %v2553 = vadd.f32 %v2551, %v2552
        %v2554 = vrot.slane %v2553, 1
        %v2555 = vadd.f32 %v2553, %v2554
        %v2556 = vmul.f32 %v2555, %v1006
        %v2557 = vadd.f32 %v2556, 1e-05
        %v2558 = vrsqrt.pop %v2557
        %v2559 = vmul.f32 %v2523, %v2558
        %v2560 = vmul.f32 %v2524, %v2558
        %v2561 = vmul.f32 %v2525, %v2558
        %v2562 = vmul.f32 %v2526, %v2558
        %v2563 = vmul.f32 %v2527, %v2558
        %v2564 = vmul.f32 %v2528, %v2558
        %v2565 = vmul.f32 %v2529, %v2558
        %v2567 = vlaneseq
        %v2568 = vshrl.u32 %v2567, 7
        %v2569 = vsub.s32 0, %v2568
        %v2570 = vrot.slane %v1860, %v2569
        %v2572 = vmul.f32 %v2570, %v2559
        %v2573 = vmul.f32 %v2570, %v2560
        %v2574 = vmul.f32 %v2570, %v2561
        %v2575 = vmul.f32 %v2570, %v2562
        %v2576 = vmul.f32 %v2570, %v2563
        %v2577 = vmul.f32 %v2570, %v2564
        %v2578 = vmul.f32 %v2570, %v2565
        %v2580 = vlaneseq
        %v2581 = vshrl.u32 %v2580, 7
        %v2582 = vsub.s32 0, %v2581
        %v2583 = vrot.slane %v1861, %v2582
        %v2585 = vadd.f32 %v2572, %v2583
        %v2586 = vadd.f32 %v2573, %v2583
        %v2587 = vadd.f32 %v2574, %v2583
        %v2588 = vadd.f32 %v2575, %v2583
        %v2589 = vadd.f32 %v2576, %v2583
        %v2590 = vadd.f32 %v2577, %v2583
        %v2591 = vadd.f32 %v2578, %v2583
        %v2592 = vadd.f32 %v1751, %v2585
        %v2593 = vadd.f32 %v1752, %v2586
        %v2594 = vadd.f32 %v1753, %v2587
        %v2595 = vadd.f32 %v1754, %v2588
        %v2596 = vadd.f32 %v1755, %v2589
        %v2597 = vadd.f32 %v1756, %v2590
        %v2598 = vadd.f32 %v1757, %v2591
        %v2599 = vpack.c.bf16 %v2593, %v2592
        %v2600 = vpack.c.bf16 %v2595, %v2594
        %v2601 = vpack.c.bf16 %v2597, %v2596
        %v2602 = vpack.c.bf16 %v2598, %v2598
        %v2603 = vpack.c.bf16 %v963, %v962
        %v2604 = vpack.c.bf16 %v965, %v964
        %v2605 = vpack.c.bf16 %v967, %v966
        %v2606 = vpack.c.bf16 %v968, %v968
        %v2611 = vunpack.c.l.b16 %v958
        %v2612 = vunpack.c.l.b16 %v959
        %v2613 = vunpack.c.l.b16 %v960
        %v2614 = vunpack.c.l.b16 %v961
        %v2615 = vpack.c.b16 %v2612, %v2611
        %v2616 = vpack.c.b16 %v2614, %v2613
        %v2620 = vsel %vm985, %v2603, 0
        %v2623 = vsel %vm985, %v2604, 0
        %v2626 = vsel %vm985, %v2605, 0
        %v2629 = vsel %vm985, %v2606, 0
        %2631 = vmatprep.subr.bf16.mxu0 0
        %2632 = vmatpush1.bf16.msra.mxu0 %v2615
        %2633 = vmatprep.subr.bf16.mxu0 0
        %2634 = vmatpush1.bf16.msra.mxu0 %v2616
        %2635 = vmatprep.subr.bf16.mxu0 0
        %2636 = vmatpush1.bf16.msra.mxu0 0
        %2637 = vmatprep.subr.bf16.mxu0 0
        %2638 = vmatpush1.bf16.msra.mxu0 0
        %2639 = vmatprep.subr.bf16.mxu0 0
        %2640 = vmatpush1.bf16.msra.mxu0 0
        %2641 = vmatprep.subr.bf16.mxu0 0
        %2642 = vmatpush1.bf16.msra.mxu0 0
        %2643 = vmatprep.subr.bf16.mxu0 0
        %2644 = vmatpush1.bf16.msra.mxu0 0
        %2645 = vmatprep.subr.bf16.mxu0 0
        %2646 = vmatpush1.bf16.msra.mxu0 0
        %2647 = vmatprep.subr.bf16.mxu0 0
        %2648 = vmatpush1.bf16.msra.mxu0 0
        %2649 = vmatprep.subr.bf16.mxu0 0
        %2650 = vmatpush1.bf16.msra.mxu0 0
        %2651 = vmatprep.subr.bf16.mxu0 0
        %2652 = vmatpush1.bf16.msra.mxu0 0
        %2653 = vmatprep.subr.bf16.mxu0 0
        %2654 = vmatpush1.bf16.msra.mxu0 0
        %2655 = vmatprep.subr.bf16.mxu0 0
        %2656 = vmatpush1.bf16.msra.mxu0 0
        %2657 = vmatprep.subr.bf16.mxu0 0
        %2658 = vmatpush1.bf16.msra.mxu0 0
        %2659 = vmatprep.subr.bf16.mxu0 0
        %2660 = vmatpush1.bf16.msra.mxu0 0
        %2661 = vmatprep.subr.bf16.mxu0 0
        %2662 = vmatpush1.bf16.msra.mxu0 0
        %2663 = vmatprep.mubr.bf16.mxu0 0
        %2664 = vmatmul.mubr.bf16.gmra.mrb[0].mxu0 %v2620
        %v2665 = vpop.f32.mrb[0].mxu0
        %v2666 = vadd.f32 0.0, %v2665
        %v2667 = vpop.f32.mrb[0].mxu0
        %v2668 = vpop.f32.mrb[0].mxu0
        %v2669 = vadd.f32 0.0, %v2668
        %v2670 = vpop.f32.mrb[0].mxu0
        %2671 = vmatprep.mubr.bf16.mxu0 0
        %2672 = vmatmul.mubr.bf16.gmra.mrb[0].mxu0 %v2623
        %v2673 = vpop.f32.mrb[0].mxu0
        %v2674 = vadd.f32 0.0, %v2673
        %v2675 = vpop.f32.mrb[0].mxu0
        %v2676 = vpop.f32.mrb[0].mxu0
        %v2677 = vadd.f32 0.0, %v2676
        %v2678 = vpop.f32.mrb[0].mxu0
        %2679 = vmatprep.mubr.bf16.mxu0 0
        %2680 = vmatmul.mubr.bf16.gmra.mrb[0].mxu0 %v2626
        %v2681 = vpop.f32.mrb[0].mxu0
        %v2682 = vadd.f32 0.0, %v2681
        %v2683 = vpop.f32.mrb[0].mxu0
        %v2684 = vpop.f32.mrb[0].mxu0
        %v2685 = vadd.f32 0.0, %v2684
        %v2686 = vpop.f32.mrb[0].mxu0
        %2687 = vmatprep.mubr.bf16.mxu0 0
        %2688 = vmatmul.mubr.bf16.gmra.mrb[0].mxu0 %v2629
        %v2689 = vpop.f32.mrb[0].mxu0
        %v2690 = vadd.f32 0.0, %v2689
        %v2691 = vpop.f32.mrb[0].mxu0
        %v2692 = vpop.f32.mrb[0].mxu0
        %v2693 = vpop.f32.mrb[0].mxu0
        %2694 = vdwg.mxu0
        %v2699 = vunpack.c.l.b16 %v954
        %v2700 = vunpack.c.l.b16 %v955
        %v2701 = vunpack.c.l.b16 %v956
        %v2702 = vunpack.c.l.b16 %v957
        %v2703 = vpack.c.b16 %v2700, %v2699
        %v2704 = vpack.c.b16 %v2702, %v2701
        %v2708 = vsel %vm985, %v2599, 0
        %v2711 = vsel %vm985, %v2600, 0
        %v2714 = vsel %vm985, %v2601, 0
        %v2717 = vsel %vm985, %v2602, 0
        %2719 = vmatprep.subr.bf16.mxu0 0
        %2720 = vmatpush1.bf16.msra.mxu0 %v2703
        %2721 = vmatprep.subr.bf16.mxu0 0
        %2722 = vmatpush1.bf16.msra.mxu0 %v2704
        %2723 = vmatprep.subr.bf16.mxu0 0
        %2724 = vmatpush1.bf16.msra.mxu0 0
        %2725 = vmatprep.subr.bf16.mxu0 0
        %2726 = vmatpush1.bf16.msra.mxu0 0
        %2727 = vmatprep.subr.bf16.mxu0 0
        %2728 = vmatpush1.bf16.msra.mxu0 0
        %2729 = vmatprep.subr.bf16.mxu0 0
        %2730 = vmatpush1.bf16.msra.mxu0 0
        %2731 = vmatprep.subr.bf16.mxu0 0
        %2732 = vmatpush1.bf16.msra.mxu0 0
        %2733 = vmatprep.subr.bf16.mxu0 0
        %2734 = vmatpush1.bf16.msra.mxu0 0
        %2735 = vmatprep.subr.bf16.mxu0 0
        %2736 = vmatpush1.bf16.msra.mxu0 0
        %2737 = vmatprep.subr.bf16.mxu0 0
        %2738 = vmatpush1.bf16.msra.mxu0 0
        %2739 = vmatprep.subr.bf16.mxu0 0
        %2740 = vmatpush1.bf16.msra.mxu0 0
        %2741 = vmatprep.subr.bf16.mxu0 0
        %2742 = vmatpush1.bf16.msra.mxu0 0
        %2743 = vmatprep.subr.bf16.mxu0 0
        %2744 = vmatpush1.bf16.msra.mxu0 0
        %2745 = vmatprep.subr.bf16.mxu0 0
        %2746 = vmatpush1.bf16.msra.mxu0 0
        %2747 = vmatprep.subr.bf16.mxu0 0
        %2748 = vmatpush1.bf16.msra.mxu0 0
        %2749 = vmatprep.subr.bf16.mxu0 0
        %2750 = vmatpush1.bf16.msra.mxu0 0
        %2751 = vmatprep.mubr.bf16.mxu0 0
        %2752 = vmatmul.mubr.bf16.gmra.mrb[0].mxu0 %v2708
        %v2753 = vpop.f32.mrb[0].mxu0
        %v2754 = vadd.f32 %v2666, %v2753
        %v2755 = vpop.f32.mrb[0].mxu0
        %v2756 = vpop.f32.mrb[0].mxu0
        %v2757 = vadd.f32 %v2669, %v2756
        %v2758 = vpop.f32.mrb[0].mxu0
        %2759 = vmatprep.mubr.bf16.mxu0 0
        %2760 = vmatmul.mubr.bf16.gmra.mrb[0].mxu0 %v2711
        %v2761 = vpop.f32.mrb[0].mxu0
        %v2762 = vadd.f32 %v2674, %v2761
        %v2763 = vpop.f32.mrb[0].mxu0
        %v2764 = vpop.f32.mrb[0].mxu0
        %v2765 = vadd.f32 %v2677, %v2764
        %v2766 = vpop.f32.mrb[0].mxu0
        %2767 = vmatprep.mubr.bf16.mxu0 0
        %2768 = vmatmul.mubr.bf16.gmra.mrb[0].mxu0 %v2714
        %v2769 = vpop.f32.mrb[0].mxu0
        %v2770 = vadd.f32 %v2682, %v2769
        %v2771 = vpop.f32.mrb[0].mxu0
        %v2772 = vpop.f32.mrb[0].mxu0
        %v2773 = vadd.f32 %v2685, %v2772
        %v2774 = vpop.f32.mrb[0].mxu0
        %2775 = vmatprep.mubr.bf16.mxu0 0
        %2776 = vmatmul.mubr.bf16.gmra.mrb[0].mxu0 %v2717
        %v2777 = vpop.f32.mrb[0].mxu0
        %v2778 = vadd.f32 %v2690, %v2777
        %v2779 = vpop.f32.mrb[0].mxu0
        %v2780 = vpop.f32.mrb[0].mxu0
        %v2781 = vpop.f32.mrb[0].mxu0
        %2782 = vdwg.mxu0
        %v2783 = vld [vmem:[%s29] sm:$0x1]
        %v2785 = vlaneseq
        %v2786 = vshrl.u32 %v2785, 7
        %v2787 = vsub.s32 0, %v2786
        %v2788 = vrot.slane %v2783, %v2787
        %v2790 = vadd.f32 %v2754, %v2788
        %v2791 = vadd.f32 %v2757, %v2788
        %v2792 = vadd.f32 %v2762, %v2788
        %v2793 = vadd.f32 %v2765, %v2788
        %v2794 = vadd.f32 %v2770, %v2788
        %v2795 = vadd.f32 %v2773, %v2788
        %v2796 = vadd.f32 %v2778, %v2788
        %v2797 = vld [vmem:[%s31] sm:$0xf]
        %v2798 = vld [vmem:[%s31 + $0x4] sm:$0xf]
        %v2799 = vld [vmem:[%s31 + $0x8] sm:$0xf]
        %v2800 = vld [vmem:[%s31 + $0xc] sm:$0xf]
        %v2801 = vld [vmem:[%s33] sm:$0x1]
        %v2802 = vld [vmem:[%s35] sm:$0x1]
        %v2803 = vld [vmem:[%s37] sm:$0x1]
        %v2805 = vsel %vm1585, %v2796, 0
        %2807 = vmatprep.subr.mxu0 0.0
        %2808 = vmatpush1.msra.mxu0 %v2790
        %2809 = vmatprep.subr.mxu0 0.0
        %2810 = vmatpush1.msra.mxu0 %v2791
        %2811 = vmatprep.subr.mxu0 0.0
        %2812 = vmatpush1.msra.mxu0 %v2792
        %2813 = vmatprep.subr.mxu0 0.0
        %2814 = vmatpush1.msra.mxu0 %v2793
        %2815 = vmatprep.subr.mxu0 0.0
        %2816 = vmatpush1.msra.mxu0 %v2794
        %2817 = vmatprep.subr.mxu0 0.0
        %2818 = vmatpush1.msra.mxu0 %v2795
        %2819 = vmatprep.subr.mxu0 0.0
        %2820 = vmatpush1.msra.mxu0 %v2805
        %2821 = vmatprep.subr.mxu0 0.0
        %2822 = vmatpush1.msra.mxu0 0.0
        %2823 = vmatprep.subr.mxu0 0.0
        %2824 = vmatpush1.msra.mxu0 0.0
        %2825 = vmatprep.subr.mxu0 0.0
        %2826 = vmatpush1.msra.mxu0 0.0
        %2827 = vmatprep.subr.mxu0 0.0
        %2828 = vmatpush1.msra.mxu0 0.0
        %2829 = vmatprep.subr.mxu0 0.0
        %2830 = vmatpush1.msra.mxu0 0.0
        %2831 = vmatprep.subr.mxu0 0.0
        %2832 = vmatpush1.msra.mxu0 0.0
        %2833 = vmatprep.subr.mxu0 0.0
        %2834 = vmatpush1.msra.mxu0 0.0
        %2835 = vmatprep.subr.mxu0 0.0
        %2836 = vmatpush1.msra.mxu0 0.0
        %2837 = vmatprep.subr.mxu0 0.0
        %2838 = vmatpush1.msra.mxu0 0.0
        %2839 = vmatprep.subr.mxu0 0.0
        %2840 = vmatpush1.msra.mxu0 0.0
        %2841 = vmatprep.subr.mxu0 0.0
        %2842 = vmatpush1.msra.mxu0 0.0
        %2843 = vmatprep.subr.mxu0 0.0
        %2844 = vmatpush1.msra.mxu0 0.0
        %2845 = vmatprep.subr.mxu0 0.0
        %2846 = vmatpush1.msra.mxu0 0.0
        %2847 = vmatprep.subr.mxu0 0.0
        %2848 = vmatpush1.msra.mxu0 0.0
        %2849 = vmatprep.subr.mxu0 0.0
        %2850 = vmatpush1.msra.mxu0 0.0
        %2851 = vmatprep.subr.mxu0 0.0
        %2852 = vmatpush1.msra.mxu0 0.0
        %2853 = vmatprep.subr.mxu0 0.0
        %2854 = vmatpush1.msra.mxu0 0.0
        %2855 = vmatprep.subr.mxu0 0.0
        %2856 = vmatpush1.msra.mxu0 0.0
        %2857 = vmatprep.subr.mxu0 0.0
        %2858 = vmatpush1.msra.mxu0 0.0
        %2859 = vmatprep.subr.mxu0 0.0
        %2860 = vmatpush1.msra.mxu0 0.0
        %2861 = vmatprep.subr.mxu0 0.0
        %2862 = vmatpush1.msra.mxu0 0.0
        %2863 = vmatprep.subr.mxu0 0.0
        %2864 = vmatpush1.msra.mxu0 0.0
        %2865 = vmatprep.subr.mxu0 0.0
        %2866 = vmatpush1.msra.mxu0 0.0
        %2867 = vmatprep.subr.mxu0 0.0
        %2868 = vmatpush1.msra.mxu0 0.0
        %2869 = vmatprep.subr.mxu0 0.0
        %2870 = vmatpush1.msra.mxu0 0.0
        %2871 = vmatprep.mubr.f32.mxu0 0.0
        %2872 = vmatmul.mubr.f32.gmra.mrb[0].mxu0 %v1863
        %v2873 = vpop.f32.mrb[0].mxu0
        %v2874 = vadd.f32 0.0, %v2873
        %v2875 = vpop.f32.mrb[0].mxu0
        %2876 = vmatprep.mubr.f32.mxu0 0.0
        %2877 = vmatmul.mubr.f32.gmra.mrb[0].mxu0 %v1866
        %v2878 = vpop.f32.mrb[0].mxu0
        %v2879 = vadd.f32 0.0, %v2878
        %v2880 = vpop.f32.mrb[0].mxu0
        %2881 = vmatprep.mubr.f32.mxu0 0.0
        %2882 = vmatmul.mubr.f32.gmra.mrb[0].mxu0 %v1869
        %v2883 = vpop.f32.mrb[0].mxu0
        %v2884 = vadd.f32 0.0, %v2883
        %v2885 = vpop.f32.mrb[0].mxu0
        %2886 = vmatprep.mubr.f32.mxu0 0.0
        %2887 = vmatmul.mubr.f32.gmra.mrb[0].mxu0 %v1872
        %v2888 = vpop.f32.mrb[0].mxu0
        %v2889 = vadd.f32 0.0, %v2888
        %v2890 = vpop.f32.mrb[0].mxu0
        %2891 = vmatprep.mubr.f32.mxu0 0.0
        %2892 = vmatmul.mubr.f32.gmra.mrb[0].mxu0 %v1875
        %v2893 = vpop.f32.mrb[0].mxu0
        %v2894 = vadd.f32 0.0, %v2893
        %v2895 = vpop.f32.mrb[0].mxu0
        %2896 = vmatprep.mubr.f32.mxu0 0.0
        %2897 = vmatmul.mubr.f32.gmra.mrb[0].mxu0 %v1878
        %v2898 = vpop.f32.mrb[0].mxu0
        %v2899 = vadd.f32 0.0, %v2898
        %v2900 = vpop.f32.mrb[0].mxu0
        %2901 = vmatprep.mubr.f32.mxu0 0.0
        %2902 = vmatmul.mubr.f32.gmra.mrb[0].mxu0 %v1881
        %v2903 = vpop.f32.mrb[0].mxu0
        %v2904 = vadd.f32 0.0, %v2903
        %v2905 = vpop.f32.mrb[0].mxu0
        %2906 = vdwg.mxu0
        %v2907 = vmax.f32 %v2790, %v2874
        %v2908 = vmax.f32 %v2791, %v2879
        %v2909 = vmax.f32 %v2792, %v2884
        %v2910 = vmax.f32 %v2793, %v2889
        %v2911 = vmax.f32 %v2794, %v2894
        %v2912 = vmax.f32 %v2795, %v2899
        %v2913 = vmax.f32 %v2796, %v2904
        %v2915 = vsel %vm1585, %v2913, 0
        %2917 = vmatprep.subr.mxu0 0.0
        %2918 = vmatpush1.msra.mxu0 %v2907
        %2919 = vmatprep.subr.mxu0 0.0
        %2920 = vmatpush1.msra.mxu0 %v2908
        %2921 = vmatprep.subr.mxu0 0.0
        %2922 = vmatpush1.msra.mxu0 %v2909
        %2923 = vmatprep.subr.mxu0 0.0
        %2924 = vmatpush1.msra.mxu0 %v2910
        %2925 = vmatprep.subr.mxu0 0.0
        %2926 = vmatpush1.msra.mxu0 %v2911
        %2927 = vmatprep.subr.mxu0 0.0
        %2928 = vmatpush1.msra.mxu0 %v2912
        %2929 = vmatprep.subr.mxu0 0.0
        %2930 = vmatpush1.msra.mxu0 %v2915
        %2931 = vmatprep.subr.mxu0 0.0
        %2932 = vmatpush1.msra.mxu0 0.0
        %2933 = vmatprep.subr.mxu0 0.0
        %2934 = vmatpush1.msra.mxu0 0.0
        %2935 = vmatprep.subr.mxu0 0.0
        %2936 = vmatpush1.msra.mxu0 0.0
        %2937 = vmatprep.subr.mxu0 0.0
        %2938 = vmatpush1.msra.mxu0 0.0
        %2939 = vmatprep.subr.mxu0 0.0
        %2940 = vmatpush1.msra.mxu0 0.0
        %2941 = vmatprep.subr.mxu0 0.0
        %2942 = vmatpush1.msra.mxu0 0.0
        %2943 = vmatprep.subr.mxu0 0.0
        %2944 = vmatpush1.msra.mxu0 0.0
        %2945 = vmatprep.subr.mxu0 0.0
        %2946 = vmatpush1.msra.mxu0 0.0
        %2947 = vmatprep.subr.mxu0 0.0
        %2948 = vmatpush1.msra.mxu0 0.0
        %2949 = vmatprep.subr.mxu0 0.0
        %2950 = vmatpush1.msra.mxu0 0.0
        %2951 = vmatprep.subr.mxu0 0.0
        %2952 = vmatpush1.msra.mxu0 0.0
        %2953 = vmatprep.subr.mxu0 0.0
        %2954 = vmatpush1.msra.mxu0 0.0
        %2955 = vmatprep.subr.mxu0 0.0
        %2956 = vmatpush1.msra.mxu0 0.0
        %2957 = vmatprep.subr.mxu0 0.0
        %2958 = vmatpush1.msra.mxu0 0.0
        %2959 = vmatprep.subr.mxu0 0.0
        %2960 = vmatpush1.msra.mxu0 0.0
        %2961 = vmatprep.subr.mxu0 0.0
        %2962 = vmatpush1.msra.mxu0 0.0
        %2963 = vmatprep.subr.mxu0 0.0
        %2964 = vmatpush1.msra.mxu0 0.0
        %2965 = vmatprep.subr.mxu0 0.0
        %2966 = vmatpush1.msra.mxu0 0.0
        %2967 = vmatprep.subr.mxu0 0.0
        %2968 = vmatpush1.msra.mxu0 0.0
        %2969 = vmatprep.subr.mxu0 0.0
        %2970 = vmatpush1.msra.mxu0 0.0
        %2971 = vmatprep.subr.mxu0 0.0
        %2972 = vmatpush1.msra.mxu0 0.0
        %2973 = vmatprep.subr.mxu0 0.0
        %2974 = vmatpush1.msra.mxu0 0.0
        %2975 = vmatprep.subr.mxu0 0.0
        %2976 = vmatpush1.msra.mxu0 0.0
        %2977 = vmatprep.subr.mxu0 0.0
        %2978 = vmatpush1.msra.mxu0 0.0
        %2979 = vmatprep.subr.mxu0 0.0
        %2980 = vmatpush1.msra.mxu0 0.0
        %2981 = vmatprep.mubr.f32.mxu0 0.0
        %2982 = vmatmul.mubr.f32.gmra.mrb[0].mxu0 %v1994
        %v2983 = vpop.f32.mrb[0].mxu0
        %v2984 = vadd.f32 0.0, %v2983
        %v2985 = vpop.f32.mrb[0].mxu0
        %2986 = vmatprep.mubr.f32.mxu0 0.0
        %2987 = vmatmul.mubr.f32.gmra.mrb[0].mxu0 %v1997
        %v2988 = vpop.f32.mrb[0].mxu0
        %v2989 = vadd.f32 0.0, %v2988
        %v2990 = vpop.f32.mrb[0].mxu0
        %2991 = vmatprep.mubr.f32.mxu0 0.0
        %2992 = vmatmul.mubr.f32.gmra.mrb[0].mxu0 %v2000
        %v2993 = vpop.f32.mrb[0].mxu0
        %v2994 = vadd.f32 0.0, %v2993
        %v2995 = vpop.f32.mrb[0].mxu0
        %2996 = vmatprep.mubr.f32.mxu0 0.0
        %2997 = vmatmul.mubr.f32.gmra.mrb[0].mxu0 %v2003
        %v2998 = vpop.f32.mrb[0].mxu0
        %v2999 = vadd.f32 0.0, %v2998
        %v3000 = vpop.f32.mrb[0].mxu0
        %3001 = vmatprep.mubr.f32.mxu0 0.0
        %3002 = vmatmul.mubr.f32.gmra.mrb[0].mxu0 %v2006
        %v3003 = vpop.f32.mrb[0].mxu0
        %v3004 = vadd.f32 0.0, %v3003
        %v3005 = vpop.f32.mrb[0].mxu0
        %3006 = vmatprep.mubr.f32.mxu0 0.0
        %3007 = vmatmul.mubr.f32.gmra.mrb[0].mxu0 %v2009
        %v3008 = vpop.f32.mrb[0].mxu0
        %v3009 = vadd.f32 0.0, %v3008
        %v3010 = vpop.f32.mrb[0].mxu0
        %3011 = vmatprep.mubr.f32.mxu0 0.0
        %3012 = vmatmul.mubr.f32.gmra.mrb[0].mxu0 %v2012
        %v3013 = vpop.f32.mrb[0].mxu0
        %v3014 = vadd.f32 0.0, %v3013
        %v3015 = vpop.f32.mrb[0].mxu0
        %3016 = vdwg.mxu0
        %v3017 = vmax.f32 %v2907, %v2984
        %v3018 = vmax.f32 %v2908, %v2989
        %v3019 = vmax.f32 %v2909, %v2994
        %v3020 = vmax.f32 %v2910, %v2999
        %v3021 = vmax.f32 %v2911, %v3004
        %v3022 = vmax.f32 %v2912, %v3009
        %v3023 = vmax.f32 %v2913, %v3014
        %v3024 = vpack.c.bf16 %v2791, %v2790
        %v3025 = vpack.c.bf16 %v2793, %v2792
        %v3026 = vpack.c.bf16 %v2795, %v2794
        %v3027 = vpack.c.bf16 %v2796, %v2796
        %v3028 = vpack.c.bf16 %v3018, %v3017
        %v3029 = vpack.c.bf16 %v3020, %v3019
        %v3030 = vpack.c.bf16 %v3022, %v3021
        %v3031 = vpack.c.bf16 %v3023, %v3023
        %3036 = vrot.lane.b32.xlu0 %v3024, 64
        %v3037 = vpop.permute.xlu0 %3036
        %3038 = vrot.lane.b32.xlu0 %v3025, 64
        %v3039 = vpop.permute.xlu0 %3038
        %3040 = vrot.lane.b32.xlu0 %v3026, 64
        %v3041 = vpop.permute.xlu0 %3040
        %3042 = vrot.lane.b32.xlu0 %v3027, 64
        %v3043 = vpop.permute.xlu0 %3042
        %3048 = vrot.lane.b32.xlu0 %v3028, 96
        %v3049 = vpop.permute.xlu0 %3048
        %3050 = vrot.lane.b32.xlu0 %v3029, 96
        %v3051 = vpop.permute.xlu0 %3050
        %3052 = vrot.lane.b32.xlu0 %v3030, 96
        %v3053 = vpop.permute.xlu0 %3052
        %3054 = vrot.lane.b32.xlu0 %v3031, 96
        %v3055 = vpop.permute.xlu0 %3054
        %v3057 = vsel %vm985, %v3037, 0
        %v3060 = vsel %vm985, %v3039, 0
        %v3063 = vsel %vm985, %v3041, 0
        %v3066 = vsel %vm985, %v3043, 0
        %v3069 = vsel %vm985, %v3049, 0
        %v3072 = vsel %vm985, %v3051, 0
        %v3075 = vsel %vm985, %v3053, 0
        %v3078 = vsel %vm985, %v3055, 0
        %3080 = vmatprep.subr.bf16.mxu0 0
        %3081 = vmatpush1.bf16.xpose.msra.mxu0 %v3069
        %3082 = vmatprep.subr.bf16.mxu0 0
        %3083 = vmatpush1.bf16.xpose.msra.mxu0 %v3072
        %3084 = vmatprep.subr.bf16.mxu0 0
        %3085 = vmatpush1.bf16.xpose.msra.mxu0 %v3075
        %3086 = vmatprep.subr.bf16.mxu0 0
        %3087 = vmatpush1.bf16.xpose.msra.mxu0 %v3078
        %3088 = vmatprep.subr.bf16.mxu0 0
        %3089 = vmatpush1.bf16.xpose.msra.mxu0 0
        %3090 = vmatprep.subr.bf16.mxu0 0
        %3091 = vmatpush1.bf16.xpose.msra.mxu0 0
        %3092 = vmatprep.subr.bf16.mxu0 0
        %3093 = vmatpush1.bf16.xpose.msra.mxu0 0
        %3094 = vmatprep.subr.bf16.mxu0 0
        %3095 = vmatpush1.bf16.xpose.msra.mxu0 0
        %3096 = vmatprep.subr.bf16.mxu0 0
        %3097 = vmatpush1.bf16.xpose.msra.mxu0 0
        %3098 = vmatprep.subr.bf16.mxu0 0
        %3099 = vmatpush1.bf16.xpose.msra.mxu0 0
        %3100 = vmatprep.subr.bf16.mxu0 0
        %3101 = vmatpush1.bf16.xpose.msra.mxu0 0
        %3102 = vmatprep.subr.bf16.mxu0 0
        %3103 = vmatpush1.bf16.xpose.msra.mxu0 0
        %3104 = vmatprep.subr.bf16.mxu0 0
        %3105 = vmatpush1.bf16.xpose.msra.mxu0 0
        %3106 = vmatprep.subr.bf16.mxu0 0
        %3107 = vmatpush1.bf16.xpose.msra.mxu0 0
        %3108 = vmatprep.subr.bf16.mxu0 0
        %3109 = vmatpush1.bf16.xpose.msra.mxu0 0
        %3110 = vmatprep.subr.bf16.mxu0 0
        %3111 = vmatpush1.bf16.xpose.msra.mxu0 0
        %3112 = vmatprep.mubr.bf16.mxu0 0
        %3113 = vmatmul.mubr.bf16.gmra.mrb[0].mxu0 %v3057
        %v3114 = vpop.f32.mrb[0].mxu0
        %v3115 = vadd.f32 %v2136, %v3114
        %v3116 = vpop.f32.mrb[0].mxu0
        %v3117 = vpop.f32.mrb[0].mxu0
        %v3118 = vadd.f32 %v2136, %v3117
        %v3119 = vpop.f32.mrb[0].mxu0
        %3120 = vmatprep.mubr.bf16.mxu0 0
        %3121 = vmatmul.mubr.bf16.gmra.mrb[0].mxu0 %v3060
        %v3122 = vpop.f32.mrb[0].mxu0
        %v3123 = vadd.f32 %v2136, %v3122
        %v3124 = vpop.f32.mrb[0].mxu0
        %v3125 = vpop.f32.mrb[0].mxu0
        %v3126 = vadd.f32 %v2136, %v3125
        %v3127 = vpop.f32.mrb[0].mxu0
        %3128 = vmatprep.mubr.bf16.mxu0 0
        %3129 = vmatmul.mubr.bf16.gmra.mrb[0].mxu0 %v3063
        %v3130 = vpop.f32.mrb[0].mxu0
        %v3131 = vadd.f32 %v2136, %v3130
        %v3132 = vpop.f32.mrb[0].mxu0
        %v3133 = vpop.f32.mrb[0].mxu0
        %v3134 = vadd.f32 %v2136, %v3133
        %v3135 = vpop.f32.mrb[0].mxu0
        %3136 = vmatprep.mubr.bf16.mxu0 0
        %3137 = vmatmul.mubr.bf16.gmra.mrb[0].mxu0 %v3066
        %v3138 = vpop.f32.mrb[0].mxu0
        %v3139 = vadd.f32 %v2136, %v3138
        %v3140 = vpop.f32.mrb[0].mxu0
        %v3141 = vpop.f32.mrb[0].mxu0
        %v3142 = vpop.f32.mrb[0].mxu0
        %3143 = vdwg.mxu0
        %v3144 = vsel %vm1486, %v3115, -inf
        %3145 = vmax.xlane.f32.xlu0 %v3144
        %v3146 = vpop.xlane.xlu0 %3145
        %v3147 = vsel %vm1486, %v3118, -inf
        %3148 = vmax.xlane.f32.xlu0 %v3147
        %v3149 = vpop.xlane.xlu0 %3148
        %v3150 = vsel %vm1486, %v3123, -inf
        %3151 = vmax.xlane.f32.xlu0 %v3150
        %v3152 = vpop.xlane.xlu0 %3151
        %v3153 = vsel %vm1486, %v3126, -inf
        %3154 = vmax.xlane.f32.xlu0 %v3153
        %v3155 = vpop.xlane.xlu0 %3154
        %v3156 = vsel %vm1486, %v3131, -inf
        %3157 = vmax.xlane.f32.xlu0 %v3156
        %v3158 = vpop.xlane.xlu0 %3157
        %v3159 = vsel %vm1486, %v3134, -inf
        %3160 = vmax.xlane.f32.xlu0 %v3159
        %v3161 = vpop.xlane.xlu0 %3160
        %v3162 = vsel %vm1505, %v3139, -inf
        %3163 = vmax.xlane.f32.xlu0 %v3162
        %v3164 = vpop.xlane.xlu0 %3163
        %v3165 = vsub.f32 %v3115, %v3146
        %v3166 = vsub.f32 %v3118, %v3149
        %v3167 = vsub.f32 %v3123, %v3152
        %v3168 = vsub.f32 %v3126, %v3155
        %v3169 = vsub.f32 %v3131, %v3158
        %v3170 = vsub.f32 %v3134, %v3161
        %v3171 = vsub.f32 %v3139, %v3164
        %v3172 = vmul.f32 %v3165, 1.442695
        %v3173 = vpow.pop %v3172
        %v3174 = vmul.f32 %v3166, 1.442695
        %v3175 = vpow.pop %v3174
        %v3176 = vmul.f32 %v3167, 1.442695
        %v3177 = vpow.pop %v3176
        %v3178 = vmul.f32 %v3168, 1.442695
        %v3179 = vpow.pop %v3178
        %v3180 = vmul.f32 %v3169, 1.442695
        %v3181 = vpow.pop %v3180
        %v3182 = vmul.f32 %v3170, 1.442695
        %v3183 = vpow.pop %v3182
        %v3184 = vmul.f32 %v3171, 1.442695
        %v3185 = vpow.pop %v3184
        %v3186 = vsel %vm1486, %v3173, 0.0
        %3187 = vadd.xlane.f32.xlu0 %v3186
        %v3188 = vpop.xlane.xlu0 %3187
        %v3189 = vsel %vm1486, %v3175, 0.0
        %3190 = vadd.xlane.f32.xlu0 %v3189
        %v3191 = vpop.xlane.xlu0 %3190
        %v3192 = vsel %vm1486, %v3177, 0.0
        %3193 = vadd.xlane.f32.xlu0 %v3192
        %v3194 = vpop.xlane.xlu0 %3193
        %v3195 = vsel %vm1486, %v3179, 0.0
        %3196 = vadd.xlane.f32.xlu0 %v3195
        %v3197 = vpop.xlane.xlu0 %3196
        %v3198 = vsel %vm1486, %v3181, 0.0
        %3199 = vadd.xlane.f32.xlu0 %v3198
        %v3200 = vpop.xlane.xlu0 %3199
        %v3201 = vsel %vm1486, %v3183, 0.0
        %3202 = vadd.xlane.f32.xlu0 %v3201
        %v3203 = vpop.xlane.xlu0 %3202
        %v3204 = vsel %vm1505, %v3185, 0.0
        %3205 = vadd.xlane.f32.xlu0 %v3204
        %v3206 = vpop.xlane.xlu0 %3205
        %v3207 = vrcp.pop %v3188
        %v3208 = vrcp.pop %v3191
        %v3209 = vrcp.pop %v3194
        %v3210 = vrcp.pop %v3197
        %v3211 = vrcp.pop %v3200
        %v3212 = vrcp.pop %v3203
        %v3213 = vrcp.pop %v3206
        %v3214 = vmul.f32 %v3173, %v3207
        %v3215 = vmul.f32 %v3175, %v3208
        %v3216 = vmul.f32 %v3177, %v3209
        %v3217 = vmul.f32 %v3179, %v3210
        %v3218 = vmul.f32 %v3181, %v3211
        %v3219 = vmul.f32 %v3183, %v3212
        %v3220 = vmul.f32 %v3185, %v3213
        %v3221 = vpack.c.bf16 %v3215, %v3214
        %v3222 = vpack.c.bf16 %v3217, %v3216
        %v3223 = vpack.c.bf16 %v3219, %v3218
        %v3224 = vpack.c.bf16 %v3220, %v3220
        %v3226 = vsel %vm1486, %v3221, 0
        %v3229 = vsel %vm1486, %v3222, 0
        %v3232 = vsel %vm1486, %v3223, 0
        %v3235 = vsel %vm1486, %v3224, 0
        %v3238 = vand.u32 %v3031, %v1587
        %3240 = vmatprep.subr.bf16.mxu0 0
        %3241 = vmatpush1.bf16.msra.mxu0 %v3028
        %3242 = vmatprep.subr.bf16.mxu0 0
        %3243 = vmatpush1.bf16.msra.mxu0 %v3029
        %3244 = vmatprep.subr.bf16.mxu0 0
        %3245 = vmatpush1.bf16.msra.mxu0 %v3030
        %3246 = vmatprep.subr.bf16.mxu0 0
        %3247 = vmatpush1.bf16.msra.mxu0 %v3238
        %3248 = vmatprep.subr.bf16.mxu0 0
        %3249 = vmatpush1.bf16.msra.mxu0 0
        %3250 = vmatprep.subr.bf16.mxu0 0
        %3251 = vmatpush1.bf16.msra.mxu0 0
        %3252 = vmatprep.subr.bf16.mxu0 0
        %3253 = vmatpush1.bf16.msra.mxu0 0
        %3254 = vmatprep.subr.bf16.mxu0 0
        %3255 = vmatpush1.bf16.msra.mxu0 0
        %3256 = vmatprep.subr.bf16.mxu0 0
        %3257 = vmatpush1.bf16.msra.mxu0 0
        %3258 = vmatprep.subr.bf16.mxu0 0
        %3259 = vmatpush1.bf16.msra.mxu0 0
        %3260 = vmatprep.subr.bf16.mxu0 0
        %3261 = vmatpush1.bf16.msra.mxu0 0
        %3262 = vmatprep.subr.bf16.mxu0 0
        %3263 = vmatpush1.bf16.msra.mxu0 0
        %3264 = vmatprep.subr.bf16.mxu0 0
        %3265 = vmatpush1.bf16.msra.mxu0 0
        %3266 = vmatprep.subr.bf16.mxu0 0
        %3267 = vmatpush1.bf16.msra.mxu0 0
        %3268 = vmatprep.subr.bf16.mxu0 0
        %3269 = vmatpush1.bf16.msra.mxu0 0
        %3270 = vmatprep.subr.bf16.mxu0 0
        %3271 = vmatpush1.bf16.msra.mxu0 0
        %3272 = vmatprep.mubr.bf16.mxu0 0
        %3273 = vmatmul.mubr.bf16.gmra.mrb[0].mxu0 %v3226
        %v3274 = vpop.f32.mrb[0].mxu0
        %v3275 = vadd.f32 0.0, %v3274
        %v3276 = vpop.f32.mrb[0].mxu0
        %v3277 = vpop.f32.mrb[0].mxu0
        %v3278 = vadd.f32 0.0, %v3277
        %v3279 = vpop.f32.mrb[0].mxu0
        %3280 = vmatprep.mubr.bf16.mxu0 0
        %3281 = vmatmul.mubr.bf16.gmra.mrb[0].mxu0 %v3229
        %v3282 = vpop.f32.mrb[0].mxu0
        %v3283 = vadd.f32 0.0, %v3282
        %v3284 = vpop.f32.mrb[0].mxu0
        %v3285 = vpop.f32.mrb[0].mxu0
        %v3286 = vadd.f32 0.0, %v3285
        %v3287 = vpop.f32.mrb[0].mxu0
        %3288 = vmatprep.mubr.bf16.mxu0 0
        %3289 = vmatmul.mubr.bf16.gmra.mrb[0].mxu0 %v3232
        %v3290 = vpop.f32.mrb[0].mxu0
        %v3291 = vadd.f32 0.0, %v3290
        %v3292 = vpop.f32.mrb[0].mxu0
        %v3293 = vpop.f32.mrb[0].mxu0
        %v3294 = vadd.f32 0.0, %v3293
        %v3295 = vpop.f32.mrb[0].mxu0
        %3296 = vmatprep.mubr.bf16.mxu0 0
        %3297 = vmatmul.mubr.bf16.gmra.mrb[0].mxu0 %v3235
        %v3298 = vpop.f32.mrb[0].mxu0
        %v3299 = vadd.f32 0.0, %v3298
        %v3300 = vpop.f32.mrb[0].mxu0
        %v3301 = vpop.f32.mrb[0].mxu0
        %v3302 = vpop.f32.mrb[0].mxu0
        %3303 = vdwg.mxu0
        %v3304 = vpack.c.bf16 %v3278, %v3275
        %v3305 = vpack.c.bf16 %v3286, %v3283
        %v3306 = vpack.c.bf16 %v3294, %v3291
        %v3307 = vpack.c.bf16 %v3299, %v3299
        %v3309 = vlaneseq
        %v3310 = vshrl.u32 %v3309, 7
        %v3311 = vsub.s32 0, %v3310
        %v3312 = vrot.slane %v2801, %v3311
        %v3318 = vunpack.c.l.b16 %v2797
        %v3319 = vunpack.c.l.b16 %v2798
        %v3320 = vunpack.c.l.b16 %v2799
        %v3321 = vunpack.c.l.b16 %v2800
        %v3322 = vpack.c.b16 %v3319, %v3318
        %v3323 = vpack.c.b16 %v3321, %v3320
        %v3327 = vsel %vm985, %v3304, 0
        %v3330 = vsel %vm985, %v3305, 0
        %v3333 = vsel %vm985, %v3306, 0
        %v3336 = vsel %vm985, %v3307, 0
        %3338 = vmatprep.subr.bf16.mxu0 0
        %3339 = vmatpush1.bf16.msra.mxu0 %v3322
        %3340 = vmatprep.subr.bf16.mxu0 0
        %3341 = vmatpush1.bf16.msra.mxu0 %v3323
        %3342 = vmatprep.subr.bf16.mxu0 0
        %3343 = vmatpush1.bf16.msra.mxu0 0
        %3344 = vmatprep.subr.bf16.mxu0 0
        %3345 = vmatpush1.bf16.msra.mxu0 0
        %3346 = vmatprep.subr.bf16.mxu0 0
        %3347 = vmatpush1.bf16.msra.mxu0 0
        %3348 = vmatprep.subr.bf16.mxu0 0
        %3349 = vmatpush1.bf16.msra.mxu0 0
        %3350 = vmatprep.subr.bf16.mxu0 0
        %3351 = vmatpush1.bf16.msra.mxu0 0
        %3352 = vmatprep.subr.bf16.mxu0 0
        %3353 = vmatpush1.bf16.msra.mxu0 0
        %3354 = vmatprep.subr.bf16.mxu0 0
        %3355 = vmatpush1.bf16.msra.mxu0 0
        %3356 = vmatprep.subr.bf16.mxu0 0
        %3357 = vmatpush1.bf16.msra.mxu0 0
        %3358 = vmatprep.subr.bf16.mxu0 0
        %3359 = vmatpush1.bf16.msra.mxu0 0
        %3360 = vmatprep.subr.bf16.mxu0 0
        %3361 = vmatpush1.bf16.msra.mxu0 0
        %3362 = vmatprep.subr.bf16.mxu0 0
        %3363 = vmatpush1.bf16.msra.mxu0 0
        %3364 = vmatprep.subr.bf16.mxu0 0
        %3365 = vmatpush1.bf16.msra.mxu0 0
        %3366 = vmatprep.subr.bf16.mxu0 0
        %3367 = vmatpush1.bf16.msra.mxu0 0
        %3368 = vmatprep.subr.bf16.mxu0 0
        %3369 = vmatpush1.bf16.msra.mxu0 0
        %3370 = vmatprep.mubr.bf16.mxu0 0
        %3371 = vmatmul.mubr.bf16.gmra.mrb[0].mxu0 %v3327
        %v3372 = vpop.f32.mrb[0].mxu0
        %v3373 = vadd.f32 %v3312, %v3372
        %v3374 = vpop.f32.mrb[0].mxu0
        %v3375 = vpop.f32.mrb[0].mxu0
        %v3376 = vadd.f32 %v3312, %v3375
        %v3377 = vpop.f32.mrb[0].mxu0
        %3378 = vmatprep.mubr.bf16.mxu0 0
        %3379 = vmatmul.mubr.bf16.gmra.mrb[0].mxu0 %v3330
        %v3380 = vpop.f32.mrb[0].mxu0
        %v3381 = vadd.f32 %v3312, %v3380
        %v3382 = vpop.f32.mrb[0].mxu0
        %v3383 = vpop.f32.mrb[0].mxu0
        %v3384 = vadd.f32 %v3312, %v3383
        %v3385 = vpop.f32.mrb[0].mxu0
        %3386 = vmatprep.mubr.bf16.mxu0 0
        %3387 = vmatmul.mubr.bf16.gmra.mrb[0].mxu0 %v3333
        %v3388 = vpop.f32.mrb[0].mxu0
        %v3389 = vadd.f32 %v3312, %v3388
        %v3390 = vpop.f32.mrb[0].mxu0
        %v3391 = vpop.f32.mrb[0].mxu0
        %v3392 = vadd.f32 %v3312, %v3391
        %v3393 = vpop.f32.mrb[0].mxu0
        %3394 = vmatprep.mubr.bf16.mxu0 0
        %3395 = vmatmul.mubr.bf16.gmra.mrb[0].mxu0 %v3336
        %v3396 = vpop.f32.mrb[0].mxu0
        %v3397 = vadd.f32 %v3312, %v3396
        %v3398 = vpop.f32.mrb[0].mxu0
        %v3399 = vpop.f32.mrb[0].mxu0
        %v3400 = vpop.f32.mrb[0].mxu0
        %3401 = vdwg.mxu0
        %vm3402 = vcmask 523264
        %v3403 = vsel %vm3402, %v3373, 0.0
        %v3404 = vsel %vm3402, %v3376, 0.0
        %v3405 = vadd.f32 %v3403, %v3404
        %v3406 = vsel %vm3402, %v3381, 0.0
        %v3407 = vadd.f32 %v3405, %v3406
        %v3408 = vsel %vm3402, %v3384, 0.0
        %v3409 = vadd.f32 %v3407, %v3408
        %v3410 = vsel %vm3402, %v3389, 0.0
        %v3411 = vadd.f32 %v3409, %v3410
        %v3412 = vsel %vm3402, %v3392, 0.0
        %v3413 = vadd.f32 %v3411, %v3412
        %vm3414 = vcmask 516096
        %v3415 = vsel %vm3414, %v3397, 0.0
        %v3416 = vadd.f32 %v3413, %v3415
        %v3417 = vrot.slane %v3416, 4
        %v3418 = vadd.f32 %v3416, %v3417
        %v3419 = vrot.slane %v3418, 2
        %v3420 = vadd.f32 %v3418, %v3419
        %v3421 = vrot.slane %v3420, 1
        %v3422 = vadd.f32 %v3420, %v3421
        %v3423 = vmul.f32 %v3422, %v1006
        %v3424 = vsub.f32 %v3373, %v3423
        %v3425 = vsub.f32 %v3376, %v3423
        %v3426 = vsub.f32 %v3381, %v3423
        %v3427 = vsub.f32 %v3384, %v3423
        %v3428 = vsub.f32 %v3389, %v3423
        %v3429 = vsub.f32 %v3392, %v3423
        %v3430 = vsub.f32 %v3397, %v3423
        %v3431 = vmul.f32 %v3424, %v3424
        %v3432 = vmul.f32 %v3425, %v3425
        %v3433 = vmul.f32 %v3426, %v3426
        %v3434 = vmul.f32 %v3427, %v3427
        %v3435 = vmul.f32 %v3428, %v3428
        %v3436 = vmul.f32 %v3429, %v3429
        %v3437 = vmul.f32 %v3430, %v3430
        %v3438 = vsel %vm3402, %v3431, 0.0
        %v3439 = vsel %vm3402, %v3432, 0.0
        %v3440 = vadd.f32 %v3438, %v3439
        %v3441 = vsel %vm3402, %v3433, 0.0
        %v3442 = vadd.f32 %v3440, %v3441
        %v3443 = vsel %vm3402, %v3434, 0.0
        %v3444 = vadd.f32 %v3442, %v3443
        %v3445 = vsel %vm3402, %v3435, 0.0
        %v3446 = vadd.f32 %v3444, %v3445
        %v3447 = vsel %vm3402, %v3436, 0.0
        %v3448 = vadd.f32 %v3446, %v3447
        %v3449 = vsel %vm3414, %v3437, 0.0
        %v3450 = vadd.f32 %v3448, %v3449
        %v3451 = vrot.slane %v3450, 4
        %v3452 = vadd.f32 %v3450, %v3451
        %v3453 = vrot.slane %v3452, 2
        %v3454 = vadd.f32 %v3452, %v3453
        %v3455 = vrot.slane %v3454, 1
        %v3456 = vadd.f32 %v3454, %v3455
        %v3457 = vmul.f32 %v3456, %v1006
        %v3458 = vadd.f32 %v3457, 1e-05
        %v3459 = vrsqrt.pop %v3458
        %v3460 = vmul.f32 %v3424, %v3459
        %v3461 = vmul.f32 %v3425, %v3459
        %v3462 = vmul.f32 %v3426, %v3459
        %v3463 = vmul.f32 %v3427, %v3459
        %v3464 = vmul.f32 %v3428, %v3459
        %v3465 = vmul.f32 %v3429, %v3459
        %v3466 = vmul.f32 %v3430, %v3459
        %v3468 = vlaneseq
        %v3469 = vshrl.u32 %v3468, 7
        %v3470 = vsub.s32 0, %v3469
        %v3471 = vrot.slane %v2802, %v3470
        %v3473 = vmul.f32 %v3471, %v3460
        %v3474 = vmul.f32 %v3471, %v3461
        %v3475 = vmul.f32 %v3471, %v3462
        %v3476 = vmul.f32 %v3471, %v3463
        %v3477 = vmul.f32 %v3471, %v3464
        %v3478 = vmul.f32 %v3471, %v3465
        %v3479 = vmul.f32 %v3471, %v3466
        %v3481 = vlaneseq
        %v3482 = vshrl.u32 %v3481, 7
        %v3483 = vsub.s32 0, %v3482
        %v3484 = vrot.slane %v2803, %v3483
        %v3486 = vadd.f32 %v3473, %v3484
        %v3487 = vadd.f32 %v3474, %v3484
        %v3488 = vadd.f32 %v3475, %v3484
        %v3489 = vadd.f32 %v3476, %v3484
        %v3490 = vadd.f32 %v3477, %v3484
        %v3491 = vadd.f32 %v3478, %v3484
        %v3492 = vadd.f32 %v3479, %v3484
        %v3493 = vadd.f32 %v3486, %v2592
        %v3494 = vadd.f32 %v3487, %v2593
        %v3495 = vadd.f32 %v3488, %v2594
        %v3496 = vadd.f32 %v3489, %v2595
        %v3497 = vadd.f32 %v3490, %v2596
        %v3498 = vadd.f32 %v3491, %v2597
        %v3499 = vadd.f32 %v3492, %v2598
        %3507 = vrot.lane.b32.xlu0 %v962, 32
        %v3508 = vpop.permute.xlu0 %3507
        %3509 = vrot.lane.b32.xlu0 %v963, 32
        %v3510 = vpop.permute.xlu0 %3509
        %3511 = vrot.lane.b32.xlu0 %v964, 32
        %v3512 = vpop.permute.xlu0 %3511
        %3513 = vrot.lane.b32.xlu0 %v965, 32
        %v3514 = vpop.permute.xlu0 %3513
        %3515 = vrot.lane.b32.xlu0 %v966, 32
        %v3516 = vpop.permute.xlu0 %3515
        %3517 = vrot.lane.b32.xlu0 %v967, 32
        %v3518 = vpop.permute.xlu0 %3517
        %3519 = vrot.lane.b32.xlu0 %v968, 32
        %v3520 = vpop.permute.xlu0 %3519
        %v3528 = vadd.f32 %v3486, %v3508
        %v3529 = vadd.f32 %v3487, %v3510
        %v3530 = vadd.f32 %v3488, %v3512
        %v3531 = vadd.f32 %v3489, %v3514
        %v3532 = vadd.f32 %v3490, %v3516
        %v3533 = vadd.f32 %v3491, %v3518
        %v3534 = vadd.f32 %v3492, %v3520
        %v3535 = vpack.c.bf16 %v3493, %v3493
        %vm3536 = vcmask 253952
        %vm3537 = vsmask.f32 256
        %vm3538 = vmand %vm3536, %vm3537
        %v3539 = vld [vmem:[#allocation2] sm:$0x1]
        %v3540 = vsel %vm3538, %v3535, %v3539
        %3541 = vst [vmem:[#allocation2] sm:$0x1] %v3540
        %v3542 = vpack.c.bf16 %v3528, %v3528
        %vm3543 = vcmask 516352
        %vm3544 = vmand %vm3543, %vm3537
        %v3545 = vld [vmem:[#allocation2] sm:$0x1]
        %v3546 = vsel %vm3544, %v3542, %v3545
        %3547 = vst [vmem:[#allocation2] sm:$0x1] %v3546
        %v3550 = vunpack.c.l.s4 1966171168
        %v3551 = vunpack.c.0.s8 %v3550
        %v3552 = vlaneseq
        %v3553 = vshrl.u32 %v3552, 7
        %v3554 = vsub.s32 %v3551, %v3553
        %v3555 = vrot.slane %v3535, %v3554
        %v3557 = vunpack.c.l.s4 1966171168
        %v3558 = vunpack.c.0.s8 %v3557
        %v3559 = vlaneseq
        %v3560 = vshrl.u32 %v3559, 7
        %v3561 = vsub.s32 %v3558, %v3560
        %v3562 = vrot.slane %v3555, %v3561
        %v3564 = vshrl.u32 %v3562, 16
        %v3566 = vrot.slane %v3564, 7
        %v3567 = vrot.slane %v3566, 1
        %3568 = vrot.lane.b32.xlu0 %v3567, 64
        %v3569 = vpop.permute.xlu0 %3568
        %vm3571 = vcmask 778752
        %vm3572 = vmand %vm3571, %vm3537
        %v3573 = vld [vmem:[#allocation2] sm:$0x1]
        %v3574 = vsel %vm3572, %v3569, %v3573
        %3575 = vst [vmem:[#allocation2] sm:$0x1] %v3574
        %v3578 = vunpack.c.l.s4 1966171168
        %v3579 = vunpack.c.0.s8 %v3578
        %v3580 = vlaneseq
        %v3581 = vshrl.u32 %v3580, 7
        %v3582 = vsub.s32 %v3579, %v3581
        %v3583 = vrot.slane %v3542, %v3582
        %v3585 = vunpack.c.l.s4 1966171168
        %v3586 = vunpack.c.0.s8 %v3585
        %v3587 = vlaneseq
        %v3588 = vshrl.u32 %v3587, 7
        %v3589 = vsub.s32 %v3586, %v3588
        %v3590 = vrot.slane %v3583, %v3589
        %v3592 = vshrl.u32 %v3590, 16
        %v3594 = vrot.slane %v3592, 7
        %v3595 = vrot.slane %v3594, 1
        %3596 = vrot.lane.b32.xlu0 %v3595, 64
        %v3597 = vpop.permute.xlu0 %3596
        %vm3599 = vcmask 1041152
        %vm3600 = vmand %vm3599, %vm3537
        %v3601 = vld [vmem:[#allocation2] sm:$0x1]
        %v3602 = vsel %vm3600, %v3597, %v3601
        %3603 = vst [vmem:[#allocation2] sm:$0x1] %v3602
        %v3604 = vcombine.high %v3555, %v3555
        %v3606 = vunpack.c.l.s4 1966171168
        %v3607 = vunpack.c.0.s8 %v3606
        %v3608 = vlaneseq
        %v3609 = vshrl.u32 %v3608, 7
        %v3610 = vsub.s32 %v3607, %v3609
        %v3611 = vrot.slane %v3604, %v3610
        %v3613 = vld [vmem:[#allocation2 + $0x1] sm:$0x1]
        %v3614 = vsel %vm3538, %v3611, %v3613
        %3615 = vst [vmem:[#allocation2 + $0x1] sm:$0x1] %v3614
        %v3616 = vcombine.high %v3583, %v3583
        %v3618 = vunpack.c.l.s4 1966171168
        %v3619 = vunpack.c.0.s8 %v3618
        %v3620 = vlaneseq
        %v3621 = vshrl.u32 %v3620, 7
        %v3622 = vsub.s32 %v3619, %v3621
        %v3623 = vrot.slane %v3616, %v3622
        %v3625 = vld [vmem:[#allocation2 + $0x1] sm:$0x1]
        %v3626 = vsel %vm3544, %v3623, %v3625
        %3627 = vst [vmem:[#allocation2 + $0x1] sm:$0x1] %v3626
        %v3629 = vshrl.u32 %v3611, 16
        %v3631 = vrot.slane %v3629, 7
        %v3632 = vrot.slane %v3631, 1
        %3633 = vrot.lane.b32.xlu0 %v3632, 64
        %v3634 = vpop.permute.xlu0 %3633
        %v3636 = vld [vmem:[#allocation2 + $0x1] sm:$0x1]
        %v3637 = vsel %vm3572, %v3634, %v3636
        %3638 = vst [vmem:[#allocation2 + $0x1] sm:$0x1] %v3637
        %v3640 = vshrl.u32 %v3623, 16
        %v3642 = vrot.slane %v3640, 7
        %v3643 = vrot.slane %v3642, 1
        %3644 = vrot.lane.b32.xlu0 %v3643, 64
        %v3645 = vpop.permute.xlu0 %3644
        %v3647 = vld [vmem:[#allocation2 + $0x1] sm:$0x1]
        %v3648 = vsel %vm3600, %v3645, %v3647
        %3649 = vst [vmem:[#allocation2 + $0x1] sm:$0x1] %v3648
        %v3650 = vcombine.high %v3562, %v3562
        %v3652 = vld [vmem:[#allocation2 + $0x2] sm:$0x1]
        %v3653 = vsel %vm3538, %v3650, %v3652
        %3654 = vst [vmem:[#allocation2 + $0x2] sm:$0x1] %v3653
        %v3655 = vcombine.high %v3590, %v3590
        %v3657 = vld [vmem:[#allocation2 + $0x2] sm:$0x1]
        %v3658 = vsel %vm3544, %v3655, %v3657
        %3659 = vst [vmem:[#allocation2 + $0x2] sm:$0x1] %v3658
        %v3661 = vshrl.u32 %v3650, 16
        %v3663 = vrot.slane %v3661, 7
        %v3664 = vrot.slane %v3663, 1
        %3665 = vrot.lane.b32.xlu0 %v3664, 64
        %v3666 = vpop.permute.xlu0 %3665
        %v3668 = vld [vmem:[#allocation2 + $0x2] sm:$0x1]
        %v3669 = vsel %vm3572, %v3666, %v3668
        %3670 = vst [vmem:[#allocation2 + $0x2] sm:$0x1] %v3669
        %v3672 = vshrl.u32 %v3655, 16
        %v3674 = vrot.slane %v3672, 7
        %v3675 = vrot.slane %v3674, 1
        %3676 = vrot.lane.b32.xlu0 %v3675, 64
        %v3677 = vpop.permute.xlu0 %3676
        %v3679 = vld [vmem:[#allocation2 + $0x2] sm:$0x1]
        %v3680 = vsel %vm3600, %v3677, %v3679
        %3681 = vst [vmem:[#allocation2 + $0x2] sm:$0x1] %v3680
        %v3682 = vcombine.high %v3611, %v3611
        %v3684 = vld [vmem:[#allocation2 + $0x3] sm:$0x1]
        %v3685 = vsel %vm3538, %v3682, %v3684
        %3686 = vst [vmem:[#allocation2 + $0x3] sm:$0x1] %v3685
        %v3687 = vcombine.high %v3623, %v3623
        %v3689 = vld [vmem:[#allocation2 + $0x3] sm:$0x1]
        %v3690 = vsel %vm3544, %v3687, %v3689
        %3691 = vst [vmem:[#allocation2 + $0x3] sm:$0x1] %v3690
        %v3693 = vshrl.u32 %v3682, 16
        %v3695 = vrot.slane %v3693, 7
        %v3696 = vrot.slane %v3695, 1
        %3697 = vrot.lane.b32.xlu0 %v3696, 64
        %v3698 = vpop.permute.xlu0 %3697
        %v3700 = vld [vmem:[#allocation2 + $0x3] sm:$0x1]
        %v3701 = vsel %vm3572, %v3698, %v3700
        %3702 = vst [vmem:[#allocation2 + $0x3] sm:$0x1] %v3701
        %v3704 = vshrl.u32 %v3687, 16
        %v3706 = vrot.slane %v3704, 7
        %v3707 = vrot.slane %v3706, 1
        %3708 = vrot.lane.b32.xlu0 %v3707, 64
        %v3709 = vpop.permute.xlu0 %3708
        %v3711 = vld [vmem:[#allocation2 + $0x3] sm:$0x1]
        %v3712 = vsel %vm3600, %v3709, %v3711
        %3713 = vst [vmem:[#allocation2 + $0x3] sm:$0x1] %v3712
        %v3714 = vpack.c.bf16 %v3494, %v3494
        %v3715 = vld [vmem:[#allocation2 + $0x4] sm:$0x1]
        %v3716 = vsel %vm3538, %v3714, %v3715
        %3717 = vst [vmem:[#allocation2 + $0x4] sm:$0x1] %v3716
        %v3718 = vpack.c.bf16 %v3529, %v3529
        %v3719 = vld [vmem:[#allocation2 + $0x4] sm:$0x1]
        %v3720 = vsel %vm3544, %v3718, %v3719
        %3721 = vst [vmem:[#allocation2 + $0x4] sm:$0x1] %v3720
        %v3724 = vunpack.c.l.s4 1966171168
        %v3725 = vunpack.c.0.s8 %v3724
        %v3726 = vlaneseq
        %v3727 = vshrl.u32 %v3726, 7
        %v3728 = vsub.s32 %v3725, %v3727
        %v3729 = vrot.slane %v3714, %v3728
        %v3731 = vunpack.c.l.s4 1966171168
        %v3732 = vunpack.c.0.s8 %v3731
        %v3733 = vlaneseq
        %v3734 = vshrl.u32 %v3733, 7
        %v3735 = vsub.s32 %v3732, %v3734
        %v3736 = vrot.slane %v3729, %v3735
        %v3738 = vshrl.u32 %v3736, 16
        %v3740 = vrot.slane %v3738, 7
        %v3741 = vrot.slane %v3740, 1
        %3742 = vrot.lane.b32.xlu0 %v3741, 64
        %v3743 = vpop.permute.xlu0 %3742
        %v3745 = vld [vmem:[#allocation2 + $0x4] sm:$0x1]
        %v3746 = vsel %vm3572, %v3743, %v3745
        %3747 = vst [vmem:[#allocation2 + $0x4] sm:$0x1] %v3746
        %v3750 = vunpack.c.l.s4 1966171168
        %v3751 = vunpack.c.0.s8 %v3750
        %v3752 = vlaneseq
        %v3753 = vshrl.u32 %v3752, 7
        %v3754 = vsub.s32 %v3751, %v3753
        %v3755 = vrot.slane %v3718, %v3754
        %v3757 = vunpack.c.l.s4 1966171168
        %v3758 = vunpack.c.0.s8 %v3757
        %v3759 = vlaneseq
        %v3760 = vshrl.u32 %v3759, 7
        %v3761 = vsub.s32 %v3758, %v3760
        %v3762 = vrot.slane %v3755, %v3761
        %v3764 = vshrl.u32 %v3762, 16
        %v3766 = vrot.slane %v3764, 7
        %v3767 = vrot.slane %v3766, 1
        %3768 = vrot.lane.b32.xlu0 %v3767, 64
        %v3769 = vpop.permute.xlu0 %3768
        %v3771 = vld [vmem:[#allocation2 + $0x4] sm:$0x1]
        %v3772 = vsel %vm3600, %v3769, %v3771
        %3773 = vst [vmem:[#allocation2 + $0x4] sm:$0x1] %v3772
        %v3774 = vcombine.high %v3729, %v3729
        %v3776 = vunpack.c.l.s4 1966171168
        %v3777 = vunpack.c.0.s8 %v3776
        %v3778 = vlaneseq
        %v3779 = vshrl.u32 %v3778, 7
        %v3780 = vsub.s32 %v3777, %v3779
        %v3781 = vrot.slane %v3774, %v3780
        %v3783 = vld [vmem:[#allocation2 + $0x5] sm:$0x1]
        %v3784 = vsel %vm3538, %v3781, %v3783
        %3785 = vst [vmem:[#allocation2 + $0x5] sm:$0x1] %v3784
        %v3786 = vcombine.high %v3755, %v3755
        %v3788 = vunpack.c.l.s4 1966171168
        %v3789 = vunpack.c.0.s8 %v3788
        %v3790 = vlaneseq
        %v3791 = vshrl.u32 %v3790, 7
        %v3792 = vsub.s32 %v3789, %v3791
        %v3793 = vrot.slane %v3786, %v3792
        %v3795 = vld [vmem:[#allocation2 + $0x5] sm:$0x1]
        %v3796 = vsel %vm3544, %v3793, %v3795
        %3797 = vst [vmem:[#allocation2 + $0x5] sm:$0x1] %v3796
        %v3799 = vshrl.u32 %v3781, 16
        %v3801 = vrot.slane %v3799, 7
        %v3802 = vrot.slane %v3801, 1
        %3803 = vrot.lane.b32.xlu0 %v3802, 64
        %v3804 = vpop.permute.xlu0 %3803
        %v3806 = vld [vmem:[#allocation2 + $0x5] sm:$0x1]
        %v3807 = vsel %vm3572, %v3804, %v3806
        %3808 = vst [vmem:[#allocation2 + $0x5] sm:$0x1] %v3807
        %v3810 = vshrl.u32 %v3793, 16
        %v3812 = vrot.slane %v3810, 7
        %v3813 = vrot.slane %v3812, 1
        %3814 = vrot.lane.b32.xlu0 %v3813, 64
        %v3815 = vpop.permute.xlu0 %3814
        %v3817 = vld [vmem:[#allocation2 + $0x5] sm:$0x1]
        %v3818 = vsel %vm3600, %v3815, %v3817
        %3819 = vst [vmem:[#allocation2 + $0x5] sm:$0x1] %v3818
        %v3820 = vcombine.high %v3736, %v3736
        %v3822 = vld [vmem:[#allocation2 + $0x6] sm:$0x1]
        %v3823 = vsel %vm3538, %v3820, %v3822
        %3824 = vst [vmem:[#allocation2 + $0x6] sm:$0x1] %v3823
        %v3825 = vcombine.high %v3762, %v3762
        %v3827 = vld [vmem:[#allocation2 + $0x6] sm:$0x1]
        %v3828 = vsel %vm3544, %v3825, %v3827
        %3829 = vst [vmem:[#allocation2 + $0x6] sm:$0x1] %v3828
        %v3831 = vshrl.u32 %v3820, 16
        %v3833 = vrot.slane %v3831, 7
        %v3834 = vrot.slane %v3833, 1
        %3835 = vrot.lane.b32.xlu0 %v3834, 64
        %v3836 = vpop.permute.xlu0 %3835
        %v3838 = vld [vmem:[#allocation2 + $0x6] sm:$0x1]
        %v3839 = vsel %vm3572, %v3836, %v3838
        %3840 = vst [vmem:[#allocation2 + $0x6] sm:$0x1] %v3839
        %v3842 = vshrl.u32 %v3825, 16
        %v3844 = vrot.slane %v3842, 7
        %v3845 = vrot.slane %v3844, 1
        %3846 = vrot.lane.b32.xlu0 %v3845, 64
        %v3847 = vpop.permute.xlu0 %3846
        %v3849 = vld [vmem:[#allocation2 + $0x6] sm:$0x1]
        %v3850 = vsel %vm3600, %v3847, %v3849
        %3851 = vst [vmem:[#allocation2 + $0x6] sm:$0x1] %v3850
        %v3852 = vcombine.high %v3781, %v3781
        %v3854 = vld [vmem:[#allocation2 + $0x7] sm:$0x1]
        %v3855 = vsel %vm3538, %v3852, %v3854
        %3856 = vst [vmem:[#allocation2 + $0x7] sm:$0x1] %v3855
        %v3857 = vcombine.high %v3793, %v3793
        %v3859 = vld [vmem:[#allocation2 + $0x7] sm:$0x1]
        %v3860 = vsel %vm3544, %v3857, %v3859
        %3861 = vst [vmem:[#allocation2 + $0x7] sm:$0x1] %v3860
        %v3863 = vshrl.u32 %v3852, 16
        %v3865 = vrot.slane %v3863, 7
        %v3866 = vrot.slane %v3865, 1
        %3867 = vrot.lane.b32.xlu0 %v3866, 64
        %v3868 = vpop.permute.xlu0 %3867
        %v3870 = vld [vmem:[#allocation2 + $0x7] sm:$0x1]
        %v3871 = vsel %vm3572, %v3868, %v3870
        %3872 = vst [vmem:[#allocation2 + $0x7] sm:$0x1] %v3871
        %v3874 = vshrl.u32 %v3857, 16
        %v3876 = vrot.slane %v3874, 7
        %v3877 = vrot.slane %v3876, 1
        %3878 = vrot.lane.b32.xlu0 %v3877, 64
        %v3879 = vpop.permute.xlu0 %3878
        %v3881 = vld [vmem:[#allocation2 + $0x7] sm:$0x1]
        %v3882 = vsel %vm3600, %v3879, %v3881
        %3883 = vst [vmem:[#allocation2 + $0x7] sm:$0x1] %v3882
        %v3884 = vpack.c.bf16 %v3495, %v3495
        %v3885 = vld [vmem:[#allocation2 + $0x8] sm:$0x1]
        %v3886 = vsel %vm3538, %v3884, %v3885
        %3887 = vst [vmem:[#allocation2 + $0x8] sm:$0x1] %v3886
        %v3888 = vpack.c.bf16 %v3530, %v3530
        %v3889 = vld [vmem:[#allocation2 + $0x8] sm:$0x1]
        %v3890 = vsel %vm3544, %v3888, %v3889
        %3891 = vst [vmem:[#allocation2 + $0x8] sm:$0x1] %v3890
        %v3894 = vunpack.c.l.s4 1966171168
        %v3895 = vunpack.c.0.s8 %v3894
        %v3896 = vlaneseq
        %v3897 = vshrl.u32 %v3896, 7
        %v3898 = vsub.s32 %v3895, %v3897
        %v3899 = vrot.slane %v3884, %v3898
        %v3901 = vunpack.c.l.s4 1966171168
        %v3902 = vunpack.c.0.s8 %v3901
        %v3903 = vlaneseq
        %v3904 = vshrl.u32 %v3903, 7
        %v3905 = vsub.s32 %v3902, %v3904
        %v3906 = vrot.slane %v3899, %v3905
        %v3908 = vshrl.u32 %v3906, 16
        %v3910 = vrot.slane %v3908, 7
        %v3911 = vrot.slane %v3910, 1
        %3912 = vrot.lane.b32.xlu0 %v3911, 64
        %v3913 = vpop.permute.xlu0 %3912
        %v3915 = vld [vmem:[#allocation2 + $0x8] sm:$0x1]
        %v3916 = vsel %vm3572, %v3913, %v3915
        %3917 = vst [vmem:[#allocation2 + $0x8] sm:$0x1] %v3916
        %v3920 = vunpack.c.l.s4 1966171168
        %v3921 = vunpack.c.0.s8 %v3920
        %v3922 = vlaneseq
        %v3923 = vshrl.u32 %v3922, 7
        %v3924 = vsub.s32 %v3921, %v3923
        %v3925 = vrot.slane %v3888, %v3924
        %v3927 = vunpack.c.l.s4 1966171168
        %v3928 = vunpack.c.0.s8 %v3927
        %v3929 = vlaneseq
        %v3930 = vshrl.u32 %v3929, 7
        %v3931 = vsub.s32 %v3928, %v3930
        %v3932 = vrot.slane %v3925, %v3931
        %v3934 = vshrl.u32 %v3932, 16
        %v3936 = vrot.slane %v3934, 7
        %v3937 = vrot.slane %v3936, 1
        %3938 = vrot.lane.b32.xlu0 %v3937, 64
        %v3939 = vpop.permute.xlu0 %3938
        %v3941 = vld [vmem:[#allocation2 + $0x8] sm:$0x1]
        %v3942 = vsel %vm3600, %v3939, %v3941
        %3943 = vst [vmem:[#allocation2 + $0x8] sm:$0x1] %v3942
        %v3944 = vcombine.high %v3899, %v3899
        %v3946 = vunpack.c.l.s4 1966171168
        %v3947 = vunpack.c.0.s8 %v3946
        %v3948 = vlaneseq
        %v3949 = vshrl.u32 %v3948, 7
        %v3950 = vsub.s32 %v3947, %v3949
        %v3951 = vrot.slane %v3944, %v3950
        %v3953 = vld [vmem:[#allocation2 + $0x9] sm:$0x1]
        %v3954 = vsel %vm3538, %v3951, %v3953
        %3955 = vst [vmem:[#allocation2 + $0x9] sm:$0x1] %v3954
        %v3956 = vcombine.high %v3925, %v3925
        %v3958 = vunpack.c.l.s4 1966171168
        %v3959 = vunpack.c.0.s8 %v3958
        %v3960 = vlaneseq
        %v3961 = vshrl.u32 %v3960, 7
        %v3962 = vsub.s32 %v3959, %v3961
        %v3963 = vrot.slane %v3956, %v3962
        %v3965 = vld [vmem:[#allocation2 + $0x9] sm:$0x1]
        %v3966 = vsel %vm3544, %v3963, %v3965
        %3967 = vst [vmem:[#allocation2 + $0x9] sm:$0x1] %v3966
        %v3969 = vshrl.u32 %v3951, 16
        %v3971 = vrot.slane %v3969, 7
        %v3972 = vrot.slane %v3971, 1
        %3973 = vrot.lane.b32.xlu0 %v3972, 64
        %v3974 = vpop.permute.xlu0 %3973
        %v3976 = vld [vmem:[#allocation2 + $0x9] sm:$0x1]
        %v3977 = vsel %vm3572, %v3974, %v3976
        %3978 = vst [vmem:[#allocation2 + $0x9] sm:$0x1] %v3977
        %v3980 = vshrl.u32 %v3963, 16
        %v3982 = vrot.slane %v3980, 7
        %v3983 = vrot.slane %v3982, 1
        %3984 = vrot.lane.b32.xlu0 %v3983, 64
        %v3985 = vpop.permute.xlu0 %3984
        %v3987 = vld [vmem:[#allocation2 + $0x9] sm:$0x1]
        %v3988 = vsel %vm3600, %v3985, %v3987
        %3989 = vst [vmem:[#allocation2 + $0x9] sm:$0x1] %v3988
        %v3990 = vcombine.high %v3906, %v3906
        %v3992 = vld [vmem:[#allocation2 + $0xa] sm:$0x1]
        %v3993 = vsel %vm3538, %v3990, %v3992
        %3994 = vst [vmem:[#allocation2 + $0xa] sm:$0x1] %v3993
        %v3995 = vcombine.high %v3932, %v3932
        %v3997 = vld [vmem:[#allocation2 + $0xa] sm:$0x1]
        %v3998 = vsel %vm3544, %v3995, %v3997
        %3999 = vst [vmem:[#allocation2 + $0xa] sm:$0x1] %v3998
        %v4001 = vshrl.u32 %v3990, 16
        %v4003 = vrot.slane %v4001, 7
        %v4004 = vrot.slane %v4003, 1
        %4005 = vrot.lane.b32.xlu0 %v4004, 64
        %v4006 = vpop.permute.xlu0 %4005
        %v4008 = vld [vmem:[#allocation2 + $0xa] sm:$0x1]
        %v4009 = vsel %vm3572, %v4006, %v4008
        %4010 = vst [vmem:[#allocation2 + $0xa] sm:$0x1] %v4009
        %v4012 = vshrl.u32 %v3995, 16
        %v4014 = vrot.slane %v4012, 7
        %v4015 = vrot.slane %v4014, 1
        %4016 = vrot.lane.b32.xlu0 %v4015, 64
        %v4017 = vpop.permute.xlu0 %4016
        %v4019 = vld [vmem:[#allocation2 + $0xa] sm:$0x1]
        %v4020 = vsel %vm3600, %v4017, %v4019
        %4021 = vst [vmem:[#allocation2 + $0xa] sm:$0x1] %v4020
        %v4022 = vcombine.high %v3951, %v3951
        %v4024 = vld [vmem:[#allocation2 + $0xb] sm:$0x1]
        %v4025 = vsel %vm3538, %v4022, %v4024
        %4026 = vst [vmem:[#allocation2 + $0xb] sm:$0x1] %v4025
        %v4027 = vcombine.high %v3963, %v3963
        %v4029 = vld [vmem:[#allocation2 + $0xb] sm:$0x1]
        %v4030 = vsel %vm3544, %v4027, %v4029
        %4031 = vst [vmem:[#allocation2 + $0xb] sm:$0x1] %v4030
        %v4033 = vshrl.u32 %v4022, 16
        %v4035 = vrot.slane %v4033, 7
        %v4036 = vrot.slane %v4035, 1
        %4037 = vrot.lane.b32.xlu0 %v4036, 64
        %v4038 = vpop.permute.xlu0 %4037
        %v4040 = vld [vmem:[#allocation2 + $0xb] sm:$0x1]
        %v4041 = vsel %vm3572, %v4038, %v4040
        %4042 = vst [vmem:[#allocation2 + $0xb] sm:$0x1] %v4041
        %v4044 = vshrl.u32 %v4027, 16
        %v4046 = vrot.slane %v4044, 7
        %v4047 = vrot.slane %v4046, 1
        %4048 = vrot.lane.b32.xlu0 %v4047, 64
        %v4049 = vpop.permute.xlu0 %4048
        %v4051 = vld [vmem:[#allocation2 + $0xb] sm:$0x1]
        %v4052 = vsel %vm3600, %v4049, %v4051
        %4053 = vst [vmem:[#allocation2 + $0xb] sm:$0x1] %v4052
        %v4054 = vpack.c.bf16 %v3496, %v3496
        %v4055 = vld [vmem:[#allocation2 + $0xc] sm:$0x1]
        %v4056 = vsel %vm3538, %v4054, %v4055
        %4057 = vst [vmem:[#allocation2 + $0xc] sm:$0x1] %v4056
        %v4058 = vpack.c.bf16 %v3531, %v3531
        %v4059 = vld [vmem:[#allocation2 + $0xc] sm:$0x1]
        %v4060 = vsel %vm3544, %v4058, %v4059
        %4061 = vst [vmem:[#allocation2 + $0xc] sm:$0x1] %v4060
        %v4064 = vunpack.c.l.s4 1966171168
        %v4065 = vunpack.c.0.s8 %v4064
        %v4066 = vlaneseq
        %v4067 = vshrl.u32 %v4066, 7
        %v4068 = vsub.s32 %v4065, %v4067
        %v4069 = vrot.slane %v4054, %v4068
        %v4071 = vunpack.c.l.s4 1966171168
        %v4072 = vunpack.c.0.s8 %v4071
        %v4073 = vlaneseq
        %v4074 = vshrl.u32 %v4073, 7
        %v4075 = vsub.s32 %v4072, %v4074
        %v4076 = vrot.slane %v4069, %v4075
        %v4078 = vshrl.u32 %v4076, 16
        %v4080 = vrot.slane %v4078, 7
        %v4081 = vrot.slane %v4080, 1
        %4082 = vrot.lane.b32.xlu0 %v4081, 64
        %v4083 = vpop.permute.xlu0 %4082
        %v4085 = vld [vmem:[#allocation2 + $0xc] sm:$0x1]
        %v4086 = vsel %vm3572, %v4083, %v4085
        %4087 = vst [vmem:[#allocation2 + $0xc] sm:$0x1] %v4086
        %v4090 = vunpack.c.l.s4 1966171168
        %v4091 = vunpack.c.0.s8 %v4090
        %v4092 = vlaneseq
        %v4093 = vshrl.u32 %v4092, 7
        %v4094 = vsub.s32 %v4091, %v4093
        %v4095 = vrot.slane %v4058, %v4094
        %v4097 = vunpack.c.l.s4 1966171168
        %v4098 = vunpack.c.0.s8 %v4097
        %v4099 = vlaneseq
        %v4100 = vshrl.u32 %v4099, 7
        %v4101 = vsub.s32 %v4098, %v4100
        %v4102 = vrot.slane %v4095, %v4101
        %v4104 = vshrl.u32 %v4102, 16
        %v4106 = vrot.slane %v4104, 7
        %v4107 = vrot.slane %v4106, 1
        %4108 = vrot.lane.b32.xlu0 %v4107, 64
        %v4109 = vpop.permute.xlu0 %4108
        %v4111 = vld [vmem:[#allocation2 + $0xc] sm:$0x1]
        %v4112 = vsel %vm3600, %v4109, %v4111
        %4113 = vst [vmem:[#allocation2 + $0xc] sm:$0x1] %v4112
        %v4114 = vcombine.high %v4069, %v4069
        %v4116 = vunpack.c.l.s4 1966171168
        %v4117 = vunpack.c.0.s8 %v4116
        %v4118 = vlaneseq
        %v4119 = vshrl.u32 %v4118, 7
        %v4120 = vsub.s32 %v4117, %v4119
        %v4121 = vrot.slane %v4114, %v4120
        %v4123 = vld [vmem:[#allocation2 + $0xd] sm:$0x1]
        %v4124 = vsel %vm3538, %v4121, %v4123
        %4125 = vst [vmem:[#allocation2 + $0xd] sm:$0x1] %v4124
        %v4126 = vcombine.high %v4095, %v4095
        %v4128 = vunpack.c.l.s4 1966171168
        %v4129 = vunpack.c.0.s8 %v4128
        %v4130 = vlaneseq
        %v4131 = vshrl.u32 %v4130, 7
        %v4132 = vsub.s32 %v4129, %v4131
        %v4133 = vrot.slane %v4126, %v4132
        %v4135 = vld [vmem:[#allocation2 + $0xd] sm:$0x1]
        %v4136 = vsel %vm3544, %v4133, %v4135
        %4137 = vst [vmem:[#allocation2 + $0xd] sm:$0x1] %v4136
        %v4139 = vshrl.u32 %v4121, 16
        %v4141 = vrot.slane %v4139, 7
        %v4142 = vrot.slane %v4141, 1
        %4143 = vrot.lane.b32.xlu0 %v4142, 64
        %v4144 = vpop.permute.xlu0 %4143
        %v4146 = vld [vmem:[#allocation2 + $0xd] sm:$0x1]
        %v4147 = vsel %vm3572, %v4144, %v4146
        %4148 = vst [vmem:[#allocation2 + $0xd] sm:$0x1] %v4147
        %v4150 = vshrl.u32 %v4133, 16
        %v4152 = vrot.slane %v4150, 7
        %v4153 = vrot.slane %v4152, 1
        %4154 = vrot.lane.b32.xlu0 %v4153, 64
        %v4155 = vpop.permute.xlu0 %4154
        %v4157 = vld [vmem:[#allocation2 + $0xd] sm:$0x1]
        %v4158 = vsel %vm3600, %v4155, %v4157
        %4159 = vst [vmem:[#allocation2 + $0xd] sm:$0x1] %v4158
        %v4160 = vcombine.high %v4076, %v4076
        %v4162 = vld [vmem:[#allocation2 + $0xe] sm:$0x1]
        %v4163 = vsel %vm3538, %v4160, %v4162
        %4164 = vst [vmem:[#allocation2 + $0xe] sm:$0x1] %v4163
        %v4165 = vcombine.high %v4102, %v4102
        %v4167 = vld [vmem:[#allocation2 + $0xe] sm:$0x1]
        %v4168 = vsel %vm3544, %v4165, %v4167
        %4169 = vst [vmem:[#allocation2 + $0xe] sm:$0x1] %v4168
        %v4171 = vshrl.u32 %v4160, 16
        %v4173 = vrot.slane %v4171, 7
        %v4174 = vrot.slane %v4173, 1
        %4175 = vrot.lane.b32.xlu0 %v4174, 64
        %v4176 = vpop.permute.xlu0 %4175
        %v4178 = vld [vmem:[#allocation2 + $0xe] sm:$0x1]
        %v4179 = vsel %vm3572, %v4176, %v4178
        %4180 = vst [vmem:[#allocation2 + $0xe] sm:$0x1] %v4179
        %v4182 = vshrl.u32 %v4165, 16
        %v4184 = vrot.slane %v4182, 7
        %v4185 = vrot.slane %v4184, 1
        %4186 = vrot.lane.b32.xlu0 %v4185, 64
        %v4187 = vpop.permute.xlu0 %4186
        %v4189 = vld [vmem:[#allocation2 + $0xe] sm:$0x1]
        %v4190 = vsel %vm3600, %v4187, %v4189
        %4191 = vst [vmem:[#allocation2 + $0xe] sm:$0x1] %v4190
        %v4192 = vcombine.high %v4121, %v4121
        %v4194 = vld [vmem:[#allocation2 + $0xf] sm:$0x1]
        %v4195 = vsel %vm3538, %v4192, %v4194
        %4196 = vst [vmem:[#allocation2 + $0xf] sm:$0x1] %v4195
        %v4197 = vcombine.high %v4133, %v4133
        %v4199 = vld [vmem:[#allocation2 + $0xf] sm:$0x1]
        %v4200 = vsel %vm3544, %v4197, %v4199
        %4201 = vst [vmem:[#allocation2 + $0xf] sm:$0x1] %v4200
        %v4203 = vshrl.u32 %v4192, 16
        %v4205 = vrot.slane %v4203, 7
        %v4206 = vrot.slane %v4205, 1
        %4207 = vrot.lane.b32.xlu0 %v4206, 64
        %v4208 = vpop.permute.xlu0 %4207
        %v4210 = vld [vmem:[#allocation2 + $0xf] sm:$0x1]
        %v4211 = vsel %vm3572, %v4208, %v4210
        %4212 = vst [vmem:[#allocation2 + $0xf] sm:$0x1] %v4211
        %v4214 = vshrl.u32 %v4197, 16
        %v4216 = vrot.slane %v4214, 7
        %v4217 = vrot.slane %v4216, 1
        %4218 = vrot.lane.b32.xlu0 %v4217, 64
        %v4219 = vpop.permute.xlu0 %4218
        %v4221 = vld [vmem:[#allocation2 + $0xf] sm:$0x1]
        %v4222 = vsel %vm3600, %v4219, %v4221
        %4223 = vst [vmem:[#allocation2 + $0xf] sm:$0x1] %v4222
        %v4224 = vpack.c.bf16 %v3497, %v3497
        %v4225 = vld [vmem:[#allocation2 + $0x10] sm:$0x1]
        %v4226 = vsel %vm3538, %v4224, %v4225
        %4227 = vst [vmem:[#allocation2 + $0x10] sm:$0x1] %v4226
        %v4228 = vpack.c.bf16 %v3532, %v3532
        %v4229 = vld [vmem:[#allocation2 + $0x10] sm:$0x1]
        %v4230 = vsel %vm3544, %v4228, %v4229
        %4231 = vst [vmem:[#allocation2 + $0x10] sm:$0x1] %v4230
        %v4234 = vunpack.c.l.s4 1966171168
        %v4235 = vunpack.c.0.s8 %v4234
        %v4236 = vlaneseq
        %v4237 = vshrl.u32 %v4236, 7
        %v4238 = vsub.s32 %v4235, %v4237
        %v4239 = vrot.slane %v4224, %v4238
        %v4241 = vunpack.c.l.s4 1966171168
        %v4242 = vunpack.c.0.s8 %v4241
        %v4243 = vlaneseq
        %v4244 = vshrl.u32 %v4243, 7
        %v4245 = vsub.s32 %v4242, %v4244
        %v4246 = vrot.slane %v4239, %v4245
        %v4248 = vshrl.u32 %v4246, 16
        %v4250 = vrot.slane %v4248, 7
        %v4251 = vrot.slane %v4250, 1
        %4252 = vrot.lane.b32.xlu0 %v4251, 64
        %v4253 = vpop.permute.xlu0 %4252
        %v4255 = vld [vmem:[#allocation2 + $0x10] sm:$0x1]
        %v4256 = vsel %vm3572, %v4253, %v4255
        %4257 = vst [vmem:[#allocation2 + $0x10] sm:$0x1] %v4256
        %v4260 = vunpack.c.l.s4 1966171168
        %v4261 = vunpack.c.0.s8 %v4260
        %v4262 = vlaneseq
        %v4263 = vshrl.u32 %v4262, 7
        %v4264 = vsub.s32 %v4261, %v4263
        %v4265 = vrot.slane %v4228, %v4264
        %v4267 = vunpack.c.l.s4 1966171168
        %v4268 = vunpack.c.0.s8 %v4267
        %v4269 = vlaneseq
        %v4270 = vshrl.u32 %v4269, 7
        %v4271 = vsub.s32 %v4268, %v4270
        %v4272 = vrot.slane %v4265, %v4271
        %v4274 = vshrl.u32 %v4272, 16
        %v4276 = vrot.slane %v4274, 7
        %v4277 = vrot.slane %v4276, 1
        %4278 = vrot.lane.b32.xlu0 %v4277, 64
        %v4279 = vpop.permute.xlu0 %4278
        %v4281 = vld [vmem:[#allocation2 + $0x10] sm:$0x1]
        %v4282 = vsel %vm3600, %v4279, %v4281
        %4283 = vst [vmem:[#allocation2 + $0x10] sm:$0x1] %v4282
        %v4284 = vcombine.high %v4239, %v4239
        %v4286 = vunpack.c.l.s4 1966171168
        %v4287 = vunpack.c.0.s8 %v4286
        %v4288 = vlaneseq
        %v4289 = vshrl.u32 %v4288, 7
        %v4290 = vsub.s32 %v4287, %v4289
        %v4291 = vrot.slane %v4284, %v4290
        %v4293 = vld [vmem:[#allocation2 + $0x11] sm:$0x1]
        %v4294 = vsel %vm3538, %v4291, %v4293
        %4295 = vst [vmem:[#allocation2 + $0x11] sm:$0x1] %v4294
        %v4296 = vcombine.high %v4265, %v4265
        %v4298 = vunpack.c.l.s4 1966171168
        %v4299 = vunpack.c.0.s8 %v4298
        %v4300 = vlaneseq
        %v4301 = vshrl.u32 %v4300, 7
        %v4302 = vsub.s32 %v4299, %v4301
        %v4303 = vrot.slane %v4296, %v4302
        %v4305 = vld [vmem:[#allocation2 + $0x11] sm:$0x1]
        %v4306 = vsel %vm3544, %v4303, %v4305
        %4307 = vst [vmem:[#allocation2 + $0x11] sm:$0x1] %v4306
        %v4309 = vshrl.u32 %v4291, 16
        %v4311 = vrot.slane %v4309, 7
        %v4312 = vrot.slane %v4311, 1
        %4313 = vrot.lane.b32.xlu0 %v4312, 64
        %v4314 = vpop.permute.xlu0 %4313
        %v4316 = vld [vmem:[#allocation2 + $0x11] sm:$0x1]
        %v4317 = vsel %vm3572, %v4314, %v4316
        %4318 = vst [vmem:[#allocation2 + $0x11] sm:$0x1] %v4317
        %v4320 = vshrl.u32 %v4303, 16
        %v4322 = vrot.slane %v4320, 7
        %v4323 = vrot.slane %v4322, 1
        %4324 = vrot.lane.b32.xlu0 %v4323, 64
        %v4325 = vpop.permute.xlu0 %4324
        %v4327 = vld [vmem:[#allocation2 + $0x11] sm:$0x1]
        %v4328 = vsel %vm3600, %v4325, %v4327
        %4329 = vst [vmem:[#allocation2 + $0x11] sm:$0x1] %v4328
        %v4330 = vcombine.high %v4246, %v4246
        %v4332 = vld [vmem:[#allocation2 + $0x12] sm:$0x1]
        %v4333 = vsel %vm3538, %v4330, %v4332
        %4334 = vst [vmem:[#allocation2 + $0x12] sm:$0x1] %v4333
        %v4335 = vcombine.high %v4272, %v4272
        %v4337 = vld [vmem:[#allocation2 + $0x12] sm:$0x1]
        %v4338 = vsel %vm3544, %v4335, %v4337
        %4339 = vst [vmem:[#allocation2 + $0x12] sm:$0x1] %v4338
        %v4341 = vshrl.u32 %v4330, 16
        %v4343 = vrot.slane %v4341, 7
        %v4344 = vrot.slane %v4343, 1
        %4345 = vrot.lane.b32.xlu0 %v4344, 64
        %v4346 = vpop.permute.xlu0 %4345
        %v4348 = vld [vmem:[#allocation2 + $0x12] sm:$0x1]
        %v4349 = vsel %vm3572, %v4346, %v4348
        %4350 = vst [vmem:[#allocation2 + $0x12] sm:$0x1] %v4349
        %v4352 = vshrl.u32 %v4335, 16
        %v4354 = vrot.slane %v4352, 7
        %v4355 = vrot.slane %v4354, 1
        %4356 = vrot.lane.b32.xlu0 %v4355, 64
        %v4357 = vpop.permute.xlu0 %4356
        %v4359 = vld [vmem:[#allocation2 + $0x12] sm:$0x1]
        %v4360 = vsel %vm3600, %v4357, %v4359
        %4361 = vst [vmem:[#allocation2 + $0x12] sm:$0x1] %v4360
        %v4362 = vcombine.high %v4291, %v4291
        %v4364 = vld [vmem:[#allocation2 + $0x13] sm:$0x1]
        %v4365 = vsel %vm3538, %v4362, %v4364
        %4366 = vst [vmem:[#allocation2 + $0x13] sm:$0x1] %v4365
        %v4367 = vcombine.high %v4303, %v4303
        %v4369 = vld [vmem:[#allocation2 + $0x13] sm:$0x1]
        %v4370 = vsel %vm3544, %v4367, %v4369
        %4371 = vst [vmem:[#allocation2 + $0x13] sm:$0x1] %v4370
        %v4373 = vshrl.u32 %v4362, 16
        %v4375 = vrot.slane %v4373, 7
        %v4376 = vrot.slane %v4375, 1
        %4377 = vrot.lane.b32.xlu0 %v4376, 64
        %v4378 = vpop.permute.xlu0 %4377
        %v4380 = vld [vmem:[#allocation2 + $0x13] sm:$0x1]
        %v4381 = vsel %vm3572, %v4378, %v4380
        %4382 = vst [vmem:[#allocation2 + $0x13] sm:$0x1] %v4381
        %v4384 = vshrl.u32 %v4367, 16
        %v4386 = vrot.slane %v4384, 7
        %v4387 = vrot.slane %v4386, 1
        %4388 = vrot.lane.b32.xlu0 %v4387, 64
        %v4389 = vpop.permute.xlu0 %4388
        %v4391 = vld [vmem:[#allocation2 + $0x13] sm:$0x1]
        %v4392 = vsel %vm3600, %v4389, %v4391
        %4393 = vst [vmem:[#allocation2 + $0x13] sm:$0x1] %v4392
        %v4394 = vpack.c.bf16 %v3498, %v3498
        %v4395 = vld [vmem:[#allocation2 + $0x14] sm:$0x1]
        %v4396 = vsel %vm3538, %v4394, %v4395
        %4397 = vst [vmem:[#allocation2 + $0x14] sm:$0x1] %v4396
        %v4398 = vpack.c.bf16 %v3533, %v3533
        %v4399 = vld [vmem:[#allocation2 + $0x14] sm:$0x1]
        %v4400 = vsel %vm3544, %v4398, %v4399
        %4401 = vst [vmem:[#allocation2 + $0x14] sm:$0x1] %v4400
        %v4404 = vunpack.c.l.s4 1966171168
        %v4405 = vunpack.c.0.s8 %v4404
        %v4406 = vlaneseq
        %v4407 = vshrl.u32 %v4406, 7
        %v4408 = vsub.s32 %v4405, %v4407
        %v4409 = vrot.slane %v4394, %v4408
        %v4411 = vunpack.c.l.s4 1966171168
        %v4412 = vunpack.c.0.s8 %v4411
        %v4413 = vlaneseq
        %v4414 = vshrl.u32 %v4413, 7
        %v4415 = vsub.s32 %v4412, %v4414
        %v4416 = vrot.slane %v4409, %v4415
        %v4418 = vshrl.u32 %v4416, 16
        %v4420 = vrot.slane %v4418, 7
        %v4421 = vrot.slane %v4420, 1
        %4422 = vrot.lane.b32.xlu0 %v4421, 64
        %v4423 = vpop.permute.xlu0 %4422
        %v4425 = vld [vmem:[#allocation2 + $0x14] sm:$0x1]
        %v4426 = vsel %vm3572, %v4423, %v4425
        %4427 = vst [vmem:[#allocation2 + $0x14] sm:$0x1] %v4426
        %v4430 = vunpack.c.l.s4 1966171168
        %v4431 = vunpack.c.0.s8 %v4430
        %v4432 = vlaneseq
        %v4433 = vshrl.u32 %v4432, 7
        %v4434 = vsub.s32 %v4431, %v4433
        %v4435 = vrot.slane %v4398, %v4434
        %v4437 = vunpack.c.l.s4 1966171168
        %v4438 = vunpack.c.0.s8 %v4437
        %v4439 = vlaneseq
        %v4440 = vshrl.u32 %v4439, 7
        %v4441 = vsub.s32 %v4438, %v4440
        %v4442 = vrot.slane %v4435, %v4441
        %v4444 = vshrl.u32 %v4442, 16
        %v4446 = vrot.slane %v4444, 7
        %v4447 = vrot.slane %v4446, 1
        %4448 = vrot.lane.b32.xlu0 %v4447, 64
        %v4449 = vpop.permute.xlu0 %4448
        %v4451 = vld [vmem:[#allocation2 + $0x14] sm:$0x1]
        %v4452 = vsel %vm3600, %v4449, %v4451
        %4453 = vst [vmem:[#allocation2 + $0x14] sm:$0x1] %v4452
        %v4454 = vcombine.high %v4409, %v4409
        %v4456 = vunpack.c.l.s4 1966171168
        %v4457 = vunpack.c.0.s8 %v4456
        %v4458 = vlaneseq
        %v4459 = vshrl.u32 %v4458, 7
        %v4460 = vsub.s32 %v4457, %v4459
        %v4461 = vrot.slane %v4454, %v4460
        %v4463 = vld [vmem:[#allocation2 + $0x15] sm:$0x1]
        %v4464 = vsel %vm3538, %v4461, %v4463
        %4465 = vst [vmem:[#allocation2 + $0x15] sm:$0x1] %v4464
        %v4466 = vcombine.high %v4435, %v4435
        %v4468 = vunpack.c.l.s4 1966171168
        %v4469 = vunpack.c.0.s8 %v4468
        %v4470 = vlaneseq
        %v4471 = vshrl.u32 %v4470, 7
        %v4472 = vsub.s32 %v4469, %v4471
        %v4473 = vrot.slane %v4466, %v4472
        %v4475 = vld [vmem:[#allocation2 + $0x15] sm:$0x1]
        %v4476 = vsel %vm3544, %v4473, %v4475
        %4477 = vst [vmem:[#allocation2 + $0x15] sm:$0x1] %v4476
        %v4479 = vshrl.u32 %v4461, 16
        %v4481 = vrot.slane %v4479, 7
        %v4482 = vrot.slane %v4481, 1
        %4483 = vrot.lane.b32.xlu0 %v4482, 64
        %v4484 = vpop.permute.xlu0 %4483
        %v4486 = vld [vmem:[#allocation2 + $0x15] sm:$0x1]
        %v4487 = vsel %vm3572, %v4484, %v4486
        %4488 = vst [vmem:[#allocation2 + $0x15] sm:$0x1] %v4487
        %v4490 = vshrl.u32 %v4473, 16
        %v4492 = vrot.slane %v4490, 7
        %v4493 = vrot.slane %v4492, 1
        %4494 = vrot.lane.b32.xlu0 %v4493, 64
        %v4495 = vpop.permute.xlu0 %4494
        %v4497 = vld [vmem:[#allocation2 + $0x15] sm:$0x1]
        %v4498 = vsel %vm3600, %v4495, %v4497
        %4499 = vst [vmem:[#allocation2 + $0x15] sm:$0x1] %v4498
        %v4500 = vcombine.high %v4416, %v4416
        %v4502 = vld [vmem:[#allocation2 + $0x16] sm:$0x1]
        %v4503 = vsel %vm3538, %v4500, %v4502
        %4504 = vst [vmem:[#allocation2 + $0x16] sm:$0x1] %v4503
        %v4505 = vcombine.high %v4442, %v4442
        %v4507 = vld [vmem:[#allocation2 + $0x16] sm:$0x1]
        %v4508 = vsel %vm3544, %v4505, %v4507
        %4509 = vst [vmem:[#allocation2 + $0x16] sm:$0x1] %v4508
        %v4511 = vshrl.u32 %v4500, 16
        %v4513 = vrot.slane %v4511, 7
        %v4514 = vrot.slane %v4513, 1
        %4515 = vrot.lane.b32.xlu0 %v4514, 64
        %v4516 = vpop.permute.xlu0 %4515
        %v4518 = vld [vmem:[#allocation2 + $0x16] sm:$0x1]
        %v4519 = vsel %vm3572, %v4516, %v4518
        %4520 = vst [vmem:[#allocation2 + $0x16] sm:$0x1] %v4519
        %v4522 = vshrl.u32 %v4505, 16
        %v4524 = vrot.slane %v4522, 7
        %v4525 = vrot.slane %v4524, 1
        %4526 = vrot.lane.b32.xlu0 %v4525, 64
        %v4527 = vpop.permute.xlu0 %4526
        %v4529 = vld [vmem:[#allocation2 + $0x16] sm:$0x1]
        %v4530 = vsel %vm3600, %v4527, %v4529
        %4531 = vst [vmem:[#allocation2 + $0x16] sm:$0x1] %v4530
        %v4532 = vcombine.high %v4461, %v4461
        %v4534 = vld [vmem:[#allocation2 + $0x17] sm:$0x1]
        %v4535 = vsel %vm3538, %v4532, %v4534
        %4536 = vst [vmem:[#allocation2 + $0x17] sm:$0x1] %v4535
        %v4537 = vcombine.high %v4473, %v4473
        %v4539 = vld [vmem:[#allocation2 + $0x17] sm:$0x1]
        %v4540 = vsel %vm3544, %v4537, %v4539
        %4541 = vst [vmem:[#allocation2 + $0x17] sm:$0x1] %v4540
        %v4543 = vshrl.u32 %v4532, 16
        %v4545 = vrot.slane %v4543, 7
        %v4546 = vrot.slane %v4545, 1
        %4547 = vrot.lane.b32.xlu0 %v4546, 64
        %v4548 = vpop.permute.xlu0 %4547
        %v4550 = vld [vmem:[#allocation2 + $0x17] sm:$0x1]
        %v4551 = vsel %vm3572, %v4548, %v4550
        %4552 = vst [vmem:[#allocation2 + $0x17] sm:$0x1] %v4551
        %v4554 = vshrl.u32 %v4537, 16
        %v4556 = vrot.slane %v4554, 7
        %v4557 = vrot.slane %v4556, 1
        %4558 = vrot.lane.b32.xlu0 %v4557, 64
        %v4559 = vpop.permute.xlu0 %4558
        %v4561 = vld [vmem:[#allocation2 + $0x17] sm:$0x1]
        %v4562 = vsel %vm3600, %v4559, %v4561
        %4563 = vst [vmem:[#allocation2 + $0x17] sm:$0x1] %v4562
        %v4564 = vpack.c.bf16 %v3499, %v3499
        %v4565 = vld [vmem:[#allocation2 + $0x18] sm:$0x1]
        %v4566 = vsel %vm3538, %v4564, %v4565
        %4567 = vst [vmem:[#allocation2 + $0x18] sm:$0x1] %v4566
        %v4568 = vpack.c.bf16 %v3534, %v3534
        %v4569 = vld [vmem:[#allocation2 + $0x18] sm:$0x1]
        %v4570 = vsel %vm3544, %v4568, %v4569
        %4571 = vst [vmem:[#allocation2 + $0x18] sm:$0x1] %v4570
        %v4572 = vld [vmem:[#allocation2] sm:$0xff]
        %v4573 = vld [vmem:[#allocation2 + $0x8] sm:$0xff]
        %v4574 = vld [vmem:[#allocation2 + $0x10] sm:$0xff]
        %v4575 = vld [vmem:[#allocation2 + $0x18] sm:$0x1]
        %v4576 = vld [vmem:[%s39] sm:$0xff]
        %v4577 = vld [vmem:[%s39 + $0x8] sm:$0xff]
        %v4578 = vld [vmem:[%s39 + $0x10] sm:$0xff]
        %v4579 = vld [vmem:[%s39 + $0x18] sm:$0xff]
        %v4580 = vld [vmem:[%s39 + $0x20] sm:$0xff]
        %v4581 = vld [vmem:[%s39 + $0x28] sm:$0xff]
        %v4582 = vld [vmem:[%s39 + $0x30] sm:$0xff]
        %v4583 = vld [vmem:[%s39 + $0x38] sm:$0xff]
        %v4584 = vld [vmem:[%s39 + $0x40] sm:$0xff]
        %v4585 = vld [vmem:[%s39 + $0x48] sm:$0xff]
        %v4586 = vld [vmem:[%s39 + $0x50] sm:$0xff]
        %v4587 = vld [vmem:[%s39 + $0x58] sm:$0xff]
        %v4588 = vld [vmem:[%s39 + $0x60] sm:$0xff]
        %v4589 = vld [vmem:[%s39 + $0x68] sm:$0xff]
        %v4590 = vld [vmem:[%s39 + $0x70] sm:$0xff]
        %v4591 = vld [vmem:[%s39 + $0x78] sm:$0xff]
        %v4592 = vld [vmem:[%s39 + $0x80] sm:$0xff]
        %v4593 = vld [vmem:[%s39 + $0x88] sm:$0xff]
        %v4594 = vld [vmem:[%s39 + $0x90] sm:$0xff]
        %v4595 = vld [vmem:[%s39 + $0x98] sm:$0xff]
        %v4596 = vld [vmem:[%s39 + $0xa0] sm:$0xff]
        %v4597 = vld [vmem:[%s39 + $0xa8] sm:$0xff]
        %v4598 = vld [vmem:[%s39 + $0xb0] sm:$0xff]
        %v4599 = vld [vmem:[%s39 + $0xb8] sm:$0xff]
        %v4600 = vld [vmem:[%s39 + $0xc0] sm:$0xff]
        %v4601 = vld [vmem:[%s39 + $0xc8] sm:$0xff]
        %v4602 = vld [vmem:[%s39 + $0xd0] sm:$0xff]
        %v4603 = vld [vmem:[%s39 + $0xd8] sm:$0xff]
        %v4604 = vld [vmem:[%s39 + $0xe0] sm:$0xff]
        %v4605 = vld [vmem:[%s39 + $0xe8] sm:$0xff]
        %v4606 = vld [vmem:[%s39 + $0xf0] sm:$0xff]
        %v4607 = vld [vmem:[%s39 + $0xf8] sm:$0xff]
        %v4608 = vld [vmem:[%s39 + $0x100] sm:$0xff]
        %v4609 = vld [vmem:[%s39 + $0x108] sm:$0xff]
        %v4610 = vld [vmem:[%s39 + $0x110] sm:$0xff]
        %v4611 = vld [vmem:[%s39 + $0x118] sm:$0xff]
        %v4612 = vld [vmem:[%s39 + $0x120] sm:$0xff]
        %v4613 = vld [vmem:[%s39 + $0x128] sm:$0xff]
        %v4614 = vld [vmem:[%s39 + $0x130] sm:$0xff]
        %v4615 = vld [vmem:[%s39 + $0x138] sm:$0xff]
        %v4616 = vld [vmem:[%s39 + $0x140] sm:$0xff]
        %v4617 = vld [vmem:[%s39 + $0x148] sm:$0xff]
        %v4618 = vld [vmem:[%s39 + $0x150] sm:$0xff]
        %v4619 = vld [vmem:[%s39 + $0x158] sm:$0xff]
        %v4620 = vld [vmem:[%s39 + $0x160] sm:$0xff]
        %v4621 = vld [vmem:[%s39 + $0x168] sm:$0xff]
        %v4622 = vld [vmem:[%s39 + $0x170] sm:$0xff]
        %v4623 = vld [vmem:[%s39 + $0x178] sm:$0xff]
        %v4624 = vld [vmem:[%s39 + $0x180] sm:$0xff]
        %v4625 = vld [vmem:[%s39 + $0x188] sm:$0xff]
        %v4626 = vld [vmem:[%s39 + $0x190] sm:$0xff]
        %v4627 = vld [vmem:[%s39 + $0x198] sm:$0xff]
        %v4628 = vld [vmem:[%s39 + $0x1a0] sm:$0xff]
        %v4629 = vld [vmem:[%s39 + $0x1a8] sm:$0xff]
        %v4630 = vld [vmem:[%s39 + $0x1b0] sm:$0xff]
        %v4631 = vld [vmem:[%s39 + $0x1b8] sm:$0xff]
        %v4632 = vld [vmem:[%s39 + $0x1c0] sm:$0xff]
        %v4633 = vld [vmem:[%s39 + $0x1c8] sm:$0xff]
        %v4634 = vld [vmem:[%s39 + $0x1d0] sm:$0xff]
        %v4635 = vld [vmem:[%s39 + $0x1d8] sm:$0xff]
        %v4636 = vld [vmem:[%s39 + $0x1e0] sm:$0xff]
        %v4637 = vld [vmem:[%s39 + $0x1e8] sm:$0xff]
        %v4638 = vld [vmem:[%s39 + $0x1f0] sm:$0xff]
        %v4639 = vld [vmem:[%s39 + $0x1f8] sm:$0xff]
        %v4640 = vld [vmem:[%s39 + $0x200] sm:$0xff]
        %v4641 = vld [vmem:[%s39 + $0x208] sm:$0xff]
        %v4642 = vld [vmem:[%s39 + $0x210] sm:$0xff]
        %v4643 = vld [vmem:[%s39 + $0x218] sm:$0xff]
        %v4644 = vld [vmem:[%s39 + $0x220] sm:$0xff]
        %v4645 = vld [vmem:[%s39 + $0x228] sm:$0xff]
        %v4646 = vld [vmem:[%s39 + $0x230] sm:$0xff]
        %v4647 = vld [vmem:[%s39 + $0x238] sm:$0xff]
        %v4648 = vld [vmem:[%s39 + $0x240] sm:$0xff]
        %v4649 = vld [vmem:[%s39 + $0x248] sm:$0xff]
        %v4650 = vld [vmem:[%s39 + $0x250] sm:$0xff]
        %v4651 = vld [vmem:[%s39 + $0x258] sm:$0xff]
        %v4652 = vld [vmem:[%s39 + $0x260] sm:$0xff]
        %v4653 = vld [vmem:[%s39 + $0x268] sm:$0xff]
        %v4654 = vld [vmem:[%s39 + $0x270] sm:$0xff]
        %v4655 = vld [vmem:[%s39 + $0x278] sm:$0xff]
        %v4656 = vld [vmem:[%s39 + $0x280] sm:$0xff]
        %v4657 = vld [vmem:[%s39 + $0x288] sm:$0xff]
        %v4658 = vld [vmem:[%s39 + $0x290] sm:$0xff]
        %v4659 = vld [vmem:[%s39 + $0x298] sm:$0xff]
        %v4660 = vld [vmem:[%s39 + $0x2a0] sm:$0xff]
        %v4661 = vld [vmem:[%s39 + $0x2a8] sm:$0xff]
        %v4662 = vld [vmem:[%s39 + $0x2b0] sm:$0xff]
        %v4663 = vld [vmem:[%s39 + $0x2b8] sm:$0xff]
        %v4664 = vld [vmem:[%s39 + $0x2c0] sm:$0xff]
        %v4665 = vld [vmem:[%s39 + $0x2c8] sm:$0xff]
        %v4666 = vld [vmem:[%s39 + $0x2d0] sm:$0xff]
        %v4667 = vld [vmem:[%s39 + $0x2d8] sm:$0xff]
        %v4668 = vld [vmem:[%s39 + $0x2e0] sm:$0xff]
        %v4669 = vld [vmem:[%s39 + $0x2e8] sm:$0xff]
        %v4670 = vld [vmem:[%s39 + $0x2f0] sm:$0xff]
        %v4671 = vld [vmem:[%s39 + $0x2f8] sm:$0xff]
        %v4672 = vld [vmem:[%s39 + $0x300] sm:$0xff]
        %v4673 = vld [vmem:[%s39 + $0x308] sm:$0xff]
        %v4674 = vld [vmem:[%s39 + $0x310] sm:$0xff]
        %v4675 = vld [vmem:[%s39 + $0x318] sm:$0xff]
        %v4676 = vld [vmem:[%s39 + $0x320] sm:$0xff]
        %v4677 = vld [vmem:[%s39 + $0x328] sm:$0xff]
        %v4678 = vld [vmem:[%s39 + $0x330] sm:$0xff]
        %v4679 = vld [vmem:[%s39 + $0x338] sm:$0xff]
        %v4680 = vld [vmem:[%s39 + $0x340] sm:$0xff]
        %v4681 = vld [vmem:[%s39 + $0x348] sm:$0xff]
        %v4682 = vld [vmem:[%s39 + $0x350] sm:$0xff]
        %v4683 = vld [vmem:[%s39 + $0x358] sm:$0xff]
        %v4684 = vld [vmem:[%s39 + $0x360] sm:$0xff]
        %v4685 = vld [vmem:[%s39 + $0x368] sm:$0xff]
        %v4686 = vld [vmem:[%s39 + $0x370] sm:$0xff]
        %v4687 = vld [vmem:[%s39 + $0x378] sm:$0xff]
        %v4688 = vld [vmem:[%s39 + $0x380] sm:$0xff]
        %v4689 = vld [vmem:[%s39 + $0x388] sm:$0xff]
        %v4690 = vld [vmem:[%s39 + $0x390] sm:$0xff]
        %v4691 = vld [vmem:[%s39 + $0x398] sm:$0xff]
        %v4692 = vld [vmem:[%s39 + $0x3a0] sm:$0xff]
        %v4693 = vld [vmem:[%s39 + $0x3a8] sm:$0xff]
        %v4694 = vld [vmem:[%s39 + $0x3b0] sm:$0xff]
        %v4695 = vld [vmem:[%s39 + $0x3b8] sm:$0xff]
        %v4696 = vld [vmem:[%s39 + $0x3c0] sm:$0xff]
        %v4697 = vld [vmem:[%s39 + $0x3c8] sm:$0xff]
        %v4698 = vld [vmem:[%s39 + $0x3d0] sm:$0xff]
        %v4699 = vld [vmem:[%s39 + $0x3d8] sm:$0xff]
        %v4700 = vld [vmem:[%s39 + $0x3e0] sm:$0xff]
        %v4701 = vld [vmem:[%s39 + $0x3e8] sm:$0xff]
        %v4702 = vld [vmem:[%s39 + $0x3f0] sm:$0xff]
        %v4703 = vld [vmem:[%s39 + $0x3f8] sm:$0xff]
        %v4704 = vld [vmem:[%s39 + $0x400] sm:$0xff]
        %v4705 = vld [vmem:[%s39 + $0x408] sm:$0xff]
        %v4706 = vld [vmem:[%s39 + $0x410] sm:$0xff]
        %v4707 = vld [vmem:[%s39 + $0x418] sm:$0xff]
        %v4708 = vld [vmem:[%s39 + $0x420] sm:$0xff]
        %v4709 = vld [vmem:[%s39 + $0x428] sm:$0xff]
        %v4710 = vld [vmem:[%s39 + $0x430] sm:$0xff]
        %v4711 = vld [vmem:[%s39 + $0x438] sm:$0xff]
        %v4712 = vld [vmem:[%s39 + $0x440] sm:$0xff]
        %v4713 = vld [vmem:[%s39 + $0x448] sm:$0xff]
        %v4714 = vld [vmem:[%s39 + $0x450] sm:$0xff]
        %v4715 = vld [vmem:[%s39 + $0x458] sm:$0xff]
        %v4716 = vld [vmem:[%s39 + $0x460] sm:$0xff]
        %v4717 = vld [vmem:[%s39 + $0x468] sm:$0xff]
        %v4718 = vld [vmem:[%s39 + $0x470] sm:$0xff]
        %v4719 = vld [vmem:[%s39 + $0x478] sm:$0xff]
        %v4720 = vld [vmem:[%s39 + $0x480] sm:$0xff]
        %v4721 = vld [vmem:[%s39 + $0x488] sm:$0xff]
        %v4722 = vld [vmem:[%s39 + $0x490] sm:$0xff]
        %v4723 = vld [vmem:[%s39 + $0x498] sm:$0xff]
        %v4724 = vld [vmem:[%s39 + $0x4a0] sm:$0xff]
        %v4725 = vld [vmem:[%s39 + $0x4a8] sm:$0xff]
        %v4726 = vld [vmem:[%s39 + $0x4b0] sm:$0xff]
        %v4727 = vld [vmem:[%s39 + $0x4b8] sm:$0xff]
        %v4728 = vld [vmem:[%s39 + $0x4c0] sm:$0xff]
        %v4729 = vld [vmem:[%s39 + $0x4c8] sm:$0xff]
        %v4730 = vld [vmem:[%s39 + $0x4d0] sm:$0xff]
        %v4731 = vld [vmem:[%s39 + $0x4d8] sm:$0xff]
        %v4732 = vld [vmem:[%s39 + $0x4e0] sm:$0xff]
        %v4733 = vld [vmem:[%s39 + $0x4e8] sm:$0xff]
        %v4734 = vld [vmem:[%s39 + $0x4f0] sm:$0xff]
        %v4735 = vld [vmem:[%s39 + $0x4f8] sm:$0xff]
        %v4736 = vld [vmem:[%s39 + $0x500] sm:$0xff]
        %v4737 = vld [vmem:[%s39 + $0x508] sm:$0xff]
        %v4738 = vld [vmem:[%s39 + $0x510] sm:$0xff]
        %v4739 = vld [vmem:[%s39 + $0x518] sm:$0xff]
        %v4740 = vld [vmem:[%s39 + $0x520] sm:$0xff]
        %v4741 = vld [vmem:[%s39 + $0x528] sm:$0xff]
        %v4742 = vld [vmem:[%s39 + $0x530] sm:$0xff]
        %v4743 = vld [vmem:[%s39 + $0x538] sm:$0xff]
        %v4744 = vld [vmem:[%s39 + $0x540] sm:$0xff]
        %v4745 = vld [vmem:[%s39 + $0x548] sm:$0xff]
        %v4746 = vld [vmem:[%s39 + $0x550] sm:$0xff]
        %v4747 = vld [vmem:[%s39 + $0x558] sm:$0xff]
        %v4748 = vld [vmem:[%s39 + $0x560] sm:$0xff]
        %v4749 = vld [vmem:[%s39 + $0x568] sm:$0xff]
        %v4750 = vld [vmem:[%s39 + $0x570] sm:$0xff]
        %v4751 = vld [vmem:[%s39 + $0x578] sm:$0xff]
        %v4752 = vld [vmem:[%s39 + $0x580] sm:$0xff]
        %v4753 = vld [vmem:[%s39 + $0x588] sm:$0xff]
        %v4754 = vld [vmem:[%s39 + $0x590] sm:$0xff]
        %v4755 = vld [vmem:[%s39 + $0x598] sm:$0xff]
        %v4756 = vld [vmem:[%s39 + $0x5a0] sm:$0xff]
        %v4757 = vld [vmem:[%s39 + $0x5a8] sm:$0xff]
        %v4758 = vld [vmem:[%s39 + $0x5b0] sm:$0xff]
        %v4759 = vld [vmem:[%s39 + $0x5b8] sm:$0xff]
        %v4760 = vld [vmem:[%s39 + $0x5c0] sm:$0xff]
        %v4761 = vld [vmem:[%s39 + $0x5c8] sm:$0xff]
        %v4762 = vld [vmem:[%s39 + $0x5d0] sm:$0xff]
        %v4763 = vld [vmem:[%s39 + $0x5d8] sm:$0xff]
        %v4764 = vld [vmem:[%s39 + $0x5e0] sm:$0xff]
        %v4765 = vld [vmem:[%s39 + $0x5e8] sm:$0xff]
        %v4766 = vld [vmem:[%s39 + $0x5f0] sm:$0xff]
        %v4767 = vld [vmem:[%s39 + $0x5f8] sm:$0xff]
        %v4768 = vld [vmem:[%s39 + $0x600] sm:$0xff]
        %v4769 = vld [vmem:[%s39 + $0x608] sm:$0xff]
        %v4770 = vld [vmem:[%s39 + $0x610] sm:$0xff]
        %v4771 = vld [vmem:[%s39 + $0x618] sm:$0xff]
        %v4772 = vld [vmem:[%s39 + $0x620] sm:$0xff]
        %v4773 = vld [vmem:[%s39 + $0x628] sm:$0xff]
        %v4774 = vld [vmem:[%s39 + $0x630] sm:$0xff]
        %v4775 = vld [vmem:[%s39 + $0x638] sm:$0xff]
        %v4776 = vld [vmem:[%s39 + $0x640] sm:$0xff]
        %v4777 = vld [vmem:[%s39 + $0x648] sm:$0xff]
        %v4778 = vld [vmem:[%s39 + $0x650] sm:$0xff]
        %v4779 = vld [vmem:[%s39 + $0x658] sm:$0xff]
        %v4780 = vld [vmem:[%s39 + $0x660] sm:$0xff]
        %v4781 = vld [vmem:[%s39 + $0x668] sm:$0xff]
        %v4782 = vld [vmem:[%s39 + $0x670] sm:$0xff]
        %v4783 = vld [vmem:[%s39 + $0x678] sm:$0xff]
        %v4784 = vld [vmem:[%s39 + $0x680] sm:$0xff]
        %v4785 = vld [vmem:[%s39 + $0x688] sm:$0xff]
        %v4786 = vld [vmem:[%s39 + $0x690] sm:$0xff]
        %v4787 = vld [vmem:[%s39 + $0x698] sm:$0xff]
        %v4788 = vld [vmem:[%s39 + $0x6a0] sm:$0xff]
        %v4789 = vld [vmem:[%s39 + $0x6a8] sm:$0xff]
        %v4790 = vld [vmem:[%s39 + $0x6b0] sm:$0xff]
        %v4791 = vld [vmem:[%s39 + $0x6b8] sm:$0xff]
        %v4792 = vld [vmem:[%s39 + $0x6c0] sm:$0xff]
        %v4793 = vld [vmem:[%s39 + $0x6c8] sm:$0xff]
        %v4794 = vld [vmem:[%s39 + $0x6d0] sm:$0xff]
        %v4795 = vld [vmem:[%s39 + $0x6d8] sm:$0xff]
        %v4796 = vld [vmem:[%s39 + $0x6e0] sm:$0xff]
        %v4797 = vld [vmem:[%s39 + $0x6e8] sm:$0xff]
        %v4798 = vld [vmem:[%s39 + $0x6f0] sm:$0xff]
        %v4799 = vld [vmem:[%s39 + $0x6f8] sm:$0xff]
        %v4800 = vld [vmem:[%s39 + $0x700] sm:$0xff]
        %v4801 = vld [vmem:[%s39 + $0x708] sm:$0xff]
        %v4802 = vld [vmem:[%s39 + $0x710] sm:$0xff]
        %v4803 = vld [vmem:[%s39 + $0x718] sm:$0xff]
        %v4804 = vld [vmem:[%s39 + $0x720] sm:$0xff]
        %v4805 = vld [vmem:[%s39 + $0x728] sm:$0xff]
        %v4806 = vld [vmem:[%s39 + $0x730] sm:$0xff]
        %v4807 = vld [vmem:[%s39 + $0x738] sm:$0xff]
        %v4808 = vld [vmem:[%s39 + $0x740] sm:$0xff]
        %v4809 = vld [vmem:[%s39 + $0x748] sm:$0xff]
        %v4810 = vld [vmem:[%s39 + $0x750] sm:$0xff]
        %v4811 = vld [vmem:[%s39 + $0x758] sm:$0xff]
        %v4812 = vld [vmem:[%s39 + $0x760] sm:$0xff]
        %v4813 = vld [vmem:[%s39 + $0x768] sm:$0xff]
        %v4814 = vld [vmem:[%s39 + $0x770] sm:$0xff]
        %v4815 = vld [vmem:[%s39 + $0x778] sm:$0xff]
        %v4816 = vld [vmem:[%s39 + $0x780] sm:$0xff]
        %v4817 = vld [vmem:[%s39 + $0x788] sm:$0xff]
        %v4818 = vld [vmem:[%s39 + $0x790] sm:$0xff]
        %v4819 = vld [vmem:[%s39 + $0x798] sm:$0xff]
        %v4820 = vld [vmem:[%s39 + $0x7a0] sm:$0xff]
        %v4821 = vld [vmem:[%s39 + $0x7a8] sm:$0xff]
        %v4822 = vld [vmem:[%s39 + $0x7b0] sm:$0xff]
        %v4823 = vld [vmem:[%s39 + $0x7b8] sm:$0xff]
        %v4824 = vld [vmem:[%s39 + $0x7c0] sm:$0xff]
        %v4825 = vld [vmem:[%s39 + $0x7c8] sm:$0xff]
        %v4826 = vld [vmem:[%s39 + $0x7d0] sm:$0xff]
        %v4827 = vld [vmem:[%s39 + $0x7d8] sm:$0xff]
        %v4828 = vld [vmem:[%s39 + $0x7e0] sm:$0xff]
        %v4829 = vld [vmem:[%s39 + $0x7e8] sm:$0xff]
        %v4830 = vld [vmem:[%s39 + $0x7f0] sm:$0xff]
        %v4831 = vld [vmem:[%s39 + $0x7f8] sm:$0xff]
        %v4832 = vld [vmem:[%s39 + $0x800] sm:$0xff]
        %v4833 = vld [vmem:[%s39 + $0x808] sm:$0xff]
        %v4834 = vld [vmem:[%s39 + $0x810] sm:$0xff]
        %v4835 = vld [vmem:[%s39 + $0x818] sm:$0xff]
        %v4836 = vld [vmem:[%s39 + $0x820] sm:$0xff]
        %v4837 = vld [vmem:[%s39 + $0x828] sm:$0xff]
        %v4838 = vld [vmem:[%s39 + $0x830] sm:$0xff]
        %v4839 = vld [vmem:[%s39 + $0x838] sm:$0xff]
        %v4840 = vld [vmem:[%s39 + $0x840] sm:$0xff]
        %v4841 = vld [vmem:[%s39 + $0x848] sm:$0xff]
        %v4842 = vld [vmem:[%s39 + $0x850] sm:$0xff]
        %v4843 = vld [vmem:[%s39 + $0x858] sm:$0xff]
        %v4844 = vld [vmem:[%s39 + $0x860] sm:$0xff]
        %v4845 = vld [vmem:[%s39 + $0x868] sm:$0xff]
        %v4846 = vld [vmem:[%s39 + $0x870] sm:$0xff]
        %v4847 = vld [vmem:[%s39 + $0x878] sm:$0xff]
        %v4848 = vld [vmem:[%s39 + $0x880] sm:$0xff]
        %v4849 = vld [vmem:[%s39 + $0x888] sm:$0xff]
        %v4850 = vld [vmem:[%s39 + $0x890] sm:$0xff]
        %v4851 = vld [vmem:[%s39 + $0x898] sm:$0xff]
        %v4852 = vld [vmem:[%s39 + $0x8a0] sm:$0xff]
        %v4853 = vld [vmem:[%s39 + $0x8a8] sm:$0xff]
        %v4854 = vld [vmem:[%s39 + $0x8b0] sm:$0xff]
        %v4855 = vld [vmem:[%s39 + $0x8b8] sm:$0xff]
        %v4856 = vld [vmem:[%s39 + $0x8c0] sm:$0xff]
        %v4857 = vld [vmem:[%s39 + $0x8c8] sm:$0xff]
        %v4858 = vld [vmem:[%s39 + $0x8d0] sm:$0xff]
        %v4859 = vld [vmem:[%s39 + $0x8d8] sm:$0xff]
        %v4860 = vld [vmem:[%s39 + $0x8e0] sm:$0xff]
        %v4861 = vld [vmem:[%s39 + $0x8e8] sm:$0xff]
        %v4862 = vld [vmem:[%s39 + $0x8f0] sm:$0xff]
        %v4863 = vld [vmem:[%s39 + $0x8f8] sm:$0xff]
        %v4864 = vld [vmem:[%s39 + $0x900] sm:$0xff]
        %v4865 = vld [vmem:[%s39 + $0x908] sm:$0xff]
        %v4866 = vld [vmem:[%s39 + $0x910] sm:$0xff]
        %v4867 = vld [vmem:[%s39 + $0x918] sm:$0xff]
        %v4868 = vld [vmem:[%s39 + $0x920] sm:$0xff]
        %v4869 = vld [vmem:[%s39 + $0x928] sm:$0xff]
        %v4870 = vld [vmem:[%s39 + $0x930] sm:$0xff]
        %v4871 = vld [vmem:[%s39 + $0x938] sm:$0xff]
        %v4872 = vld [vmem:[%s39 + $0x940] sm:$0xff]
        %v4873 = vld [vmem:[%s39 + $0x948] sm:$0xff]
        %v4874 = vld [vmem:[%s39 + $0x950] sm:$0xff]
        %v4875 = vld [vmem:[%s39 + $0x958] sm:$0xff]
        %v4876 = vld [vmem:[%s39 + $0x960] sm:$0xff]
        %v4877 = vld [vmem:[%s39 + $0x968] sm:$0xff]
        %v4878 = vld [vmem:[%s39 + $0x970] sm:$0xff]
        %v4879 = vld [vmem:[%s39 + $0x978] sm:$0xff]
        %v4880 = vld [vmem:[%s39 + $0x980] sm:$0xff]
        %v4881 = vld [vmem:[%s39 + $0x988] sm:$0xff]
        %v4882 = vld [vmem:[%s39 + $0x990] sm:$0xff]
        %v4883 = vld [vmem:[%s39 + $0x998] sm:$0xff]
        %v4884 = vld [vmem:[%s39 + $0x9a0] sm:$0xff]
        %v4885 = vld [vmem:[%s39 + $0x9a8] sm:$0xff]
        %v4886 = vld [vmem:[%s39 + $0x9b0] sm:$0xff]
        %v4887 = vld [vmem:[%s39 + $0x9b8] sm:$0xff]
        %v4888 = vld [vmem:[%s39 + $0x9c0] sm:$0xff]
        %v4889 = vld [vmem:[%s39 + $0x9c8] sm:$0xff]
        %v4890 = vld [vmem:[%s39 + $0x9d0] sm:$0xff]
        %v4891 = vld [vmem:[%s39 + $0x9d8] sm:$0xff]
        %v4892 = vld [vmem:[%s39 + $0x9e0] sm:$0xff]
        %v4893 = vld [vmem:[%s39 + $0x9e8] sm:$0xff]
        %v4894 = vld [vmem:[%s39 + $0x9f0] sm:$0xff]
        %v4895 = vld [vmem:[%s39 + $0x9f8] sm:$0xff]
        %v4896 = vld [vmem:[%s39 + $0xa00] sm:$0xff]
        %v4897 = vld [vmem:[%s39 + $0xa08] sm:$0xff]
        %v4898 = vld [vmem:[%s39 + $0xa10] sm:$0xff]
        %v4899 = vld [vmem:[%s39 + $0xa18] sm:$0xff]
        %v4900 = vld [vmem:[%s39 + $0xa20] sm:$0xff]
        %v4901 = vld [vmem:[%s39 + $0xa28] sm:$0xff]
        %v4902 = vld [vmem:[%s39 + $0xa30] sm:$0xff]
        %v4903 = vld [vmem:[%s39 + $0xa38] sm:$0xff]
        %v4904 = vld [vmem:[%s39 + $0xa40] sm:$0xff]
        %v4905 = vld [vmem:[%s39 + $0xa48] sm:$0xff]
        %v4906 = vld [vmem:[%s39 + $0xa50] sm:$0xff]
        %v4907 = vld [vmem:[%s39 + $0xa58] sm:$0xff]
        %v4908 = vld [vmem:[%s39 + $0xa60] sm:$0xff]
        %v4909 = vld [vmem:[%s39 + $0xa68] sm:$0xff]
        %v4910 = vld [vmem:[%s39 + $0xa70] sm:$0xff]
        %v4911 = vld [vmem:[%s39 + $0xa78] sm:$0xff]
        %v4912 = vld [vmem:[%s39 + $0xa80] sm:$0xff]
        %v4913 = vld [vmem:[%s39 + $0xa88] sm:$0xff]
        %v4914 = vld [vmem:[%s39 + $0xa90] sm:$0xff]
        %v4915 = vld [vmem:[%s39 + $0xa98] sm:$0xff]
        %v4916 = vld [vmem:[%s39 + $0xaa0] sm:$0xff]
        %v4917 = vld [vmem:[%s39 + $0xaa8] sm:$0xff]
        %v4918 = vld [vmem:[%s39 + $0xab0] sm:$0xff]
        %v4919 = vld [vmem:[%s39 + $0xab8] sm:$0xff]
        %v4920 = vld [vmem:[%s39 + $0xac0] sm:$0xff]
        %v4921 = vld [vmem:[%s39 + $0xac8] sm:$0xff]
        %v4922 = vld [vmem:[%s39 + $0xad0] sm:$0xff]
        %v4923 = vld [vmem:[%s39 + $0xad8] sm:$0xff]
        %v4924 = vld [vmem:[%s39 + $0xae0] sm:$0xff]
        %v4925 = vld [vmem:[%s39 + $0xae8] sm:$0xff]
        %v4926 = vld [vmem:[%s39 + $0xaf0] sm:$0xff]
        %v4927 = vld [vmem:[%s39 + $0xaf8] sm:$0xff]
        %v4928 = vld [vmem:[%s39 + $0xb00] sm:$0xff]
        %v4929 = vld [vmem:[%s39 + $0xb08] sm:$0xff]
        %v4930 = vld [vmem:[%s39 + $0xb10] sm:$0xff]
        %v4931 = vld [vmem:[%s39 + $0xb18] sm:$0xff]
        %v4932 = vld [vmem:[%s39 + $0xb20] sm:$0xff]
        %v4933 = vld [vmem:[%s39 + $0xb28] sm:$0xff]
        %v4934 = vld [vmem:[%s39 + $0xb30] sm:$0xff]
        %v4935 = vld [vmem:[%s39 + $0xb38] sm:$0xff]
        %v4936 = vld [vmem:[%s39 + $0xb40] sm:$0xff]
        %v4937 = vld [vmem:[%s39 + $0xb48] sm:$0xff]
        %v4938 = vld [vmem:[%s39 + $0xb50] sm:$0xff]
        %v4939 = vld [vmem:[%s39 + $0xb58] sm:$0xff]
        %v4940 = vld [vmem:[%s39 + $0xb60] sm:$0xff]
        %v4941 = vld [vmem:[%s39 + $0xb68] sm:$0xff]
        %v4942 = vld [vmem:[%s39 + $0xb70] sm:$0xff]
        %v4943 = vld [vmem:[%s39 + $0xb78] sm:$0xff]
        %v4944 = vld [vmem:[%s39 + $0xb80] sm:$0xff]
        %v4945 = vld [vmem:[%s39 + $0xb88] sm:$0xff]
        %v4946 = vld [vmem:[%s39 + $0xb90] sm:$0xff]
        %v4947 = vld [vmem:[%s39 + $0xb98] sm:$0xff]
        %v4948 = vld [vmem:[%s39 + $0xba0] sm:$0xff]
        %v4949 = vld [vmem:[%s39 + $0xba8] sm:$0xff]
        %v4950 = vld [vmem:[%s39 + $0xbb0] sm:$0xff]
        %v4951 = vld [vmem:[%s39 + $0xbb8] sm:$0xff]
        %v4952 = vld [vmem:[%s39 + $0xbc0] sm:$0xff]
        %v4953 = vld [vmem:[%s39 + $0xbc8] sm:$0xff]
        %v4954 = vld [vmem:[%s39 + $0xbd0] sm:$0xff]
        %v4955 = vld [vmem:[%s39 + $0xbd8] sm:$0xff]
        %v4956 = vld [vmem:[%s39 + $0xbe0] sm:$0xff]
        %v4957 = vld [vmem:[%s39 + $0xbe8] sm:$0xff]
        %v4958 = vld [vmem:[%s39 + $0xbf0] sm:$0xff]
        %v4959 = vld [vmem:[%s39 + $0xbf8] sm:$0xff]
        %v4960 = vld [vmem:[%s39 + $0xc00] sm:$0xff]
        %v4961 = vld [vmem:[%s39 + $0xc08] sm:$0xff]
        %v4962 = vld [vmem:[%s39 + $0xc10] sm:$0xff]
        %v4963 = vld [vmem:[%s39 + $0xc18] sm:$0xff]
        %v4964 = vld [vmem:[%s39 + $0xc20] sm:$0xff]
        %v4965 = vld [vmem:[%s39 + $0xc28] sm:$0xff]
        %v4966 = vld [vmem:[%s39 + $0xc30] sm:$0xff]
        %v4967 = vld [vmem:[%s39 + $0xc38] sm:$0xff]
        %v4968 = vld [vmem:[%s41] sm:$0x3]
        %v4973 = vcombine.high %v4572, %v4572
        %v4975 = vunpack.c.l.s4 1966171168
        %v4976 = vunpack.c.0.s8 %v4975
        %v4977 = vlaneseq
        %v4978 = vshrl.u32 %v4977, 7
        %v4979 = vsub.s32 %v4976, %v4978
        %v4980 = vrot.slane %v4572, %v4979
        %v4982 = vunpack.c.l.s4 1966171168
        %v4983 = vunpack.c.0.s8 %v4982
        %v4984 = vlaneseq
        %v4985 = vshrl.u32 %v4984, 7
        %v4986 = vsub.s32 %v4983, %v4985
        %v4987 = vrot.slane %v4973, %v4986
        %v4988 = vcombine.high %v4980, %v4980
        %v4989 = vcombine.high %v4987, %v4987
        %v4991 = vunpack.c.l.s4 1966171168
        %v4992 = vunpack.c.0.s8 %v4991
        %v4993 = vlaneseq
        %v4994 = vshrl.u32 %v4993, 7
        %v4995 = vsub.s32 %v4992, %v4994
        %v4996 = vrot.slane %v4980, %v4995
        %v4998 = vunpack.c.l.s4 1966171168
        %v4999 = vunpack.c.0.s8 %v4998
        %v5000 = vlaneseq
        %v5001 = vshrl.u32 %v5000, 7
        %v5002 = vsub.s32 %v4999, %v5001
        %v5003 = vrot.slane %v4987, %v5002
        %v5005 = vunpack.c.l.s4 1966171168
        %v5006 = vunpack.c.0.s8 %v5005
        %v5007 = vlaneseq
        %v5008 = vshrl.u32 %v5007, 7
        %v5009 = vsub.s32 %v5006, %v5008
        %v5010 = vrot.slane %v4988, %v5009
        %v5012 = vunpack.c.l.s4 1966171168
        %v5013 = vunpack.c.0.s8 %v5012
        %v5014 = vlaneseq
        %v5015 = vshrl.u32 %v5014, 7
        %v5016 = vsub.s32 %v5013, %v5015
        %v5017 = vrot.slane %v4989, %v5016
        %v5018 = vcombine.high %v4996, %v4996
        %v5019 = vcombine.high %v5003, %v5003
        %v5020 = vcombine.high %v5010, %v5010
        %v5021 = vcombine.high %v5017, %v5017
        %v5022 = vcombine.high %v4573, %v4573
        %v5024 = vunpack.c.l.s4 1966171168
        %v5025 = vunpack.c.0.s8 %v5024
        %v5026 = vlaneseq
        %v5027 = vshrl.u32 %v5026, 7
        %v5028 = vsub.s32 %v5025, %v5027
        %v5029 = vrot.slane %v4573, %v5028
        %v5031 = vunpack.c.l.s4 1966171168
        %v5032 = vunpack.c.0.s8 %v5031
        %v5033 = vlaneseq
        %v5034 = vshrl.u32 %v5033, 7
        %v5035 = vsub.s32 %v5032, %v5034
        %v5036 = vrot.slane %v5022, %v5035
        %v5037 = vcombine.high %v5029, %v5029
        %v5038 = vcombine.high %v5036, %v5036
        %v5040 = vunpack.c.l.s4 1966171168
        %v5041 = vunpack.c.0.s8 %v5040
        %v5042 = vlaneseq
        %v5043 = vshrl.u32 %v5042, 7
        %v5044 = vsub.s32 %v5041, %v5043
        %v5045 = vrot.slane %v5029, %v5044
        %v5047 = vunpack.c.l.s4 1966171168
        %v5048 = vunpack.c.0.s8 %v5047
        %v5049 = vlaneseq
        %v5050 = vshrl.u32 %v5049, 7
        %v5051 = vsub.s32 %v5048, %v5050
        %v5052 = vrot.slane %v5036, %v5051
        %v5054 = vunpack.c.l.s4 1966171168
        %v5055 = vunpack.c.0.s8 %v5054
        %v5056 = vlaneseq
        %v5057 = vshrl.u32 %v5056, 7
        %v5058 = vsub.s32 %v5055, %v5057
        %v5059 = vrot.slane %v5037, %v5058
        %v5061 = vunpack.c.l.s4 1966171168
        %v5062 = vunpack.c.0.s8 %v5061
        %v5063 = vlaneseq
        %v5064 = vshrl.u32 %v5063, 7
        %v5065 = vsub.s32 %v5062, %v5064
        %v5066 = vrot.slane %v5038, %v5065
        %v5067 = vcombine.high %v5045, %v5045
        %v5068 = vcombine.high %v5052, %v5052
        %v5069 = vcombine.high %v5059, %v5059
        %v5070 = vcombine.high %v5066, %v5066
        %v5071 = vcombine.high %v4574, %v4574
        %v5073 = vunpack.c.l.s4 1966171168
        %v5074 = vunpack.c.0.s8 %v5073
        %v5075 = vlaneseq
        %v5076 = vshrl.u32 %v5075, 7
        %v5077 = vsub.s32 %v5074, %v5076
        %v5078 = vrot.slane %v4574, %v5077
        %v5080 = vunpack.c.l.s4 1966171168
        %v5081 = vunpack.c.0.s8 %v5080
        %v5082 = vlaneseq
        %v5083 = vshrl.u32 %v5082, 7
        %v5084 = vsub.s32 %v5081, %v5083
        %v5085 = vrot.slane %v5071, %v5084
        %v5086 = vcombine.high %v5078, %v5078
        %v5087 = vcombine.high %v5085, %v5085
        %v5089 = vunpack.c.l.s4 1966171168
        %v5090 = vunpack.c.0.s8 %v5089
        %v5091 = vlaneseq
        %v5092 = vshrl.u32 %v5091, 7
        %v5093 = vsub.s32 %v5090, %v5092
        %v5094 = vrot.slane %v5078, %v5093
        %v5096 = vunpack.c.l.s4 1966171168
        %v5097 = vunpack.c.0.s8 %v5096
        %v5098 = vlaneseq
        %v5099 = vshrl.u32 %v5098, 7
        %v5100 = vsub.s32 %v5097, %v5099
        %v5101 = vrot.slane %v5085, %v5100
        %v5103 = vunpack.c.l.s4 1966171168
        %v5104 = vunpack.c.0.s8 %v5103
        %v5105 = vlaneseq
        %v5106 = vshrl.u32 %v5105, 7
        %v5107 = vsub.s32 %v5104, %v5106
        %v5108 = vrot.slane %v5086, %v5107
        %v5110 = vunpack.c.l.s4 1966171168
        %v5111 = vunpack.c.0.s8 %v5110
        %v5112 = vlaneseq
        %v5113 = vshrl.u32 %v5112, 7
        %v5114 = vsub.s32 %v5111, %v5113
        %v5115 = vrot.slane %v5087, %v5114
        %v5116 = vcombine.high %v5094, %v5094
        %v5117 = vcombine.high %v5101, %v5101
        %v5118 = vcombine.high %v5108, %v5108
        %v5119 = vcombine.high %v5115, %v5115
        %v5121 = vunpack.c.l.s4 1966171168
        %v5122 = vunpack.c.0.s8 %v5121
        %v5123 = vlaneseq
        %v5124 = vshrl.u32 %v5123, 7
        %v5125 = vsub.s32 %v5122, %v5124
        %v5126 = vrot.slane %v4575, %v5125
        %v5128 = vunpack.c.l.s4 1966171168
        %v5129 = vunpack.c.0.s8 %v5128
        %v5130 = vlaneseq
        %v5131 = vshrl.u32 %v5130, 7
        %v5132 = vsub.s32 %v5129, %v5131
        %v5133 = vrot.slane %v5126, %v5132
        %v5550 = vunpack.c.l.b16 %v4576
        %v5551 = vunpack.c.h.b16 %v4576
        %v5552 = vunpack.c.l.b16 %v4577
        %v5553 = vunpack.c.h.b16 %v4577
        %v5554 = vunpack.c.l.b16 %v4578
        %v5555 = vunpack.c.h.b16 %v4578
        %v5556 = vunpack.c.l.b16 %v4579
        %v5557 = vunpack.c.h.b16 %v4579
        %v5558 = vunpack.c.l.b16 %v4580
        %v5559 = vunpack.c.h.b16 %v4580
        %v5560 = vunpack.c.l.b16 %v4581
        %v5561 = vunpack.c.h.b16 %v4581
        %v5562 = vunpack.c.l.b16 %v4582
        %v5563 = vunpack.c.h.b16 %v4582
        %v5564 = vunpack.c.l.b16 %v4583
        %v5565 = vunpack.c.h.b16 %v4583
        %v5566 = vunpack.c.l.b16 %v4584
        %v5567 = vunpack.c.h.b16 %v4584
        %v5568 = vunpack.c.l.b16 %v4585
        %v5569 = vunpack.c.h.b16 %v4585
        %v5570 = vunpack.c.l.b16 %v4586
        %v5571 = vunpack.c.h.b16 %v4586
        %v5572 = vunpack.c.l.b16 %v4587
        %v5573 = vunpack.c.h.b16 %v4587
        %v5574 = vunpack.c.l.b16 %v4588
        %v5575 = vunpack.c.h.b16 %v4588
        %v5576 = vunpack.c.l.b16 %v4589
        %v5577 = vunpack.c.h.b16 %v4589
        %v5578 = vunpack.c.l.b16 %v4590
        %v5579 = vunpack.c.h.b16 %v4590
        %v5580 = vunpack.c.l.b16 %v4591
        %v5581 = vunpack.c.h.b16 %v4591
        %v5582 = vunpack.c.l.b16 %v4592
        %v5583 = vunpack.c.h.b16 %v4592
        %v5584 = vunpack.c.l.b16 %v4593
        %v5585 = vunpack.c.h.b16 %v4593
        %v5586 = vunpack.c.l.b16 %v4594
        %v5587 = vunpack.c.h.b16 %v4594
        %v5588 = vunpack.c.l.b16 %v4595
        %v5589 = vunpack.c.h.b16 %v4595
        %v5590 = vunpack.c.l.b16 %v4596
        %v5591 = vunpack.c.h.b16 %v4596
        %v5592 = vunpack.c.l.b16 %v4597
        %v5593 = vunpack.c.h.b16 %v4597
        %v5594 = vunpack.c.l.b16 %v4598
        %v5595 = vunpack.c.h.b16 %v4598
        %v5596 = vunpack.c.l.b16 %v4599
        %v5597 = vunpack.c.h.b16 %v4599
        %v5598 = vunpack.c.l.b16 %v4600
        %v5599 = vunpack.c.h.b16 %v4600
        %v5600 = vunpack.c.l.b16 %v4601
        %v5601 = vunpack.c.h.b16 %v4601
        %v5602 = vunpack.c.l.b16 %v4602
        %v5603 = vunpack.c.h.b16 %v4602
        %v5604 = vunpack.c.l.b16 %v4603
        %v5605 = vunpack.c.h.b16 %v4603
        %v5606 = vunpack.c.l.b16 %v4604
        %v5607 = vunpack.c.h.b16 %v4604
        %v5608 = vunpack.c.l.b16 %v4605
        %v5609 = vunpack.c.h.b16 %v4605
        %v5610 = vunpack.c.l.b16 %v4606
        %v5611 = vunpack.c.h.b16 %v4606
        %v5612 = vunpack.c.l.b16 %v4607
        %v5613 = vunpack.c.h.b16 %v4607
        %v5614 = vunpack.c.l.b16 %v4608
        %v5615 = vunpack.c.h.b16 %v4608
        %v5616 = vunpack.c.l.b16 %v4609
        %v5617 = vunpack.c.h.b16 %v4609
        %v5618 = vunpack.c.l.b16 %v4610
        %v5619 = vunpack.c.h.b16 %v4610
        %v5620 = vunpack.c.l.b16 %v4611
        %v5621 = vunpack.c.h.b16 %v4611
        %v5622 = vunpack.c.l.b16 %v4612
        %v5623 = vunpack.c.h.b16 %v4612
        %v5624 = vunpack.c.l.b16 %v4613
        %v5625 = vunpack.c.h.b16 %v4613
        %v5626 = vunpack.c.l.b16 %v4614
        %v5627 = vunpack.c.h.b16 %v4614
        %v5628 = vunpack.c.l.b16 %v4615
        %v5629 = vunpack.c.h.b16 %v4615
        %v5630 = vunpack.c.l.b16 %v4616
        %v5631 = vunpack.c.h.b16 %v4616
        %v5632 = vunpack.c.l.b16 %v4617
        %v5633 = vunpack.c.h.b16 %v4617
        %v5634 = vunpack.c.l.b16 %v4618
        %v5635 = vunpack.c.h.b16 %v4618
        %v5636 = vunpack.c.l.b16 %v4619
        %v5637 = vunpack.c.h.b16 %v4619
        %v5638 = vunpack.c.l.b16 %v4620
        %v5639 = vunpack.c.h.b16 %v4620
        %v5640 = vunpack.c.l.b16 %v4621
        %v5641 = vunpack.c.h.b16 %v4621
        %v5642 = vunpack.c.l.b16 %v4622
        %v5643 = vunpack.c.h.b16 %v4622
        %v5644 = vunpack.c.l.b16 %v4623
        %v5645 = vunpack.c.h.b16 %v4623
        %v5646 = vunpack.c.l.b16 %v4624
        %v5647 = vunpack.c.h.b16 %v4624
        %v5648 = vunpack.c.l.b16 %v4625
        %v5649 = vunpack.c.h.b16 %v4625
        %v5650 = vunpack.c.l.b16 %v4626
        %v5651 = vunpack.c.h.b16 %v4626
        %v5652 = vunpack.c.l.b16 %v4627
        %v5653 = vunpack.c.h.b16 %v4627
        %v5654 = vunpack.c.l.b16 %v4628
        %v5655 = vunpack.c.h.b16 %v4628
        %v5656 = vunpack.c.l.b16 %v4629
        %v5657 = vunpack.c.h.b16 %v4629
        %v5658 = vunpack.c.l.b16 %v4630
        %v5659 = vunpack.c.h.b16 %v4630
        %v5660 = vunpack.c.l.b16 %v4631
        %v5661 = vunpack.c.h.b16 %v4631
        %v5662 = vunpack.c.l.b16 %v4632
        %v5663 = vunpack.c.h.b16 %v4632
        %v5664 = vunpack.c.l.b16 %v4633
        %v5665 = vunpack.c.h.b16 %v4633
        %v5666 = vunpack.c.l.b16 %v4634
        %v5667 = vunpack.c.h.b16 %v4634
        %v5668 = vunpack.c.l.b16 %v4635
        %v5669 = vunpack.c.h.b16 %v4635
        %v5670 = vunpack.c.l.b16 %v4636
        %v5671 = vunpack.c.h.b16 %v4636
        %v5672 = vunpack.c.l.b16 %v4637
        %v5673 = vunpack.c.h.b16 %v4637
        %v5674 = vunpack.c.l.b16 %v4638
        %v5675 = vunpack.c.h.b16 %v4638
        %v5676 = vunpack.c.l.b16 %v4639
        %v5677 = vunpack.c.h.b16 %v4639
        %v5678 = vunpack.c.l.b16 %v4640
        %v5679 = vunpack.c.h.b16 %v4640
        %v5680 = vunpack.c.l.b16 %v4641
        %v5681 = vunpack.c.h.b16 %v4641
        %v5682 = vunpack.c.l.b16 %v4642
        %v5683 = vunpack.c.h.b16 %v4642
        %v5684 = vunpack.c.l.b16 %v4643
        %v5685 = vunpack.c.h.b16 %v4643
        %v5686 = vunpack.c.l.b16 %v4644
        %v5687 = vunpack.c.h.b16 %v4644
        %v5688 = vunpack.c.l.b16 %v4645
        %v5689 = vunpack.c.h.b16 %v4645
        %v5690 = vunpack.c.l.b16 %v4646
        %v5691 = vunpack.c.h.b16 %v4646
        %v5692 = vunpack.c.l.b16 %v4647
        %v5693 = vunpack.c.h.b16 %v4647
        %v5694 = vunpack.c.l.b16 %v4648
        %v5695 = vunpack.c.h.b16 %v4648
        %v5696 = vunpack.c.l.b16 %v4649
        %v5697 = vunpack.c.h.b16 %v4649
        %v5698 = vunpack.c.l.b16 %v4650
        %v5699 = vunpack.c.h.b16 %v4650
        %v5700 = vunpack.c.l.b16 %v4651
        %v5701 = vunpack.c.h.b16 %v4651
        %v5702 = vunpack.c.l.b16 %v4652
        %v5703 = vunpack.c.h.b16 %v4652
        %v5704 = vunpack.c.l.b16 %v4653
        %v5705 = vunpack.c.h.b16 %v4653
        %v5706 = vunpack.c.l.b16 %v4654
        %v5707 = vunpack.c.h.b16 %v4654
        %v5708 = vunpack.c.l.b16 %v4655
        %v5709 = vunpack.c.h.b16 %v4655
        %v5710 = vunpack.c.l.b16 %v4656
        %v5711 = vunpack.c.h.b16 %v4656
        %v5712 = vunpack.c.l.b16 %v4657
        %v5713 = vunpack.c.h.b16 %v4657
        %v5714 = vunpack.c.l.b16 %v4658
        %v5715 = vunpack.c.h.b16 %v4658
        %v5716 = vunpack.c.l.b16 %v4659
        %v5717 = vunpack.c.h.b16 %v4659
        %v5718 = vunpack.c.l.b16 %v4660
        %v5719 = vunpack.c.h.b16 %v4660
        %v5720 = vunpack.c.l.b16 %v4661
        %v5721 = vunpack.c.h.b16 %v4661
        %v5722 = vunpack.c.l.b16 %v4662
        %v5723 = vunpack.c.h.b16 %v4662
        %v5724 = vunpack.c.l.b16 %v4663
        %v5725 = vunpack.c.h.b16 %v4663
        %v5726 = vunpack.c.l.b16 %v4664
        %v5727 = vunpack.c.h.b16 %v4664
        %v5728 = vunpack.c.l.b16 %v4665
        %v5729 = vunpack.c.h.b16 %v4665
        %v5730 = vunpack.c.l.b16 %v4666
        %v5731 = vunpack.c.h.b16 %v4666
        %v5732 = vunpack.c.l.b16 %v4667
        %v5733 = vunpack.c.h.b16 %v4667
        %v5734 = vunpack.c.l.b16 %v4668
        %v5735 = vunpack.c.h.b16 %v4668
        %v5736 = vunpack.c.l.b16 %v4669
        %v5737 = vunpack.c.h.b16 %v4669
        %v5738 = vunpack.c.l.b16 %v4670
        %v5739 = vunpack.c.h.b16 %v4670
        %v5740 = vunpack.c.l.b16 %v4671
        %v5741 = vunpack.c.h.b16 %v4671
        %v5742 = vunpack.c.l.b16 %v4672
        %v5743 = vunpack.c.h.b16 %v4672
        %v5744 = vunpack.c.l.b16 %v4673
        %v5745 = vunpack.c.h.b16 %v4673
        %v5746 = vunpack.c.l.b16 %v4674
        %v5747 = vunpack.c.h.b16 %v4674
        %v5748 = vunpack.c.l.b16 %v4675
        %v5749 = vunpack.c.h.b16 %v4675
        %v5750 = vunpack.c.l.b16 %v4676
        %v5751 = vunpack.c.h.b16 %v4676
        %v5752 = vunpack.c.l.b16 %v4677
        %v5753 = vunpack.c.h.b16 %v4677
        %v5754 = vunpack.c.l.b16 %v4678
        %v5755 = vunpack.c.h.b16 %v4678
        %v5756 = vunpack.c.l.b16 %v4679
        %v5757 = vunpack.c.h.b16 %v4679
        %v5758 = vunpack.c.l.b16 %v4680
        %v5759 = vunpack.c.h.b16 %v4680
        %v5760 = vunpack.c.l.b16 %v4681
        %v5761 = vunpack.c.h.b16 %v4681
        %v5762 = vunpack.c.l.b16 %v4682
        %v5763 = vunpack.c.h.b16 %v4682
        %v5764 = vunpack.c.l.b16 %v4683
        %v5765 = vunpack.c.h.b16 %v4683
        %v5766 = vunpack.c.l.b16 %v4684
        %v5767 = vunpack.c.h.b16 %v4684
        %v5768 = vunpack.c.l.b16 %v4685
        %v5769 = vunpack.c.h.b16 %v4685
        %v5770 = vunpack.c.l.b16 %v4686
        %v5771 = vunpack.c.h.b16 %v4686
        %v5772 = vunpack.c.l.b16 %v4687
        %v5773 = vunpack.c.h.b16 %v4687
        %v5774 = vunpack.c.l.b16 %v4688
        %v5775 = vunpack.c.h.b16 %v4688
        %v5776 = vunpack.c.l.b16 %v4689
        %v5777 = vunpack.c.h.b16 %v4689
        %v5778 = vunpack.c.l.b16 %v4690
        %v5779 = vunpack.c.h.b16 %v4690
        %v5780 = vunpack.c.l.b16 %v4691
        %v5781 = vunpack.c.h.b16 %v4691
        %v5782 = vunpack.c.l.b16 %v4692
        %v5783 = vunpack.c.h.b16 %v4692
        %v5784 = vunpack.c.l.b16 %v4693
        %v5785 = vunpack.c.h.b16 %v4693
        %v5786 = vunpack.c.l.b16 %v4694
        %v5787 = vunpack.c.h.b16 %v4694
        %v5788 = vunpack.c.l.b16 %v4695
        %v5789 = vunpack.c.h.b16 %v4695
        %v5790 = vunpack.c.l.b16 %v4696
        %v5791 = vunpack.c.h.b16 %v4696
        %v5792 = vunpack.c.l.b16 %v4697
        %v5793 = vunpack.c.h.b16 %v4697
        %v5794 = vunpack.c.l.b16 %v4698
        %v5795 = vunpack.c.h.b16 %v4698
        %v5796 = vunpack.c.l.b16 %v4699
        %v5797 = vunpack.c.h.b16 %v4699
        %v5798 = vunpack.c.l.b16 %v4700
        %v5799 = vunpack.c.h.b16 %v4700
        %v5800 = vunpack.c.l.b16 %v4701
        %v5801 = vunpack.c.h.b16 %v4701
        %v5802 = vunpack.c.l.b16 %v4702
        %v5803 = vunpack.c.h.b16 %v4702
        %v5804 = vunpack.c.l.b16 %v4703
        %v5805 = vunpack.c.h.b16 %v4703
        %v5806 = vunpack.c.l.b16 %v4704
        %v5807 = vunpack.c.h.b16 %v4704
        %v5808 = vunpack.c.l.b16 %v4705
        %v5809 = vunpack.c.h.b16 %v4705
        %v5810 = vunpack.c.l.b16 %v4706
        %v5811 = vunpack.c.h.b16 %v4706
        %v5812 = vunpack.c.l.b16 %v4707
        %v5813 = vunpack.c.h.b16 %v4707
        %v5814 = vunpack.c.l.b16 %v4708
        %v5815 = vunpack.c.h.b16 %v4708
        %v5816 = vunpack.c.l.b16 %v4709
        %v5817 = vunpack.c.h.b16 %v4709
        %v5818 = vunpack.c.l.b16 %v4710
        %v5819 = vunpack.c.h.b16 %v4710
        %v5820 = vunpack.c.l.b16 %v4711
        %v5821 = vunpack.c.h.b16 %v4711
        %v5822 = vunpack.c.l.b16 %v4712
        %v5823 = vunpack.c.h.b16 %v4712
        %v5824 = vunpack.c.l.b16 %v4713
        %v5825 = vunpack.c.h.b16 %v4713
        %v5826 = vunpack.c.l.b16 %v4714
        %v5827 = vunpack.c.h.b16 %v4714
        %v5828 = vunpack.c.l.b16 %v4715
        %v5829 = vunpack.c.h.b16 %v4715
        %v5830 = vunpack.c.l.b16 %v4716
        %v5831 = vunpack.c.h.b16 %v4716
        %v5832 = vunpack.c.l.b16 %v4717
        %v5833 = vunpack.c.h.b16 %v4717
        %v5834 = vunpack.c.l.b16 %v4718
        %v5835 = vunpack.c.h.b16 %v4718
        %v5836 = vunpack.c.l.b16 %v4719
        %v5837 = vunpack.c.h.b16 %v4719
        %v5838 = vunpack.c.l.b16 %v4720
        %v5839 = vunpack.c.h.b16 %v4720
        %v5840 = vunpack.c.l.b16 %v4721
        %v5841 = vunpack.c.h.b16 %v4721
        %v5842 = vunpack.c.l.b16 %v4722
        %v5843 = vunpack.c.h.b16 %v4722
        %v5844 = vunpack.c.l.b16 %v4723
        %v5845 = vunpack.c.h.b16 %v4723
        %v5846 = vunpack.c.l.b16 %v4724
        %v5847 = vunpack.c.h.b16 %v4724
        %v5848 = vunpack.c.l.b16 %v4725
        %v5849 = vunpack.c.h.b16 %v4725
        %v5850 = vunpack.c.l.b16 %v4726
        %v5851 = vunpack.c.h.b16 %v4726
        %v5852 = vunpack.c.l.b16 %v4727
        %v5853 = vunpack.c.h.b16 %v4727
        %v5854 = vunpack.c.l.b16 %v4728
        %v5855 = vunpack.c.h.b16 %v4728
        %v5856 = vunpack.c.l.b16 %v4729
        %v5857 = vunpack.c.h.b16 %v4729
        %v5858 = vunpack.c.l.b16 %v4730
        %v5859 = vunpack.c.h.b16 %v4730
        %v5860 = vunpack.c.l.b16 %v4731
        %v5861 = vunpack.c.h.b16 %v4731
        %v5862 = vunpack.c.l.b16 %v4732
        %v5863 = vunpack.c.h.b16 %v4732
        %v5864 = vunpack.c.l.b16 %v4733
        %v5865 = vunpack.c.h.b16 %v4733
        %v5866 = vunpack.c.l.b16 %v4734
        %v5867 = vunpack.c.h.b16 %v4734
        %v5868 = vunpack.c.l.b16 %v4735
        %v5869 = vunpack.c.h.b16 %v4735
        %v5870 = vunpack.c.l.b16 %v4736
        %v5871 = vunpack.c.h.b16 %v4736
        %v5872 = vunpack.c.l.b16 %v4737
        %v5873 = vunpack.c.h.b16 %v4737
        %v5874 = vunpack.c.l.b16 %v4738
        %v5875 = vunpack.c.h.b16 %v4738
        %v5876 = vunpack.c.l.b16 %v4739
        %v5877 = vunpack.c.h.b16 %v4739
        %v5878 = vunpack.c.l.b16 %v4740
        %v5879 = vunpack.c.h.b16 %v4740
        %v5880 = vunpack.c.l.b16 %v4741
        %v5881 = vunpack.c.h.b16 %v4741
        %v5882 = vunpack.c.l.b16 %v4742
        %v5883 = vunpack.c.h.b16 %v4742
        %v5884 = vunpack.c.l.b16 %v4743
        %v5885 = vunpack.c.h.b16 %v4743
        %v5886 = vunpack.c.l.b16 %v4744
        %v5887 = vunpack.c.h.b16 %v4744
        %v5888 = vunpack.c.l.b16 %v4745
        %v5889 = vunpack.c.h.b16 %v4745
        %v5890 = vunpack.c.l.b16 %v4746
        %v5891 = vunpack.c.h.b16 %v4746
        %v5892 = vunpack.c.l.b16 %v4747
        %v5893 = vunpack.c.h.b16 %v4747
        %v5894 = vunpack.c.l.b16 %v4748
        %v5895 = vunpack.c.h.b16 %v4748
        %v5896 = vunpack.c.l.b16 %v4749
        %v5897 = vunpack.c.h.b16 %v4749
        %v5898 = vunpack.c.l.b16 %v4750
        %v5899 = vunpack.c.h.b16 %v4750
        %v5900 = vunpack.c.l.b16 %v4751
        %v5901 = vunpack.c.h.b16 %v4751
        %v5902 = vunpack.c.l.b16 %v4752
        %v5903 = vunpack.c.h.b16 %v4752
        %v5904 = vunpack.c.l.b16 %v4753
        %v5905 = vunpack.c.h.b16 %v4753
        %v5906 = vunpack.c.l.b16 %v4754
        %v5907 = vunpack.c.h.b16 %v4754
        %v5908 = vunpack.c.l.b16 %v4755
        %v5909 = vunpack.c.h.b16 %v4755
        %v5910 = vunpack.c.l.b16 %v4756
        %v5911 = vunpack.c.h.b16 %v4756
        %v5912 = vunpack.c.l.b16 %v4757
        %v5913 = vunpack.c.h.b16 %v4757
        %v5914 = vunpack.c.l.b16 %v4758
        %v5915 = vunpack.c.h.b16 %v4758
        %v5916 = vunpack.c.l.b16 %v4759
        %v5917 = vunpack.c.h.b16 %v4759
        %v5918 = vunpack.c.l.b16 %v4760
        %v5919 = vunpack.c.h.b16 %v4760
        %v5920 = vunpack.c.l.b16 %v4761
        %v5921 = vunpack.c.h.b16 %v4761
        %v5922 = vunpack.c.l.b16 %v4762
        %v5923 = vunpack.c.h.b16 %v4762
        %v5924 = vunpack.c.l.b16 %v4763
        %v5925 = vunpack.c.h.b16 %v4763
        %v5926 = vunpack.c.l.b16 %v4764
        %v5927 = vunpack.c.h.b16 %v4764
        %v5928 = vunpack.c.l.b16 %v4765
        %v5929 = vunpack.c.h.b16 %v4765
        %v5930 = vunpack.c.l.b16 %v4766
        %v5931 = vunpack.c.h.b16 %v4766
        %v5932 = vunpack.c.l.b16 %v4767
        %v5933 = vunpack.c.h.b16 %v4767
        %v5934 = vunpack.c.l.b16 %v4768
        %v5935 = vunpack.c.h.b16 %v4768
        %v5936 = vunpack.c.l.b16 %v4769
        %v5937 = vunpack.c.h.b16 %v4769
        %v5938 = vunpack.c.l.b16 %v4770
        %v5939 = vunpack.c.h.b16 %v4770
        %v5940 = vunpack.c.l.b16 %v4771
        %v5941 = vunpack.c.h.b16 %v4771
        %v5942 = vunpack.c.l.b16 %v4772
        %v5943 = vunpack.c.h.b16 %v4772
        %v5944 = vunpack.c.l.b16 %v4773
        %v5945 = vunpack.c.h.b16 %v4773
        %v5946 = vunpack.c.l.b16 %v4774
        %v5947 = vunpack.c.h.b16 %v4774
        %v5948 = vunpack.c.l.b16 %v4775
        %v5949 = vunpack.c.h.b16 %v4775
        %v5950 = vunpack.c.l.b16 %v4776
        %v5951 = vunpack.c.h.b16 %v4776
        %v5952 = vunpack.c.l.b16 %v4777
        %v5953 = vunpack.c.h.b16 %v4777
        %v5954 = vunpack.c.l.b16 %v4778
        %v5955 = vunpack.c.h.b16 %v4778
        %v5956 = vunpack.c.l.b16 %v4779
        %v5957 = vunpack.c.h.b16 %v4779
        %v5958 = vunpack.c.l.b16 %v4780
        %v5959 = vunpack.c.h.b16 %v4780
        %v5960 = vunpack.c.l.b16 %v4781
        %v5961 = vunpack.c.h.b16 %v4781
        %v5962 = vunpack.c.l.b16 %v4782
        %v5963 = vunpack.c.h.b16 %v4782
        %v5964 = vunpack.c.l.b16 %v4783
        %v5965 = vunpack.c.h.b16 %v4783
        %v5966 = vunpack.c.l.b16 %v4784
        %v5967 = vunpack.c.h.b16 %v4784
        %v5968 = vunpack.c.l.b16 %v4785
        %v5969 = vunpack.c.h.b16 %v4785
        %v5970 = vunpack.c.l.b16 %v4786
        %v5971 = vunpack.c.h.b16 %v4786
        %v5972 = vunpack.c.l.b16 %v4787
        %v5973 = vunpack.c.h.b16 %v4787
        %v5974 = vunpack.c.l.b16 %v4788
        %v5975 = vunpack.c.h.b16 %v4788
        %v5976 = vunpack.c.l.b16 %v4789
        %v5977 = vunpack.c.h.b16 %v4789
        %v5978 = vunpack.c.l.b16 %v4790
        %v5979 = vunpack.c.h.b16 %v4790
        %v5980 = vunpack.c.l.b16 %v4791
        %v5981 = vunpack.c.h.b16 %v4791
        %v5982 = vunpack.c.l.b16 %v4792
        %v5983 = vunpack.c.h.b16 %v4792
        %v5984 = vunpack.c.l.b16 %v4793
        %v5985 = vunpack.c.h.b16 %v4793
        %v5986 = vunpack.c.l.b16 %v4794
        %v5987 = vunpack.c.h.b16 %v4794
        %v5988 = vunpack.c.l.b16 %v4795
        %v5989 = vunpack.c.h.b16 %v4795
        %v5990 = vunpack.c.l.b16 %v4796
        %v5991 = vunpack.c.h.b16 %v4796
        %v5992 = vunpack.c.l.b16 %v4797
        %v5993 = vunpack.c.h.b16 %v4797
        %v5994 = vunpack.c.l.b16 %v4798
        %v5995 = vunpack.c.h.b16 %v4798
        %v5996 = vunpack.c.l.b16 %v4799
        %v5997 = vunpack.c.h.b16 %v4799
        %v5998 = vunpack.c.l.b16 %v4800
        %v5999 = vunpack.c.h.b16 %v4800
        %v6000 = vunpack.c.l.b16 %v4801
        %v6001 = vunpack.c.h.b16 %v4801
        %v6002 = vunpack.c.l.b16 %v4802
        %v6003 = vunpack.c.h.b16 %v4802
        %v6004 = vunpack.c.l.b16 %v4803
        %v6005 = vunpack.c.h.b16 %v4803
        %v6006 = vunpack.c.l.b16 %v4804
        %v6007 = vunpack.c.h.b16 %v4804
        %v6008 = vunpack.c.l.b16 %v4805
        %v6009 = vunpack.c.h.b16 %v4805
        %v6010 = vunpack.c.l.b16 %v4806
        %v6011 = vunpack.c.h.b16 %v4806
        %v6012 = vunpack.c.l.b16 %v4807
        %v6013 = vunpack.c.h.b16 %v4807
        %v6014 = vunpack.c.l.b16 %v4808
        %v6015 = vunpack.c.h.b16 %v4808
        %v6016 = vunpack.c.l.b16 %v4809
        %v6017 = vunpack.c.h.b16 %v4809
        %v6018 = vunpack.c.l.b16 %v4810
        %v6019 = vunpack.c.h.b16 %v4810
        %v6020 = vunpack.c.l.b16 %v4811
        %v6021 = vunpack.c.h.b16 %v4811
        %v6022 = vunpack.c.l.b16 %v4812
        %v6023 = vunpack.c.h.b16 %v4812
        %v6024 = vunpack.c.l.b16 %v4813
        %v6025 = vunpack.c.h.b16 %v4813
        %v6026 = vunpack.c.l.b16 %v4814
        %v6027 = vunpack.c.h.b16 %v4814
        %v6028 = vunpack.c.l.b16 %v4815
        %v6029 = vunpack.c.h.b16 %v4815
        %v6030 = vunpack.c.l.b16 %v4816
        %v6031 = vunpack.c.h.b16 %v4816
        %v6032 = vunpack.c.l.b16 %v4817
        %v6033 = vunpack.c.h.b16 %v4817
        %v6034 = vunpack.c.l.b16 %v4818
        %v6035 = vunpack.c.h.b16 %v4818
        %v6036 = vunpack.c.l.b16 %v4819
        %v6037 = vunpack.c.h.b16 %v4819
        %v6038 = vunpack.c.l.b16 %v4820
        %v6039 = vunpack.c.h.b16 %v4820
        %v6040 = vunpack.c.l.b16 %v4821
        %v6041 = vunpack.c.h.b16 %v4821
        %v6042 = vunpack.c.l.b16 %v4822
        %v6043 = vunpack.c.h.b16 %v4822
        %v6044 = vunpack.c.l.b16 %v4823
        %v6045 = vunpack.c.h.b16 %v4823
        %v6046 = vunpack.c.l.b16 %v4824
        %v6047 = vunpack.c.h.b16 %v4824
        %v6048 = vunpack.c.l.b16 %v4825
        %v6049 = vunpack.c.h.b16 %v4825
        %v6050 = vunpack.c.l.b16 %v4826
        %v6051 = vunpack.c.h.b16 %v4826
        %v6052 = vunpack.c.l.b16 %v4827
        %v6053 = vunpack.c.h.b16 %v4827
        %v6054 = vunpack.c.l.b16 %v4828
        %v6055 = vunpack.c.h.b16 %v4828
        %v6056 = vunpack.c.l.b16 %v4829
        %v6057 = vunpack.c.h.b16 %v4829
        %v6058 = vunpack.c.l.b16 %v4830
        %v6059 = vunpack.c.h.b16 %v4830
        %v6060 = vunpack.c.l.b16 %v4831
        %v6061 = vunpack.c.h.b16 %v4831
        %v6062 = vunpack.c.l.b16 %v4832
        %v6063 = vunpack.c.h.b16 %v4832
        %v6064 = vunpack.c.l.b16 %v4833
        %v6065 = vunpack.c.h.b16 %v4833
        %v6066 = vunpack.c.l.b16 %v4834
        %v6067 = vunpack.c.h.b16 %v4834
        %v6068 = vunpack.c.l.b16 %v4835
        %v6069 = vunpack.c.h.b16 %v4835
        %v6070 = vunpack.c.l.b16 %v4836
        %v6071 = vunpack.c.h.b16 %v4836
        %v6072 = vunpack.c.l.b16 %v4837
        %v6073 = vunpack.c.h.b16 %v4837
        %v6074 = vunpack.c.l.b16 %v4838
        %v6075 = vunpack.c.h.b16 %v4838
        %v6076 = vunpack.c.l.b16 %v4839
        %v6077 = vunpack.c.h.b16 %v4839
        %v6078 = vunpack.c.l.b16 %v4840
        %v6079 = vunpack.c.h.b16 %v4840
        %v6080 = vunpack.c.l.b16 %v4841
        %v6081 = vunpack.c.h.b16 %v4841
        %v6082 = vunpack.c.l.b16 %v4842
        %v6083 = vunpack.c.h.b16 %v4842
        %v6084 = vunpack.c.l.b16 %v4843
        %v6085 = vunpack.c.h.b16 %v4843
        %v6086 = vunpack.c.l.b16 %v4844
        %v6087 = vunpack.c.h.b16 %v4844
        %v6088 = vunpack.c.l.b16 %v4845
        %v6089 = vunpack.c.h.b16 %v4845
        %v6090 = vunpack.c.l.b16 %v4846
        %v6091 = vunpack.c.h.b16 %v4846
        %v6092 = vunpack.c.l.b16 %v4847
        %v6093 = vunpack.c.h.b16 %v4847
        %v6094 = vunpack.c.l.b16 %v4848
        %v6095 = vunpack.c.h.b16 %v4848
        %v6096 = vunpack.c.l.b16 %v4849
        %v6097 = vunpack.c.h.b16 %v4849
        %v6098 = vunpack.c.l.b16 %v4850
        %v6099 = vunpack.c.h.b16 %v4850
        %v6100 = vunpack.c.l.b16 %v4851
        %v6101 = vunpack.c.h.b16 %v4851
        %v6102 = vunpack.c.l.b16 %v4852
        %v6103 = vunpack.c.h.b16 %v4852
        %v6104 = vunpack.c.l.b16 %v4853
        %v6105 = vunpack.c.h.b16 %v4853
        %v6106 = vunpack.c.l.b16 %v4854
        %v6107 = vunpack.c.h.b16 %v4854
        %v6108 = vunpack.c.l.b16 %v4855
        %v6109 = vunpack.c.h.b16 %v4855
        %v6110 = vunpack.c.l.b16 %v4856
        %v6111 = vunpack.c.h.b16 %v4856
        %v6112 = vunpack.c.l.b16 %v4857
        %v6113 = vunpack.c.h.b16 %v4857
        %v6114 = vunpack.c.l.b16 %v4858
        %v6115 = vunpack.c.h.b16 %v4858
        %v6116 = vunpack.c.l.b16 %v4859
        %v6117 = vunpack.c.h.b16 %v4859
        %v6118 = vunpack.c.l.b16 %v4860
        %v6119 = vunpack.c.h.b16 %v4860
        %v6120 = vunpack.c.l.b16 %v4861
        %v6121 = vunpack.c.h.b16 %v4861
        %v6122 = vunpack.c.l.b16 %v4862
        %v6123 = vunpack.c.h.b16 %v4862
        %v6124 = vunpack.c.l.b16 %v4863
        %v6125 = vunpack.c.h.b16 %v4863
        %v6126 = vunpack.c.l.b16 %v4864
        %v6127 = vunpack.c.h.b16 %v4864
        %v6128 = vunpack.c.l.b16 %v4865
        %v6129 = vunpack.c.h.b16 %v4865
        %v6130 = vunpack.c.l.b16 %v4866
        %v6131 = vunpack.c.h.b16 %v4866
        %v6132 = vunpack.c.l.b16 %v4867
        %v6133 = vunpack.c.h.b16 %v4867
        %v6134 = vunpack.c.l.b16 %v4868
        %v6135 = vunpack.c.h.b16 %v4868
        %v6136 = vunpack.c.l.b16 %v4869
        %v6137 = vunpack.c.h.b16 %v4869
        %v6138 = vunpack.c.l.b16 %v4870
        %v6139 = vunpack.c.h.b16 %v4870
        %v6140 = vunpack.c.l.b16 %v4871
        %v6141 = vunpack.c.h.b16 %v4871
        %v6142 = vunpack.c.l.b16 %v4872
        %v6143 = vunpack.c.h.b16 %v4872
        %v6144 = vunpack.c.l.b16 %v4873
        %v6145 = vunpack.c.h.b16 %v4873
        %v6146 = vunpack.c.l.b16 %v4874
        %v6147 = vunpack.c.h.b16 %v4874
        %v6148 = vunpack.c.l.b16 %v4875
        %v6149 = vunpack.c.h.b16 %v4875
        %v6150 = vunpack.c.l.b16 %v4876
        %v6151 = vunpack.c.h.b16 %v4876
        %v6152 = vunpack.c.l.b16 %v4877
        %v6153 = vunpack.c.h.b16 %v4877
        %v6154 = vunpack.c.l.b16 %v4878
        %v6155 = vunpack.c.h.b16 %v4878
        %v6156 = vunpack.c.l.b16 %v4879
        %v6157 = vunpack.c.h.b16 %v4879
        %v6158 = vunpack.c.l.b16 %v4880
        %v6159 = vunpack.c.h.b16 %v4880
        %v6160 = vunpack.c.l.b16 %v4881
        %v6161 = vunpack.c.h.b16 %v4881
        %v6162 = vunpack.c.l.b16 %v4882
        %v6163 = vunpack.c.h.b16 %v4882
        %v6164 = vunpack.c.l.b16 %v4883
        %v6165 = vunpack.c.h.b16 %v4883
        %v6166 = vunpack.c.l.b16 %v4884
        %v6167 = vunpack.c.h.b16 %v4884
        %v6168 = vunpack.c.l.b16 %v4885
        %v6169 = vunpack.c.h.b16 %v4885
        %v6170 = vunpack.c.l.b16 %v4886
        %v6171 = vunpack.c.h.b16 %v4886
        %v6172 = vunpack.c.l.b16 %v4887
        %v6173 = vunpack.c.h.b16 %v4887
        %v6174 = vunpack.c.l.b16 %v4888
        %v6175 = vunpack.c.h.b16 %v4888
        %v6176 = vunpack.c.l.b16 %v4889
        %v6177 = vunpack.c.h.b16 %v4889
        %v6178 = vunpack.c.l.b16 %v4890
        %v6179 = vunpack.c.h.b16 %v4890
        %v6180 = vunpack.c.l.b16 %v4891
        %v6181 = vunpack.c.h.b16 %v4891
        %v6182 = vunpack.c.l.b16 %v4892
        %v6183 = vunpack.c.h.b16 %v4892
        %v6184 = vunpack.c.l.b16 %v4893
        %v6185 = vunpack.c.h.b16 %v4893
        %v6186 = vunpack.c.l.b16 %v4894
        %v6187 = vunpack.c.h.b16 %v4894
        %v6188 = vunpack.c.l.b16 %v4895
        %v6189 = vunpack.c.h.b16 %v4895
        %v6190 = vunpack.c.l.b16 %v4896
        %v6191 = vunpack.c.h.b16 %v4896
        %v6192 = vunpack.c.l.b16 %v4897
        %v6193 = vunpack.c.h.b16 %v4897
        %v6194 = vunpack.c.l.b16 %v4898
        %v6195 = vunpack.c.h.b16 %v4898
        %v6196 = vunpack.c.l.b16 %v4899
        %v6197 = vunpack.c.h.b16 %v4899
        %v6198 = vunpack.c.l.b16 %v4900
        %v6199 = vunpack.c.h.b16 %v4900
        %v6200 = vunpack.c.l.b16 %v4901
        %v6201 = vunpack.c.h.b16 %v4901
        %v6202 = vunpack.c.l.b16 %v4902
        %v6203 = vunpack.c.h.b16 %v4902
        %v6204 = vunpack.c.l.b16 %v4903
        %v6205 = vunpack.c.h.b16 %v4903
        %v6206 = vunpack.c.l.b16 %v4904
        %v6207 = vunpack.c.h.b16 %v4904
        %v6208 = vunpack.c.l.b16 %v4905
        %v6209 = vunpack.c.h.b16 %v4905
        %v6210 = vunpack.c.l.b16 %v4906
        %v6211 = vunpack.c.h.b16 %v4906
        %v6212 = vunpack.c.l.b16 %v4907
        %v6213 = vunpack.c.h.b16 %v4907
        %v6214 = vunpack.c.l.b16 %v4908
        %v6215 = vunpack.c.h.b16 %v4908
        %v6216 = vunpack.c.l.b16 %v4909
        %v6217 = vunpack.c.h.b16 %v4909
        %v6218 = vunpack.c.l.b16 %v4910
        %v6219 = vunpack.c.h.b16 %v4910
        %v6220 = vunpack.c.l.b16 %v4911
        %v6221 = vunpack.c.h.b16 %v4911
        %v6222 = vunpack.c.l.b16 %v4912
        %v6223 = vunpack.c.h.b16 %v4912
        %v6224 = vunpack.c.l.b16 %v4913
        %v6225 = vunpack.c.h.b16 %v4913
        %v6226 = vunpack.c.l.b16 %v4914
        %v6227 = vunpack.c.h.b16 %v4914
        %v6228 = vunpack.c.l.b16 %v4915
        %v6229 = vunpack.c.h.b16 %v4915
        %v6230 = vunpack.c.l.b16 %v4916
        %v6231 = vunpack.c.h.b16 %v4916
        %v6232 = vunpack.c.l.b16 %v4917
        %v6233 = vunpack.c.h.b16 %v4917
        %v6234 = vunpack.c.l.b16 %v4918
        %v6235 = vunpack.c.h.b16 %v4918
        %v6236 = vunpack.c.l.b16 %v4919
        %v6237 = vunpack.c.h.b16 %v4919
        %v6238 = vunpack.c.l.b16 %v4920
        %v6239 = vunpack.c.h.b16 %v4920
        %v6240 = vunpack.c.l.b16 %v4921
        %v6241 = vunpack.c.h.b16 %v4921
        %v6242 = vunpack.c.l.b16 %v4922
        %v6243 = vunpack.c.h.b16 %v4922
        %v6244 = vunpack.c.l.b16 %v4923
        %v6245 = vunpack.c.h.b16 %v4923
        %v6246 = vunpack.c.l.b16 %v4924
        %v6247 = vunpack.c.h.b16 %v4924
        %v6248 = vunpack.c.l.b16 %v4925
        %v6249 = vunpack.c.h.b16 %v4925
        %v6250 = vunpack.c.l.b16 %v4926
        %v6251 = vunpack.c.h.b16 %v4926
        %v6252 = vunpack.c.l.b16 %v4927
        %v6253 = vunpack.c.h.b16 %v4927
        %v6254 = vunpack.c.l.b16 %v4928
        %v6255 = vunpack.c.h.b16 %v4928
        %v6256 = vunpack.c.l.b16 %v4929
        %v6257 = vunpack.c.h.b16 %v4929
        %v6258 = vunpack.c.l.b16 %v4930
        %v6259 = vunpack.c.h.b16 %v4930
        %v6260 = vunpack.c.l.b16 %v4931
        %v6261 = vunpack.c.h.b16 %v4931
        %v6262 = vunpack.c.l.b16 %v4932
        %v6263 = vunpack.c.h.b16 %v4932
        %v6264 = vunpack.c.l.b16 %v4933
        %v6265 = vunpack.c.h.b16 %v4933
        %v6266 = vunpack.c.l.b16 %v4934
        %v6267 = vunpack.c.h.b16 %v4934
        %v6268 = vunpack.c.l.b16 %v4935
        %v6269 = vunpack.c.h.b16 %v4935
        %v6270 = vunpack.c.l.b16 %v4936
        %v6271 = vunpack.c.h.b16 %v4936
        %v6272 = vunpack.c.l.b16 %v4937
        %v6273 = vunpack.c.h.b16 %v4937
        %v6274 = vunpack.c.l.b16 %v4938
        %v6275 = vunpack.c.h.b16 %v4938
        %v6276 = vunpack.c.l.b16 %v4939
        %v6277 = vunpack.c.h.b16 %v4939
        %v6278 = vunpack.c.l.b16 %v4940
        %v6279 = vunpack.c.h.b16 %v4940
        %v6280 = vunpack.c.l.b16 %v4941
        %v6281 = vunpack.c.h.b16 %v4941
        %v6282 = vunpack.c.l.b16 %v4942
        %v6283 = vunpack.c.h.b16 %v4942
        %v6284 = vunpack.c.l.b16 %v4943
        %v6285 = vunpack.c.h.b16 %v4943
        %v6286 = vunpack.c.l.b16 %v4944
        %v6287 = vunpack.c.h.b16 %v4944
        %v6288 = vunpack.c.l.b16 %v4945
        %v6289 = vunpack.c.h.b16 %v4945
        %v6290 = vunpack.c.l.b16 %v4946
        %v6291 = vunpack.c.h.b16 %v4946
        %v6292 = vunpack.c.l.b16 %v4947
        %v6293 = vunpack.c.h.b16 %v4947
        %v6294 = vunpack.c.l.b16 %v4948
        %v6295 = vunpack.c.h.b16 %v4948
        %v6296 = vunpack.c.l.b16 %v4949
        %v6297 = vunpack.c.h.b16 %v4949
        %v6298 = vunpack.c.l.b16 %v4950
        %v6299 = vunpack.c.h.b16 %v4950
        %v6300 = vunpack.c.l.b16 %v4951
        %v6301 = vunpack.c.h.b16 %v4951
        %v6302 = vunpack.c.l.b16 %v4952
        %v6303 = vunpack.c.h.b16 %v4952
        %v6304 = vunpack.c.l.b16 %v4953
        %v6305 = vunpack.c.h.b16 %v4953
        %v6306 = vunpack.c.l.b16 %v4954
        %v6307 = vunpack.c.h.b16 %v4954
        %v6308 = vunpack.c.l.b16 %v4955
        %v6309 = vunpack.c.h.b16 %v4955
        %v6310 = vunpack.c.l.b16 %v4956
        %v6311 = vunpack.c.h.b16 %v4956
        %v6312 = vunpack.c.l.b16 %v4957
        %v6313 = vunpack.c.h.b16 %v4957
        %v6314 = vunpack.c.l.b16 %v4958
        %v6315 = vunpack.c.h.b16 %v4958
        %v6316 = vunpack.c.l.b16 %v4959
        %v6317 = vunpack.c.h.b16 %v4959
        %v6318 = vunpack.c.l.b16 %v4960
        %v6319 = vunpack.c.h.b16 %v4960
        %v6320 = vunpack.c.l.b16 %v4961
        %v6321 = vunpack.c.h.b16 %v4961
        %v6322 = vunpack.c.l.b16 %v4962
        %v6323 = vunpack.c.h.b16 %v4962
        %v6324 = vunpack.c.l.b16 %v4963
        %v6325 = vunpack.c.h.b16 %v4963
        %v6326 = vunpack.c.l.b16 %v4964
        %v6327 = vunpack.c.h.b16 %v4964
        %v6328 = vunpack.c.l.b16 %v4965
        %v6329 = vunpack.c.h.b16 %v4965
        %v6330 = vunpack.c.l.b16 %v4966
        %v6331 = vunpack.c.h.b16 %v4966
        %v6332 = vunpack.c.l.b16 %v4967
        %v6333 = vunpack.c.h.b16 %v4967
        %v6334 = vpack.c.b16 %v5552, %v5550
        %v6335 = vpack.c.b16 %v5553, %v5551
        %v6336 = vpack.c.b16 %v5556, %v5554
        %v6337 = vpack.c.b16 %v5557, %v5555
        %v6338 = vpack.c.b16 %v5560, %v5558
        %v6339 = vpack.c.b16 %v5561, %v5559
        %v6340 = vpack.c.b16 %v5564, %v5562
        %v6341 = vpack.c.b16 %v5565, %v5563
        %v6342 = vpack.c.b16 %v5568, %v5566
        %v6343 = vpack.c.b16 %v5569, %v5567
        %v6344 = vpack.c.b16 %v5572, %v5570
        %v6345 = vpack.c.b16 %v5573, %v5571
        %v6346 = vpack.c.b16 %v5576, %v5574
        %v6347 = vpack.c.b16 %v5577, %v5575
        %v6348 = vpack.c.b16 %v5580, %v5578
        %v6349 = vpack.c.b16 %v5581, %v5579
        %v6350 = vpack.c.b16 %v5584, %v5582
        %v6351 = vpack.c.b16 %v5585, %v5583
        %v6352 = vpack.c.b16 %v5588, %v5586
        %v6353 = vpack.c.b16 %v5589, %v5587
        %v6354 = vpack.c.b16 %v5592, %v5590
        %v6355 = vpack.c.b16 %v5593, %v5591
        %v6356 = vpack.c.b16 %v5596, %v5594
        %v6357 = vpack.c.b16 %v5597, %v5595
        %v6358 = vpack.c.b16 %v5600, %v5598
        %v6359 = vpack.c.b16 %v5601, %v5599
        %v6360 = vpack.c.b16 %v5604, %v5602
        %v6361 = vpack.c.b16 %v5605, %v5603
        %v6362 = vpack.c.b16 %v5608, %v5606
        %v6363 = vpack.c.b16 %v5609, %v5607
        %v6364 = vpack.c.b16 %v5612, %v5610
        %v6365 = vpack.c.b16 %v5613, %v5611
        %v6366 = vpack.c.b16 %v5616, %v5614
        %v6367 = vpack.c.b16 %v5617, %v5615
        %v6368 = vpack.c.b16 %v5620, %v5618
        %v6369 = vpack.c.b16 %v5621, %v5619
        %v6370 = vpack.c.b16 %v5624, %v5622
        %v6371 = vpack.c.b16 %v5625, %v5623
        %v6372 = vpack.c.b16 %v5628, %v5626
        %v6373 = vpack.c.b16 %v5629, %v5627
        %v6374 = vpack.c.b16 %v5632, %v5630
        %v6375 = vpack.c.b16 %v5633, %v5631
        %v6376 = vpack.c.b16 %v5636, %v5634
        %v6377 = vpack.c.b16 %v5637, %v5635
        %v6378 = vpack.c.b16 %v5640, %v5638
        %v6379 = vpack.c.b16 %v5641, %v5639
        %v6380 = vpack.c.b16 %v5644, %v5642
        %v6381 = vpack.c.b16 %v5645, %v5643
        %v6382 = vpack.c.b16 %v5648, %v5646
        %v6383 = vpack.c.b16 %v5649, %v5647
        %v6384 = vpack.c.b16 %v5652, %v5650
        %v6385 = vpack.c.b16 %v5653, %v5651
        %v6386 = vpack.c.b16 %v5656, %v5654
        %v6387 = vpack.c.b16 %v5657, %v5655
        %v6388 = vpack.c.b16 %v5660, %v5658
        %v6389 = vpack.c.b16 %v5661, %v5659
        %v6390 = vpack.c.b16 %v5664, %v5662
        %v6391 = vpack.c.b16 %v5665, %v5663
        %v6392 = vpack.c.b16 %v5668, %v5666
        %v6393 = vpack.c.b16 %v5669, %v5667
        %v6394 = vpack.c.b16 %v5672, %v5670
        %v6395 = vpack.c.b16 %v5673, %v5671
        %v6396 = vpack.c.b16 %v5676, %v5674
        %v6397 = vpack.c.b16 %v5677, %v5675
        %v6398 = vpack.c.b16 %v5680, %v5678
        %v6399 = vpack.c.b16 %v5681, %v5679
        %v6400 = vpack.c.b16 %v5684, %v5682
        %v6401 = vpack.c.b16 %v5685, %v5683
        %v6402 = vpack.c.b16 %v5688, %v5686
        %v6403 = vpack.c.b16 %v5689, %v5687
        %v6404 = vpack.c.b16 %v5692, %v5690
        %v6405 = vpack.c.b16 %v5693, %v5691
        %v6406 = vpack.c.b16 %v5696, %v5694
        %v6407 = vpack.c.b16 %v5697, %v5695
        %v6408 = vpack.c.b16 %v5700, %v5698
        %v6409 = vpack.c.b16 %v5701, %v5699
        %v6410 = vpack.c.b16 %v5704, %v5702
        %v6411 = vpack.c.b16 %v5705, %v5703
        %v6412 = vpack.c.b16 %v5708, %v5706
        %v6413 = vpack.c.b16 %v5709, %v5707
        %v6414 = vpack.c.b16 %v5712, %v5710
        %v6415 = vpack.c.b16 %v5713, %v5711
        %v6416 = vpack.c.b16 %v5716, %v5714
        %v6417 = vpack.c.b16 %v5717, %v5715
        %v6418 = vpack.c.b16 %v5720, %v5718
        %v6419 = vpack.c.b16 %v5721, %v5719
        %v6420 = vpack.c.b16 %v5724, %v5722
        %v6421 = vpack.c.b16 %v5725, %v5723
        %v6422 = vpack.c.b16 %v5728, %v5726
        %v6423 = vpack.c.b16 %v5729, %v5727
        %v6424 = vpack.c.b16 %v5732, %v5730
        %v6425 = vpack.c.b16 %v5733, %v5731
        %v6426 = vpack.c.b16 %v5736, %v5734
        %v6427 = vpack.c.b16 %v5737, %v5735
        %v6428 = vpack.c.b16 %v5740, %v5738
        %v6429 = vpack.c.b16 %v5741, %v5739
        %v6430 = vpack.c.b16 %v5744, %v5742
        %v6431 = vpack.c.b16 %v5745, %v5743
        %v6432 = vpack.c.b16 %v5748, %v5746
        %v6433 = vpack.c.b16 %v5749, %v5747
        %v6434 = vpack.c.b16 %v5752, %v5750
        %v6435 = vpack.c.b16 %v5753, %v5751
        %v6436 = vpack.c.b16 %v5756, %v5754
        %v6437 = vpack.c.b16 %v5757, %v5755
        %v6438 = vpack.c.b16 %v5760, %v5758
        %v6439 = vpack.c.b16 %v5761, %v5759
        %v6440 = vpack.c.b16 %v5764, %v5762
        %v6441 = vpack.c.b16 %v5765, %v5763
        %v6442 = vpack.c.b16 %v5768, %v5766
        %v6443 = vpack.c.b16 %v5769, %v5767
        %v6444 = vpack.c.b16 %v5772, %v5770
        %v6445 = vpack.c.b16 %v5773, %v5771
        %v6446 = vpack.c.b16 %v5776, %v5774
        %v6447 = vpack.c.b16 %v5777, %v5775
        %v6448 = vpack.c.b16 %v5780, %v5778
        %v6449 = vpack.c.b16 %v5781, %v5779
        %v6450 = vpack.c.b16 %v5784, %v5782
        %v6451 = vpack.c.b16 %v5785, %v5783
        %v6452 = vpack.c.b16 %v5788, %v5786
        %v6453 = vpack.c.b16 %v5789, %v5787
        %v6454 = vpack.c.b16 %v5792, %v5790
        %v6455 = vpack.c.b16 %v5793, %v5791
        %v6456 = vpack.c.b16 %v5796, %v5794
        %v6457 = vpack.c.b16 %v5797, %v5795
        %v6458 = vpack.c.b16 %v5800, %v5798
        %v6459 = vpack.c.b16 %v5801, %v5799
        %v6460 = vpack.c.b16 %v5804, %v5802
        %v6461 = vpack.c.b16 %v5805, %v5803
        %v6462 = vpack.c.b16 %v5808, %v5806
        %v6463 = vpack.c.b16 %v5809, %v5807
        %v6464 = vpack.c.b16 %v5812, %v5810
        %v6465 = vpack.c.b16 %v5813, %v5811
        %v6466 = vpack.c.b16 %v5816, %v5814
        %v6467 = vpack.c.b16 %v5817, %v5815
        %v6468 = vpack.c.b16 %v5820, %v5818
        %v6469 = vpack.c.b16 %v5821, %v5819
        %v6470 = vpack.c.b16 %v5824, %v5822
        %v6471 = vpack.c.b16 %v5825, %v5823
        %v6472 = vpack.c.b16 %v5828, %v5826
        %v6473 = vpack.c.b16 %v5829, %v5827
        %v6474 = vpack.c.b16 %v5832, %v5830
        %v6475 = vpack.c.b16 %v5833, %v5831
        %v6476 = vpack.c.b16 %v5836, %v5834
        %v6477 = vpack.c.b16 %v5837, %v5835
        %v6478 = vpack.c.b16 %v5840, %v5838
        %v6479 = vpack.c.b16 %v5841, %v5839
        %v6480 = vpack.c.b16 %v5844, %v5842
        %v6481 = vpack.c.b16 %v5845, %v5843
        %v6482 = vpack.c.b16 %v5848, %v5846
        %v6483 = vpack.c.b16 %v5849, %v5847
        %v6484 = vpack.c.b16 %v5852, %v5850
        %v6485 = vpack.c.b16 %v5853, %v5851
        %v6486 = vpack.c.b16 %v5856, %v5854
        %v6487 = vpack.c.b16 %v5857, %v5855
        %v6488 = vpack.c.b16 %v5860, %v5858
        %v6489 = vpack.c.b16 %v5861, %v5859
        %v6490 = vpack.c.b16 %v5864, %v5862
        %v6491 = vpack.c.b16 %v5865, %v5863
        %v6492 = vpack.c.b16 %v5868, %v5866
        %v6493 = vpack.c.b16 %v5869, %v5867
        %v6494 = vpack.c.b16 %v5872, %v5870
        %v6495 = vpack.c.b16 %v5873, %v5871
        %v6496 = vpack.c.b16 %v5876, %v5874
        %v6497 = vpack.c.b16 %v5877, %v5875
        %v6498 = vpack.c.b16 %v5880, %v5878
        %v6499 = vpack.c.b16 %v5881, %v5879
        %v6500 = vpack.c.b16 %v5884, %v5882
        %v6501 = vpack.c.b16 %v5885, %v5883
        %v6502 = vpack.c.b16 %v5888, %v5886
        %v6503 = vpack.c.b16 %v5889, %v5887
        %v6504 = vpack.c.b16 %v5892, %v5890
        %v6505 = vpack.c.b16 %v5893, %v5891
        %v6506 = vpack.c.b16 %v5896, %v5894
        %v6507 = vpack.c.b16 %v5897, %v5895
        %v6508 = vpack.c.b16 %v5900, %v5898
        %v6509 = vpack.c.b16 %v5901, %v5899
        %v6510 = vpack.c.b16 %v5904, %v5902
        %v6511 = vpack.c.b16 %v5905, %v5903
        %v6512 = vpack.c.b16 %v5908, %v5906
        %v6513 = vpack.c.b16 %v5909, %v5907
        %v6514 = vpack.c.b16 %v5912, %v5910
        %v6515 = vpack.c.b16 %v5913, %v5911
        %v6516 = vpack.c.b16 %v5916, %v5914
        %v6517 = vpack.c.b16 %v5917, %v5915
        %v6518 = vpack.c.b16 %v5920, %v5918
        %v6519 = vpack.c.b16 %v5921, %v5919
        %v6520 = vpack.c.b16 %v5924, %v5922
        %v6521 = vpack.c.b16 %v5925, %v5923
        %v6522 = vpack.c.b16 %v5928, %v5926
        %v6523 = vpack.c.b16 %v5929, %v5927
        %v6524 = vpack.c.b16 %v5932, %v5930
        %v6525 = vpack.c.b16 %v5933, %v5931
        %v6526 = vpack.c.b16 %v5936, %v5934
        %v6527 = vpack.c.b16 %v5937, %v5935
        %v6528 = vpack.c.b16 %v5940, %v5938
        %v6529 = vpack.c.b16 %v5941, %v5939
        %v6530 = vpack.c.b16 %v5944, %v5942
        %v6531 = vpack.c.b16 %v5945, %v5943
        %v6532 = vpack.c.b16 %v5948, %v5946
        %v6533 = vpack.c.b16 %v5949, %v5947
        %v6534 = vpack.c.b16 %v5952, %v5950
        %v6535 = vpack.c.b16 %v5953, %v5951
        %v6536 = vpack.c.b16 %v5956, %v5954
        %v6537 = vpack.c.b16 %v5957, %v5955
        %v6538 = vpack.c.b16 %v5960, %v5958
        %v6539 = vpack.c.b16 %v5961, %v5959
        %v6540 = vpack.c.b16 %v5964, %v5962
        %v6541 = vpack.c.b16 %v5965, %v5963
        %v6542 = vpack.c.b16 %v5968, %v5966
        %v6543 = vpack.c.b16 %v5969, %v5967
        %v6544 = vpack.c.b16 %v5972, %v5970
        %v6545 = vpack.c.b16 %v5973, %v5971
        %v6546 = vpack.c.b16 %v5976, %v5974
        %v6547 = vpack.c.b16 %v5977, %v5975
        %v6548 = vpack.c.b16 %v5980, %v5978
        %v6549 = vpack.c.b16 %v5981, %v5979
        %v6550 = vpack.c.b16 %v5984, %v5982
        %v6551 = vpack.c.b16 %v5985, %v5983
        %v6552 = vpack.c.b16 %v5988, %v5986
        %v6553 = vpack.c.b16 %v5989, %v5987
        %v6554 = vpack.c.b16 %v5992, %v5990
        %v6555 = vpack.c.b16 %v5993, %v5991
        %v6556 = vpack.c.b16 %v5996, %v5994
        %v6557 = vpack.c.b16 %v5997, %v5995
        %v6558 = vpack.c.b16 %v6000, %v5998
        %v6559 = vpack.c.b16 %v6001, %v5999
        %v6560 = vpack.c.b16 %v6004, %v6002
        %v6561 = vpack.c.b16 %v6005, %v6003
        %v6562 = vpack.c.b16 %v6008, %v6006
        %v6563 = vpack.c.b16 %v6009, %v6007
        %v6564 = vpack.c.b16 %v6012, %v6010
        %v6565 = vpack.c.b16 %v6013, %v6011
        %v6566 = vpack.c.b16 %v6016, %v6014
        %v6567 = vpack.c.b16 %v6017, %v6015
        %v6568 = vpack.c.b16 %v6020, %v6018
        %v6569 = vpack.c.b16 %v6021, %v6019
        %v6570 = vpack.c.b16 %v6024, %v6022
        %v6571 = vpack.c.b16 %v6025, %v6023
        %v6572 = vpack.c.b16 %v6028, %v6026
        %v6573 = vpack.c.b16 %v6029, %v6027
        %v6574 = vpack.c.b16 %v6032, %v6030
        %v6575 = vpack.c.b16 %v6033, %v6031
        %v6576 = vpack.c.b16 %v6036, %v6034
        %v6577 = vpack.c.b16 %v6037, %v6035
        %v6578 = vpack.c.b16 %v6040, %v6038
        %v6579 = vpack.c.b16 %v6041, %v6039
        %v6580 = vpack.c.b16 %v6044, %v6042
        %v6581 = vpack.c.b16 %v6045, %v6043
        %v6582 = vpack.c.b16 %v6048, %v6046
        %v6583 = vpack.c.b16 %v6049, %v6047
        %v6584 = vpack.c.b16 %v6052, %v6050
        %v6585 = vpack.c.b16 %v6053, %v6051
        %v6586 = vpack.c.b16 %v6056, %v6054
        %v6587 = vpack.c.b16 %v6057, %v6055
        %v6588 = vpack.c.b16 %v6060, %v6058
        %v6589 = vpack.c.b16 %v6061, %v6059
        %v6590 = vpack.c.b16 %v6064, %v6062
        %v6591 = vpack.c.b16 %v6065, %v6063
        %v6592 = vpack.c.b16 %v6068, %v6066
        %v6593 = vpack.c.b16 %v6069, %v6067
        %v6594 = vpack.c.b16 %v6072, %v6070
        %v6595 = vpack.c.b16 %v6073, %v6071
        %v6596 = vpack.c.b16 %v6076, %v6074
        %v6597 = vpack.c.b16 %v6077, %v6075
        %v6598 = vpack.c.b16 %v6080, %v6078
        %v6599 = vpack.c.b16 %v6081, %v6079
        %v6600 = vpack.c.b16 %v6084, %v6082
        %v6601 = vpack.c.b16 %v6085, %v6083
        %v6602 = vpack.c.b16 %v6088, %v6086
        %v6603 = vpack.c.b16 %v6089, %v6087
        %v6604 = vpack.c.b16 %v6092, %v6090
        %v6605 = vpack.c.b16 %v6093, %v6091
        %v6606 = vpack.c.b16 %v6096, %v6094
        %v6607 = vpack.c.b16 %v6097, %v6095
        %v6608 = vpack.c.b16 %v6100, %v6098
        %v6609 = vpack.c.b16 %v6101, %v6099
        %v6610 = vpack.c.b16 %v6104, %v6102
        %v6611 = vpack.c.b16 %v6105, %v6103
        %v6612 = vpack.c.b16 %v6108, %v6106
        %v6613 = vpack.c.b16 %v6109, %v6107
        %v6614 = vpack.c.b16 %v6112, %v6110
        %v6615 = vpack.c.b16 %v6113, %v6111
        %v6616 = vpack.c.b16 %v6116, %v6114
        %v6617 = vpack.c.b16 %v6117, %v6115
        %v6618 = vpack.c.b16 %v6120, %v6118
        %v6619 = vpack.c.b16 %v6121, %v6119
        %v6620 = vpack.c.b16 %v6124, %v6122
        %v6621 = vpack.c.b16 %v6125, %v6123
        %v6622 = vpack.c.b16 %v6128, %v6126
        %v6623 = vpack.c.b16 %v6129, %v6127
        %v6624 = vpack.c.b16 %v6132, %v6130
        %v6625 = vpack.c.b16 %v6133, %v6131
        %v6626 = vpack.c.b16 %v6136, %v6134
        %v6627 = vpack.c.b16 %v6137, %v6135
        %v6628 = vpack.c.b16 %v6140, %v6138
        %v6629 = vpack.c.b16 %v6141, %v6139
        %v6630 = vpack.c.b16 %v6144, %v6142
        %v6631 = vpack.c.b16 %v6145, %v6143
        %v6632 = vpack.c.b16 %v6148, %v6146
        %v6633 = vpack.c.b16 %v6149, %v6147
        %v6634 = vpack.c.b16 %v6152, %v6150
        %v6635 = vpack.c.b16 %v6153, %v6151
        %v6636 = vpack.c.b16 %v6156, %v6154
        %v6637 = vpack.c.b16 %v6157, %v6155
        %v6638 = vpack.c.b16 %v6160, %v6158
        %v6639 = vpack.c.b16 %v6161, %v6159
        %v6640 = vpack.c.b16 %v6164, %v6162
        %v6641 = vpack.c.b16 %v6165, %v6163
        %v6642 = vpack.c.b16 %v6168, %v6166
        %v6643 = vpack.c.b16 %v6169, %v6167
        %v6644 = vpack.c.b16 %v6172, %v6170
        %v6645 = vpack.c.b16 %v6173, %v6171
        %v6646 = vpack.c.b16 %v6176, %v6174
        %v6647 = vpack.c.b16 %v6177, %v6175
        %v6648 = vpack.c.b16 %v6180, %v6178
        %v6649 = vpack.c.b16 %v6181, %v6179
        %v6650 = vpack.c.b16 %v6184, %v6182
        %v6651 = vpack.c.b16 %v6185, %v6183
        %v6652 = vpack.c.b16 %v6188, %v6186
        %v6653 = vpack.c.b16 %v6189, %v6187
        %v6654 = vpack.c.b16 %v6192, %v6190
        %v6655 = vpack.c.b16 %v6193, %v6191
        %v6656 = vpack.c.b16 %v6196, %v6194
        %v6657 = vpack.c.b16 %v6197, %v6195
        %v6658 = vpack.c.b16 %v6200, %v6198
        %v6659 = vpack.c.b16 %v6201, %v6199
        %v6660 = vpack.c.b16 %v6204, %v6202
        %v6661 = vpack.c.b16 %v6205, %v6203
        %v6662 = vpack.c.b16 %v6208, %v6206
        %v6663 = vpack.c.b16 %v6209, %v6207
        %v6664 = vpack.c.b16 %v6212, %v6210
        %v6665 = vpack.c.b16 %v6213, %v6211
        %v6666 = vpack.c.b16 %v6216, %v6214
        %v6667 = vpack.c.b16 %v6217, %v6215
        %v6668 = vpack.c.b16 %v6220, %v6218
        %v6669 = vpack.c.b16 %v6221, %v6219
        %v6670 = vpack.c.b16 %v6224, %v6222
        %v6671 = vpack.c.b16 %v6225, %v6223
        %v6672 = vpack.c.b16 %v6228, %v6226
        %v6673 = vpack.c.b16 %v6229, %v6227
        %v6674 = vpack.c.b16 %v6232, %v6230
        %v6675 = vpack.c.b16 %v6233, %v6231
        %v6676 = vpack.c.b16 %v6236, %v6234
        %v6677 = vpack.c.b16 %v6237, %v6235
        %v6678 = vpack.c.b16 %v6240, %v6238
        %v6679 = vpack.c.b16 %v6241, %v6239
        %v6680 = vpack.c.b16 %v6244, %v6242
        %v6681 = vpack.c.b16 %v6245, %v6243
        %v6682 = vpack.c.b16 %v6248, %v6246
        %v6683 = vpack.c.b16 %v6249, %v6247
        %v6684 = vpack.c.b16 %v6252, %v6250
        %v6685 = vpack.c.b16 %v6253, %v6251
        %v6686 = vpack.c.b16 %v6256, %v6254
        %v6687 = vpack.c.b16 %v6257, %v6255
        %v6688 = vpack.c.b16 %v6260, %v6258
        %v6689 = vpack.c.b16 %v6261, %v6259
        %v6690 = vpack.c.b16 %v6264, %v6262
        %v6691 = vpack.c.b16 %v6265, %v6263
        %v6692 = vpack.c.b16 %v6268, %v6266
        %v6693 = vpack.c.b16 %v6269, %v6267
        %v6694 = vpack.c.b16 %v6272, %v6270
        %v6695 = vpack.c.b16 %v6273, %v6271
        %v6696 = vpack.c.b16 %v6276, %v6274
        %v6697 = vpack.c.b16 %v6277, %v6275
        %v6698 = vpack.c.b16 %v6280, %v6278
        %v6699 = vpack.c.b16 %v6281, %v6279
        %v6700 = vpack.c.b16 %v6284, %v6282
        %v6701 = vpack.c.b16 %v6285, %v6283
        %v6702 = vpack.c.b16 %v6288, %v6286
        %v6703 = vpack.c.b16 %v6289, %v6287
        %v6704 = vpack.c.b16 %v6292, %v6290
        %v6705 = vpack.c.b16 %v6293, %v6291
        %v6706 = vpack.c.b16 %v6296, %v6294
        %v6707 = vpack.c.b16 %v6297, %v6295
        %v6708 = vpack.c.b16 %v6300, %v6298
        %v6709 = vpack.c.b16 %v6301, %v6299
        %v6710 = vpack.c.b16 %v6304, %v6302
        %v6711 = vpack.c.b16 %v6305, %v6303
        %v6712 = vpack.c.b16 %v6308, %v6306
        %v6713 = vpack.c.b16 %v6309, %v6307
        %v6714 = vpack.c.b16 %v6312, %v6310
        %v6715 = vpack.c.b16 %v6313, %v6311
        %v6716 = vpack.c.b16 %v6316, %v6314
        %v6717 = vpack.c.b16 %v6317, %v6315
        %v6718 = vpack.c.b16 %v6320, %v6318
        %v6719 = vpack.c.b16 %v6321, %v6319
        %v6720 = vpack.c.b16 %v6324, %v6322
        %v6721 = vpack.c.b16 %v6325, %v6323
        %v6722 = vpack.c.b16 %v6328, %v6326
        %v6723 = vpack.c.b16 %v6329, %v6327
        %v6724 = vpack.c.b16 %v6332, %v6330
        %v6725 = vpack.c.b16 %v6333, %v6331
        %v7119 = vlaneseq
        %v7120 = vshrl.u32 %v7119, 7
        %v7121 = vsub.s32 0, %v7120
        %v7122 = vrot.slane %v4968, %v7121
        %v7123 = vlaneseq
        %v7124 = vshrl.u32 %v7123, 7
        %v7125 = vsub.s32 1, %v7124
        %v7126 = vrot.slane %v4968, %v7125
        %v7130 = vsel %vm3402, %v5133, 0
        %7132 = vmatprep.subr.bf16.mxu0 %v6335
        %7133 = vmatpush1.bf16.msra.mxu0 %v6334
        %7134 = vmatprep.subr.bf16.mxu0 %v6337
        %7135 = vmatpush1.bf16.msra.mxu0 %v6336
        %7136 = vmatprep.subr.bf16.mxu0 %v6339
        %7137 = vmatpush1.bf16.msra.mxu0 %v6338
        %7138 = vmatprep.subr.bf16.mxu0 %v6341
        %7139 = vmatpush1.bf16.msra.mxu0 %v6340
        %7140 = vmatprep.subr.bf16.mxu0 %v6343
        %7141 = vmatpush1.bf16.msra.mxu0 %v6342
        %7142 = vmatprep.subr.bf16.mxu0 %v6345
        %7143 = vmatpush1.bf16.msra.mxu0 %v6344
        %7144 = vmatprep.subr.bf16.mxu0 %v6347
        %7145 = vmatpush1.bf16.msra.mxu0 %v6346
        %7146 = vmatprep.subr.bf16.mxu0 %v6349
        %7147 = vmatpush1.bf16.msra.mxu0 %v6348
        %7148 = vmatprep.subr.bf16.mxu0 %v6351
        %7149 = vmatpush1.bf16.msra.mxu0 %v6350
        %7150 = vmatprep.subr.bf16.mxu0 %v6353
        %7151 = vmatpush1.bf16.msra.mxu0 %v6352
        %7152 = vmatprep.subr.bf16.mxu0 %v6355
        %7153 = vmatpush1.bf16.msra.mxu0 %v6354
        %7154 = vmatprep.subr.bf16.mxu0 %v6357
        %7155 = vmatpush1.bf16.msra.mxu0 %v6356
        %7156 = vmatprep.subr.bf16.mxu0 %v6359
        %7157 = vmatpush1.bf16.msra.mxu0 %v6358
        %7158 = vmatprep.subr.bf16.mxu0 %v6361
        %7159 = vmatpush1.bf16.msra.mxu0 %v6360
        %7160 = vmatprep.subr.bf16.mxu0 %v6363
        %7161 = vmatpush1.bf16.msra.mxu0 %v6362
        %7162 = vmatprep.subr.bf16.mxu0 %v6365
        %7163 = vmatpush1.bf16.msra.mxu0 %v6364
        %7164 = vmatprep.mubr.bf16.mxu0 %v5010
        %7165 = vmatmul.mubr.bf16.gmra.mrb[0].mxu0 %v4996
        %v7166 = vpop.f32.mrb[0].mxu0
        %v7167 = vadd.f32 %v7122, %v7166
        %v7168 = vpop.f32.mrb[0].mxu0
        %v7169 = vadd.f32 %v7126, %v7168
        %v7170 = vpop.f32.mrb[0].mxu0
        %v7171 = vpop.f32.mrb[0].mxu0
        %7172 = vdwg.mxu0
        %7173 = vmatprep.subr.bf16.mxu0 %v6367
        %7174 = vmatpush1.bf16.msra.mxu0 %v6366
        %7175 = vmatprep.subr.bf16.mxu0 %v6369
        %7176 = vmatpush1.bf16.msra.mxu0 %v6368
        %7177 = vmatprep.subr.bf16.mxu0 %v6371
        %7178 = vmatpush1.bf16.msra.mxu0 %v6370
        %7179 = vmatprep.subr.bf16.mxu0 %v6373
        %7180 = vmatpush1.bf16.msra.mxu0 %v6372
        %7181 = vmatprep.subr.bf16.mxu0 %v6375
        %7182 = vmatpush1.bf16.msra.mxu0 %v6374
        %7183 = vmatprep.subr.bf16.mxu0 %v6377
        %7184 = vmatpush1.bf16.msra.mxu0 %v6376
        %7185 = vmatprep.subr.bf16.mxu0 %v6379
        %7186 = vmatpush1.bf16.msra.mxu0 %v6378
        %7187 = vmatprep.subr.bf16.mxu0 %v6381
        %7188 = vmatpush1.bf16.msra.mxu0 %v6380
        %7189 = vmatprep.subr.bf16.mxu0 %v6383
        %7190 = vmatpush1.bf16.msra.mxu0 %v6382
        %7191 = vmatprep.subr.bf16.mxu0 %v6385
        %7192 = vmatpush1.bf16.msra.mxu0 %v6384
        %7193 = vmatprep.subr.bf16.mxu0 %v6387
        %7194 = vmatpush1.bf16.msra.mxu0 %v6386
        %7195 = vmatprep.subr.bf16.mxu0 %v6389
        %7196 = vmatpush1.bf16.msra.mxu0 %v6388
        %7197 = vmatprep.subr.bf16.mxu0 %v6391
        %7198 = vmatpush1.bf16.msra.mxu0 %v6390
        %7199 = vmatprep.subr.bf16.mxu0 %v6393
        %7200 = vmatpush1.bf16.msra.mxu0 %v6392
        %7201 = vmatprep.subr.bf16.mxu0 %v6395
        %7202 = vmatpush1.bf16.msra.mxu0 %v6394
        %7203 = vmatprep.subr.bf16.mxu0 %v6397
        %7204 = vmatpush1.bf16.msra.mxu0 %v6396
        %7205 = vmatprep.mubr.bf16.mxu0 %v5020
        %7206 = vmatmul.mubr.bf16.gmra.mrb[0].mxu0 %v5018
        %v7207 = vpop.f32.mrb[0].mxu0
        %v7208 = vadd.f32 %v7167, %v7207
        %v7209 = vpop.f32.mrb[0].mxu0
        %v7210 = vadd.f32 %v7169, %v7209
        %v7211 = vpop.f32.mrb[0].mxu0
        %v7212 = vpop.f32.mrb[0].mxu0
        %7213 = vdwg.mxu0
        %7214 = vmatprep.subr.bf16.mxu0 %v6399
        %7215 = vmatpush1.bf16.msra.mxu0 %v6398
        %7216 = vmatprep.subr.bf16.mxu0 %v6401
        %7217 = vmatpush1.bf16.msra.mxu0 %v6400
        %7218 = vmatprep.subr.bf16.mxu0 %v6403
        %7219 = vmatpush1.bf16.msra.mxu0 %v6402
        %7220 = vmatprep.subr.bf16.mxu0 %v6405
        %7221 = vmatpush1.bf16.msra.mxu0 %v6404
        %7222 = vmatprep.subr.bf16.mxu0 %v6407
        %7223 = vmatpush1.bf16.msra.mxu0 %v6406
        %7224 = vmatprep.subr.bf16.mxu0 %v6409
        %7225 = vmatpush1.bf16.msra.mxu0 %v6408
        %7226 = vmatprep.subr.bf16.mxu0 %v6411
        %7227 = vmatpush1.bf16.msra.mxu0 %v6410
        %7228 = vmatprep.subr.bf16.mxu0 %v6413
        %7229 = vmatpush1.bf16.msra.mxu0 %v6412
        %7230 = vmatprep.subr.bf16.mxu0 %v6415
        %7231 = vmatpush1.bf16.msra.mxu0 %v6414
        %7232 = vmatprep.subr.bf16.mxu0 %v6417
        %7233 = vmatpush1.bf16.msra.mxu0 %v6416
        %7234 = vmatprep.subr.bf16.mxu0 %v6419
        %7235 = vmatpush1.bf16.msra.mxu0 %v6418
        %7236 = vmatprep.subr.bf16.mxu0 %v6421
        %7237 = vmatpush1.bf16.msra.mxu0 %v6420
        %7238 = vmatprep.subr.bf16.mxu0 %v6423
        %7239 = vmatpush1.bf16.msra.mxu0 %v6422
        %7240 = vmatprep.subr.bf16.mxu0 %v6425
        %7241 = vmatpush1.bf16.msra.mxu0 %v6424
        %7242 = vmatprep.subr.bf16.mxu0 %v6427
        %7243 = vmatpush1.bf16.msra.mxu0 %v6426
        %7244 = vmatprep.subr.bf16.mxu0 %v6429
        %7245 = vmatpush1.bf16.msra.mxu0 %v6428
        %7246 = vmatprep.mubr.bf16.mxu0 %v5017
        %7247 = vmatmul.mubr.bf16.gmra.mrb[0].mxu0 %v5003
        %v7248 = vpop.f32.mrb[0].mxu0
        %v7249 = vadd.f32 %v7208, %v7248
        %v7250 = vpop.f32.mrb[0].mxu0
        %v7251 = vadd.f32 %v7210, %v7250
        %v7252 = vpop.f32.mrb[0].mxu0
        %v7253 = vpop.f32.mrb[0].mxu0
        %7254 = vdwg.mxu0
        %7255 = vmatprep.subr.bf16.mxu0 %v6431
        %7256 = vmatpush1.bf16.msra.mxu0 %v6430
        %7257 = vmatprep.subr.bf16.mxu0 %v6433
        %7258 = vmatpush1.bf16.msra.mxu0 %v6432
        %7259 = vmatprep.subr.bf16.mxu0 %v6435
        %7260 = vmatpush1.bf16.msra.mxu0 %v6434
        %7261 = vmatprep.subr.bf16.mxu0 %v6437
        %7262 = vmatpush1.bf16.msra.mxu0 %v6436
        %7263 = vmatprep.subr.bf16.mxu0 %v6439
        %7264 = vmatpush1.bf16.msra.mxu0 %v6438
        %7265 = vmatprep.subr.bf16.mxu0 %v6441
        %7266 = vmatpush1.bf16.msra.mxu0 %v6440
        %7267 = vmatprep.subr.bf16.mxu0 %v6443
        %7268 = vmatpush1.bf16.msra.mxu0 %v6442
        %7269 = vmatprep.subr.bf16.mxu0 %v6445
        %7270 = vmatpush1.bf16.msra.mxu0 %v6444
        %7271 = vmatprep.subr.bf16.mxu0 %v6447
        %7272 = vmatpush1.bf16.msra.mxu0 %v6446
        %7273 = vmatprep.subr.bf16.mxu0 %v6449
        %7274 = vmatpush1.bf16.msra.mxu0 %v6448
        %7275 = vmatprep.subr.bf16.mxu0 %v6451
        %7276 = vmatpush1.bf16.msra.mxu0 %v6450
        %7277 = vmatprep.subr.bf16.mxu0 %v6453
        %7278 = vmatpush1.bf16.msra.mxu0 %v6452
        %7279 = vmatprep.subr.bf16.mxu0 %v6455
        %7280 = vmatpush1.bf16.msra.mxu0 %v6454
        %7281 = vmatprep.subr.bf16.mxu0 %v6457
        %7282 = vmatpush1.bf16.msra.mxu0 %v6456
        %7283 = vmatprep.subr.bf16.mxu0 %v6459
        %7284 = vmatpush1.bf16.msra.mxu0 %v6458
        %7285 = vmatprep.subr.bf16.mxu0 %v6461
        %7286 = vmatpush1.bf16.msra.mxu0 %v6460
        %7287 = vmatprep.mubr.bf16.mxu0 %v5021
        %7288 = vmatmul.mubr.bf16.gmra.mrb[0].mxu0 %v5019
        %v7289 = vpop.f32.mrb[0].mxu0
        %v7290 = vadd.f32 %v7249, %v7289
        %v7291 = vpop.f32.mrb[0].mxu0
        %v7292 = vadd.f32 %v7251, %v7291
        %v7293 = vpop.f32.mrb[0].mxu0
        %v7294 = vpop.f32.mrb[0].mxu0
        %7295 = vdwg.mxu0
        %7296 = vmatprep.subr.bf16.mxu0 %v6463
        %7297 = vmatpush1.bf16.msra.mxu0 %v6462
        %7298 = vmatprep.subr.bf16.mxu0 %v6465
        %7299 = vmatpush1.bf16.msra.mxu0 %v6464
        %7300 = vmatprep.subr.bf16.mxu0 %v6467
        %7301 = vmatpush1.bf16.msra.mxu0 %v6466
        %7302 = vmatprep.subr.bf16.mxu0 %v6469
        %7303 = vmatpush1.bf16.msra.mxu0 %v6468
        %7304 = vmatprep.subr.bf16.mxu0 %v6471
        %7305 = vmatpush1.bf16.msra.mxu0 %v6470
        %7306 = vmatprep.subr.bf16.mxu0 %v6473
        %7307 = vmatpush1.bf16.msra.mxu0 %v6472
        %7308 = vmatprep.subr.bf16.mxu0 %v6475
        %7309 = vmatpush1.bf16.msra.mxu0 %v6474
        %7310 = vmatprep.subr.bf16.mxu0 %v6477
        %7311 = vmatpush1.bf16.msra.mxu0 %v6476
        %7312 = vmatprep.subr.bf16.mxu0 %v6479
        %7313 = vmatpush1.bf16.msra.mxu0 %v6478
        %7314 = vmatprep.subr.bf16.mxu0 %v6481
        %7315 = vmatpush1.bf16.msra.mxu0 %v6480
        %7316 = vmatprep.subr.bf16.mxu0 %v6483
        %7317 = vmatpush1.bf16.msra.mxu0 %v6482
        %7318 = vmatprep.subr.bf16.mxu0 %v6485
        %7319 = vmatpush1.bf16.msra.mxu0 %v6484
        %7320 = vmatprep.subr.bf16.mxu0 %v6487
        %7321 = vmatpush1.bf16.msra.mxu0 %v6486
        %7322 = vmatprep.subr.bf16.mxu0 %v6489
        %7323 = vmatpush1.bf16.msra.mxu0 %v6488
        %7324 = vmatprep.subr.bf16.mxu0 %v6491
        %7325 = vmatpush1.bf16.msra.mxu0 %v6490
        %7326 = vmatprep.subr.bf16.mxu0 %v6493
        %7327 = vmatpush1.bf16.msra.mxu0 %v6492
        %7328 = vmatprep.mubr.bf16.mxu0 %v5059
        %7329 = vmatmul.mubr.bf16.gmra.mrb[0].mxu0 %v5045
        %v7330 = vpop.f32.mrb[0].mxu0
        %v7331 = vadd.f32 %v7290, %v7330
        %v7332 = vpop.f32.mrb[0].mxu0
        %v7333 = vadd.f32 %v7292, %v7332
        %v7334 = vpop.f32.mrb[0].mxu0
        %v7335 = vpop.f32.mrb[0].mxu0
        %7336 = vdwg.mxu0
        %7337 = vmatprep.subr.bf16.mxu0 %v6495
        %7338 = vmatpush1.bf16.msra.mxu0 %v6494
        %7339 = vmatprep.subr.bf16.mxu0 %v6497
        %7340 = vmatpush1.bf16.msra.mxu0 %v6496
        %7341 = vmatprep.subr.bf16.mxu0 %v6499
        %7342 = vmatpush1.bf16.msra.mxu0 %v6498
        %7343 = vmatprep.subr.bf16.mxu0 %v6501
        %7344 = vmatpush1.bf16.msra.mxu0 %v6500
        %7345 = vmatprep.subr.bf16.mxu0 %v6503
        %7346 = vmatpush1.bf16.msra.mxu0 %v6502
        %7347 = vmatprep.subr.bf16.mxu0 %v6505
        %7348 = vmatpush1.bf16.msra.mxu0 %v6504
        %7349 = vmatprep.subr.bf16.mxu0 %v6507
        %7350 = vmatpush1.bf16.msra.mxu0 %v6506
        %7351 = vmatprep.subr.bf16.mxu0 %v6509
        %7352 = vmatpush1.bf16.msra.mxu0 %v6508
        %7353 = vmatprep.subr.bf16.mxu0 %v6511
        %7354 = vmatpush1.bf16.msra.mxu0 %v6510
        %7355 = vmatprep.subr.bf16.mxu0 %v6513
        %7356 = vmatpush1.bf16.msra.mxu0 %v6512
        %7357 = vmatprep.subr.bf16.mxu0 %v6515
        %7358 = vmatpush1.bf16.msra.mxu0 %v6514
        %7359 = vmatprep.subr.bf16.mxu0 %v6517
        %7360 = vmatpush1.bf16.msra.mxu0 %v6516
        %7361 = vmatprep.subr.bf16.mxu0 %v6519
        %7362 = vmatpush1.bf16.msra.mxu0 %v6518
        %7363 = vmatprep.subr.bf16.mxu0 %v6521
        %7364 = vmatpush1.bf16.msra.mxu0 %v6520
        %7365 = vmatprep.subr.bf16.mxu0 %v6523
        %7366 = vmatpush1.bf16.msra.mxu0 %v6522
        %7367 = vmatprep.subr.bf16.mxu0 %v6525
        %7368 = vmatpush1.bf16.msra.mxu0 %v6524
        %7369 = vmatprep.mubr.bf16.mxu0 %v5069
        %7370 = vmatmul.mubr.bf16.gmra.mrb[0].mxu0 %v5067
        %v7371 = vpop.f32.mrb[0].mxu0
        %v7372 = vadd.f32 %v7331, %v7371
        %v7373 = vpop.f32.mrb[0].mxu0
        %v7374 = vadd.f32 %v7333, %v7373
        %v7375 = vpop.f32.mrb[0].mxu0
        %v7376 = vpop.f32.mrb[0].mxu0
        %7377 = vdwg.mxu0
        %7378 = vmatprep.subr.bf16.mxu0 %v6527
        %7379 = vmatpush1.bf16.msra.mxu0 %v6526
        %7380 = vmatprep.subr.bf16.mxu0 %v6529
        %7381 = vmatpush1.bf16.msra.mxu0 %v6528
        %7382 = vmatprep.subr.bf16.mxu0 %v6531
        %7383 = vmatpush1.bf16.msra.mxu0 %v6530
        %7384 = vmatprep.subr.bf16.mxu0 %v6533
        %7385 = vmatpush1.bf16.msra.mxu0 %v6532
        %7386 = vmatprep.subr.bf16.mxu0 %v6535
        %7387 = vmatpush1.bf16.msra.mxu0 %v6534
        %7388 = vmatprep.subr.bf16.mxu0 %v6537
        %7389 = vmatpush1.bf16.msra.mxu0 %v6536
        %7390 = vmatprep.subr.bf16.mxu0 %v6539
        %7391 = vmatpush1.bf16.msra.mxu0 %v6538
        %7392 = vmatprep.subr.bf16.mxu0 %v6541
        %7393 = vmatpush1.bf16.msra.mxu0 %v6540
        %7394 = vmatprep.subr.bf16.mxu0 %v6543
        %7395 = vmatpush1.bf16.msra.mxu0 %v6542
        %7396 = vmatprep.subr.bf16.mxu0 %v6545
        %7397 = vmatpush1.bf16.msra.mxu0 %v6544
        %7398 = vmatprep.subr.bf16.mxu0 %v6547
        %7399 = vmatpush1.bf16.msra.mxu0 %v6546
        %7400 = vmatprep.subr.bf16.mxu0 %v6549
        %7401 = vmatpush1.bf16.msra.mxu0 %v6548
        %7402 = vmatprep.subr.bf16.mxu0 %v6551
        %7403 = vmatpush1.bf16.msra.mxu0 %v6550
        %7404 = vmatprep.subr.bf16.mxu0 %v6553
        %7405 = vmatpush1.bf16.msra.mxu0 %v6552
        %7406 = vmatprep.subr.bf16.mxu0 %v6555
        %7407 = vmatpush1.bf16.msra.mxu0 %v6554
        %7408 = vmatprep.subr.bf16.mxu0 %v6557
        %7409 = vmatpush1.bf16.msra.mxu0 %v6556
        %7410 = vmatprep.mubr.bf16.mxu0 %v5066
        %7411 = vmatmul.mubr.bf16.gmra.mrb[0].mxu0 %v5052
        %v7412 = vpop.f32.mrb[0].mxu0
        %v7413 = vadd.f32 %v7372, %v7412
        %v7414 = vpop.f32.mrb[0].mxu0
        %v7415 = vadd.f32 %v7374, %v7414
        %v7416 = vpop.f32.mrb[0].mxu0
        %v7417 = vpop.f32.mrb[0].mxu0
        %7418 = vdwg.mxu0
        %7419 = vmatprep.subr.bf16.mxu0 %v6559
        %7420 = vmatpush1.bf16.msra.mxu0 %v6558
        %7421 = vmatprep.subr.bf16.mxu0 %v6561
        %7422 = vmatpush1.bf16.msra.mxu0 %v6560
        %7423 = vmatprep.subr.bf16.mxu0 %v6563
        %7424 = vmatpush1.bf16.msra.mxu0 %v6562
        %7425 = vmatprep.subr.bf16.mxu0 %v6565
        %7426 = vmatpush1.bf16.msra.mxu0 %v6564
        %7427 = vmatprep.subr.bf16.mxu0 %v6567
        %7428 = vmatpush1.bf16.msra.mxu0 %v6566
        %7429 = vmatprep.subr.bf16.mxu0 %v6569
        %7430 = vmatpush1.bf16.msra.mxu0 %v6568
        %7431 = vmatprep.subr.bf16.mxu0 %v6571
        %7432 = vmatpush1.bf16.msra.mxu0 %v6570
        %7433 = vmatprep.subr.bf16.mxu0 %v6573
        %7434 = vmatpush1.bf16.msra.mxu0 %v6572
        %7435 = vmatprep.subr.bf16.mxu0 %v6575
        %7436 = vmatpush1.bf16.msra.mxu0 %v6574
        %7437 = vmatprep.subr.bf16.mxu0 %v6577
        %7438 = vmatpush1.bf16.msra.mxu0 %v6576
        %7439 = vmatprep.subr.bf16.mxu0 %v6579
        %7440 = vmatpush1.bf16.msra.mxu0 %v6578
        %7441 = vmatprep.subr.bf16.mxu0 %v6581
        %7442 = vmatpush1.bf16.msra.mxu0 %v6580
        %7443 = vmatprep.subr.bf16.mxu0 %v6583
        %7444 = vmatpush1.bf16.msra.mxu0 %v6582
        %7445 = vmatprep.subr.bf16.mxu0 %v6585
        %7446 = vmatpush1.bf16.msra.mxu0 %v6584
        %7447 = vmatprep.subr.bf16.mxu0 %v6587
        %7448 = vmatpush1.bf16.msra.mxu0 %v6586
        %7449 = vmatprep.subr.bf16.mxu0 %v6589
        %7450 = vmatpush1.bf16.msra.mxu0 %v6588
        %7451 = vmatprep.mubr.bf16.mxu0 %v5070
        %7452 = vmatmul.mubr.bf16.gmra.mrb[0].mxu0 %v5068
        %v7453 = vpop.f32.mrb[0].mxu0
        %v7454 = vadd.f32 %v7413, %v7453
        %v7455 = vpop.f32.mrb[0].mxu0
        %v7456 = vadd.f32 %v7415, %v7455
        %v7457 = vpop.f32.mrb[0].mxu0
        %v7458 = vpop.f32.mrb[0].mxu0
        %7459 = vdwg.mxu0
        %7460 = vmatprep.subr.bf16.mxu0 %v6591
        %7461 = vmatpush1.bf16.msra.mxu0 %v6590
        %7462 = vmatprep.subr.bf16.mxu0 %v6593
        %7463 = vmatpush1.bf16.msra.mxu0 %v6592
        %7464 = vmatprep.subr.bf16.mxu0 %v6595
        %7465 = vmatpush1.bf16.msra.mxu0 %v6594
        %7466 = vmatprep.subr.bf16.mxu0 %v6597
        %7467 = vmatpush1.bf16.msra.mxu0 %v6596
        %7468 = vmatprep.subr.bf16.mxu0 %v6599
        %7469 = vmatpush1.bf16.msra.mxu0 %v6598
        %7470 = vmatprep.subr.bf16.mxu0 %v6601
        %7471 = vmatpush1.bf16.msra.mxu0 %v6600
        %7472 = vmatprep.subr.bf16.mxu0 %v6603
        %7473 = vmatpush1.bf16.msra.mxu0 %v6602
        %7474 = vmatprep.subr.bf16.mxu0 %v6605
        %7475 = vmatpush1.bf16.msra.mxu0 %v6604
        %7476 = vmatprep.subr.bf16.mxu0 %v6607
        %7477 = vmatpush1.bf16.msra.mxu0 %v6606
        %7478 = vmatprep.subr.bf16.mxu0 %v6609
        %7479 = vmatpush1.bf16.msra.mxu0 %v6608
        %7480 = vmatprep.subr.bf16.mxu0 %v6611
        %7481 = vmatpush1.bf16.msra.mxu0 %v6610
        %7482 = vmatprep.subr.bf16.mxu0 %v6613
        %7483 = vmatpush1.bf16.msra.mxu0 %v6612
        %7484 = vmatprep.subr.bf16.mxu0 %v6615
        %7485 = vmatpush1.bf16.msra.mxu0 %v6614
        %7486 = vmatprep.subr.bf16.mxu0 %v6617
        %7487 = vmatpush1.bf16.msra.mxu0 %v6616
        %7488 = vmatprep.subr.bf16.mxu0 %v6619
        %7489 = vmatpush1.bf16.msra.mxu0 %v6618
        %7490 = vmatprep.subr.bf16.mxu0 %v6621
        %7491 = vmatpush1.bf16.msra.mxu0 %v6620
        %7492 = vmatprep.mubr.bf16.mxu0 %v5108
        %7493 = vmatmul.mubr.bf16.gmra.mrb[0].mxu0 %v5094
        %v7494 = vpop.f32.mrb[0].mxu0
        %v7495 = vadd.f32 %v7454, %v7494
        %v7496 = vpop.f32.mrb[0].mxu0
        %v7497 = vadd.f32 %v7456, %v7496
        %v7498 = vpop.f32.mrb[0].mxu0
        %v7499 = vpop.f32.mrb[0].mxu0
        %7500 = vdwg.mxu0
        %7501 = vmatprep.subr.bf16.mxu0 %v6623
        %7502 = vmatpush1.bf16.msra.mxu0 %v6622
        %7503 = vmatprep.subr.bf16.mxu0 %v6625
        %7504 = vmatpush1.bf16.msra.mxu0 %v6624
        %7505 = vmatprep.subr.bf16.mxu0 %v6627
        %7506 = vmatpush1.bf16.msra.mxu0 %v6626
        %7507 = vmatprep.subr.bf16.mxu0 %v6629
        %7508 = vmatpush1.bf16.msra.mxu0 %v6628
        %7509 = vmatprep.subr.bf16.mxu0 %v6631
        %7510 = vmatpush1.bf16.msra.mxu0 %v6630
        %7511 = vmatprep.subr.bf16.mxu0 %v6633
        %7512 = vmatpush1.bf16.msra.mxu0 %v6632
        %7513 = vmatprep.subr.bf16.mxu0 %v6635
        %7514 = vmatpush1.bf16.msra.mxu0 %v6634
        %7515 = vmatprep.subr.bf16.mxu0 %v6637
        %7516 = vmatpush1.bf16.msra.mxu0 %v6636
        %7517 = vmatprep.subr.bf16.mxu0 %v6639
        %7518 = vmatpush1.bf16.msra.mxu0 %v6638
        %7519 = vmatprep.subr.bf16.mxu0 %v6641
        %7520 = vmatpush1.bf16.msra.mxu0 %v6640
        %7521 = vmatprep.subr.bf16.mxu0 %v6643
        %7522 = vmatpush1.bf16.msra.mxu0 %v6642
        %7523 = vmatprep.subr.bf16.mxu0 %v6645
        %7524 = vmatpush1.bf16.msra.mxu0 %v6644
        %7525 = vmatprep.subr.bf16.mxu0 %v6647
        %7526 = vmatpush1.bf16.msra.mxu0 %v6646
        %7527 = vmatprep.subr.bf16.mxu0 %v6649
        %7528 = vmatpush1.bf16.msra.mxu0 %v6648
        %7529 = vmatprep.subr.bf16.mxu0 %v6651
        %7530 = vmatpush1.bf16.msra.mxu0 %v6650
        %7531 = vmatprep.subr.bf16.mxu0 %v6653
        %7532 = vmatpush1.bf16.msra.mxu0 %v6652
        %7533 = vmatprep.mubr.bf16.mxu0 %v5118
        %7534 = vmatmul.mubr.bf16.gmra.mrb[0].mxu0 %v5116
        %v7535 = vpop.f32.mrb[0].mxu0
        %v7536 = vadd.f32 %v7495, %v7535
        %v7537 = vpop.f32.mrb[0].mxu0
        %v7538 = vadd.f32 %v7497, %v7537
        %v7539 = vpop.f32.mrb[0].mxu0
        %v7540 = vpop.f32.mrb[0].mxu0
        %7541 = vdwg.mxu0
        %7542 = vmatprep.subr.bf16.mxu0 %v6655
        %7543 = vmatpush1.bf16.msra.mxu0 %v6654
        %7544 = vmatprep.subr.bf16.mxu0 %v6657
        %7545 = vmatpush1.bf16.msra.mxu0 %v6656
        %7546 = vmatprep.subr.bf16.mxu0 %v6659
        %7547 = vmatpush1.bf16.msra.mxu0 %v6658
        %7548 = vmatprep.subr.bf16.mxu0 %v6661
        %7549 = vmatpush1.bf16.msra.mxu0 %v6660
        %7550 = vmatprep.subr.bf16.mxu0 %v6663
        %7551 = vmatpush1.bf16.msra.mxu0 %v6662
        %7552 = vmatprep.subr.bf16.mxu0 %v6665
        %7553 = vmatpush1.bf16.msra.mxu0 %v6664
        %7554 = vmatprep.subr.bf16.mxu0 %v6667
        %7555 = vmatpush1.bf16.msra.mxu0 %v6666
        %7556 = vmatprep.subr.bf16.mxu0 %v6669
        %7557 = vmatpush1.bf16.msra.mxu0 %v6668
        %7558 = vmatprep.subr.bf16.mxu0 %v6671
        %7559 = vmatpush1.bf16.msra.mxu0 %v6670
        %7560 = vmatprep.subr.bf16.mxu0 %v6673
        %7561 = vmatpush1.bf16.msra.mxu0 %v6672
        %7562 = vmatprep.subr.bf16.mxu0 %v6675
        %7563 = vmatpush1.bf16.msra.mxu0 %v6674
        %7564 = vmatprep.subr.bf16.mxu0 %v6677
        %7565 = vmatpush1.bf16.msra.mxu0 %v6676
        %7566 = vmatprep.subr.bf16.mxu0 %v6679
        %7567 = vmatpush1.bf16.msra.mxu0 %v6678
        %7568 = vmatprep.subr.bf16.mxu0 %v6681
        %7569 = vmatpush1.bf16.msra.mxu0 %v6680
        %7570 = vmatprep.subr.bf16.mxu0 %v6683
        %7571 = vmatpush1.bf16.msra.mxu0 %v6682
        %7572 = vmatprep.subr.bf16.mxu0 %v6685
        %7573 = vmatpush1.bf16.msra.mxu0 %v6684
        %7574 = vmatprep.mubr.bf16.mxu0 %v5115
        %7575 = vmatmul.mubr.bf16.gmra.mrb[0].mxu0 %v5101
        %v7576 = vpop.f32.mrb[0].mxu0
        %v7577 = vadd.f32 %v7536, %v7576
        %v7578 = vpop.f32.mrb[0].mxu0
        %v7579 = vadd.f32 %v7538, %v7578
        %v7580 = vpop.f32.mrb[0].mxu0
        %v7581 = vpop.f32.mrb[0].mxu0
        %7582 = vdwg.mxu0
        %7583 = vmatprep.subr.bf16.mxu0 %v6687
        %7584 = vmatpush1.bf16.msra.mxu0 %v6686
        %7585 = vmatprep.subr.bf16.mxu0 %v6689
        %7586 = vmatpush1.bf16.msra.mxu0 %v6688
        %7587 = vmatprep.subr.bf16.mxu0 %v6691
        %7588 = vmatpush1.bf16.msra.mxu0 %v6690
        %7589 = vmatprep.subr.bf16.mxu0 %v6693
        %7590 = vmatpush1.bf16.msra.mxu0 %v6692
        %7591 = vmatprep.subr.bf16.mxu0 %v6695
        %7592 = vmatpush1.bf16.msra.mxu0 %v6694
        %7593 = vmatprep.subr.bf16.mxu0 %v6697
        %7594 = vmatpush1.bf16.msra.mxu0 %v6696
        %7595 = vmatprep.subr.bf16.mxu0 %v6699
        %7596 = vmatpush1.bf16.msra.mxu0 %v6698
        %7597 = vmatprep.subr.bf16.mxu0 %v6701
        %7598 = vmatpush1.bf16.msra.mxu0 %v6700
        %7599 = vmatprep.subr.bf16.mxu0 %v6703
        %7600 = vmatpush1.bf16.msra.mxu0 %v6702
        %7601 = vmatprep.subr.bf16.mxu0 %v6705
        %7602 = vmatpush1.bf16.msra.mxu0 %v6704
        %7603 = vmatprep.subr.bf16.mxu0 %v6707
        %7604 = vmatpush1.bf16.msra.mxu0 %v6706
        %7605 = vmatprep.subr.bf16.mxu0 %v6709
        %7606 = vmatpush1.bf16.msra.mxu0 %v6708
        %7607 = vmatprep.subr.bf16.mxu0 %v6711
        %7608 = vmatpush1.bf16.msra.mxu0 %v6710
        %7609 = vmatprep.subr.bf16.mxu0 %v6713
        %7610 = vmatpush1.bf16.msra.mxu0 %v6712
        %7611 = vmatprep.subr.bf16.mxu0 %v6715
        %7612 = vmatpush1.bf16.msra.mxu0 %v6714
        %7613 = vmatprep.subr.bf16.mxu0 %v6717
        %7614 = vmatpush1.bf16.msra.mxu0 %v6716
        %7615 = vmatprep.mubr.bf16.mxu0 %v5119
        %7616 = vmatmul.mubr.bf16.gmra.mrb[0].mxu0 %v5117
        %v7617 = vpop.f32.mrb[0].mxu0
        %v7618 = vadd.f32 %v7577, %v7617
        %v7619 = vpop.f32.mrb[0].mxu0
        %v7620 = vadd.f32 %v7579, %v7619
        %v7621 = vpop.f32.mrb[0].mxu0
        %v7622 = vpop.f32.mrb[0].mxu0
        %7623 = vdwg.mxu0
        %7624 = vmatprep.subr.bf16.mxu0 %v6719
        %7625 = vmatpush1.bf16.msra.mxu0 %v6718
        %7626 = vmatprep.subr.bf16.mxu0 %v6721
        %7627 = vmatpush1.bf16.msra.mxu0 %v6720
        %7628 = vmatprep.subr.bf16.mxu0 %v6723
        %7629 = vmatpush1.bf16.msra.mxu0 %v6722
        %7630 = vmatprep.subr.bf16.mxu0 %v6725
        %7631 = vmatpush1.bf16.msra.mxu0 %v6724
        %7632 = vmatprep.subr.bf16.mxu0 0
        %7633 = vmatpush1.bf16.msra.mxu0 0
        %7634 = vmatprep.subr.bf16.mxu0 0
        %7635 = vmatpush1.bf16.msra.mxu0 0
        %7636 = vmatprep.subr.bf16.mxu0 0
        %7637 = vmatpush1.bf16.msra.mxu0 0
        %7638 = vmatprep.subr.bf16.mxu0 0
        %7639 = vmatpush1.bf16.msra.mxu0 0
        %7640 = vmatprep.subr.bf16.mxu0 0
        %7641 = vmatpush1.bf16.msra.mxu0 0
        %7642 = vmatprep.subr.bf16.mxu0 0
        %7643 = vmatpush1.bf16.msra.mxu0 0
        %7644 = vmatprep.subr.bf16.mxu0 0
        %7645 = vmatpush1.bf16.msra.mxu0 0
        %7646 = vmatprep.subr.bf16.mxu0 0
        %7647 = vmatpush1.bf16.msra.mxu0 0
        %7648 = vmatprep.subr.bf16.mxu0 0
        %7649 = vmatpush1.bf16.msra.mxu0 0
        %7650 = vmatprep.subr.bf16.mxu0 0
        %7651 = vmatpush1.bf16.msra.mxu0 0
        %7652 = vmatprep.subr.bf16.mxu0 0
        %7653 = vmatpush1.bf16.msra.mxu0 0
        %7654 = vmatprep.subr.bf16.mxu0 0
        %7655 = vmatpush1.bf16.msra.mxu0 0
        %7656 = vmatprep.mubr.bf16.mxu0 0
        %7657 = vmatmul.mubr.bf16.gmra.mrb[0].mxu0 %v7130
        %v7658 = vpop.f32.mrb[0].mxu0
        %v7659 = vadd.f32 %v7618, %v7658
        %v7660 = vpop.f32.mrb[0].mxu0
        %v7661 = vadd.f32 %v7620, %v7660
        %v7662 = vpop.f32.mrb[0].mxu0
        %v7663 = vpop.f32.mrb[0].mxu0
        %7664 = vdwg.mxu0
        %v7665 = vmax.f32 %v7659, 0.0
        %v7666 = vmax.f32 %v7661, 0.0
        %v7667 = vld [vmem:[%s43] sm:$0xf]
        %v7668 = vld [vmem:[%s43 + $0x4] sm:$0xf]
        %v7669 = vld [vmem:[%s43 + $0x8] sm:$0xf]
        %v7670 = vld [vmem:[%s43 + $0xc] sm:$0xf]
        %v7671 = vld [vmem:[%s43 + $0x10] sm:$0xf]
        %v7672 = vld [vmem:[%s43 + $0x14] sm:$0xf]
        %v7673 = vld [vmem:[%s43 + $0x18] sm:$0xf]
        %v7674 = vld [vmem:[%s43 + $0x1c] sm:$0xf]
        %v7675 = vld [vmem:[%s43 + $0x20] sm:$0xf]
        %v7676 = vld [vmem:[%s43 + $0x24] sm:$0xf]
        %v7677 = vld [vmem:[%s43 + $0x28] sm:$0xf]
        %v7678 = vld [vmem:[%s43 + $0x2c] sm:$0xf]
        %v7679 = vld [vmem:[%s43 + $0x30] sm:$0xf]
        %v7680 = vld [vmem:[%s43 + $0x34] sm:$0xf]
        %v7681 = vld [vmem:[%s43 + $0x38] sm:$0xf]
        %v7682 = vld [vmem:[%s43 + $0x3c] sm:$0xf]
        %v7683 = vld [vmem:[%s43 + $0x40] sm:$0xf]
        %v7684 = vld [vmem:[%s43 + $0x44] sm:$0xf]
        %v7685 = vld [vmem:[%s43 + $0x48] sm:$0xf]
        %v7686 = vld [vmem:[%s43 + $0x4c] sm:$0xf]
        %v7687 = vld [vmem:[%s43 + $0x50] sm:$0xf]
        %v7688 = vld [vmem:[%s43 + $0x54] sm:$0xf]
        %v7689 = vld [vmem:[%s43 + $0x58] sm:$0xf]
        %v7690 = vld [vmem:[%s43 + $0x5c] sm:$0xf]
        %v7691 = vld [vmem:[%s43 + $0x60] sm:$0xf]
        %v7692 = vld [vmem:[%s43 + $0x64] sm:$0xf]
        %v7693 = vld [vmem:[%s43 + $0x68] sm:$0xf]
        %v7694 = vld [vmem:[%s43 + $0x6c] sm:$0xf]
        %v7695 = vld [vmem:[%s43 + $0x70] sm:$0xf]
        %v7696 = vld [vmem:[%s43 + $0x74] sm:$0xf]
        %v7697 = vld [vmem:[%s43 + $0x78] sm:$0xf]
        %v7698 = vld [vmem:[%s43 + $0x7c] sm:$0xf]
        %v7699 = vpack.c.bf16 %v7665, %v7665
        %v7700 = vpack.c.bf16 %v7666, %v7666
        %v7701 = vld [vmem:[%s45] sm:$0x1]
        %v7734 = vunpack.c.l.b16 %v7667
        %v7735 = vunpack.c.l.b16 %v7668
        %v7736 = vunpack.c.l.b16 %v7669
        %v7737 = vunpack.c.l.b16 %v7670
        %v7738 = vunpack.c.l.b16 %v7671
        %v7739 = vunpack.c.l.b16 %v7672
        %v7740 = vunpack.c.l.b16 %v7673
        %v7741 = vunpack.c.l.b16 %v7674
        %v7742 = vunpack.c.l.b16 %v7675
        %v7743 = vunpack.c.l.b16 %v7676
        %v7744 = vunpack.c.l.b16 %v7677
        %v7745 = vunpack.c.l.b16 %v7678
        %v7746 = vunpack.c.l.b16 %v7679
        %v7747 = vunpack.c.l.b16 %v7680
        %v7748 = vunpack.c.l.b16 %v7681
        %v7749 = vunpack.c.l.b16 %v7682
        %v7750 = vunpack.c.l.b16 %v7683
        %v7751 = vunpack.c.l.b16 %v7684
        %v7752 = vunpack.c.l.b16 %v7685
        %v7753 = vunpack.c.l.b16 %v7686
        %v7754 = vunpack.c.l.b16 %v7687
        %v7755 = vunpack.c.l.b16 %v7688
        %v7756 = vunpack.c.l.b16 %v7689
        %v7757 = vunpack.c.l.b16 %v7690
        %v7758 = vunpack.c.l.b16 %v7691
        %v7759 = vunpack.c.l.b16 %v7692
        %v7760 = vunpack.c.l.b16 %v7693
        %v7761 = vunpack.c.l.b16 %v7694
        %v7762 = vunpack.c.l.b16 %v7695
        %v7763 = vunpack.c.l.b16 %v7696
        %v7764 = vunpack.c.l.b16 %v7697
        %v7765 = vunpack.c.l.b16 %v7698
        %v7766 = vpack.c.b16 %v7735, %v7734
        %v7767 = vpack.c.b16 %v7737, %v7736
        %v7768 = vpack.c.b16 %v7739, %v7738
        %v7769 = vpack.c.b16 %v7741, %v7740
        %v7770 = vpack.c.b16 %v7743, %v7742
        %v7771 = vpack.c.b16 %v7745, %v7744
        %v7772 = vpack.c.b16 %v7747, %v7746
        %v7773 = vpack.c.b16 %v7749, %v7748
        %v7774 = vpack.c.b16 %v7751, %v7750
        %v7775 = vpack.c.b16 %v7753, %v7752
        %v7776 = vpack.c.b16 %v7755, %v7754
        %v7777 = vpack.c.b16 %v7757, %v7756
        %v7778 = vpack.c.b16 %v7759, %v7758
        %v7779 = vpack.c.b16 %v7761, %v7760
        %v7780 = vpack.c.b16 %v7763, %v7762
        %v7781 = vpack.c.b16 %v7765, %v7764
        %7798 = vmatprep.subr.bf16.mxu0 0
        %7799 = vmatpush1.bf16.msra.mxu0 %v7766
        %7800 = vmatprep.subr.bf16.mxu0 0
        %7801 = vmatpush1.bf16.msra.mxu0 %v7767
        %7802 = vmatprep.subr.bf16.mxu0 0
        %7803 = vmatpush1.bf16.msra.mxu0 %v7768
        %7804 = vmatprep.subr.bf16.mxu0 0
        %7805 = vmatpush1.bf16.msra.mxu0 %v7769
        %7806 = vmatprep.subr.bf16.mxu0 0
        %7807 = vmatpush1.bf16.msra.mxu0 %v7770
        %7808 = vmatprep.subr.bf16.mxu0 0
        %7809 = vmatpush1.bf16.msra.mxu0 %v7771
        %7810 = vmatprep.subr.bf16.mxu0 0
        %7811 = vmatpush1.bf16.msra.mxu0 %v7772
        %7812 = vmatprep.subr.bf16.mxu0 0
        %7813 = vmatpush1.bf16.msra.mxu0 %v7773
        %7814 = vmatprep.subr.bf16.mxu0 0
        %7815 = vmatpush1.bf16.msra.mxu0 %v7774
        %7816 = vmatprep.subr.bf16.mxu0 0
        %7817 = vmatpush1.bf16.msra.mxu0 %v7775
        %7818 = vmatprep.subr.bf16.mxu0 0
        %7819 = vmatpush1.bf16.msra.mxu0 %v7776
        %7820 = vmatprep.subr.bf16.mxu0 0
        %7821 = vmatpush1.bf16.msra.mxu0 %v7777
        %7822 = vmatprep.subr.bf16.mxu0 0
        %7823 = vmatpush1.bf16.msra.mxu0 %v7778
        %7824 = vmatprep.subr.bf16.mxu0 0
        %7825 = vmatpush1.bf16.msra.mxu0 %v7779
        %7826 = vmatprep.subr.bf16.mxu0 0
        %7827 = vmatpush1.bf16.msra.mxu0 %v7780
        %7828 = vmatprep.subr.bf16.mxu0 0
        %7829 = vmatpush1.bf16.msra.mxu0 %v7781
        %7830 = vmatprep.mubr.bf16.mxu0 %v7700
        %7831 = vmatmul.mubr.bf16.gmra.mrb[0].mxu0 %v7699
        %v7832 = vpop.f32.mrb[0].mxu0
        %v7833 = vadd.f32 %v7701, %v7832
        %v7834 = vpop.f32.mrb[0].mxu0
        %v7835 = vpop.f32.mrb[0].mxu0
        %v7836 = vpop.f32.mrb[0].mxu0
        %7837 = vdwg.mxu0
        %v7838 = vand.u32 2147483647, %v7833
        %v7839 = vsub.f32 0.0, %v7838
        %v7840 = vmul.f32 %v7839, 1.442695
        %v7841 = vpow.pop %v7840
        %v7842 = vadd.f32 %v7841, 1.0
        %v7843 = vrcp.pop %v7842
        %vm7844 = vcmp.ge.f32.partialorder %v7833, 0.0
        %v7845 = vmul.f32 %v7841, %v7843
        %v7846 = vsel %vm7844, %v7843, %v7845
        %v7847 = vld [vmem:[%s924] sm:$0x1]
        %v7848 = vld [vmem:[%s47] sm:$0x7]
        %v7849 = vld [vmem:[%s49] sm:$0x1]
        %vm7850 = vcmask 23552
        %v7852 = vsel %vm7850, %v7847, 0
        %vm7854 = vcmask 1042432
        %v7856 = vsel %vm7854, %v7848, 0
        %7858 = vmatprep.subr.mxu0 0.0
        %7859 = vmatpush1.msra.mxu0 %v7856
        %7860 = vmatprep.subr.mxu0 0.0
        %7861 = vmatpush1.msra.mxu0 0.0
        %7862 = vmatprep.subr.mxu0 0.0
        %7863 = vmatpush1.msra.mxu0 0.0
        %7864 = vmatprep.subr.mxu0 0.0
        %7865 = vmatpush1.msra.mxu0 0.0
        %7866 = vmatprep.subr.mxu0 0.0
        %7867 = vmatpush1.msra.mxu0 0.0
        %7868 = vmatprep.subr.mxu0 0.0
        %7869 = vmatpush1.msra.mxu0 0.0
        %7870 = vmatprep.subr.mxu0 0.0
        %7871 = vmatpush1.msra.mxu0 0.0
        %7872 = vmatprep.subr.mxu0 0.0
        %7873 = vmatpush1.msra.mxu0 0.0
        %7874 = vmatprep.subr.mxu0 0.0
        %7875 = vmatpush1.msra.mxu0 0.0
        %7876 = vmatprep.subr.mxu0 0.0
        %7877 = vmatpush1.msra.mxu0 0.0
        %7878 = vmatprep.subr.mxu0 0.0
        %7879 = vmatpush1.msra.mxu0 0.0
        %7880 = vmatprep.subr.mxu0 0.0
        %7881 = vmatpush1.msra.mxu0 0.0
        %7882 = vmatprep.subr.mxu0 0.0
        %7883 = vmatpush1.msra.mxu0 0.0
        %7884 = vmatprep.subr.mxu0 0.0
        %7885 = vmatpush1.msra.mxu0 0.0
        %7886 = vmatprep.subr.mxu0 0.0
        %7887 = vmatpush1.msra.mxu0 0.0
        %7888 = vmatprep.subr.mxu0 0.0
        %7889 = vmatpush1.msra.mxu0 0.0
        %7890 = vmatprep.subr.mxu0 0.0
        %7891 = vmatpush1.msra.mxu0 0.0
        %7892 = vmatprep.subr.mxu0 0.0
        %7893 = vmatpush1.msra.mxu0 0.0
        %7894 = vmatprep.subr.mxu0 0.0
        %7895 = vmatpush1.msra.mxu0 0.0
        %7896 = vmatprep.subr.mxu0 0.0
        %7897 = vmatpush1.msra.mxu0 0.0
        %7898 = vmatprep.subr.mxu0 0.0
        %7899 = vmatpush1.msra.mxu0 0.0
        %7900 = vmatprep.subr.mxu0 0.0
        %7901 = vmatpush1.msra.mxu0 0.0
        %7902 = vmatprep.subr.mxu0 0.0
        %7903 = vmatpush1.msra.mxu0 0.0
        %7904 = vmatprep.subr.mxu0 0.0
        %7905 = vmatpush1.msra.mxu0 0.0
        %7906 = vmatprep.subr.mxu0 0.0
        %7907 = vmatpush1.msra.mxu0 0.0
        %7908 = vmatprep.subr.mxu0 0.0
        %7909 = vmatpush1.msra.mxu0 0.0
        %7910 = vmatprep.subr.mxu0 0.0
        %7911 = vmatpush1.msra.mxu0 0.0
        %7912 = vmatprep.subr.mxu0 0.0
        %7913 = vmatpush1.msra.mxu0 0.0
        %7914 = vmatprep.subr.mxu0 0.0
        %7915 = vmatpush1.msra.mxu0 0.0
        %7916 = vmatprep.subr.mxu0 0.0
        %7917 = vmatpush1.msra.mxu0 0.0
        %7918 = vmatprep.subr.mxu0 0.0
        %7919 = vmatpush1.msra.mxu0 0.0
        %7920 = vmatprep.subr.mxu0 0.0
        %7921 = vmatpush1.msra.mxu0 0.0
        %7922 = vmatprep.mubr.f32.mxu0 0.0
        %7923 = vmatmul.mubr.f32.gmra.mrb[0].mxu0 %v7852
        %v7924 = vpop.f32.mrb[0].mxu0
        %v7925 = vadd.f32 %v7849, %v7924
        %v7926 = vpop.f32.mrb[0].mxu0
        %7927 = vdwg.mxu0
        %v7928 = vand.u32 2147483647, %v7925
        %v7929 = vsub.f32 0.0, %v7928
        %v7930 = vmul.f32 %v7929, 1.442695
        %v7931 = vpow.pop %v7930
        %v7932 = vadd.f32 %v7931, 1.0
        %v7933 = vrcp.pop %v7932
        %vm7934 = vcmp.ge.f32.partialorder %v7925, 0.0
        %v7935 = vmul.f32 %v7931, %v7933
        %v7936 = vsel %vm7934, %v7933, %v7935
        %v7937 = vld [vmem:[%s927] sm:$0x1]
        %v7938 = vld [vmem:[%s51] sm:$0x3]
        %v7939 = vld [vmem:[%s53] sm:$0xff]
        %v7940 = vld [vmem:[%s53 + $0x8] sm:$0xff]
        %v7942 = vsel %vm2162, %v7936, 0
        %7944 = vmatprep.subr.mxu0 0.0
        %7945 = vmatpush1.msra.mxu0 %v7939
        %7946 = vmatprep.subr.mxu0 0.0
        %7947 = vmatpush1.msra.mxu0 %v7940
        %7948 = vmatprep.subr.mxu0 0.0
        %7949 = vmatpush1.msra.mxu0 0.0
        %7950 = vmatprep.subr.mxu0 0.0
        %7951 = vmatpush1.msra.mxu0 0.0
        %7952 = vmatprep.subr.mxu0 0.0
        %7953 = vmatpush1.msra.mxu0 0.0
        %7954 = vmatprep.subr.mxu0 0.0
        %7955 = vmatpush1.msra.mxu0 0.0
        %7956 = vmatprep.subr.mxu0 0.0
        %7957 = vmatpush1.msra.mxu0 0.0
        %7958 = vmatprep.subr.mxu0 0.0
        %7959 = vmatpush1.msra.mxu0 0.0
        %7960 = vmatprep.subr.mxu0 0.0
        %7961 = vmatpush1.msra.mxu0 0.0
        %7962 = vmatprep.subr.mxu0 0.0
        %7963 = vmatpush1.msra.mxu0 0.0
        %7964 = vmatprep.subr.mxu0 0.0
        %7965 = vmatpush1.msra.mxu0 0.0
        %7966 = vmatprep.subr.mxu0 0.0
        %7967 = vmatpush1.msra.mxu0 0.0
        %7968 = vmatprep.subr.mxu0 0.0
        %7969 = vmatpush1.msra.mxu0 0.0
        %7970 = vmatprep.subr.mxu0 0.0
        %7971 = vmatpush1.msra.mxu0 0.0
        %7972 = vmatprep.subr.mxu0 0.0
        %7973 = vmatpush1.msra.mxu0 0.0
        %7974 = vmatprep.subr.mxu0 0.0
        %7975 = vmatpush1.msra.mxu0 0.0
        %7976 = vmatprep.subr.mxu0 0.0
        %7977 = vmatpush1.msra.mxu0 0.0
        %7978 = vmatprep.subr.mxu0 0.0
        %7979 = vmatpush1.msra.mxu0 0.0
        %7980 = vmatprep.subr.mxu0 0.0
        %7981 = vmatpush1.msra.mxu0 0.0
        %7982 = vmatprep.subr.mxu0 0.0
        %7983 = vmatpush1.msra.mxu0 0.0
        %7984 = vmatprep.subr.mxu0 0.0
        %7985 = vmatpush1.msra.mxu0 0.0
        %7986 = vmatprep.subr.mxu0 0.0
        %7987 = vmatpush1.msra.mxu0 0.0
        %7988 = vmatprep.subr.mxu0 0.0
        %7989 = vmatpush1.msra.mxu0 0.0
        %7990 = vmatprep.subr.mxu0 0.0
        %7991 = vmatpush1.msra.mxu0 0.0
        %7992 = vmatprep.subr.mxu0 0.0
        %7993 = vmatpush1.msra.mxu0 0.0
        %7994 = vmatprep.subr.mxu0 0.0
        %7995 = vmatpush1.msra.mxu0 0.0
        %7996 = vmatprep.subr.mxu0 0.0
        %7997 = vmatpush1.msra.mxu0 0.0
        %7998 = vmatprep.subr.mxu0 0.0
        %7999 = vmatpush1.msra.mxu0 0.0
        %8000 = vmatprep.subr.mxu0 0.0
        %8001 = vmatpush1.msra.mxu0 0.0
        %8002 = vmatprep.subr.mxu0 0.0
        %8003 = vmatpush1.msra.mxu0 0.0
        %8004 = vmatprep.subr.mxu0 0.0
        %8005 = vmatpush1.msra.mxu0 0.0
        %8006 = vmatprep.subr.mxu0 0.0
        %8007 = vmatpush1.msra.mxu0 0.0
        %8008 = vmatprep.mubr.f32.mxu0 0.0
        %8009 = vmatmul.mubr.f32.gmra.mrb[0].mxu0 %v7942
        %v8010 = vpop.f32.mrb[0].mxu0
        %v8011 = vadd.f32 0.0, %v8010
        %v8012 = vpop.f32.mrb[0].mxu0
        %8013 = vdwg.mxu0
        %vm8014 = vcmask 15360
        %v8016 = vsel %vm8014, %v7937, 0
        %vm8018 = vcmask 1041408
        %v8020 = vsel %vm8018, %v7938, 0
        %8022 = vmatprep.subr.mxu0 0.0
        %8023 = vmatpush1.msra.mxu0 %v8020
        %8024 = vmatprep.subr.mxu0 0.0
        %8025 = vmatpush1.msra.mxu0 0.0
        %8026 = vmatprep.subr.mxu0 0.0
        %8027 = vmatpush1.msra.mxu0 0.0
        %8028 = vmatprep.subr.mxu0 0.0
        %8029 = vmatpush1.msra.mxu0 0.0
        %8030 = vmatprep.subr.mxu0 0.0
        %8031 = vmatpush1.msra.mxu0 0.0
        %8032 = vmatprep.subr.mxu0 0.0
        %8033 = vmatpush1.msra.mxu0 0.0
        %8034 = vmatprep.subr.mxu0 0.0
        %8035 = vmatpush1.msra.mxu0 0.0
        %8036 = vmatprep.subr.mxu0 0.0
        %8037 = vmatpush1.msra.mxu0 0.0
        %8038 = vmatprep.subr.mxu0 0.0
        %8039 = vmatpush1.msra.mxu0 0.0
        %8040 = vmatprep.subr.mxu0 0.0
        %8041 = vmatpush1.msra.mxu0 0.0
        %8042 = vmatprep.subr.mxu0 0.0
        %8043 = vmatpush1.msra.mxu0 0.0
        %8044 = vmatprep.subr.mxu0 0.0
        %8045 = vmatpush1.msra.mxu0 0.0
        %8046 = vmatprep.subr.mxu0 0.0
        %8047 = vmatpush1.msra.mxu0 0.0
        %8048 = vmatprep.subr.mxu0 0.0
        %8049 = vmatpush1.msra.mxu0 0.0
        %8050 = vmatprep.subr.mxu0 0.0
        %8051 = vmatpush1.msra.mxu0 0.0
        %8052 = vmatprep.subr.mxu0 0.0
        %8053 = vmatpush1.msra.mxu0 0.0
        %8054 = vmatprep.subr.mxu0 0.0
        %8055 = vmatpush1.msra.mxu0 0.0
        %8056 = vmatprep.subr.mxu0 0.0
        %8057 = vmatpush1.msra.mxu0 0.0
        %8058 = vmatprep.subr.mxu0 0.0
        %8059 = vmatpush1.msra.mxu0 0.0
        %8060 = vmatprep.subr.mxu0 0.0
        %8061 = vmatpush1.msra.mxu0 0.0
        %8062 = vmatprep.subr.mxu0 0.0
        %8063 = vmatpush1.msra.mxu0 0.0
        %8064 = vmatprep.subr.mxu0 0.0
        %8065 = vmatpush1.msra.mxu0 0.0
        %8066 = vmatprep.subr.mxu0 0.0
        %8067 = vmatpush1.msra.mxu0 0.0
        %8068 = vmatprep.subr.mxu0 0.0
        %8069 = vmatpush1.msra.mxu0 0.0
        %8070 = vmatprep.subr.mxu0 0.0
        %8071 = vmatpush1.msra.mxu0 0.0
        %8072 = vmatprep.subr.mxu0 0.0
        %8073 = vmatpush1.msra.mxu0 0.0
        %8074 = vmatprep.subr.mxu0 0.0
        %8075 = vmatpush1.msra.mxu0 0.0
        %8076 = vmatprep.subr.mxu0 0.0
        %8077 = vmatpush1.msra.mxu0 0.0
        %8078 = vmatprep.subr.mxu0 0.0
        %8079 = vmatpush1.msra.mxu0 0.0
        %8080 = vmatprep.subr.mxu0 0.0
        %8081 = vmatpush1.msra.mxu0 0.0
        %8082 = vmatprep.subr.mxu0 0.0
        %8083 = vmatpush1.msra.mxu0 0.0
        %8084 = vmatprep.subr.mxu0 0.0
        %8085 = vmatpush1.msra.mxu0 0.0
        %8086 = vmatprep.mubr.f32.mxu0 0.0
        %8087 = vmatmul.mubr.f32.gmra.mrb[0].mxu0 %v8016
        %v8088 = vpop.f32.mrb[0].mxu0
        %v8089 = vadd.f32 %v8011, %v8088
        %v8090 = vpop.f32.mrb[0].mxu0
        %8091 = vdwg.mxu0
        %v8092 = vld [vmem:[%s55] sm:$0xff]
        %v8093 = vld [vmem:[%s55 + $0x8] sm:$0xff]
        %v8094 = vld [vmem:[%s55 + $0x10] sm:$0xff]
        %v8095 = vld [vmem:[%s55 + $0x18] sm:$0xff]
        %v8096 = vld [vmem:[%s55 + $0x20] sm:$0xff]
        %v8097 = vld [vmem:[%s55 + $0x28] sm:$0xff]
        %v8098 = vld [vmem:[%s55 + $0x30] sm:$0xff]
        %v8099 = vld [vmem:[%s55 + $0x38] sm:$0xff]
        %v8100 = vld [vmem:[%s55 + $0x40] sm:$0xff]
        %v8101 = vld [vmem:[%s55 + $0x48] sm:$0xff]
        %v8102 = vld [vmem:[%s55 + $0x50] sm:$0xff]
        %v8103 = vld [vmem:[%s55 + $0x58] sm:$0xff]
        %v8104 = vld [vmem:[%s55 + $0x60] sm:$0xff]
        %v8105 = vld [vmem:[%s55 + $0x68] sm:$0x3f]
        %vm8106 = vcmask 900096
        %v8108 = vsel %vm8106, %v7846, 0
        %vm8110 = vcmask 1045504
        %v8112 = vsel %vm8110, %v8105, 0
        %8114 = vmatprep.subr.mxu0 0.0
        %8115 = vmatpush1.msra.mxu0 %v8092
        %8116 = vmatprep.subr.mxu0 0.0
        %8117 = vmatpush1.msra.mxu0 %v8093
        %8118 = vmatprep.subr.mxu0 0.0
        %8119 = vmatpush1.msra.mxu0 %v8094
        %8120 = vmatprep.subr.mxu0 0.0
        %8121 = vmatpush1.msra.mxu0 %v8095
        %8122 = vmatprep.subr.mxu0 0.0
        %8123 = vmatpush1.msra.mxu0 %v8096
        %8124 = vmatprep.subr.mxu0 0.0
        %8125 = vmatpush1.msra.mxu0 %v8097
        %8126 = vmatprep.subr.mxu0 0.0
        %8127 = vmatpush1.msra.mxu0 %v8098
        %8128 = vmatprep.subr.mxu0 0.0
        %8129 = vmatpush1.msra.mxu0 %v8099
        %8130 = vmatprep.subr.mxu0 0.0
        %8131 = vmatpush1.msra.mxu0 %v8100
        %8132 = vmatprep.subr.mxu0 0.0
        %8133 = vmatpush1.msra.mxu0 %v8101
        %8134 = vmatprep.subr.mxu0 0.0
        %8135 = vmatpush1.msra.mxu0 %v8102
        %8136 = vmatprep.subr.mxu0 0.0
        %8137 = vmatpush1.msra.mxu0 %v8103
        %8138 = vmatprep.subr.mxu0 0.0
        %8139 = vmatpush1.msra.mxu0 %v8104
        %8140 = vmatprep.subr.mxu0 0.0
        %8141 = vmatpush1.msra.mxu0 %v8112
        %8142 = vmatprep.subr.mxu0 0.0
        %8143 = vmatpush1.msra.mxu0 0.0
        %8144 = vmatprep.subr.mxu0 0.0
        %8145 = vmatpush1.msra.mxu0 0.0
        %8146 = vmatprep.subr.mxu0 0.0
        %8147 = vmatpush1.msra.mxu0 0.0
        %8148 = vmatprep.subr.mxu0 0.0
        %8149 = vmatpush1.msra.mxu0 0.0
        %8150 = vmatprep.subr.mxu0 0.0
        %8151 = vmatpush1.msra.mxu0 0.0
        %8152 = vmatprep.subr.mxu0 0.0
        %8153 = vmatpush1.msra.mxu0 0.0
        %8154 = vmatprep.subr.mxu0 0.0
        %8155 = vmatpush1.msra.mxu0 0.0
        %8156 = vmatprep.subr.mxu0 0.0
        %8157 = vmatpush1.msra.mxu0 0.0
        %8158 = vmatprep.subr.mxu0 0.0
        %8159 = vmatpush1.msra.mxu0 0.0
        %8160 = vmatprep.subr.mxu0 0.0
        %8161 = vmatpush1.msra.mxu0 0.0
        %8162 = vmatprep.subr.mxu0 0.0
        %8163 = vmatpush1.msra.mxu0 0.0
        %8164 = vmatprep.subr.mxu0 0.0
        %8165 = vmatpush1.msra.mxu0 0.0
        %8166 = vmatprep.subr.mxu0 0.0
        %8167 = vmatpush1.msra.mxu0 0.0
        %8168 = vmatprep.subr.mxu0 0.0
        %8169 = vmatpush1.msra.mxu0 0.0
        %8170 = vmatprep.subr.mxu0 0.0
        %8171 = vmatpush1.msra.mxu0 0.0
        %8172 = vmatprep.subr.mxu0 0.0
        %8173 = vmatpush1.msra.mxu0 0.0
        %8174 = vmatprep.subr.mxu0 0.0
        %8175 = vmatpush1.msra.mxu0 0.0
        %8176 = vmatprep.subr.mxu0 0.0
        %8177 = vmatpush1.msra.mxu0 0.0
        %8178 = vmatprep.mubr.f32.mxu0 0.0
        %8179 = vmatmul.mubr.f32.gmra.mrb[0].mxu0 %v8108
        %v8180 = vpop.f32.mrb[0].mxu0
        %v8181 = vadd.f32 0.0, %v8180
        %v8182 = vpop.f32.mrb[0].mxu0
        %8183 = vdwg.mxu0
        %v8184 = vadd.f32 %v8089, %v8181
        %v8185 = vld [vmem:[%s57] sm:$0x1]
        %v8186 = vadd.f32 %v8184, %v8185
        %8187 = vst [vmem:[%s916] sm:$0x1] %v8186
        %s8188 = sand.u32 %s705, 1
        %s8189 = scalar_lea.sflag [#allocation4], %s8188
        %s8190 = sand.u32 %s705, 1
        %s8191 = scalar_lea.vmem [#allocation3], %s8190
        // Predicated region
        $region137: #{bsfn_ava_forward.3} parent=135 // pred_check
          %p8192 = pneg %p715
        $region138: #{bsfn_ava_forward.3} parent=135 // pred_check_branch
          %8194 = sbr.rel (%p8192) target = $region140
        $region139: #{bsfn_ava_forward.3} parent=135 // pred_region
          %s8196 = ssub.s32 16, 16
          %8197 = vsyncadd %s8189, %s8196
          %s8198 = smul.addr %s73, 16
          %s8199 = scalar_lea.hbm %s59, %s8198
          %s8201 = sshll.u32 %s8191, 4
          %s8202 = int_to_ptr.vmem [resolvable:$true] %s8201
          %8204 = dma.vmem_to_hbm [thread:$0]  %s8202, 16, %s8199, %s8189
        $region140: #{bsfn_ava_forward.3} parent=135 // pred_fallthru
          _
      $region136: #{bsfn_ava_forward.3} parent=5 // pred_fallthru
        _
      %p8205 = scmp.le.s32.totalorder 2, %s68
      // Predicated region
      $region141: #{bsfn_ava_forward.3} parent=5 // pred_check
        %p8206 = pneg %p8205
      $region142: #{bsfn_ava_forward.3} parent=5 // pred_check_branch
        %8208 = sbr.rel (%p8206) target = $region144
      $region143: #{bsfn_ava_forward.3} parent=5 // pred_region
        %s8209 = ssub.s32 %s68, 2
        // Predicated region
        $region145: #{bsfn_ava_forward.3} parent=143 // pred_check
          %p8210 = pneg %p721
        $region146: #{bsfn_ava_forward.3} parent=143 // pred_check_branch
          %8212 = sbr.rel (%p8210) target = $region148
        $region147: #{bsfn_ava_forward.3} parent=143 // pred_region
          %s8213 = sand.u32 %s706, 1
          %s8214 = scalar_lea.sflag [#allocation4], %s8213
          %s8215 = sand.u32 %s706, 1
          %s8216 = scalar_lea.vmem [#allocation3], %s8215
          %8217 = dma.done %s8214, 16
        $region148: #{bsfn_ava_forward.3} parent=143 // pred_fallthru
          _
      $region144: #{bsfn_ava_forward.3} parent=5 // pred_fallthru
        _
    $region6: #{bsfn_ava_forward.3} parent=1 // loop_footer
      %s72 = sadd.s32 1, %s68
    $region7: #{bsfn_ava_forward.3} parent=1 // loop_footer_branch
      %67 = sbr.rel target = $region3
    $region8: #{bsfn_ava_forward.3} parent=1 // loop_exit
      _
    %8218 = vsyncpa [#allocation4], 1
    %s8219 = scalar_lea.sflag [#allocation4], 1
    %8220 = vsyncpa %s8219, 1

</llo_original>
